<compile_context>
chip_gen: v7x
topology: tpu7x:2x2x1
jax: 0.10.0
libtpu: 0.0.40
codegen_flags: <defaults>
</compile_context>

<pallas_src>
import jax
import jax.numpy as jnp
from jax.experimental import pallas as pl
from jax.experimental.pallas import tpu as pltpu

LANE = 128  # channel padding width == TPU lane count


# ---------------------------------------------------------------------------
# Fused kernel: 4 x (conv3x3 + BN + ReLU + maxpool2x2) + linear head, one image per grid step
# ---------------------------------------------------------------------------
def _make_kernel(layer_dims):
    n_layers = len(layer_dims)

    def conv_pool(buf, w_ref, shift_ref, pbuf, H, W):
        """One conv3x3(pad=1) + folded-BN/bias + ReLU + maxpool2x2 stage.

        `buf` rows [W+1, W+1+H*W) hold the flat (h*W + w) activation (LANE lanes), with
        >= W+1 zero halo rows on each side (flat zero rows handle the height border).
        Returns the pooled (H/2*W/2, LANE) activation as a value.
        """
        HW = H * W
        H2, W2 = H // 2, W // 2
        HW2 = H2 * W2
        lw = W.bit_length() - 1            # log2(W)   (W is a power of 2)
        lw2 = max(W2.bit_length() - 1, 0)  # log2(W/2)
        base = W + 1                       # buf row of flat position 0

        # Width-boundary masks over OUTPUT positions p. Full (HW, LANE) shape so the
        # select below is a plain per-lane VPU op (no lane broadcast needed).
        p_iota = jax.lax.broadcasted_iota(jnp.int32, (HW, LANE), 0)
        wcol = jnp.bitwise_and(p_iota, W - 1)            # p % W
        mask_l = wcol != 0                               # tap dw = -1 valid
        mask_r = wcol != (W - 1)                         # tap dw = +1 valid

        # 3x3 conv = 9 accumulating matmuls over flat-shifted slices. Taps are grouped
        # by dw so each width-wrap mask is applied once to the per-dw partial sum.
        acc = jnp.zeros((HW, LANE), jnp.float32)
        for dw in (-1, 0, 1):
            part = jnp.zeros((HW, LANE), jnp.float32)
            for dh in (-1, 0, 1):
                k = (dh + 1) * 3 + (dw + 1)              # packed-weight tap index
                s = dh * W + dw
                a = buf[base + s: base + s + HW, :]
                part = part + jnp.dot(a, w_ref[k * LANE:(k + 1) * LANE, :],
                                      preferred_element_type=jnp.float32)
            if dw == -1:
                part = jnp.where(mask_l, part, 0.0)
            elif dw == 1:
                part = jnp.where(mask_r, part, 0.0)
            acc = acc + part
        y = jnp.maximum(acc + shift_ref[...], 0.0)       # folded BN/bias + ReLU (f32)

        # Fused 2x2/stride-2 maxpool: max over the 4 taps via shifted slices ...
        pbuf[0:HW, :] = y
        t = jnp.maximum(
            jnp.maximum(pbuf[0:HW, :], pbuf[1:1 + HW, :]),
            jnp.maximum(pbuf[W:W + HW, :], pbuf[W + 1:W + 1 + HW, :]))
        if HW2 == 1:                                     # last stage: single window
            return t[0:1, :]
        # ... then pick the stride-2 positions with a 0/1 selection matmul (stays 2D / MXU).
        q_idx = jax.lax.broadcasted_iota(jnp.int32, (HW2, HW), 0)
        p_idx = jax.lax.broadcasted_iota(jnp.int32, (HW2, HW), 1)
        sel = (jnp.left_shift(jnp.right_shift(q_idx, lw2), lw + 1)
               + jnp.left_shift(jnp.bitwise_and(q_idx, W2 - 1), 1))
        sel_mat = (p_idx == sel).astype(jnp.float32)
        return jnp.dot(sel_mat, t, preferred_element_type=jnp.float32)   # (HW2, LANE)

    def kernel(*refs):
        x_ref = refs[0]
        wrefs = refs[1:1 + 2 * n_layers:2]
        srefs = refs[2:2 + 2 * n_layers:2]
        wl_ref = refs[1 + 2 * n_layers]
        bl_ref = refs[2 + 2 * n_layers]
        o_ref = refs[3 + 2 * n_layers]
        bufs = refs[4 + 2 * n_layers: 4 + 3 * n_layers]
        pbuf = refs[4 + 3 * n_layers]

        # Zero ONLY the halo rows (they are never written by the compute below, but must
        # be zero/finite; interior rows are fully overwritten before being read).
        for i, (H, W) in enumerate(layer_dims):
            HW = H * W
            R = bufs[i].shape[0]
            bufs[i][0:W + 1, :] = jnp.zeros((W + 1, LANE), jnp.float32)
            bufs[i][W + 1 + HW:R, :] = jnp.zeros((R - (W + 1) - HW, LANE), jnp.float32)
        H0, W0 = layer_dims[0]
        HW0 = H0 * W0
        Rp = pbuf.shape[0]
        pbuf[HW0:Rp, :] = jnp.zeros((Rp - HW0, LANE), jnp.float32)

        # Encoder stack: activations never leave VMEM.
        bufs[0][W0 + 1: W0 + 1 + HW0, :] = x_ref[0]
        act = None
        for i, (H, W) in enumerate(layer_dims):
            if i > 0:
                bufs[i][W + 1: W + 1 + H * W, :] = act
            act = conv_pool(bufs[i], wrefs[i], srefs[i], pbuf, H, W)

        # Classifier head: act is (1, LANE), real features in the leading lanes.
        o_ref[0] = (jnp.dot(act, wl_ref[...], preferred_element_type=jnp.float32)
                    + bl_ref[...]).astype(o_ref.dtype)

    return kernel


# ---------------------------------------------------------------------------
# Parameter packing (wrapper-side, once): fold BN + bias, pad channels to 128 lanes
# ---------------------------------------------------------------------------
def _fold_bn(w, b, gamma, beta, mean, var, eps=1e-5):
    scale = gamma / jnp.sqrt(var + eps)
    return w * scale, beta + (b - mean) * scale


def _pack_conv_weight(w_folded):
    kh, kw, cin, cout = w_folded.shape
    wk = w_folded.reshape(kh * kw, cin, cout)
    wp = jnp.zeros((kh * kw, LANE, LANE), jnp.float32).at[:, :cin, :cout].set(wk)
    return wp.reshape(kh * kw * LANE, LANE)


def _pack_row(v):
    return jnp.zeros((1, LANE), jnp.float32).at[0, :v.shape[0]].set(v)


# ---------------------------------------------------------------------------
# Forward: x (NHWC) -> logits
# ---------------------------------------------------------------------------
def classifier_forward(x_nhwc, params):
    N, H, W, c_in = x_nhwc.shape
    n_layers = len(params["convs"])
    assert H % (2 ** n_layers) == 0 and W % (2 ** n_layers) == 0, \
        "spatial dims must be divisible by 2**n_layers for the maxpool stack"
    assert (H & (H - 1)) == 0 and (W & (W - 1)) == 0, \
        "kernel's flat-index bit tricks assume power-of-two spatial dims"
    layer_dims = tuple((H >> i, W >> i) for i in range(n_layers))
    HW = H * W

    packed = []
    for (w, b, gamma, beta, mean, var) in params["convs"]:
        w_f, shift = _fold_bn(w, b, gamma, beta, mean, var)
        packed.append((_pack_conv_weight(w_f), _pack_row(shift)))
    wl, bl = params["linear"]
    hidden, n_classes = wl.shape
    wl_p = jnp.zeros((LANE, LANE), jnp.float32).at[:hidden, :n_classes].set(wl)
    bl_p = _pack_row(bl)

    x_flat = jnp.pad(x_nhwc.reshape(N, HW, c_in).astype(jnp.float32),
                     ((0, 0), (0, 0), (0, LANE - c_in)))

    def _rows(n):
        return ((n + 7) // 8) * 8

    scratch = [pltpu.VMEM((_rows(h * w + 2 * w + 2), LANE), jnp.float32)
               for (h, w) in layer_dims]
    scratch.append(pltpu.VMEM((_rows(HW + W + 1), LANE), jnp.float32))   # shared pool buffer

    def _full(shape):
        zeros = (0,) * len(shape)
        return pl.BlockSpec(shape, lambda n: zeros)   # grid-invariant -> DMA'd once

    in_specs = [pl.BlockSpec((1, HW, LANE), lambda n: (n, 0, 0))]
    operands = [x_flat]
    for wp, sp in packed:
        in_specs += [_full(wp.shape), _full(sp.shape)]
        operands += [wp, sp]
    in_specs += [_full(wl_p.shape), _full(bl_p.shape)]
    operands += [wl_p, bl_p]

    out = pl.pallas_call(
        _make_kernel(layer_dims),
        out_shape=jax.ShapeDtypeStruct((N, 1, LANE), jnp.float32),
        grid=(N,),
        in_specs=in_specs,
        out_specs=pl.BlockSpec((1, 1, LANE), lambda n: (n, 0, 0)),
        scratch_shapes=scratch,
        compiler_params=pltpu.CompilerParams(
            dimension_semantics=("parallel",),
            vmem_limit_bytes=32 * 1024 * 1024),
    )(*operands)
    return out[:, 0, :n_classes]


# ---------------------------------------------------------------------------
# Deterministic synthetic params + pure-JAX reference (for a correctness check)
# ---------------------------------------------------------------------------
def init_params(key, c_in, hidden, n_classes, n_layers=4):
    convs = []
    cins = [c_in] + [hidden] * (n_layers - 1)
    for i in range(n_layers):
        k = jax.random.fold_in(key, i)
        kw, kb, kg, kbe, km, kv = jax.random.split(k, 6)
        fan_in = 9 * cins[i]
        w = jax.random.normal(kw, (3, 3, cins[i], hidden), jnp.float32) * (2.0 / fan_in) ** 0.5
        b = 0.1 * jax.random.normal(kb, (hidden,), jnp.float32)
        gamma = 1.0 + 0.1 * jax.random.normal(kg, (hidden,), jnp.float32)
        beta = 0.1 * jax.random.normal(kbe, (hidden,), jnp.float32)
        mean = 0.1 * jax.random.normal(km, (hidden,), jnp.float32)
        var = 1.0 + 0.1 * jnp.abs(jax.random.normal(kv, (hidden,), jnp.float32))
        convs.append((w, b, gamma, beta, mean, var))
    kl = jax.random.fold_in(key, 1000)
    kwl, kbl = jax.random.split(kl)
    wl = jax.random.normal(kwl, (hidden, n_classes), jnp.float32) * (1.0 / hidden) ** 0.5
    bl = 0.1 * jax.random.normal(kbl, (n_classes,), jnp.float32)
    return {"convs": convs, "linear": (wl, bl)}


def classifier_reference(x_nhwc, params, eps=1e-5):
    x = x_nhwc
    for (w, b, gamma, beta, mean, var) in params["convs"]:
        y = jax.lax.conv_general_dilated(
            x, w, window_strides=(1, 1), padding="SAME",
            dimension_numbers=("NHWC", "HWIO", "NHWC")) + b
        y = (y - mean) * (gamma / jnp.sqrt(var + eps)) + beta
        y = jnp.maximum(y, 0.0)
        x = jax.lax.reduce_window(y, -jnp.inf, jax.lax.max,
                                  (1, 2, 2, 1), (1, 2, 2, 1), "VALID")
    feat = x.reshape(x.shape[0], -1)
    wl, bl = params["linear"]
    return feat @ wl + bl


if __name__ == "__main__":
    key = jax.random.PRNGKey(0)
    k_x, k_p = jax.random.split(key)

    N, C, H, W = 2, 4, 16, 16
    hidden, n_classes = 8, 5

    # PyTorch-style NCHW input, transposed to the kernel's NHWC layout.
    x_nchw = jax.random.normal(k_x, (N, C, H, W), jnp.float32)
    x_nhwc = jnp.transpose(x_nchw, (0, 2, 3, 1))
    params = init_params(k_p, C, hidden, n_classes)

    logits = jax.jit(classifier_forward)(x_nhwc, params)
    logits = jax.block_until_ready(logits)
    assert logits.shape == (N, n_classes), logits.shape
    assert bool(jnp.all(jnp.isfinite(logits)))

    ref = classifier_reference(x_nhwc, params)
    err = float(jnp.max(jnp.abs(logits - ref)))
    assert err < 1e-2, f"kernel vs reference max abs err = {err}"
    print("KERNEL_OK")
</pallas_src>

<mosaic_0001>
module attributes {stable_mosaic.version = 11 : i64} {
  func.func @kernel(%arg0: i32, %arg1: memref<1x256x128xf32, #tpu.memory_space<vmem>>, %arg2: memref<1152x128xf32, #tpu.memory_space<vmem>>, %arg3: memref<1x128xf32, #tpu.memory_space<vmem>>, %arg4: memref<1152x128xf32, #tpu.memory_space<vmem>>, %arg5: memref<1x128xf32, #tpu.memory_space<vmem>>, %arg6: memref<1152x128xf32, #tpu.memory_space<vmem>>, %arg7: memref<1x128xf32, #tpu.memory_space<vmem>>, %arg8: memref<1152x128xf32, #tpu.memory_space<vmem>>, %arg9: memref<1x128xf32, #tpu.memory_space<vmem>>, %arg10: memref<128x128xf32, #tpu.memory_space<vmem>>, %arg11: memref<1x128xf32, #tpu.memory_space<vmem>>, %arg12: memref<1x1x128xf32, #tpu.memory_space<vmem>>, %arg13: memref<296x128xf32, #tpu.memory_space<vmem>>, %arg14: memref<88x128xf32, #tpu.memory_space<vmem>>, %arg15: memref<32x128xf32, #tpu.memory_space<vmem>>, %arg16: memref<16x128xf32, #tpu.memory_space<vmem>>, %arg17: memref<280x128xf32, #tpu.memory_space<vmem>>) attributes {dimension_semantics = [#tpu.dimension_semantics<parallel>], iteration_bounds = array<i64: 2>, scalar_prefetch = 0 : i64, scratch_operands = 5 : i64, tpu.core_type = #tpu.core_type<tc>, window_params = [{transform_indices = @transform_0, window_bounds = array<i64: 1, 256, 128>}, {pipeline_mode = #tpu.pipeline_mode<synchronous>, transform_indices = @transform_1, window_bounds = array<i64: 1152, 128>}, {pipeline_mode = #tpu.pipeline_mode<synchronous>, transform_indices = @transform_2, window_bounds = array<i64: 1, 128>}, {pipeline_mode = #tpu.pipeline_mode<synchronous>, transform_indices = @transform_3, window_bounds = array<i64: 1152, 128>}, {pipeline_mode = #tpu.pipeline_mode<synchronous>, transform_indices = @transform_4, window_bounds = array<i64: 1, 128>}, {pipeline_mode = #tpu.pipeline_mode<synchronous>, transform_indices = @transform_5, window_bounds = array<i64: 1152, 128>}, {pipeline_mode = #tpu.pipeline_mode<synchronous>, transform_indices = @transform_6, window_bounds = array<i64: 1, 128>}, {pipeline_mode = #tpu.pipeline_mode<synchronous>, transform_indices = @transform_7, window_bounds = array<i64: 1152, 128>}, {pipeline_mode = #tpu.pipeline_mode<synchronous>, transform_indices = @transform_8, window_bounds = array<i64: 1, 128>}, {pipeline_mode = #tpu.pipeline_mode<synchronous>, transform_indices = @transform_9, window_bounds = array<i64: 128, 128>}, {pipeline_mode = #tpu.pipeline_mode<synchronous>, transform_indices = @transform_10, window_bounds = array<i64: 1, 128>}, {transform_indices = @transform_11, window_bounds = array<i64: 1, 1, 128>}]} {
    %cst = arith.constant 0.000000e+00 : f32
    %0 = vector.broadcast %cst : f32 to vector<17x128xf32>
    %c0 = arith.constant 0 : index
    %c0_0 = arith.constant 0 : index
    %1 = vector.load %arg13[%c0, %c0_0] : memref<296x128xf32, #tpu.memory_space<vmem>>, vector<17x128xf32>
    tpu.vector_store %arg13[%c0, %c0_0], %0 {strides = array<i32>} : memref<296x128xf32, #tpu.memory_space<vmem>>, vector<17x128xf32>,
    %cst_1 = arith.constant 0.000000e+00 : f32
    %2 = vector.broadcast %cst_1 : f32 to vector<23x128xf32>
    %c273 = arith.constant 273 : index
    %c0_2 = arith.constant 0 : index
    %3 = vector.load %arg13[%c273, %c0_2] : memref<296x128xf32, #tpu.memory_space<vmem>>, vector<23x128xf32>
    tpu.vector_store %arg13[%c273, %c0_2], %2 {strides = array<i32>} : memref<296x128xf32, #tpu.memory_space<vmem>>, vector<23x128xf32>,
    %cst_3 = arith.constant 0.000000e+00 : f32
    %4 = vector.broadcast %cst_3 : f32 to vector<9x128xf32>
    %c0_4 = arith.constant 0 : index
    %c0_5 = arith.constant 0 : index
    %5 = vector.load %arg14[%c0_4, %c0_5] : memref<88x128xf32, #tpu.memory_space<vmem>>, vector<9x128xf32>
    tpu.vector_store %arg14[%c0_4, %c0_5], %4 {strides = array<i32>} : memref<88x128xf32, #tpu.memory_space<vmem>>, vector<9x128xf32>,
    %cst_6 = arith.constant 0.000000e+00 : f32
    %6 = vector.broadcast %cst_6 : f32 to vector<15x128xf32>
    %c73 = arith.constant 73 : index
    %c0_7 = arith.constant 0 : index
    %7 = vector.load %arg14[%c73, %c0_7] : memref<88x128xf32, #tpu.memory_space<vmem>>, vector<15x128xf32>
    tpu.vector_store %arg14[%c73, %c0_7], %6 {strides = array<i32>} : memref<88x128xf32, #tpu.memory_space<vmem>>, vector<15x128xf32>,
    %cst_8 = arith.constant 0.000000e+00 : f32
    %8 = vector.broadcast %cst_8 : f32 to vector<5x128xf32>
    %c0_9 = arith.constant 0 : index
    %c0_10 = arith.constant 0 : index
    %9 = vector.load %arg15[%c0_9, %c0_10] : memref<32x128xf32, #tpu.memory_space<vmem>>, vector<5x128xf32>
    tpu.vector_store %arg15[%c0_9, %c0_10], %8 {strides = array<i32>} : memref<32x128xf32, #tpu.memory_space<vmem>>, vector<5x128xf32>,
    %cst_11 = arith.constant 0.000000e+00 : f32
    %10 = vector.broadcast %cst_11 : f32 to vector<11x128xf32>
    %c21 = arith.constant 21 : index
    %c0_12 = arith.constant 0 : index
    %11 = vector.load %arg15[%c21, %c0_12] : memref<32x128xf32, #tpu.memory_space<vmem>>, vector<11x128xf32>
    tpu.vector_store %arg15[%c21, %c0_12], %10 {strides = array<i32>} : memref<32x128xf32, #tpu.memory_space<vmem>>, vector<11x128xf32>,
    %cst_13 = arith.constant 0.000000e+00 : f32
    %12 = vector.broadcast %cst_13 : f32 to vector<3x128xf32>
    %c0_14 = arith.constant 0 : index
    %c0_15 = arith.constant 0 : index
    %13 = vector.load %arg16[%c0_14, %c0_15] : memref<16x128xf32, #tpu.memory_space<vmem>>, vector<3x128xf32>
    tpu.vector_store %arg16[%c0_14, %c0_15], %12 {strides = array<i32>} : memref<16x128xf32, #tpu.memory_space<vmem>>, vector<3x128xf32>,
    %cst_16 = arith.constant 0.000000e+00 : f32
    %14 = vector.broadcast %cst_16 : f32 to vector<9x128xf32>
    %c7 = arith.constant 7 : index
    %c0_17 = arith.constant 0 : index
    %15 = vector.load %arg16[%c7, %c0_17] : memref<16x128xf32, #tpu.memory_space<vmem>>, vector<9x128xf32>
    tpu.vector_store %arg16[%c7, %c0_17], %14 {strides = array<i32>} : memref<16x128xf32, #tpu.memory_space<vmem>>, vector<9x128xf32>,
    %cst_18 = arith.constant 0.000000e+00 : f32
    %16 = vector.broadcast %cst_18 : f32 to vector<24x128xf32>
    %c256 = arith.constant 256 : index
    %c0_19 = arith.constant 0 : index
    %17 = vector.load %arg17[%c256, %c0_19] : memref<280x128xf32, #tpu.memory_space<vmem>>, vector<24x128xf32>
    tpu.vector_store %arg17[%c256, %c0_19], %16 {strides = array<i32>} : memref<280x128xf32, #tpu.memory_space<vmem>>, vector<24x128xf32>,
    %c0_20 = arith.constant 0 : index
    %c0_21 = arith.constant 0 : index
    %c0_22 = arith.constant 0 : index
    %18 = vector.load %arg1[%c0_20, %c0_21, %c0_22] : memref<1x256x128xf32, #tpu.memory_space<vmem>>, vector<1x256x128xf32>
    %19 = vector.shape_cast %18 : vector<1x256x128xf32> to vector<256x128xf32>
    %c17 = arith.constant 17 : index
    %c0_23 = arith.constant 0 : index
    %20 = vector.load %arg13[%c17, %c0_23] : memref<296x128xf32, #tpu.memory_space<vmem>>, vector<256x128xf32>
    tpu.vector_store %arg13[%c17, %c0_23], %19 {strides = array<i32>} : memref<296x128xf32, #tpu.memory_space<vmem>>, vector<256x128xf32>,
    %21 = tpu.iota {dimensions = array<i32: 0>} : vector<256x128xi32>
    %c15_i32 = arith.constant 15 : i32
    %22 = vector.broadcast %c15_i32 : i32 to vector<256x128xi32>
    %23 = arith.andi %21, %22 : vector<256x128xi32>
    %c0_i32 = arith.constant 0 : i32
    %24 = vector.broadcast %c0_i32 : i32 to vector<256x128xi32>
    %25 = arith.cmpi ne, %23, %24 : vector<256x128xi32>
    %c15_i32_24 = arith.constant 15 : i32
    %26 = vector.broadcast %c15_i32_24 : i32 to vector<256x128xi32>
    %27 = arith.cmpi ne, %23, %26 : vector<256x128xi32>
    %cst_25 = arith.constant 0.000000e+00 : f32
    %28 = vector.broadcast %cst_25 : f32 to vector<256x128xf32>
    %cst_26 = arith.constant 0.000000e+00 : f32
    %29 = vector.broadcast %cst_26 : f32 to vector<256x128xf32>
    %c0_27 = arith.constant 0 : index
    %c0_28 = arith.constant 0 : index
    %30 = vector.load %arg13[%c0_27, %c0_28] : memref<296x128xf32, #tpu.memory_space<vmem>>, vector<256x128xf32>
    %c0_29 = arith.constant 0 : index
    %c0_30 = arith.constant 0 : index
    %31 = vector.load %arg2[%c0_29, %c0_30] : memref<1152x128xf32, #tpu.memory_space<vmem>>, vector<128x128xf32>
    %cst_31 = arith.constant dense<0.000000e+00> : vector<256x128xf32>
    %32 = tpu.matmul %30, %31, %cst_31 {dimension_numbers = #tpu.dot_dimension_numbers<[1], [0], [0], [1], [0, 0, 1, 1], [], []>} : vector<256x128xf32>, vector<128x128xf32>, vector<256x128xf32> -> vector<256x128xf32>
    %33 = arith.addf %29, %32 : vector<256x128xf32>
    %c16 = arith.constant 16 : index
    %c0_32 = arith.constant 0 : index
    %34 = vector.load %arg13[%c16, %c0_32] : memref<296x128xf32, #tpu.memory_space<vmem>>, vector<256x128xf32>
    %c384 = arith.constant 384 : index
    %c0_33 = arith.constant 0 : index
    %35 = vector.load %arg2[%c384, %c0_33] : memref<1152x128xf32, #tpu.memory_space<vmem>>, vector<128x128xf32>
    %cst_34 = arith.constant dense<0.000000e+00> : vector<256x128xf32>
    %36 = tpu.matmul %34, %35, %cst_34 {dimension_numbers = #tpu.dot_dimension_numbers<[1], [0], [0], [1], [0, 0, 1, 1], [], []>} : vector<256x128xf32>, vector<128x128xf32>, vector<256x128xf32> -> vector<256x128xf32>
    %37 = arith.addf %33, %36 : vector<256x128xf32>
    %c32 = arith.constant 32 : index
    %c0_35 = arith.constant 0 : index
    %38 = vector.load %arg13[%c32, %c0_35] : memref<296x128xf32, #tpu.memory_space<vmem>>, vector<256x128xf32>
    %c768 = arith.constant 768 : index
    %c0_36 = arith.constant 0 : index
    %39 = vector.load %arg2[%c768, %c0_36] : memref<1152x128xf32, #tpu.memory_space<vmem>>, vector<128x128xf32>
    %cst_37 = arith.constant dense<0.000000e+00> : vector<256x128xf32>
    %40 = tpu.matmul %38, %39, %cst_37 {dimension_numbers = #tpu.dot_dimension_numbers<[1], [0], [0], [1], [0, 0, 1, 1], [], []>} : vector<256x128xf32>, vector<128x128xf32>, vector<256x128xf32> -> vector<256x128xf32>
    %41 = arith.addf %37, %40 : vector<256x128xf32>
    %cst_38 = arith.constant 0.000000e+00 : f32
    %42 = vector.broadcast %cst_38 : f32 to vector<256x128xf32>
    %43 = arith.select %25, %41, %42 : vector<256x128xi1>, vector<256x128xf32>
    %44 = arith.addf %28, %43 : vector<256x128xf32>
    %cst_39 = arith.constant 0.000000e+00 : f32
    %45 = vector.broadcast %cst_39 : f32 to vector<256x128xf32>
    %c1 = arith.constant 1 : index
    %c0_40 = arith.constant 0 : index
    %46 = vector.load %arg13[%c1, %c0_40] : memref<296x128xf32, #tpu.memory_space<vmem>>, vector<256x128xf32>
    %c128 = arith.constant 128 : index
    %c0_41 = arith.constant 0 : index
    %47 = vector.load %arg2[%c128, %c0_41] : memref<1152x128xf32, #tpu.memory_space<vmem>>, vector<128x128xf32>
    %cst_42 = arith.constant dense<0.000000e+00> : vector<256x128xf32>
    %48 = tpu.matmul %46, %47, %cst_42 {dimension_numbers = #tpu.dot_dimension_numbers<[1], [0], [0], [1], [0, 0, 1, 1], [], []>} : vector<256x128xf32>, vector<128x128xf32>, vector<256x128xf32> -> vector<256x128xf32>
    %49 = arith.addf %45, %48 : vector<256x128xf32>
    %c17_43 = arith.constant 17 : index
    %c0_44 = arith.constant 0 : index
    %50 = vector.load %arg13[%c17_43, %c0_44] : memref<296x128xf32, #tpu.memory_space<vmem>>, vector<256x128xf32>
    %c512 = arith.constant 512 : index
    %c0_45 = arith.constant 0 : index
    %51 = vector.load %arg2[%c512, %c0_45] : memref<1152x128xf32, #tpu.memory_space<vmem>>, vector<128x128xf32>
    %cst_46 = arith.constant dense<0.000000e+00> : vector<256x128xf32>
    %52 = tpu.matmul %50, %51, %cst_46 {dimension_numbers = #tpu.dot_dimension_numbers<[1], [0], [0], [1], [0, 0, 1, 1], [], []>} : vector<256x128xf32>, vector<128x128xf32>, vector<256x128xf32> -> vector<256x128xf32>
    %53 = arith.addf %49, %52 : vector<256x128xf32>
    %c33 = arith.constant 33 : index
    %c0_47 = arith.constant 0 : index
    %54 = vector.load %arg13[%c33, %c0_47] : memref<296x128xf32, #tpu.memory_space<vmem>>, vector<256x128xf32>
    %c896 = arith.constant 896 : index
    %c0_48 = arith.constant 0 : index
    %55 = vector.load %arg2[%c896, %c0_48] : memref<1152x128xf32, #tpu.memory_space<vmem>>, vector<128x128xf32>
    %cst_49 = arith.constant dense<0.000000e+00> : vector<256x128xf32>
    %56 = tpu.matmul %54, %55, %cst_49 {dimension_numbers = #tpu.dot_dimension_numbers<[1], [0], [0], [1], [0, 0, 1, 1], [], []>} : vector<256x128xf32>, vector<128x128xf32>, vector<256x128xf32> -> vector<256x128xf32>
    %57 = arith.addf %53, %56 : vector<256x128xf32>
    %58 = arith.addf %44, %57 : vector<256x128xf32>
    %cst_50 = arith.constant 0.000000e+00 : f32
    %59 = vector.broadcast %cst_50 : f32 to vector<256x128xf32>
    %c2 = arith.constant 2 : index
    %c0_51 = arith.constant 0 : index
    %60 = vector.load %arg13[%c2, %c0_51] : memref<296x128xf32, #tpu.memory_space<vmem>>, vector<256x128xf32>
    %c256_52 = arith.constant 256 : index
    %c0_53 = arith.constant 0 : index
    %61 = vector.load %arg2[%c256_52, %c0_53] : memref<1152x128xf32, #tpu.memory_space<vmem>>, vector<128x128xf32>
    %cst_54 = arith.constant dense<0.000000e+00> : vector<256x128xf32>
    %62 = tpu.matmul %60, %61, %cst_54 {dimension_numbers = #tpu.dot_dimension_numbers<[1], [0], [0], [1], [0, 0, 1, 1], [], []>} : vector<256x128xf32>, vector<128x128xf32>, vector<256x128xf32> -> vector<256x128xf32>
    %63 = arith.addf %59, %62 : vector<256x128xf32>
    %c18 = arith.constant 18 : index
    %c0_55 = arith.constant 0 : index
    %64 = vector.load %arg13[%c18, %c0_55] : memref<296x128xf32, #tpu.memory_space<vmem>>, vector<256x128xf32>
    %c640 = arith.constant 640 : index
    %c0_56 = arith.constant 0 : index
    %65 = vector.load %arg2[%c640, %c0_56] : memref<1152x128xf32, #tpu.memory_space<vmem>>, vector<128x128xf32>
    %cst_57 = arith.constant dense<0.000000e+00> : vector<256x128xf32>
    %66 = tpu.matmul %64, %65, %cst_57 {dimension_numbers = #tpu.dot_dimension_numbers<[1], [0], [0], [1], [0, 0, 1, 1], [], []>} : vector<256x128xf32>, vector<128x128xf32>, vector<256x128xf32> -> vector<256x128xf32>
    %67 = arith.addf %63, %66 : vector<256x128xf32>
    %c34 = arith.constant 34 : index
    %c0_58 = arith.constant 0 : index
    %68 = vector.load %arg13[%c34, %c0_58] : memref<296x128xf32, #tpu.memory_space<vmem>>, vector<256x128xf32>
    %c1024 = arith.constant 1024 : index
    %c0_59 = arith.constant 0 : index
    %69 = vector.load %arg2[%c1024, %c0_59] : memref<1152x128xf32, #tpu.memory_space<vmem>>, vector<128x128xf32>
    %cst_60 = arith.constant dense<0.000000e+00> : vector<256x128xf32>
    %70 = tpu.matmul %68, %69, %cst_60 {dimension_numbers = #tpu.dot_dimension_numbers<[1], [0], [0], [1], [0, 0, 1, 1], [], []>} : vector<256x128xf32>, vector<128x128xf32>, vector<256x128xf32> -> vector<256x128xf32>
    %71 = arith.addf %67, %70 : vector<256x128xf32>
    %cst_61 = arith.constant 0.000000e+00 : f32
    %72 = vector.broadcast %cst_61 : f32 to vector<256x128xf32>
    %73 = arith.select %27, %71, %72 : vector<256x128xi1>, vector<256x128xf32>
    %74 = arith.addf %58, %73 : vector<256x128xf32>
    %c0_62 = arith.constant 0 : index
    %c0_63 = arith.constant 0 : index
    %75 = vector.load %arg3[%c0_62, %c0_63] : memref<1x128xf32, #tpu.memory_space<vmem>>, vector<1x128xf32>
    %76 = vector.broadcast %75 : vector<1x128xf32> to vector<256x128xf32>
    %77 = arith.addf %74, %76 : vector<256x128xf32>
    %cst_64 = arith.constant 0.000000e+00 : f32
    %78 = vector.broadcast %cst_64 : f32 to vector<256x128xf32>
    %79 = arith.maximumf %77, %78 : vector<256x128xf32>
    %c0_65 = arith.constant 0 : index
    %c0_66 = arith.constant 0 : index
    %80 = vector.load %arg17[%c0_65, %c0_66] : memref<280x128xf32, #tpu.memory_space<vmem>>, vector<256x128xf32>
    tpu.vector_store %arg17[%c0_65, %c0_66], %79 {strides = array<i32>} : memref<280x128xf32, #tpu.memory_space<vmem>>, vector<256x128xf32>,
    %c0_67 = arith.constant 0 : index
    %c0_68 = arith.constant 0 : index
    %81 = vector.load %arg17[%c0_67, %c0_68] : memref<280x128xf32, #tpu.memory_space<vmem>>, vector<256x128xf32>
    %c1_69 = arith.constant 1 : index
    %c0_70 = arith.constant 0 : index
    %82 = vector.load %arg17[%c1_69, %c0_70] : memref<280x128xf32, #tpu.memory_space<vmem>>, vector<256x128xf32>
    %83 = arith.maximumf %81, %82 : vector<256x128xf32>
    %c16_71 = arith.constant 16 : index
    %c0_72 = arith.constant 0 : index
    %84 = vector.load %arg17[%c16_71, %c0_72] : memref<280x128xf32, #tpu.memory_space<vmem>>, vector<256x128xf32>
    %c17_73 = arith.constant 17 : index
    %c0_74 = arith.constant 0 : index
    %85 = vector.load %arg17[%c17_73, %c0_74] : memref<280x128xf32, #tpu.memory_space<vmem>>, vector<256x128xf32>
    %86 = arith.maximumf %84, %85 : vector<256x128xf32>
    %87 = arith.maximumf %83, %86 : vector<256x128xf32>
    %88 = tpu.iota {dimensions = array<i32: 0>} : vector<64x256xi32>
    %89 = tpu.iota {dimensions = array<i32: 1>} : vector<64x256xi32>
    %c3_i32 = arith.constant 3 : i32
    %90 = vector.broadcast %c3_i32 : i32 to vector<64x256xi32>
    %91 = arith.shrsi %88, %90 : vector<64x256xi32>
    %c5_i32 = arith.constant 5 : i32
    %92 = vector.broadcast %c5_i32 : i32 to vector<64x256xi32>
    %93 = arith.shli %91, %92 : vector<64x256xi32>
    %c7_i32 = arith.constant 7 : i32
    %94 = vector.broadcast %c7_i32 : i32 to vector<64x256xi32>
    %95 = arith.andi %88, %94 : vector<64x256xi32>
    %c1_i32 = arith.constant 1 : i32
    %96 = vector.broadcast %c1_i32 : i32 to vector<64x256xi32>
    %97 = arith.shli %95, %96 : vector<64x256xi32>
    %98 = arith.addi %93, %97 : vector<64x256xi32>
    %99 = arith.cmpi eq, %89, %98 : vector<64x256xi32>
    %100 = arith.extui %99 : vector<64x256xi1> to vector<64x256xi32>
    %101 = arith.sitofp %100 : vector<64x256xi32> to vector<64x256xf32>
    %cst_75 = arith.constant dense<0.000000e+00> : vector<64x128xf32>
    %102 = tpu.matmul %101, %87, %cst_75 {dimension_numbers = #tpu.dot_dimension_numbers<[1], [0], [0], [1], [0, 0, 1, 1], [], []>} : vector<64x256xf32>, vector<256x128xf32>, vector<64x128xf32> -> vector<64x128xf32>
    %c9 = arith.constant 9 : index
    %c0_76 = arith.constant 0 : index
    %103 = vector.load %arg14[%c9, %c0_76] : memref<88x128xf32, #tpu.memory_space<vmem>>, vector<64x128xf32>
    tpu.vector_store %arg14[%c9, %c0_76], %102 {strides = array<i32>} : memref<88x128xf32, #tpu.memory_space<vmem>>, vector<64x128xf32>,
    %104 = tpu.iota {dimensions = array<i32: 0>} : vector<64x128xi32>
    %c7_i32_77 = arith.constant 7 : i32
    %105 = vector.broadcast %c7_i32_77 : i32 to vector<64x128xi32>
    %106 = arith.andi %104, %105 : vector<64x128xi32>
    %c0_i32_78 = arith.constant 0 : i32
    %107 = vector.broadcast %c0_i32_78 : i32 to vector<64x128xi32>
    %108 = arith.cmpi ne, %106, %107 : vector<64x128xi32>
    %c7_i32_79 = arith.constant 7 : i32
    %109 = vector.broadcast %c7_i32_79 : i32 to vector<64x128xi32>
    %110 = arith.cmpi ne, %106, %109 : vector<64x128xi32>
    %cst_80 = arith.constant 0.000000e+00 : f32
    %111 = vector.broadcast %cst_80 : f32 to vector<64x128xf32>
    %cst_81 = arith.constant 0.000000e+00 : f32
    %112 = vector.broadcast %cst_81 : f32 to vector<64x128xf32>
    %c0_82 = arith.constant 0 : index
    %c0_83 = arith.constant 0 : index
    %113 = vector.load %arg14[%c0_82, %c0_83] : memref<88x128xf32, #tpu.memory_space<vmem>>, vector<64x128xf32>
    %c0_84 = arith.constant 0 : index
    %c0_85 = arith.constant 0 : index
    %114 = vector.load %arg4[%c0_84, %c0_85] : memref<1152x128xf32, #tpu.memory_space<vmem>>, vector<128x128xf32>
    %cst_86 = arith.constant dense<0.000000e+00> : vector<64x128xf32>
    %115 = tpu.matmul %113, %114, %cst_86 {dimension_numbers = #tpu.dot_dimension_numbers<[1], [0], [0], [1], [0, 0, 1, 1], [], []>} : vector<64x128xf32>, vector<128x128xf32>, vector<64x128xf32> -> vector<64x128xf32>
    %116 = arith.addf %112, %115 : vector<64x128xf32>
    %c8 = arith.constant 8 : index
    %c0_87 = arith.constant 0 : index
    %117 = vector.load %arg14[%c8, %c0_87] : memref<88x128xf32, #tpu.memory_space<vmem>>, vector<64x128xf32>
    %c384_88 = arith.constant 384 : index
    %c0_89 = arith.constant 0 : index
    %118 = vector.load %arg4[%c384_88, %c0_89] : memref<1152x128xf32, #tpu.memory_space<vmem>>, vector<128x128xf32>
    %cst_90 = arith.constant dense<0.000000e+00> : vector<64x128xf32>
    %119 = tpu.matmul %117, %118, %cst_90 {dimension_numbers = #tpu.dot_dimension_numbers<[1], [0], [0], [1], [0, 0, 1, 1], [], []>} : vector<64x128xf32>, vector<128x128xf32>, vector<64x128xf32> -> vector<64x128xf32>
    %120 = arith.addf %116, %119 : vector<64x128xf32>
    %c16_91 = arith.constant 16 : index
    %c0_92 = arith.constant 0 : index
    %121 = vector.load %arg14[%c16_91, %c0_92] : memref<88x128xf32, #tpu.memory_space<vmem>>, vector<64x128xf32>
    %c768_93 = arith.constant 768 : index
    %c0_94 = arith.constant 0 : index
    %122 = vector.load %arg4[%c768_93, %c0_94] : memref<1152x128xf32, #tpu.memory_space<vmem>>, vector<128x128xf32>
    %cst_95 = arith.constant dense<0.000000e+00> : vector<64x128xf32>
    %123 = tpu.matmul %121, %122, %cst_95 {dimension_numbers = #tpu.dot_dimension_numbers<[1], [0], [0], [1], [0, 0, 1, 1], [], []>} : vector<64x128xf32>, vector<128x128xf32>, vector<64x128xf32> -> vector<64x128xf32>
    %124 = arith.addf %120, %123 : vector<64x128xf32>
    %cst_96 = arith.constant 0.000000e+00 : f32
    %125 = vector.broadcast %cst_96 : f32 to vector<64x128xf32>
    %126 = arith.select %108, %124, %125 : vector<64x128xi1>, vector<64x128xf32>
    %127 = arith.addf %111, %126 : vector<64x128xf32>
    %cst_97 = arith.constant 0.000000e+00 : f32
    %128 = vector.broadcast %cst_97 : f32 to vector<64x128xf32>
    %c1_98 = arith.constant 1 : index
    %c0_99 = arith.constant 0 : index
    %129 = vector.load %arg14[%c1_98, %c0_99] : memref<88x128xf32, #tpu.memory_space<vmem>>, vector<64x128xf32>
    %c128_100 = arith.constant 128 : index
    %c0_101 = arith.constant 0 : index
    %130 = vector.load %arg4[%c128_100, %c0_101] : memref<1152x128xf32, #tpu.memory_space<vmem>>, vector<128x128xf32>
    %cst_102 = arith.constant dense<0.000000e+00> : vector<64x128xf32>
    %131 = tpu.matmul %129, %130, %cst_102 {dimension_numbers = #tpu.dot_dimension_numbers<[1], [0], [0], [1], [0, 0, 1, 1], [], []>} : vector<64x128xf32>, vector<128x128xf32>, vector<64x128xf32> -> vector<64x128xf32>
    %132 = arith.addf %128, %131 : vector<64x128xf32>
    %c9_103 = arith.constant 9 : index
    %c0_104 = arith.constant 0 : index
    %133 = vector.load %arg14[%c9_103, %c0_104] : memref<88x128xf32, #tpu.memory_space<vmem>>, vector<64x128xf32>
    %c512_105 = arith.constant 512 : index
    %c0_106 = arith.constant 0 : index
    %134 = vector.load %arg4[%c512_105, %c0_106] : memref<1152x128xf32, #tpu.memory_space<vmem>>, vector<128x128xf32>
    %cst_107 = arith.constant dense<0.000000e+00> : vector<64x128xf32>
    %135 = tpu.matmul %133, %134, %cst_107 {dimension_numbers = #tpu.dot_dimension_numbers<[1], [0], [0], [1], [0, 0, 1, 1], [], []>} : vector<64x128xf32>, vector<128x128xf32>, vector<64x128xf32> -> vector<64x128xf32>
    %136 = arith.addf %132, %135 : vector<64x128xf32>
    %c17_108 = arith.constant 17 : index
    %c0_109 = arith.constant 0 : index
    %137 = vector.load %arg14[%c17_108, %c0_109] : memref<88x128xf32, #tpu.memory_space<vmem>>, vector<64x128xf32>
    %c896_110 = arith.constant 896 : index
    %c0_111 = arith.constant 0 : index
    %138 = vector.load %arg4[%c896_110, %c0_111] : memref<1152x128xf32, #tpu.memory_space<vmem>>, vector<128x128xf32>
    %cst_112 = arith.constant dense<0.000000e+00> : vector<64x128xf32>
    %139 = tpu.matmul %137, %138, %cst_112 {dimension_numbers = #tpu.dot_dimension_numbers<[1], [0], [0], [1], [0, 0, 1, 1], [], []>} : vector<64x128xf32>, vector<128x128xf32>, vector<64x128xf32> -> vector<64x128xf32>
    %140 = arith.addf %136, %139 : vector<64x128xf32>
    %141 = arith.addf %127, %140 : vector<64x128xf32>
    %cst_113 = arith.constant 0.000000e+00 : f32
    %142 = vector.broadcast %cst_113 : f32 to vector<64x128xf32>
    %c2_114 = arith.constant 2 : index
    %c0_115 = arith.constant 0 : index
    %143 = vector.load %arg14[%c2_114, %c0_115] : memref<88x128xf32, #tpu.memory_space<vmem>>, vector<64x128xf32>
    %c256_116 = arith.constant 256 : index
    %c0_117 = arith.constant 0 : index
    %144 = vector.load %arg4[%c256_116, %c0_117] : memref<1152x128xf32, #tpu.memory_space<vmem>>, vector<128x128xf32>
    %cst_118 = arith.constant dense<0.000000e+00> : vector<64x128xf32>
    %145 = tpu.matmul %143, %144, %cst_118 {dimension_numbers = #tpu.dot_dimension_numbers<[1], [0], [0], [1], [0, 0, 1, 1], [], []>} : vector<64x128xf32>, vector<128x128xf32>, vector<64x128xf32> -> vector<64x128xf32>
    %146 = arith.addf %142, %145 : vector<64x128xf32>
    %c10 = arith.constant 10 : index
    %c0_119 = arith.constant 0 : index
    %147 = vector.load %arg14[%c10, %c0_119] : memref<88x128xf32, #tpu.memory_space<vmem>>, vector<64x128xf32>
    %c640_120 = arith.constant 640 : index
    %c0_121 = arith.constant 0 : index
    %148 = vector.load %arg4[%c640_120, %c0_121] : memref<1152x128xf32, #tpu.memory_space<vmem>>, vector<128x128xf32>
    %cst_122 = arith.constant dense<0.000000e+00> : vector<64x128xf32>
    %149 = tpu.matmul %147, %148, %cst_122 {dimension_numbers = #tpu.dot_dimension_numbers<[1], [0], [0], [1], [0, 0, 1, 1], [], []>} : vector<64x128xf32>, vector<128x128xf32>, vector<64x128xf32> -> vector<64x128xf32>
    %150 = arith.addf %146, %149 : vector<64x128xf32>
    %c18_123 = arith.constant 18 : index
    %c0_124 = arith.constant 0 : index
    %151 = vector.load %arg14[%c18_123, %c0_124] : memref<88x128xf32, #tpu.memory_space<vmem>>, vector<64x128xf32>
    %c1024_125 = arith.constant 1024 : index
    %c0_126 = arith.constant 0 : index
    %152 = vector.load %arg4[%c1024_125, %c0_126] : memref<1152x128xf32, #tpu.memory_space<vmem>>, vector<128x128xf32>
    %cst_127 = arith.constant dense<0.000000e+00> : vector<64x128xf32>
    %153 = tpu.matmul %151, %152, %cst_127 {dimension_numbers = #tpu.dot_dimension_numbers<[1], [0], [0], [1], [0, 0, 1, 1], [], []>} : vector<64x128xf32>, vector<128x128xf32>, vector<64x128xf32> -> vector<64x128xf32>
    %154 = arith.addf %150, %153 : vector<64x128xf32>
    %cst_128 = arith.constant 0.000000e+00 : f32
    %155 = vector.broadcast %cst_128 : f32 to vector<64x128xf32>
    %156 = arith.select %110, %154, %155 : vector<64x128xi1>, vector<64x128xf32>
    %157 = arith.addf %141, %156 : vector<64x128xf32>
    %c0_129 = arith.constant 0 : index
    %c0_130 = arith.constant 0 : index
    %158 = vector.load %arg5[%c0_129, %c0_130] : memref<1x128xf32, #tpu.memory_space<vmem>>, vector<1x128xf32>
    %159 = vector.broadcast %158 : vector<1x128xf32> to vector<64x128xf32>
    %160 = arith.addf %157, %159 : vector<64x128xf32>
    %cst_131 = arith.constant 0.000000e+00 : f32
    %161 = vector.broadcast %cst_131 : f32 to vector<64x128xf32>
    %162 = arith.maximumf %160, %161 : vector<64x128xf32>
    %c0_132 = arith.constant 0 : index
    %c0_133 = arith.constant 0 : index
    %163 = vector.load %arg17[%c0_132, %c0_133] : memref<280x128xf32, #tpu.memory_space<vmem>>, vector<64x128xf32>
    tpu.vector_store %arg17[%c0_132, %c0_133], %162 {strides = array<i32>} : memref<280x128xf32, #tpu.memory_space<vmem>>, vector<64x128xf32>,
    %c0_134 = arith.constant 0 : index
    %c0_135 = arith.constant 0 : index
    %164 = vector.load %arg17[%c0_134, %c0_135] : memref<280x128xf32, #tpu.memory_space<vmem>>, vector<64x128xf32>
    %c1_136 = arith.constant 1 : index
    %c0_137 = arith.constant 0 : index
    %165 = vector.load %arg17[%c1_136, %c0_137] : memref<280x128xf32, #tpu.memory_space<vmem>>, vector<64x128xf32>
    %166 = arith.maximumf %164, %165 : vector<64x128xf32>
    %c8_138 = arith.constant 8 : index
    %c0_139 = arith.constant 0 : index
    %167 = vector.load %arg17[%c8_138, %c0_139] : memref<280x128xf32, #tpu.memory_space<vmem>>, vector<64x128xf32>
    %c9_140 = arith.constant 9 : index
    %c0_141 = arith.constant 0 : index
    %168 = vector.load %arg17[%c9_140, %c0_141] : memref<280x128xf32, #tpu.memory_space<vmem>>, vector<64x128xf32>
    %169 = arith.maximumf %167, %168 : vector<64x128xf32>
    %170 = arith.maximumf %166, %169 : vector<64x128xf32>
    %171 = tpu.iota {dimensions = array<i32: 0>} : vector<16x64xi32>
    %172 = tpu.iota {dimensions = array<i32: 1>} : vector<16x64xi32>
    %c2_i32 = arith.constant 2 : i32
    %173 = vector.broadcast %c2_i32 : i32 to vector<16x64xi32>
    %174 = arith.shrsi %171, %173 : vector<16x64xi32>
    %c4_i32 = arith.constant 4 : i32
    %175 = vector.broadcast %c4_i32 : i32 to vector<16x64xi32>
    %176 = arith.shli %174, %175 : vector<16x64xi32>
    %c3_i32_142 = arith.constant 3 : i32
    %177 = vector.broadcast %c3_i32_142 : i32 to vector<16x64xi32>
    %178 = arith.andi %171, %177 : vector<16x64xi32>
    %c1_i32_143 = arith.constant 1 : i32
    %179 = vector.broadcast %c1_i32_143 : i32 to vector<16x64xi32>
    %180 = arith.shli %178, %179 : vector<16x64xi32>
    %181 = arith.addi %176, %180 : vector<16x64xi32>
    %182 = arith.cmpi eq, %172, %181 : vector<16x64xi32>
    %183 = arith.extui %182 : vector<16x64xi1> to vector<16x64xi32>
    %184 = arith.sitofp %183 : vector<16x64xi32> to vector<16x64xf32>
    %cst_144 = arith.constant dense<0.000000e+00> : vector<16x128xf32>
    %185 = tpu.matmul %184, %170, %cst_144 {dimension_numbers = #tpu.dot_dimension_numbers<[1], [0], [0], [1], [0, 0, 1, 1], [], []>} : vector<16x64xf32>, vector<64x128xf32>, vector<16x128xf32> -> vector<16x128xf32>
    %c5 = arith.constant 5 : index
    %c0_145 = arith.constant 0 : index
    %186 = vector.load %arg15[%c5, %c0_145] : memref<32x128xf32, #tpu.memory_space<vmem>>, vector<16x128xf32>
    tpu.vector_store %arg15[%c5, %c0_145], %185 {strides = array<i32>} : memref<32x128xf32, #tpu.memory_space<vmem>>, vector<16x128xf32>,
    %187 = tpu.iota {dimensions = array<i32: 0>} : vector<16x128xi32>
    %c3_i32_146 = arith.constant 3 : i32
    %188 = vector.broadcast %c3_i32_146 : i32 to vector<16x128xi32>
    %189 = arith.andi %187, %188 : vector<16x128xi32>
    %c0_i32_147 = arith.constant 0 : i32
    %190 = vector.broadcast %c0_i32_147 : i32 to vector<16x128xi32>
    %191 = arith.cmpi ne, %189, %190 : vector<16x128xi32>
    %c3_i32_148 = arith.constant 3 : i32
    %192 = vector.broadcast %c3_i32_148 : i32 to vector<16x128xi32>
    %193 = arith.cmpi ne, %189, %192 : vector<16x128xi32>
    %cst_149 = arith.constant 0.000000e+00 : f32
    %194 = vector.broadcast %cst_149 : f32 to vector<16x128xf32>
    %cst_150 = arith.constant 0.000000e+00 : f32
    %195 = vector.broadcast %cst_150 : f32 to vector<16x128xf32>
    %c0_151 = arith.constant 0 : index
    %c0_152 = arith.constant 0 : index
    %196 = vector.load %arg15[%c0_151, %c0_152] : memref<32x128xf32, #tpu.memory_space<vmem>>, vector<16x128xf32>
    %c0_153 = arith.constant 0 : index
    %c0_154 = arith.constant 0 : index
    %197 = vector.load %arg6[%c0_153, %c0_154] : memref<1152x128xf32, #tpu.memory_space<vmem>>, vector<128x128xf32>
    %cst_155 = arith.constant dense<0.000000e+00> : vector<16x128xf32>
    %198 = tpu.matmul %196, %197, %cst_155 {dimension_numbers = #tpu.dot_dimension_numbers<[1], [0], [0], [1], [0, 0, 1, 1], [], []>} : vector<16x128xf32>, vector<128x128xf32>, vector<16x128xf32> -> vector<16x128xf32>
    %199 = arith.addf %195, %198 : vector<16x128xf32>
    %c4 = arith.constant 4 : index
    %c0_156 = arith.constant 0 : index
    %200 = vector.load %arg15[%c4, %c0_156] : memref<32x128xf32, #tpu.memory_space<vmem>>, vector<16x128xf32>
    %c384_157 = arith.constant 384 : index
    %c0_158 = arith.constant 0 : index
    %201 = vector.load %arg6[%c384_157, %c0_158] : memref<1152x128xf32, #tpu.memory_space<vmem>>, vector<128x128xf32>
    %cst_159 = arith.constant dense<0.000000e+00> : vector<16x128xf32>
    %202 = tpu.matmul %200, %201, %cst_159 {dimension_numbers = #tpu.dot_dimension_numbers<[1], [0], [0], [1], [0, 0, 1, 1], [], []>} : vector<16x128xf32>, vector<128x128xf32>, vector<16x128xf32> -> vector<16x128xf32>
    %203 = arith.addf %199, %202 : vector<16x128xf32>
    %c8_160 = arith.constant 8 : index
    %c0_161 = arith.constant 0 : index
    %204 = vector.load %arg15[%c8_160, %c0_161] : memref<32x128xf32, #tpu.memory_space<vmem>>, vector<16x128xf32>
    %c768_162 = arith.constant 768 : index
    %c0_163 = arith.constant 0 : index
    %205 = vector.load %arg6[%c768_162, %c0_163] : memref<1152x128xf32, #tpu.memory_space<vmem>>, vector<128x128xf32>
    %cst_164 = arith.constant dense<0.000000e+00> : vector<16x128xf32>
    %206 = tpu.matmul %204, %205, %cst_164 {dimension_numbers = #tpu.dot_dimension_numbers<[1], [0], [0], [1], [0, 0, 1, 1], [], []>} : vector<16x128xf32>, vector<128x128xf32>, vector<16x128xf32> -> vector<16x128xf32>
    %207 = arith.addf %203, %206 : vector<16x128xf32>
    %cst_165 = arith.constant 0.000000e+00 : f32
    %208 = vector.broadcast %cst_165 : f32 to vector<16x128xf32>
    %209 = arith.select %191, %207, %208 : vector<16x128xi1>, vector<16x128xf32>
    %210 = arith.addf %194, %209 : vector<16x128xf32>
    %cst_166 = arith.constant 0.000000e+00 : f32
    %211 = vector.broadcast %cst_166 : f32 to vector<16x128xf32>
    %c1_167 = arith.constant 1 : index
    %c0_168 = arith.constant 0 : index
    %212 = vector.load %arg15[%c1_167, %c0_168] : memref<32x128xf32, #tpu.memory_space<vmem>>, vector<16x128xf32>
    %c128_169 = arith.constant 128 : index
    %c0_170 = arith.constant 0 : index
    %213 = vector.load %arg6[%c128_169, %c0_170] : memref<1152x128xf32, #tpu.memory_space<vmem>>, vector<128x128xf32>
    %cst_171 = arith.constant dense<0.000000e+00> : vector<16x128xf32>
    %214 = tpu.matmul %212, %213, %cst_171 {dimension_numbers = #tpu.dot_dimension_numbers<[1], [0], [0], [1], [0, 0, 1, 1], [], []>} : vector<16x128xf32>, vector<128x128xf32>, vector<16x128xf32> -> vector<16x128xf32>
    %215 = arith.addf %211, %214 : vector<16x128xf32>
    %c5_172 = arith.constant 5 : index
    %c0_173 = arith.constant 0 : index
    %216 = vector.load %arg15[%c5_172, %c0_173] : memref<32x128xf32, #tpu.memory_space<vmem>>, vector<16x128xf32>
    %c512_174 = arith.constant 512 : index
    %c0_175 = arith.constant 0 : index
    %217 = vector.load %arg6[%c512_174, %c0_175] : memref<1152x128xf32, #tpu.memory_space<vmem>>, vector<128x128xf32>
    %cst_176 = arith.constant dense<0.000000e+00> : vector<16x128xf32>
    %218 = tpu.matmul %216, %217, %cst_176 {dimension_numbers = #tpu.dot_dimension_numbers<[1], [0], [0], [1], [0, 0, 1, 1], [], []>} : vector<16x128xf32>, vector<128x128xf32>, vector<16x128xf32> -> vector<16x128xf32>
    %219 = arith.addf %215, %218 : vector<16x128xf32>
    %c9_177 = arith.constant 9 : index
    %c0_178 = arith.constant 0 : index
    %220 = vector.load %arg15[%c9_177, %c0_178] : memref<32x128xf32, #tpu.memory_space<vmem>>, vector<16x128xf32>
    %c896_179 = arith.constant 896 : index
    %c0_180 = arith.constant 0 : index
    %221 = vector.load %arg6[%c896_179, %c0_180] : memref<1152x128xf32, #tpu.memory_space<vmem>>, vector<128x128xf32>
    %cst_181 = arith.constant dense<0.000000e+00> : vector<16x128xf32>
    %222 = tpu.matmul %220, %221, %cst_181 {dimension_numbers = #tpu.dot_dimension_numbers<[1], [0], [0], [1], [0, 0, 1, 1], [], []>} : vector<16x128xf32>, vector<128x128xf32>, vector<16x128xf32> -> vector<16x128xf32>
    %223 = arith.addf %219, %222 : vector<16x128xf32>
    %224 = arith.addf %210, %223 : vector<16x128xf32>
    %cst_182 = arith.constant 0.000000e+00 : f32
    %225 = vector.broadcast %cst_182 : f32 to vector<16x128xf32>
    %c2_183 = arith.constant 2 : index
    %c0_184 = arith.constant 0 : index
    %226 = vector.load %arg15[%c2_183, %c0_184] : memref<32x128xf32, #tpu.memory_space<vmem>>, vector<16x128xf32>
    %c256_185 = arith.constant 256 : index
    %c0_186 = arith.constant 0 : index
    %227 = vector.load %arg6[%c256_185, %c0_186] : memref<1152x128xf32, #tpu.memory_space<vmem>>, vector<128x128xf32>
    %cst_187 = arith.constant dense<0.000000e+00> : vector<16x128xf32>
    %228 = tpu.matmul %226, %227, %cst_187 {dimension_numbers = #tpu.dot_dimension_numbers<[1], [0], [0], [1], [0, 0, 1, 1], [], []>} : vector<16x128xf32>, vector<128x128xf32>, vector<16x128xf32> -> vector<16x128xf32>
    %229 = arith.addf %225, %228 : vector<16x128xf32>
    %c6 = arith.constant 6 : index
    %c0_188 = arith.constant 0 : index
    %230 = vector.load %arg15[%c6, %c0_188] : memref<32x128xf32, #tpu.memory_space<vmem>>, vector<16x128xf32>
    %c640_189 = arith.constant 640 : index
    %c0_190 = arith.constant 0 : index
    %231 = vector.load %arg6[%c640_189, %c0_190] : memref<1152x128xf32, #tpu.memory_space<vmem>>, vector<128x128xf32>
    %cst_191 = arith.constant dense<0.000000e+00> : vector<16x128xf32>
    %232 = tpu.matmul %230, %231, %cst_191 {dimension_numbers = #tpu.dot_dimension_numbers<[1], [0], [0], [1], [0, 0, 1, 1], [], []>} : vector<16x128xf32>, vector<128x128xf32>, vector<16x128xf32> -> vector<16x128xf32>
    %233 = arith.addf %229, %232 : vector<16x128xf32>
    %c10_192 = arith.constant 10 : index
    %c0_193 = arith.constant 0 : index
    %234 = vector.load %arg15[%c10_192, %c0_193] : memref<32x128xf32, #tpu.memory_space<vmem>>, vector<16x128xf32>
    %c1024_194 = arith.constant 1024 : index
    %c0_195 = arith.constant 0 : index
    %235 = vector.load %arg6[%c1024_194, %c0_195] : memref<1152x128xf32, #tpu.memory_space<vmem>>, vector<128x128xf32>
    %cst_196 = arith.constant dense<0.000000e+00> : vector<16x128xf32>
    %236 = tpu.matmul %234, %235, %cst_196 {dimension_numbers = #tpu.dot_dimension_numbers<[1], [0], [0], [1], [0, 0, 1, 1], [], []>} : vector<16x128xf32>, vector<128x128xf32>, vector<16x128xf32> -> vector<16x128xf32>
    %237 = arith.addf %233, %236 : vector<16x128xf32>
    %cst_197 = arith.constant 0.000000e+00 : f32
    %238 = vector.broadcast %cst_197 : f32 to vector<16x128xf32>
    %239 = arith.select %193, %237, %238 : vector<16x128xi1>, vector<16x128xf32>
    %240 = arith.addf %224, %239 : vector<16x128xf32>
    %c0_198 = arith.constant 0 : index
    %c0_199 = arith.constant 0 : index
    %241 = vector.load %arg7[%c0_198, %c0_199] : memref<1x128xf32, #tpu.memory_space<vmem>>, vector<1x128xf32>
    %242 = vector.broadcast %241 : vector<1x128xf32> to vector<16x128xf32>
    %243 = arith.addf %240, %242 : vector<16x128xf32>
    %cst_200 = arith.constant 0.000000e+00 : f32
    %244 = vector.broadcast %cst_200 : f32 to vector<16x128xf32>
    %245 = arith.maximumf %243, %244 : vector<16x128xf32>
    %c0_201 = arith.constant 0 : index
    %c0_202 = arith.constant 0 : index
    %246 = vector.load %arg17[%c0_201, %c0_202] : memref<280x128xf32, #tpu.memory_space<vmem>>, vector<16x128xf32>
    tpu.vector_store %arg17[%c0_201, %c0_202], %245 {strides = array<i32>} : memref<280x128xf32, #tpu.memory_space<vmem>>, vector<16x128xf32>,
    %c0_203 = arith.constant 0 : index
    %c0_204 = arith.constant 0 : index
    %247 = vector.load %arg17[%c0_203, %c0_204] : memref<280x128xf32, #tpu.memory_space<vmem>>, vector<16x128xf32>
    %c1_205 = arith.constant 1 : index
    %c0_206 = arith.constant 0 : index
    %248 = vector.load %arg17[%c1_205, %c0_206] : memref<280x128xf32, #tpu.memory_space<vmem>>, vector<16x128xf32>
    %249 = arith.maximumf %247, %248 : vector<16x128xf32>
    %c4_207 = arith.constant 4 : index
    %c0_208 = arith.constant 0 : index
    %250 = vector.load %arg17[%c4_207, %c0_208] : memref<280x128xf32, #tpu.memory_space<vmem>>, vector<16x128xf32>
    %c5_209 = arith.constant 5 : index
    %c0_210 = arith.constant 0 : index
    %251 = vector.load %arg17[%c5_209, %c0_210] : memref<280x128xf32, #tpu.memory_space<vmem>>, vector<16x128xf32>
    %252 = arith.maximumf %250, %251 : vector<16x128xf32>
    %253 = arith.maximumf %249, %252 : vector<16x128xf32>
    %254 = tpu.iota {dimensions = array<i32: 0>} : vector<4x16xi32>
    %255 = tpu.iota {dimensions = array<i32: 1>} : vector<4x16xi32>
    %c1_i32_211 = arith.constant 1 : i32
    %256 = vector.broadcast %c1_i32_211 : i32 to vector<4x16xi32>
    %257 = arith.shrsi %254, %256 : vector<4x16xi32>
    %c3_i32_212 = arith.constant 3 : i32
    %258 = vector.broadcast %c3_i32_212 : i32 to vector<4x16xi32>
    %259 = arith.shli %257, %258 : vector<4x16xi32>
    %c1_i32_213 = arith.constant 1 : i32
    %260 = vector.broadcast %c1_i32_213 : i32 to vector<4x16xi32>
    %261 = arith.andi %254, %260 : vector<4x16xi32>
    %c1_i32_214 = arith.constant 1 : i32
    %262 = vector.broadcast %c1_i32_214 : i32 to vector<4x16xi32>
    %263 = arith.shli %261, %262 : vector<4x16xi32>
    %264 = arith.addi %259, %263 : vector<4x16xi32>
    %265 = arith.cmpi eq, %255, %264 : vector<4x16xi32>
    %266 = arith.extui %265 : vector<4x16xi1> to vector<4x16xi32>
    %267 = arith.sitofp %266 : vector<4x16xi32> to vector<4x16xf32>
    %cst_215 = arith.constant dense<0.000000e+00> : vector<4x128xf32>
    %268 = tpu.matmul %267, %253, %cst_215 {dimension_numbers = #tpu.dot_dimension_numbers<[1], [0], [0], [1], [0, 0, 1, 1], [], []>} : vector<4x16xf32>, vector<16x128xf32>, vector<4x128xf32> -> vector<4x128xf32>
    %c3 = arith.constant 3 : index
    %c0_216 = arith.constant 0 : index
    %269 = vector.load %arg16[%c3, %c0_216] : memref<16x128xf32, #tpu.memory_space<vmem>>, vector<4x128xf32>
    tpu.vector_store %arg16[%c3, %c0_216], %268 {strides = array<i32>} : memref<16x128xf32, #tpu.memory_space<vmem>>, vector<4x128xf32>,
    %270 = tpu.iota {dimensions = array<i32: 0>} : vector<4x128xi32>
    %c1_i32_217 = arith.constant 1 : i32
    %271 = vector.broadcast %c1_i32_217 : i32 to vector<4x128xi32>
    %272 = arith.andi %270, %271 : vector<4x128xi32>
    %c0_i32_218 = arith.constant 0 : i32
    %273 = vector.broadcast %c0_i32_218 : i32 to vector<4x128xi32>
    %274 = arith.cmpi ne, %272, %273 : vector<4x128xi32>
    %c1_i32_219 = arith.constant 1 : i32
    %275 = vector.broadcast %c1_i32_219 : i32 to vector<4x128xi32>
    %276 = arith.cmpi ne, %272, %275 : vector<4x128xi32>
    %cst_220 = arith.constant 0.000000e+00 : f32
    %277 = vector.broadcast %cst_220 : f32 to vector<4x128xf32>
    %cst_221 = arith.constant 0.000000e+00 : f32
    %278 = vector.broadcast %cst_221 : f32 to vector<4x128xf32>
    %c0_222 = arith.constant 0 : index
    %c0_223 = arith.constant 0 : index
    %279 = vector.load %arg16[%c0_222, %c0_223] : memref<16x128xf32, #tpu.memory_space<vmem>>, vector<4x128xf32>
    %c0_224 = arith.constant 0 : index
    %c0_225 = arith.constant 0 : index
    %280 = vector.load %arg8[%c0_224, %c0_225] : memref<1152x128xf32, #tpu.memory_space<vmem>>, vector<128x128xf32>
    %cst_226 = arith.constant dense<0.000000e+00> : vector<4x128xf32>
    %281 = tpu.matmul %279, %280, %cst_226 {dimension_numbers = #tpu.dot_dimension_numbers<[1], [0], [0], [1], [0, 0, 1, 1], [], []>} : vector<4x128xf32>, vector<128x128xf32>, vector<4x128xf32> -> vector<4x128xf32>
    %282 = arith.addf %278, %281 : vector<4x128xf32>
    %c2_227 = arith.constant 2 : index
    %c0_228 = arith.constant 0 : index
    %283 = vector.load %arg16[%c2_227, %c0_228] : memref<16x128xf32, #tpu.memory_space<vmem>>, vector<4x128xf32>
    %c384_229 = arith.constant 384 : index
    %c0_230 = arith.constant 0 : index
    %284 = vector.load %arg8[%c384_229, %c0_230] : memref<1152x128xf32, #tpu.memory_space<vmem>>, vector<128x128xf32>
    %cst_231 = arith.constant dense<0.000000e+00> : vector<4x128xf32>
    %285 = tpu.matmul %283, %284, %cst_231 {dimension_numbers = #tpu.dot_dimension_numbers<[1], [0], [0], [1], [0, 0, 1, 1], [], []>} : vector<4x128xf32>, vector<128x128xf32>, vector<4x128xf32> -> vector<4x128xf32>
    %286 = arith.addf %282, %285 : vector<4x128xf32>
    %c4_232 = arith.constant 4 : index
    %c0_233 = arith.constant 0 : index
    %287 = vector.load %arg16[%c4_232, %c0_233] : memref<16x128xf32, #tpu.memory_space<vmem>>, vector<4x128xf32>
    %c768_234 = arith.constant 768 : index
    %c0_235 = arith.constant 0 : index
    %288 = vector.load %arg8[%c768_234, %c0_235] : memref<1152x128xf32, #tpu.memory_space<vmem>>, vector<128x128xf32>
    %cst_236 = arith.constant dense<0.000000e+00> : vector<4x128xf32>
    %289 = tpu.matmul %287, %288, %cst_236 {dimension_numbers = #tpu.dot_dimension_numbers<[1], [0], [0], [1], [0, 0, 1, 1], [], []>} : vector<4x128xf32>, vector<128x128xf32>, vector<4x128xf32> -> vector<4x128xf32>
    %290 = arith.addf %286, %289 : vector<4x128xf32>
    %cst_237 = arith.constant 0.000000e+00 : f32
    %291 = vector.broadcast %cst_237 : f32 to vector<4x128xf32>
    %292 = arith.select %274, %290, %291 : vector<4x128xi1>, vector<4x128xf32>
    %293 = arith.addf %277, %292 : vector<4x128xf32>
    %cst_238 = arith.constant 0.000000e+00 : f32
    %294 = vector.broadcast %cst_238 : f32 to vector<4x128xf32>
    %c1_239 = arith.constant 1 : index
    %c0_240 = arith.constant 0 : index
    %295 = vector.load %arg16[%c1_239, %c0_240] : memref<16x128xf32, #tpu.memory_space<vmem>>, vector<4x128xf32>
    %c128_241 = arith.constant 128 : index
    %c0_242 = arith.constant 0 : index
    %296 = vector.load %arg8[%c128_241, %c0_242] : memref<1152x128xf32, #tpu.memory_space<vmem>>, vector<128x128xf32>
    %cst_243 = arith.constant dense<0.000000e+00> : vector<4x128xf32>
    %297 = tpu.matmul %295, %296, %cst_243 {dimension_numbers = #tpu.dot_dimension_numbers<[1], [0], [0], [1], [0, 0, 1, 1], [], []>} : vector<4x128xf32>, vector<128x128xf32>, vector<4x128xf32> -> vector<4x128xf32>
    %298 = arith.addf %294, %297 : vector<4x128xf32>
    %c3_244 = arith.constant 3 : index
    %c0_245 = arith.constant 0 : index
    %299 = vector.load %arg16[%c3_244, %c0_245] : memref<16x128xf32, #tpu.memory_space<vmem>>, vector<4x128xf32>
    %c512_246 = arith.constant 512 : index
    %c0_247 = arith.constant 0 : index
    %300 = vector.load %arg8[%c512_246, %c0_247] : memref<1152x128xf32, #tpu.memory_space<vmem>>, vector<128x128xf32>
    %cst_248 = arith.constant dense<0.000000e+00> : vector<4x128xf32>
    %301 = tpu.matmul %299, %300, %cst_248 {dimension_numbers = #tpu.dot_dimension_numbers<[1], [0], [0], [1], [0, 0, 1, 1], [], []>} : vector<4x128xf32>, vector<128x128xf32>, vector<4x128xf32> -> vector<4x128xf32>
    %302 = arith.addf %298, %301 : vector<4x128xf32>
    %c5_249 = arith.constant 5 : index
    %c0_250 = arith.constant 0 : index
    %303 = vector.load %arg16[%c5_249, %c0_250] : memref<16x128xf32, #tpu.memory_space<vmem>>, vector<4x128xf32>
    %c896_251 = arith.constant 896 : index
    %c0_252 = arith.constant 0 : index
    %304 = vector.load %arg8[%c896_251, %c0_252] : memref<1152x128xf32, #tpu.memory_space<vmem>>, vector<128x128xf32>
    %cst_253 = arith.constant dense<0.000000e+00> : vector<4x128xf32>
    %305 = tpu.matmul %303, %304, %cst_253 {dimension_numbers = #tpu.dot_dimension_numbers<[1], [0], [0], [1], [0, 0, 1, 1], [], []>} : vector<4x128xf32>, vector<128x128xf32>, vector<4x128xf32> -> vector<4x128xf32>
    %306 = arith.addf %302, %305 : vector<4x128xf32>
    %307 = arith.addf %293, %306 : vector<4x128xf32>
    %cst_254 = arith.constant 0.000000e+00 : f32
    %308 = vector.broadcast %cst_254 : f32 to vector<4x128xf32>
    %c2_255 = arith.constant 2 : index
    %c0_256 = arith.constant 0 : index
    %309 = vector.load %arg16[%c2_255, %c0_256] : memref<16x128xf32, #tpu.memory_space<vmem>>, vector<4x128xf32>
    %c256_257 = arith.constant 256 : index
    %c0_258 = arith.constant 0 : index
    %310 = vector.load %arg8[%c256_257, %c0_258] : memref<1152x128xf32, #tpu.memory_space<vmem>>, vector<128x128xf32>
    %cst_259 = arith.constant dense<0.000000e+00> : vector<4x128xf32>
    %311 = tpu.matmul %309, %310, %cst_259 {dimension_numbers = #tpu.dot_dimension_numbers<[1], [0], [0], [1], [0, 0, 1, 1], [], []>} : vector<4x128xf32>, vector<128x128xf32>, vector<4x128xf32> -> vector<4x128xf32>
    %312 = arith.addf %308, %311 : vector<4x128xf32>
    %c4_260 = arith.constant 4 : index
    %c0_261 = arith.constant 0 : index
    %313 = vector.load %arg16[%c4_260, %c0_261] : memref<16x128xf32, #tpu.memory_space<vmem>>, vector<4x128xf32>
    %c640_262 = arith.constant 640 : index
    %c0_263 = arith.constant 0 : index
    %314 = vector.load %arg8[%c640_262, %c0_263] : memref<1152x128xf32, #tpu.memory_space<vmem>>, vector<128x128xf32>
    %cst_264 = arith.constant dense<0.000000e+00> : vector<4x128xf32>
    %315 = tpu.matmul %313, %314, %cst_264 {dimension_numbers = #tpu.dot_dimension_numbers<[1], [0], [0], [1], [0, 0, 1, 1], [], []>} : vector<4x128xf32>, vector<128x128xf32>, vector<4x128xf32> -> vector<4x128xf32>
    %316 = arith.addf %312, %315 : vector<4x128xf32>
    %c6_265 = arith.constant 6 : index
    %c0_266 = arith.constant 0 : index
    %317 = vector.load %arg16[%c6_265, %c0_266] : memref<16x128xf32, #tpu.memory_space<vmem>>, vector<4x128xf32>
    %c1024_267 = arith.constant 1024 : index
    %c0_268 = arith.constant 0 : index
    %318 = vector.load %arg8[%c1024_267, %c0_268] : memref<1152x128xf32, #tpu.memory_space<vmem>>, vector<128x128xf32>
    %cst_269 = arith.constant dense<0.000000e+00> : vector<4x128xf32>
    %319 = tpu.matmul %317, %318, %cst_269 {dimension_numbers = #tpu.dot_dimension_numbers<[1], [0], [0], [1], [0, 0, 1, 1], [], []>} : vector<4x128xf32>, vector<128x128xf32>, vector<4x128xf32> -> vector<4x128xf32>
    %320 = arith.addf %316, %319 : vector<4x128xf32>
    %cst_270 = arith.constant 0.000000e+00 : f32
    %321 = vector.broadcast %cst_270 : f32 to vector<4x128xf32>
    %322 = arith.select %276, %320, %321 : vector<4x128xi1>, vector<4x128xf32>
    %323 = arith.addf %307, %322 : vector<4x128xf32>
    %c0_271 = arith.constant 0 : index
    %c0_272 = arith.constant 0 : index
    %324 = vector.load %arg9[%c0_271, %c0_272] : memref<1x128xf32, #tpu.memory_space<vmem>>, vector<1x128xf32>
    %325 = vector.broadcast %324 : vector<1x128xf32> to vector<4x128xf32>
    %326 = arith.addf %323, %325 : vector<4x128xf32>
    %cst_273 = arith.constant 0.000000e+00 : f32
    %327 = vector.broadcast %cst_273 : f32 to vector<4x128xf32>
    %328 = arith.maximumf %326, %327 : vector<4x128xf32>
    %c0_274 = arith.constant 0 : index
    %c0_275 = arith.constant 0 : index
    %329 = vector.load %arg17[%c0_274, %c0_275] : memref<280x128xf32, #tpu.memory_space<vmem>>, vector<4x128xf32>
    tpu.vector_store %arg17[%c0_274, %c0_275], %328 {strides = array<i32>} : memref<280x128xf32, #tpu.memory_space<vmem>>, vector<4x128xf32>,
    %c0_276 = arith.constant 0 : index
    %c0_277 = arith.constant 0 : index
    %330 = vector.load %arg17[%c0_276, %c0_277] : memref<280x128xf32, #tpu.memory_space<vmem>>, vector<4x128xf32>
    %c1_278 = arith.constant 1 : index
    %c0_279 = arith.constant 0 : index
    %331 = vector.load %arg17[%c1_278, %c0_279] : memref<280x128xf32, #tpu.memory_space<vmem>>, vector<4x128xf32>
    %332 = arith.maximumf %330, %331 : vector<4x128xf32>
    %c2_280 = arith.constant 2 : index
    %c0_281 = arith.constant 0 : index
    %333 = vector.load %arg17[%c2_280, %c0_281] : memref<280x128xf32, #tpu.memory_space<vmem>>, vector<4x128xf32>
    %c3_282 = arith.constant 3 : index
    %c0_283 = arith.constant 0 : index
    %334 = vector.load %arg17[%c3_282, %c0_283] : memref<280x128xf32, #tpu.memory_space<vmem>>, vector<4x128xf32>
    %335 = arith.maximumf %333, %334 : vector<4x128xf32>
    %336 = arith.maximumf %332, %335 : vector<4x128xf32>
    %337 = vector.extract_strided_slice %336 {offsets = [0, 0], sizes = [1, 128], strides = [1, 1]} : vector<4x128xf32> to vector<1x128xf32>
    %c0_284 = arith.constant 0 : index
    %c0_285 = arith.constant 0 : index
    %338 = vector.load %arg10[%c0_284, %c0_285] : memref<128x128xf32, #tpu.memory_space<vmem>>, vector<128x128xf32>
    %cst_286 = arith.constant dense<0.000000e+00> : vector<1x128xf32>
    %339 = tpu.matmul %337, %338, %cst_286 {dimension_numbers = #tpu.dot_dimension_numbers<[1], [0], [0], [1], [0, 0, 1, 1], [], []>} : vector<1x128xf32>, vector<128x128xf32>, vector<1x128xf32> -> vector<1x128xf32>
    %c0_287 = arith.constant 0 : index
    %c0_288 = arith.constant 0 : index
    %340 = vector.load %arg11[%c0_287, %c0_288] : memref<1x128xf32, #tpu.memory_space<vmem>>, vector<1x128xf32>
    %341 = arith.addf %339, %340 : vector<1x128xf32>
    %c0_289 = arith.constant 0 : index
    %c0_290 = arith.constant 0 : index
    %c0_291 = arith.constant 0 : index
    %342 = vector.load %arg12[%c0_289, %c0_290, %c0_291] : memref<1x1x128xf32, #tpu.memory_space<vmem>>, vector<1x1x128xf32>
    %343 = vector.shape_cast %342 : vector<1x1x128xf32> to vector<1x128xf32>
    %344 = vector.shape_cast %341 : vector<1x128xf32> to vector<1x1x128xf32>
    tpu.vector_store %arg12[%c0_289, %c0_290, %c0_291], %344 {strides = array<i32>} : memref<1x1x128xf32, #tpu.memory_space<vmem>>, vector<1x1x128xf32>,
    return
  }
  func.func @transform_0(%arg0: i32) -> (i32, i32, i32) {
    %c0_i32 = arith.constant 0 : i32
    %c0_i32_0 = arith.constant 0 : i32
    %c0_i32_1 = arith.constant 0 : i32
    return %arg0, %c0_i32, %c0_i32_0 : i32, i32, i32
  }
  func.func @transform_1(%arg0: i32) -> (i32, i32) {
    %c0_i32 = arith.constant 0 : i32
    %c0_i32_0 = arith.constant 0 : i32
    %c0_i32_1 = arith.constant 0 : i32
    return %c0_i32, %c0_i32_0 : i32, i32
  }
  func.func @transform_2(%arg0: i32) -> (i32, i32) {
    %c0_i32 = arith.constant 0 : i32
    %c0_i32_0 = arith.constant 0 : i32
    %c0_i32_1 = arith.constant 0 : i32
    return %c0_i32, %c0_i32_0 : i32, i32
  }
  func.func @transform_3(%arg0: i32) -> (i32, i32) {
    %c0_i32 = arith.constant 0 : i32
    %c0_i32_0 = arith.constant 0 : i32
    %c0_i32_1 = arith.constant 0 : i32
    return %c0_i32, %c0_i32_0 : i32, i32
  }
  func.func @transform_4(%arg0: i32) -> (i32, i32) {
    %c0_i32 = arith.constant 0 : i32
    %c0_i32_0 = arith.constant 0 : i32
    %c0_i32_1 = arith.constant 0 : i32
    return %c0_i32, %c0_i32_0 : i32, i32
  }
  func.func @transform_5(%arg0: i32) -> (i32, i32) {
    %c0_i32 = arith.constant 0 : i32
    %c0_i32_0 = arith.constant 0 : i32
    %c0_i32_1 = arith.constant 0 : i32
    return %c0_i32, %c0_i32_0 : i32, i32
  }
  func.func @transform_6(%arg0: i32) -> (i32, i32) {
    %c0_i32 = arith.constant 0 : i32
    %c0_i32_0 = arith.constant 0 : i32
    %c0_i32_1 = arith.constant 0 : i32
    return %c0_i32, %c0_i32_0 : i32, i32
  }
  func.func @transform_7(%arg0: i32) -> (i32, i32) {
    %c0_i32 = arith.constant 0 : i32
    %c0_i32_0 = arith.constant 0 : i32
    %c0_i32_1 = arith.constant 0 : i32
    return %c0_i32, %c0_i32_0 : i32, i32
  }
  func.func @transform_8(%arg0: i32) -> (i32, i32) {
    %c0_i32 = arith.constant 0 : i32
    %c0_i32_0 = arith.constant 0 : i32
    %c0_i32_1 = arith.constant 0 : i32
    return %c0_i32, %c0_i32_0 : i32, i32
  }
  func.func @transform_9(%arg0: i32) -> (i32, i32) {
    %c0_i32 = arith.constant 0 : i32
    %c0_i32_0 = arith.constant 0 : i32
    %c0_i32_1 = arith.constant 0 : i32
    return %c0_i32, %c0_i32_0 : i32, i32
  }
  func.func @transform_10(%arg0: i32) -> (i32, i32) {
    %c0_i32 = arith.constant 0 : i32
    %c0_i32_0 = arith.constant 0 : i32
    %c0_i32_1 = arith.constant 0 : i32
    return %c0_i32, %c0_i32_0 : i32, i32
  }
  func.func @transform_11(%arg0: i32) -> (i32, i32, i32) {
    %c0_i32 = arith.constant 0 : i32
    %c0_i32_0 = arith.constant 0 : i32
    %c0_i32_1 = arith.constant 0 : i32
    return %arg0, %c0_i32, %c0_i32_0 : i32, i32, i32
  }
}

</mosaic_0001>

<llo_original>
// kernel: classifier_forward.1
$region0: #{classifier_forward.1}
  #allocation0 [shape = 'u32[]', space=smem, size = 0x4, offset = 0x4, fixed_abs, tag = 'smem constant byte address 0x4 - core index']
  #allocation1 [shape = 'u32[144,128]{1,0:T(1,128)}', space=vmem, size = 0x12000, scoped, tag = 'internal scratch']
  #allocation2 [shape = 'f32[296,128]{1,0:T(8,128)}', space=vmem, size = 0x25000, scoped, tag = 'scratch operand']
  #allocation3 [shape = 'f32[88,128]{1,0:T(8,128)}', space=vmem, size = 0xb000, scoped, tag = 'scratch operand']
  #allocation4 [shape = 'f32[32,128]{1,0:T(8,128)}', space=vmem, size = 0x4000, scoped, tag = 'scratch operand']
  #allocation5 [shape = 'f32[16,128]{1,0:T(8,128)}', space=vmem, size = 0x2000, scoped, tag = 'scratch operand']
  #allocation6 [shape = 'f32[280,128]{1,0:T(8,128)}', space=vmem, size = 0x23000, scoped, tag = 'scratch operand']
  %s0 = inlined_call_operand.vmem [shape: f32[2,256,128], index: 0, kind: input, shape index: {}]
  %s1 = inlined_call_operand.vmem [shape: f32[1152,128], index: 1, kind: input, shape index: {}]
  %s2 = inlined_call_operand.vmem [shape: f32[1,128], index: 2, kind: input, shape index: {}]
  %s3 = inlined_call_operand.vmem [shape: f32[1152,128], index: 3, kind: input, shape index: {}]
  %s4 = inlined_call_operand.vmem [shape: f32[1,128], index: 4, kind: input, shape index: {}]
  %s5 = inlined_call_operand.vmem [shape: f32[1152,128], index: 5, kind: input, shape index: {}]
  %s6 = inlined_call_operand.vmem [shape: f32[1,128], index: 6, kind: input, shape index: {}]
  %s7 = inlined_call_operand.vmem [shape: f32[1152,128], index: 7, kind: input, shape index: {}]
  %s8 = inlined_call_operand.vmem [shape: f32[1,128], index: 8, kind: input, shape index: {}]
  %s9 = inlined_call_operand.vmem [shape: f32[128,128], index: 9, kind: input, shape index: {}]
  %s10 = inlined_call_operand.vmem [shape: f32[1,128], index: 10, kind: input, shape index: {}]
  %s11 = inlined_call_operand.hbm [shape: f32[2,1,128], index: 11, kind: output, shape index: {}]
  %s12 = sld [smem:[#allocation0]]
  $region77: #{classifier_forward.1} parent=0
    _
  %s14 = ssub.s32 1, %s12
  %s15 = scalar_select 0, %s14, %s12
  $region1: #{classifier_forward.1} parent=0
    #allocation7 [shape = 'u8[1024]{0}', space=vmem, size = 0x400, scoped, tag = 'output window, operand 0']
    #allocation8 [shape = 's32[2]{0}', space=sflag, size = 0x8, scoped, tag = 'scoped memory for classifier_forward.1']
    %16 = vsyncpa [#allocation8], 0
    %s17 = scalar_lea.sflag [#allocation8], 1
    %18 = vsyncpa %s17, 0
    loop: start=0, step=1, limit=4
    $region2: #{classifier_forward.1} parent=1 // loop_pre_header
      _
    $region3: #{classifier_forward.1} parent=1 // loop_header
      %s20 = sphi 0, %s24
      %p21 = scmp.ge.s32.totalorder %s20, 4
      %s30 = sphi 0, %s32
      %s33 = sphi 0, %s30
      %s34 = sphi 0, %s33
      %s50 = sphi 0, %s34
      %s54 = sphi 0, %s54
      %s56 = sphi 0, %s54
      %s57 = sphi 0, %s56
      %s71 = sphi 0, %s57
      %s75 = sphi 0, %s75
      %s77 = sphi 0, %s75
      %s78 = sphi 0, %s77
      %s92 = sphi 0, %s78
      %s96 = sphi 0, %s96
      %s98 = sphi 0, %s96
      %s99 = sphi 0, %s98
      %s113 = sphi 0, %s99
      %s117 = sphi 0, %s117
      %s119 = sphi 0, %s117
      %s120 = sphi 0, %s119
      %s134 = sphi 0, %s120
      %s138 = sphi 0, %s138
      %s140 = sphi 0, %s138
      %s141 = sphi 0, %s140
      %s155 = sphi 0, %s141
      %s159 = sphi 0, %s159
      %s161 = sphi 0, %s159
      %s162 = sphi 0, %s161
      %s176 = sphi 0, %s162
      %s180 = sphi 0, %s180
      %s182 = sphi 0, %s180
      %s183 = sphi 0, %s182
      %s197 = sphi 0, %s183
      %s201 = sphi 0, %s201
      %s203 = sphi 0, %s201
      %s204 = sphi 0, %s203
      %s218 = sphi 0, %s204
      %s222 = sphi 0, %s222
      %s224 = sphi 0, %s222
      %s225 = sphi 0, %s224
      %s239 = sphi 0, %s225
      %s243 = sphi 0, %s243
      %s245 = sphi 0, %s243
      %s246 = sphi 0, %s245
      %s260 = sphi 0, %s246
      %s266 = sphi 0, %s268
      %s269 = sphi 0, %s266
      %s270 = sphi 0, %s269
      %s286 = sphi 0, %s270
    $region4: #{classifier_forward.1} parent=1 // loop_header_branch
      %23 = sbr.rel (%p21) target = $region8
    $region5: #{classifier_forward.1} parent=1 // loop_body
      %s25 = ssub.s32 %s20, 1
      %s26 = ssub.s32 %s20, 2
      %s27 = sadd.s32 %s20, 1
      %s28 = ssub.s32 %s20, %s27
      %p29 = scmp.eq.s32.totalorder %s28, 0
      %s31 = sadd.s32 %s30, 1
      %s32 = scalar_select %p29, %s30, %s31
      %p35 = pneg %p29
      %p36 = scmp.eq.s32.totalorder %s20, 1
      %p37 = por %p35, %p36
      %p38 = scmp.ne.s32.totalorder %s30, %s33
      %p39 = scmp.eq.s32.totalorder %s20, 0
      %p40 = por %p38, %p39
      %p41 = scmp.ne.s32.totalorder %s30, %s33
      %p42 = scmp.eq.s32.totalorder %s25, 1
      %p43 = por %p41, %p42
      %p44 = scmp.ne.s32.totalorder %s33, %s34
      %p45 = scmp.eq.s32.totalorder %s25, 0
      %p46 = por %p44, %p45
      %p47 = scmp.ne.s32.totalorder %s33, %s34
      %p48 = scmp.eq.s32.totalorder %s26, 1
      %p49 = por %p47, %p48
      %p51 = scmp.ne.s32.totalorder %s34, %s50
      %p52 = scmp.eq.s32.totalorder %s26, 0
      %p53 = por %p51, %p52
      %s55 = sadd.s32 %s54, 1
      %p58 = scmp.eq.s32.totalorder %s20, 1
      %p59 = scmp.ne.s32.totalorder %s54, %s56
      %p60 = scmp.eq.s32.totalorder %s20, 0
      %p61 = por %p59, %p60
      %p62 = scmp.ne.s32.totalorder %s54, %s56
      %p63 = scmp.eq.s32.totalorder %s25, 1
      %p64 = por %p62, %p63
      %p65 = scmp.ne.s32.totalorder %s56, %s57
      %p66 = scmp.eq.s32.totalorder %s25, 0
      %p67 = por %p65, %p66
      %p68 = scmp.ne.s32.totalorder %s56, %s57
      %p69 = scmp.eq.s32.totalorder %s26, 1
      %p70 = por %p68, %p69
      %p72 = scmp.ne.s32.totalorder %s57, %s71
      %p73 = scmp.eq.s32.totalorder %s26, 0
      %p74 = por %p72, %p73
      %s76 = sadd.s32 %s75, 1
      %p79 = scmp.eq.s32.totalorder %s20, 1
      %p80 = scmp.ne.s32.totalorder %s75, %s77
      %p81 = scmp.eq.s32.totalorder %s20, 0
      %p82 = por %p80, %p81
      %p83 = scmp.ne.s32.totalorder %s75, %s77
      %p84 = scmp.eq.s32.totalorder %s25, 1
      %p85 = por %p83, %p84
      %p86 = scmp.ne.s32.totalorder %s77, %s78
      %p87 = scmp.eq.s32.totalorder %s25, 0
      %p88 = por %p86, %p87
      %p89 = scmp.ne.s32.totalorder %s77, %s78
      %p90 = scmp.eq.s32.totalorder %s26, 1
      %p91 = por %p89, %p90
      %p93 = scmp.ne.s32.totalorder %s78, %s92
      %p94 = scmp.eq.s32.totalorder %s26, 0
      %p95 = por %p93, %p94
      %s97 = sadd.s32 %s96, 1
      %p100 = scmp.eq.s32.totalorder %s20, 1
      %p101 = scmp.ne.s32.totalorder %s96, %s98
      %p102 = scmp.eq.s32.totalorder %s20, 0
      %p103 = por %p101, %p102
      %p104 = scmp.ne.s32.totalorder %s96, %s98
      %p105 = scmp.eq.s32.totalorder %s25, 1
      %p106 = por %p104, %p105
      %p107 = scmp.ne.s32.totalorder %s98, %s99
      %p108 = scmp.eq.s32.totalorder %s25, 0
      %p109 = por %p107, %p108
      %p110 = scmp.ne.s32.totalorder %s98, %s99
      %p111 = scmp.eq.s32.totalorder %s26, 1
      %p112 = por %p110, %p111
      %p114 = scmp.ne.s32.totalorder %s99, %s113
      %p115 = scmp.eq.s32.totalorder %s26, 0
      %p116 = por %p114, %p115
      %s118 = sadd.s32 %s117, 1
      %p121 = scmp.eq.s32.totalorder %s20, 1
      %p122 = scmp.ne.s32.totalorder %s117, %s119
      %p123 = scmp.eq.s32.totalorder %s20, 0
      %p124 = por %p122, %p123
      %p125 = scmp.ne.s32.totalorder %s117, %s119
      %p126 = scmp.eq.s32.totalorder %s25, 1
      %p127 = por %p125, %p126
      %p128 = scmp.ne.s32.totalorder %s119, %s120
      %p129 = scmp.eq.s32.totalorder %s25, 0
      %p130 = por %p128, %p129
      %p131 = scmp.ne.s32.totalorder %s119, %s120
      %p132 = scmp.eq.s32.totalorder %s26, 1
      %p133 = por %p131, %p132
      %p135 = scmp.ne.s32.totalorder %s120, %s134
      %p136 = scmp.eq.s32.totalorder %s26, 0
      %p137 = por %p135, %p136
      %s139 = sadd.s32 %s138, 1
      %p142 = scmp.eq.s32.totalorder %s20, 1
      %p143 = scmp.ne.s32.totalorder %s138, %s140
      %p144 = scmp.eq.s32.totalorder %s20, 0
      %p145 = por %p143, %p144
      %p146 = scmp.ne.s32.totalorder %s138, %s140
      %p147 = scmp.eq.s32.totalorder %s25, 1
      %p148 = por %p146, %p147
      %p149 = scmp.ne.s32.totalorder %s140, %s141
      %p150 = scmp.eq.s32.totalorder %s25, 0
      %p151 = por %p149, %p150
      %p152 = scmp.ne.s32.totalorder %s140, %s141
      %p153 = scmp.eq.s32.totalorder %s26, 1
      %p154 = por %p152, %p153
      %p156 = scmp.ne.s32.totalorder %s141, %s155
      %p157 = scmp.eq.s32.totalorder %s26, 0
      %p158 = por %p156, %p157
      %s160 = sadd.s32 %s159, 1
      %p163 = scmp.eq.s32.totalorder %s20, 1
      %p164 = scmp.ne.s32.totalorder %s159, %s161
      %p165 = scmp.eq.s32.totalorder %s20, 0
      %p166 = por %p164, %p165
      %p167 = scmp.ne.s32.totalorder %s159, %s161
      %p168 = scmp.eq.s32.totalorder %s25, 1
      %p169 = por %p167, %p168
      %p170 = scmp.ne.s32.totalorder %s161, %s162
      %p171 = scmp.eq.s32.totalorder %s25, 0
      %p172 = por %p170, %p171
      %p173 = scmp.ne.s32.totalorder %s161, %s162
      %p174 = scmp.eq.s32.totalorder %s26, 1
      %p175 = por %p173, %p174
      %p177 = scmp.ne.s32.totalorder %s162, %s176
      %p178 = scmp.eq.s32.totalorder %s26, 0
      %p179 = por %p177, %p178
      %s181 = sadd.s32 %s180, 1
      %p184 = scmp.eq.s32.totalorder %s20, 1
      %p185 = scmp.ne.s32.totalorder %s180, %s182
      %p186 = scmp.eq.s32.totalorder %s20, 0
      %p187 = por %p185, %p186
      %p188 = scmp.ne.s32.totalorder %s180, %s182
      %p189 = scmp.eq.s32.totalorder %s25, 1
      %p190 = por %p188, %p189
      %p191 = scmp.ne.s32.totalorder %s182, %s183
      %p192 = scmp.eq.s32.totalorder %s25, 0
      %p193 = por %p191, %p192
      %p194 = scmp.ne.s32.totalorder %s182, %s183
      %p195 = scmp.eq.s32.totalorder %s26, 1
      %p196 = por %p194, %p195
      %p198 = scmp.ne.s32.totalorder %s183, %s197
      %p199 = scmp.eq.s32.totalorder %s26, 0
      %p200 = por %p198, %p199
      %s202 = sadd.s32 %s201, 1
      %p205 = scmp.eq.s32.totalorder %s20, 1
      %p206 = scmp.ne.s32.totalorder %s201, %s203
      %p207 = scmp.eq.s32.totalorder %s20, 0
      %p208 = por %p206, %p207
      %p209 = scmp.ne.s32.totalorder %s201, %s203
      %p210 = scmp.eq.s32.totalorder %s25, 1
      %p211 = por %p209, %p210
      %p212 = scmp.ne.s32.totalorder %s203, %s204
      %p213 = scmp.eq.s32.totalorder %s25, 0
      %p214 = por %p212, %p213
      %p215 = scmp.ne.s32.totalorder %s203, %s204
      %p216 = scmp.eq.s32.totalorder %s26, 1
      %p217 = por %p215, %p216
      %p219 = scmp.ne.s32.totalorder %s204, %s218
      %p220 = scmp.eq.s32.totalorder %s26, 0
      %p221 = por %p219, %p220
      %s223 = sadd.s32 %s222, 1
      %p226 = scmp.eq.s32.totalorder %s20, 1
      %p227 = scmp.ne.s32.totalorder %s222, %s224
      %p228 = scmp.eq.s32.totalorder %s20, 0
      %p229 = por %p227, %p228
      %p230 = scmp.ne.s32.totalorder %s222, %s224
      %p231 = scmp.eq.s32.totalorder %s25, 1
      %p232 = por %p230, %p231
      %p233 = scmp.ne.s32.totalorder %s224, %s225
      %p234 = scmp.eq.s32.totalorder %s25, 0
      %p235 = por %p233, %p234
      %p236 = scmp.ne.s32.totalorder %s224, %s225
      %p237 = scmp.eq.s32.totalorder %s26, 1
      %p238 = por %p236, %p237
      %p240 = scmp.ne.s32.totalorder %s225, %s239
      %p241 = scmp.eq.s32.totalorder %s26, 0
      %p242 = por %p240, %p241
      %s244 = sadd.s32 %s243, 1
      %p247 = scmp.eq.s32.totalorder %s20, 1
      %p248 = scmp.ne.s32.totalorder %s243, %s245
      %p249 = scmp.eq.s32.totalorder %s20, 0
      %p250 = por %p248, %p249
      %p251 = scmp.ne.s32.totalorder %s243, %s245
      %p252 = scmp.eq.s32.totalorder %s25, 1
      %p253 = por %p251, %p252
      %p254 = scmp.ne.s32.totalorder %s245, %s246
      %p255 = scmp.eq.s32.totalorder %s25, 0
      %p256 = por %p254, %p255
      %p257 = scmp.ne.s32.totalorder %s245, %s246
      %p258 = scmp.eq.s32.totalorder %s26, 1
      %p259 = por %p257, %p258
      %p261 = scmp.ne.s32.totalorder %s246, %s260
      %p262 = scmp.eq.s32.totalorder %s26, 0
      %p263 = por %p261, %p262
      %s264 = ssub.s32 %s20, %s27
      %p265 = scmp.eq.s32.totalorder %s264, 0
      %s267 = sadd.s32 %s266, 1
      %s268 = scalar_select %p265, %s266, %s267
      %p271 = pneg %p265
      %p272 = scmp.eq.s32.totalorder %s20, 1
      %p273 = por %p271, %p272
      %p274 = scmp.ne.s32.totalorder %s266, %s269
      %p275 = scmp.eq.s32.totalorder %s20, 0
      %p276 = por %p274, %p275
      %p277 = scmp.ne.s32.totalorder %s266, %s269
      %p278 = scmp.eq.s32.totalorder %s25, 1
      %p279 = por %p277, %p278
      %p280 = scmp.ne.s32.totalorder %s269, %s270
      %p281 = scmp.eq.s32.totalorder %s25, 0
      %p282 = por %p280, %p281
      %p283 = scmp.ne.s32.totalorder %s269, %s270
      %p284 = scmp.eq.s32.totalorder %s26, 1
      %p285 = por %p283, %p284
      %p287 = scmp.ne.s32.totalorder %s270, %s286
      %p288 = scmp.eq.s32.totalorder %s26, 0
      %p289 = por %p287, %p288
      %p290 = scmp.le.s32.totalorder 1, %s20
      %p291 = scmp.lt.s32.totalorder %s20, 3
      %p292 = pnand %p290, %p291
      %p293 = pneg %p292
      // Predicated region
      $region9: #{classifier_forward.1} parent=5 // pred_check
        _
      $region10: #{classifier_forward.1} parent=5 // pred_check_branch
        %295 = sbr.rel (%p292) target = $region12
      $region11: #{classifier_forward.1} parent=5 // pred_region
        %s296 = ssub.s32 %s20, 1
        // Predicated region
        $region13: #{classifier_forward.1} parent=11 // pred_check
          %p297 = pneg %p67
        $region14: #{classifier_forward.1} parent=11 // pred_check_branch
          %299 = sbr.rel (%p297) target = $region16
        $region15: #{classifier_forward.1} parent=11 // pred_region
          _
        $region16: #{classifier_forward.1} parent=11 // pred_fallthru
          _
        // Predicated region
        $region17: #{classifier_forward.1} parent=11 // pred_check
          %p300 = pneg %p88
        $region18: #{classifier_forward.1} parent=11 // pred_check_branch
          %302 = sbr.rel (%p300) target = $region20
        $region19: #{classifier_forward.1} parent=11 // pred_region
          _
        $region20: #{classifier_forward.1} parent=11 // pred_fallthru
          _
        // Predicated region
        $region21: #{classifier_forward.1} parent=11 // pred_check
          %p303 = pneg %p109
        $region22: #{classifier_forward.1} parent=11 // pred_check_branch
          %305 = sbr.rel (%p303) target = $region24
        $region23: #{classifier_forward.1} parent=11 // pred_region
          _
        $region24: #{classifier_forward.1} parent=11 // pred_fallthru
          _
        // Predicated region
        $region25: #{classifier_forward.1} parent=11 // pred_check
          %p306 = pneg %p130
        $region26: #{classifier_forward.1} parent=11 // pred_check_branch
          %308 = sbr.rel (%p306) target = $region28
        $region27: #{classifier_forward.1} parent=11 // pred_region
          _
        $region28: #{classifier_forward.1} parent=11 // pred_fallthru
          _
        // Predicated region
        $region29: #{classifier_forward.1} parent=11 // pred_check
          %p309 = pneg %p151
        $region30: #{classifier_forward.1} parent=11 // pred_check_branch
          %311 = sbr.rel (%p309) target = $region32
        $region31: #{classifier_forward.1} parent=11 // pred_region
          _
        $region32: #{classifier_forward.1} parent=11 // pred_fallthru
          _
        // Predicated region
        $region33: #{classifier_forward.1} parent=11 // pred_check
          %p312 = pneg %p172
        $region34: #{classifier_forward.1} parent=11 // pred_check_branch
          %314 = sbr.rel (%p312) target = $region36
        $region35: #{classifier_forward.1} parent=11 // pred_region
          _
        $region36: #{classifier_forward.1} parent=11 // pred_fallthru
          _
        // Predicated region
        $region37: #{classifier_forward.1} parent=11 // pred_check
          %p315 = pneg %p193
        $region38: #{classifier_forward.1} parent=11 // pred_check_branch
          %317 = sbr.rel (%p315) target = $region40
        $region39: #{classifier_forward.1} parent=11 // pred_region
          _
        $region40: #{classifier_forward.1} parent=11 // pred_fallthru
          _
        // Predicated region
        $region41: #{classifier_forward.1} parent=11 // pred_check
          %p318 = pneg %p214
        $region42: #{classifier_forward.1} parent=11 // pred_check_branch
          %320 = sbr.rel (%p318) target = $region44
        $region43: #{classifier_forward.1} parent=11 // pred_region
          _
        $region44: #{classifier_forward.1} parent=11 // pred_fallthru
          _
        // Predicated region
        $region45: #{classifier_forward.1} parent=11 // pred_check
          %p321 = pneg %p235
        $region46: #{classifier_forward.1} parent=11 // pred_check_branch
          %323 = sbr.rel (%p321) target = $region48
        $region47: #{classifier_forward.1} parent=11 // pred_region
          _
        $region48: #{classifier_forward.1} parent=11 // pred_fallthru
          _
        // Predicated region
        $region49: #{classifier_forward.1} parent=11 // pred_check
          %p324 = pneg %p256
        $region50: #{classifier_forward.1} parent=11 // pred_check_branch
          %326 = sbr.rel (%p324) target = $region52
        $region51: #{classifier_forward.1} parent=11 // pred_region
          _
        $region52: #{classifier_forward.1} parent=11 // pred_fallthru
          _
      $region12: #{classifier_forward.1} parent=5 // pred_fallthru
        _
      %p327 = scmp.lt.s32.totalorder %s20, 2
      // Predicated region
      $region53: #{classifier_forward.1} parent=5 // pred_check
        %p328 = pneg %p327
      $region54: #{classifier_forward.1} parent=5 // pred_check_branch
        %330 = sbr.rel (%p328) target = $region56
      $region55: #{classifier_forward.1} parent=5 // pred_region
        // Predicated region
        $region57: #{classifier_forward.1} parent=55 // pred_check
          %p331 = pneg %p40
        $region58: #{classifier_forward.1} parent=55 // pred_check_branch
          %333 = sbr.rel (%p331) target = $region60
        $region59: #{classifier_forward.1} parent=55 // pred_region
          %p334 = scmp.lt.s32.totalorder %s20, 1
          %s335 = scalar_select %p334, %s20, 1
          %s336 = smul.addr %s335, 32
          %s337 = smul.addr %s336, 8
          %s338 = scalar_lea.vmem %s0, %s337
        $region60: #{classifier_forward.1} parent=55 // pred_fallthru
          _
      $region56: #{classifier_forward.1} parent=5 // pred_fallthru
        _
      %p339 = scmp.le.s32.totalorder 1, %s20
      %p340 = scmp.lt.s32.totalorder %s20, 3
      %p341 = pnand %p339, %p340
      %p342 = pneg %p341
      // Predicated region
      $region61: #{classifier_forward.1} parent=5 // pred_check
        _
      $region62: #{classifier_forward.1} parent=5 // pred_check_branch
        %344 = sbr.rel (%p341) target = $region64
      $region63: #{classifier_forward.1} parent=5 // pred_region
        %s345 = ssub.s32 %s20, 1
        %p346 = scmp.lt.s32.totalorder %s25, 1
        %s347 = scalar_select %p346, %s25, 1
        %s348 = smul.addr %s347, 32
        %s349 = smul.addr %s348, 8
        %s350 = scalar_lea.vmem %s0, %s349
        %p351 = pneg %p46
        %p352 = pneg %p43
        %p353 = pneg %p67
        %p354 = pneg %p64
        %p355 = pneg %p88
        %p356 = pneg %p85
        %p357 = pneg %p109
        %p358 = pneg %p106
        %p359 = pneg %p130
        %p360 = pneg %p127
        %p361 = pneg %p151
        %p362 = pneg %p148
        %p363 = pneg %p172
        %p364 = pneg %p169
        %p365 = pneg %p193
        %p366 = pneg %p190
        %p367 = pneg %p214
        %p368 = pneg %p211
        %p369 = pneg %p235
        %p370 = pneg %p232
        %p371 = pneg %p256
        %p372 = pneg %p253
        %p373 = pneg %p282
        %p374 = pneg %p279
        %s375 = sand.u32 %s269, 1
        %s376 = scalar_lea.sflag [#allocation8], %s375
        %s377 = sand.u32 %s269, 1
        %s378 = scalar_lea.vmem [#allocation7], %s377
        %p379 = scmp.lt.s32.totalorder %s25, 1
        %s380 = scalar_select %p379, %s25, 1
        %s381 = smul.addr %s380, 32
        %s382 = smul.addr %s381, 8
        %s383 = scalar_lea.vmem %s0, %s382
        %384 = vst [vmem:[#allocation2] sm:$0xff] 0.0
        %385 = vst [vmem:[#allocation2 + $0x8] sm:$0xff] 0.0
        %386 = vst [vmem:[#allocation2 + $0x10] sm:$0x1] 0.0
        %387 = vst [vmem:[#allocation2 + $0x111] sm:$0xff] 0.0
        %388 = vst [vmem:[#allocation2 + $0x119] sm:$0xff] 0.0
        %389 = vst [vmem:[#allocation2 + $0x121] sm:$0x7f] 0.0
        %390 = vst [vmem:[#allocation3] sm:$0xff] 0.0
        %391 = vst [vmem:[#allocation3 + $0x8] sm:$0x1] 0.0
        %392 = vst [vmem:[#allocation3 + $0x49] sm:$0xff] 0.0
        %393 = vst [vmem:[#allocation3 + $0x51] sm:$0x7f] 0.0
        %394 = vst [vmem:[#allocation4] sm:$0x1f] 0.0
        %395 = vst [vmem:[#allocation4 + $0x15] sm:$0xff] 0.0
        %396 = vst [vmem:[#allocation4 + $0x1d] sm:$0x7] 0.0
        %397 = vst [vmem:[#allocation5] sm:$0x7] 0.0
        %398 = vst [vmem:[#allocation5 + $0x7] sm:$0xff] 0.0
        %399 = vst [vmem:[#allocation5 + $0xf] sm:$0x1] 0.0
        %400 = vst [vmem:[#allocation6 + $0x100] sm:$0xff] 0.0
        %401 = vst [vmem:[#allocation6 + $0x108] sm:$0xff] 0.0
        %402 = vst [vmem:[#allocation6 + $0x110] sm:$0xff] 0.0
        %v403 = vld [vmem:[%s383] sm:$0xff]
        %v404 = vld [vmem:[%s383 + $0x8] sm:$0xff]
        %v405 = vld [vmem:[%s383 + $0x10] sm:$0xff]
        %v406 = vld [vmem:[%s383 + $0x18] sm:$0xff]
        %v407 = vld [vmem:[%s383 + $0x20] sm:$0xff]
        %v408 = vld [vmem:[%s383 + $0x28] sm:$0xff]
        %v409 = vld [vmem:[%s383 + $0x30] sm:$0xff]
        %v410 = vld [vmem:[%s383 + $0x38] sm:$0xff]
        %v411 = vld [vmem:[%s383 + $0x40] sm:$0xff]
        %v412 = vld [vmem:[%s383 + $0x48] sm:$0xff]
        %v413 = vld [vmem:[%s383 + $0x50] sm:$0xff]
        %v414 = vld [vmem:[%s383 + $0x58] sm:$0xff]
        %v415 = vld [vmem:[%s383 + $0x60] sm:$0xff]
        %v416 = vld [vmem:[%s383 + $0x68] sm:$0xff]
        %v417 = vld [vmem:[%s383 + $0x70] sm:$0xff]
        %v418 = vld [vmem:[%s383 + $0x78] sm:$0xff]
        %v419 = vld [vmem:[%s383 + $0x80] sm:$0xff]
        %v420 = vld [vmem:[%s383 + $0x88] sm:$0xff]
        %v421 = vld [vmem:[%s383 + $0x90] sm:$0xff]
        %v422 = vld [vmem:[%s383 + $0x98] sm:$0xff]
        %v423 = vld [vmem:[%s383 + $0xa0] sm:$0xff]
        %v424 = vld [vmem:[%s383 + $0xa8] sm:$0xff]
        %v425 = vld [vmem:[%s383 + $0xb0] sm:$0xff]
        %v426 = vld [vmem:[%s383 + $0xb8] sm:$0xff]
        %v427 = vld [vmem:[%s383 + $0xc0] sm:$0xff]
        %v428 = vld [vmem:[%s383 + $0xc8] sm:$0xff]
        %v429 = vld [vmem:[%s383 + $0xd0] sm:$0xff]
        %v430 = vld [vmem:[%s383 + $0xd8] sm:$0xff]
        %v431 = vld [vmem:[%s383 + $0xe0] sm:$0xff]
        %v432 = vld [vmem:[%s383 + $0xe8] sm:$0xff]
        %v433 = vld [vmem:[%s383 + $0xf0] sm:$0xff]
        %v434 = vld [vmem:[%s383 + $0xf8] sm:$0xff]
        %435 = vst [vmem:[#allocation2 + $0x11] sm:$0xff] %v403
        %436 = vst [vmem:[#allocation2 + $0x19] sm:$0xff] %v404
        %437 = vst [vmem:[#allocation2 + $0x21] sm:$0xff] %v405
        %438 = vst [vmem:[#allocation2 + $0x29] sm:$0xff] %v406
        %439 = vst [vmem:[#allocation2 + $0x31] sm:$0xff] %v407
        %440 = vst [vmem:[#allocation2 + $0x39] sm:$0xff] %v408
        %441 = vst [vmem:[#allocation2 + $0x41] sm:$0xff] %v409
        %442 = vst [vmem:[#allocation2 + $0x49] sm:$0xff] %v410
        %443 = vst [vmem:[#allocation2 + $0x51] sm:$0xff] %v411
        %444 = vst [vmem:[#allocation2 + $0x59] sm:$0xff] %v412
        %445 = vst [vmem:[#allocation2 + $0x61] sm:$0xff] %v413
        %446 = vst [vmem:[#allocation2 + $0x69] sm:$0xff] %v414
        %447 = vst [vmem:[#allocation2 + $0x71] sm:$0xff] %v415
        %448 = vst [vmem:[#allocation2 + $0x79] sm:$0xff] %v416
        %449 = vst [vmem:[#allocation2 + $0x81] sm:$0xff] %v417
        %450 = vst [vmem:[#allocation2 + $0x89] sm:$0xff] %v418
        %451 = vst [vmem:[#allocation2 + $0x91] sm:$0xff] %v419
        %452 = vst [vmem:[#allocation2 + $0x99] sm:$0xff] %v420
        %453 = vst [vmem:[#allocation2 + $0xa1] sm:$0xff] %v421
        %454 = vst [vmem:[#allocation2 + $0xa9] sm:$0xff] %v422
        %455 = vst [vmem:[#allocation2 + $0xb1] sm:$0xff] %v423
        %456 = vst [vmem:[#allocation2 + $0xb9] sm:$0xff] %v424
        %457 = vst [vmem:[#allocation2 + $0xc1] sm:$0xff] %v425
        %458 = vst [vmem:[#allocation2 + $0xc9] sm:$0xff] %v426
        %459 = vst [vmem:[#allocation2 + $0xd1] sm:$0xff] %v427
        %460 = vst [vmem:[#allocation2 + $0xd9] sm:$0xff] %v428
        %461 = vst [vmem:[#allocation2 + $0xe1] sm:$0xff] %v429
        %462 = vst [vmem:[#allocation2 + $0xe9] sm:$0xff] %v430
        %463 = vst [vmem:[#allocation2 + $0xf1] sm:$0xff] %v431
        %464 = vst [vmem:[#allocation2 + $0xf9] sm:$0xff] %v432
        %465 = vst [vmem:[#allocation2 + $0x101] sm:$0xff] %v433
        %466 = vst [vmem:[#allocation2 + $0x109] sm:$0xff] %v434
        %v467 = vlaneseq
        %v468 = vshrl.u32 %v467, 7
        %v469 = vadd.s32 %v468, 8
        %v470 = vadd.s32 %v468, 16
        %v471 = vadd.s32 %v468, 24
        %v472 = vadd.s32 %v468, 32
        %v473 = vadd.s32 %v468, 40
        %v474 = vadd.s32 %v468, 48
        %v475 = vadd.s32 %v468, 56
        %v476 = vadd.s32 %v468, 64
        %v477 = vadd.s32 %v468, 72
        %v478 = vadd.s32 %v468, 80
        %v479 = vadd.s32 %v468, 88
        %v480 = vadd.s32 %v468, 96
        %v481 = vadd.s32 %v468, 104
        %v482 = vadd.s32 %v468, 112
        %v483 = vadd.s32 %v468, 120
        %v484 = vadd.s32 %v468, 128
        %v485 = vadd.s32 %v468, 136
        %v486 = vadd.s32 %v468, 144
        %v487 = vadd.s32 %v468, 152
        %v488 = vadd.s32 %v468, 160
        %v489 = vadd.s32 %v468, 168
        %v490 = vadd.s32 %v468, 176
        %v491 = vadd.s32 %v468, 184
        %v492 = vadd.s32 %v468, 192
        %v493 = vadd.s32 %v468, 200
        %v494 = vadd.s32 %v468, 208
        %v495 = vadd.s32 %v468, 216
        %v496 = vadd.s32 %v468, 224
        %v497 = vadd.s32 %v468, 232
        %v498 = vadd.s32 %v468, 240
        %v499 = vadd.s32 %v468, 248
        %v500 = vand.u32 %v468, 15
        %v501 = vand.u32 %v469, 15
        %v502 = vand.u32 %v470, 15
        %v503 = vand.u32 %v471, 15
        %v504 = vand.u32 %v472, 15
        %v505 = vand.u32 %v473, 15
        %v506 = vand.u32 %v474, 15
        %v507 = vand.u32 %v475, 15
        %v508 = vand.u32 %v476, 15
        %v509 = vand.u32 %v477, 15
        %v510 = vand.u32 %v478, 15
        %v511 = vand.u32 %v479, 15
        %v512 = vand.u32 %v480, 15
        %v513 = vand.u32 %v481, 15
        %v514 = vand.u32 %v482, 15
        %v515 = vand.u32 %v483, 15
        %v516 = vand.u32 %v484, 15
        %v517 = vand.u32 %v485, 15
        %v518 = vand.u32 %v486, 15
        %v519 = vand.u32 %v487, 15
        %v520 = vand.u32 %v488, 15
        %v521 = vand.u32 %v489, 15
        %v522 = vand.u32 %v490, 15
        %v523 = vand.u32 %v491, 15
        %v524 = vand.u32 %v492, 15
        %v525 = vand.u32 %v493, 15
        %v526 = vand.u32 %v494, 15
        %v527 = vand.u32 %v495, 15
        %v528 = vand.u32 %v496, 15
        %v529 = vand.u32 %v497, 15
        %v530 = vand.u32 %v498, 15
        %v531 = vand.u32 %v499, 15
        %vm532 = vcmp.ne.s32.totalorder %v500, 0
        %vm533 = vcmp.ne.s32.totalorder %v501, 0
        %vm534 = vcmp.ne.s32.totalorder %v502, 0
        %vm535 = vcmp.ne.s32.totalorder %v503, 0
        %vm536 = vcmp.ne.s32.totalorder %v504, 0
        %vm537 = vcmp.ne.s32.totalorder %v505, 0
        %vm538 = vcmp.ne.s32.totalorder %v506, 0
        %vm539 = vcmp.ne.s32.totalorder %v507, 0
        %vm540 = vcmp.ne.s32.totalorder %v508, 0
        %vm541 = vcmp.ne.s32.totalorder %v509, 0
        %vm542 = vcmp.ne.s32.totalorder %v510, 0
        %vm543 = vcmp.ne.s32.totalorder %v511, 0
        %vm544 = vcmp.ne.s32.totalorder %v512, 0
        %vm545 = vcmp.ne.s32.totalorder %v513, 0
        %vm546 = vcmp.ne.s32.totalorder %v514, 0
        %vm547 = vcmp.ne.s32.totalorder %v515, 0
        %vm548 = vcmp.ne.s32.totalorder %v516, 0
        %vm549 = vcmp.ne.s32.totalorder %v517, 0
        %vm550 = vcmp.ne.s32.totalorder %v518, 0
        %vm551 = vcmp.ne.s32.totalorder %v519, 0
        %vm552 = vcmp.ne.s32.totalorder %v520, 0
        %vm553 = vcmp.ne.s32.totalorder %v521, 0
        %vm554 = vcmp.ne.s32.totalorder %v522, 0
        %vm555 = vcmp.ne.s32.totalorder %v523, 0
        %vm556 = vcmp.ne.s32.totalorder %v524, 0
        %vm557 = vcmp.ne.s32.totalorder %v525, 0
        %vm558 = vcmp.ne.s32.totalorder %v526, 0
        %vm559 = vcmp.ne.s32.totalorder %v527, 0
        %vm560 = vcmp.ne.s32.totalorder %v528, 0
        %vm561 = vcmp.ne.s32.totalorder %v529, 0
        %vm562 = vcmp.ne.s32.totalorder %v530, 0
        %vm563 = vcmp.ne.s32.totalorder %v531, 0
        %vm564 = vcmp.ne.s32.totalorder %v500, 15
        %vm565 = vcmp.ne.s32.totalorder %v501, 15
        %vm566 = vcmp.ne.s32.totalorder %v502, 15
        %vm567 = vcmp.ne.s32.totalorder %v503, 15
        %vm568 = vcmp.ne.s32.totalorder %v504, 15
        %vm569 = vcmp.ne.s32.totalorder %v505, 15
        %vm570 = vcmp.ne.s32.totalorder %v506, 15
        %vm571 = vcmp.ne.s32.totalorder %v507, 15
        %vm572 = vcmp.ne.s32.totalorder %v508, 15
        %vm573 = vcmp.ne.s32.totalorder %v509, 15
        %vm574 = vcmp.ne.s32.totalorder %v510, 15
        %vm575 = vcmp.ne.s32.totalorder %v511, 15
        %vm576 = vcmp.ne.s32.totalorder %v512, 15
        %vm577 = vcmp.ne.s32.totalorder %v513, 15
        %vm578 = vcmp.ne.s32.totalorder %v514, 15
        %vm579 = vcmp.ne.s32.totalorder %v515, 15
        %vm580 = vcmp.ne.s32.totalorder %v516, 15
        %vm581 = vcmp.ne.s32.totalorder %v517, 15
        %vm582 = vcmp.ne.s32.totalorder %v518, 15
        %vm583 = vcmp.ne.s32.totalorder %v519, 15
        %vm584 = vcmp.ne.s32.totalorder %v520, 15
        %vm585 = vcmp.ne.s32.totalorder %v521, 15
        %vm586 = vcmp.ne.s32.totalorder %v522, 15
        %vm587 = vcmp.ne.s32.totalorder %v523, 15
        %vm588 = vcmp.ne.s32.totalorder %v524, 15
        %vm589 = vcmp.ne.s32.totalorder %v525, 15
        %vm590 = vcmp.ne.s32.totalorder %v526, 15
        %vm591 = vcmp.ne.s32.totalorder %v527, 15
        %vm592 = vcmp.ne.s32.totalorder %v528, 15
        %vm593 = vcmp.ne.s32.totalorder %v529, 15
        %vm594 = vcmp.ne.s32.totalorder %v530, 15
        %vm595 = vcmp.ne.s32.totalorder %v531, 15
        %v596 = vld [vmem:[#allocation2] sm:$0xff]
        %v597 = vld [vmem:[#allocation2 + $0x8] sm:$0xff]
        %v598 = vld [vmem:[#allocation2 + $0x10] sm:$0xff]
        %v599 = vld [vmem:[#allocation2 + $0x18] sm:$0xff]
        %v600 = vld [vmem:[#allocation2 + $0x20] sm:$0xff]
        %v601 = vld [vmem:[#allocation2 + $0x28] sm:$0xff]
        %v602 = vld [vmem:[#allocation2 + $0x30] sm:$0xff]
        %v603 = vld [vmem:[#allocation2 + $0x38] sm:$0xff]
        %v604 = vld [vmem:[#allocation2 + $0x40] sm:$0xff]
        %v605 = vld [vmem:[#allocation2 + $0x48] sm:$0xff]
        %v606 = vld [vmem:[#allocation2 + $0x50] sm:$0xff]
        %v607 = vld [vmem:[#allocation2 + $0x58] sm:$0xff]
        %v608 = vld [vmem:[#allocation2 + $0x60] sm:$0xff]
        %v609 = vld [vmem:[#allocation2 + $0x68] sm:$0xff]
        %v610 = vld [vmem:[#allocation2 + $0x70] sm:$0xff]
        %v611 = vld [vmem:[#allocation2 + $0x78] sm:$0xff]
        %v612 = vld [vmem:[#allocation2 + $0x80] sm:$0xff]
        %v613 = vld [vmem:[#allocation2 + $0x88] sm:$0xff]
        %v614 = vld [vmem:[#allocation2 + $0x90] sm:$0xff]
        %v615 = vld [vmem:[#allocation2 + $0x98] sm:$0xff]
        %v616 = vld [vmem:[#allocation2 + $0xa0] sm:$0xff]
        %v617 = vld [vmem:[#allocation2 + $0xa8] sm:$0xff]
        %v618 = vld [vmem:[#allocation2 + $0xb0] sm:$0xff]
        %v619 = vld [vmem:[#allocation2 + $0xb8] sm:$0xff]
        %v620 = vld [vmem:[#allocation2 + $0xc0] sm:$0xff]
        %v621 = vld [vmem:[#allocation2 + $0xc8] sm:$0xff]
        %v622 = vld [vmem:[#allocation2 + $0xd0] sm:$0xff]
        %v623 = vld [vmem:[#allocation2 + $0xd8] sm:$0xff]
        %v624 = vld [vmem:[#allocation2 + $0xe0] sm:$0xff]
        %v625 = vld [vmem:[#allocation2 + $0xe8] sm:$0xff]
        %v626 = vld [vmem:[#allocation2 + $0xf0] sm:$0xff]
        %v627 = vld [vmem:[#allocation2 + $0xf8] sm:$0xff]
        %v628 = vld [vmem:[%s1] sm:$0xff]
        %v629 = vld [vmem:[%s1 + $0x8] sm:$0xff]
        %v630 = vld [vmem:[%s1 + $0x10] sm:$0xff]
        %v631 = vld [vmem:[%s1 + $0x18] sm:$0xff]
        %v632 = vld [vmem:[%s1 + $0x20] sm:$0xff]
        %v633 = vld [vmem:[%s1 + $0x28] sm:$0xff]
        %v634 = vld [vmem:[%s1 + $0x30] sm:$0xff]
        %v635 = vld [vmem:[%s1 + $0x38] sm:$0xff]
        %v636 = vld [vmem:[%s1 + $0x40] sm:$0xff]
        %v637 = vld [vmem:[%s1 + $0x48] sm:$0xff]
        %v638 = vld [vmem:[%s1 + $0x50] sm:$0xff]
        %v639 = vld [vmem:[%s1 + $0x58] sm:$0xff]
        %v640 = vld [vmem:[%s1 + $0x60] sm:$0xff]
        %v641 = vld [vmem:[%s1 + $0x68] sm:$0xff]
        %v642 = vld [vmem:[%s1 + $0x70] sm:$0xff]
        %v643 = vld [vmem:[%s1 + $0x78] sm:$0xff]
        %v644 = vld [vmem:[#allocation2 + $0x100] sm:$0xff]
        %v645 = vld [vmem:[#allocation2 + $0x108] sm:$0xff]
        %v646 = vld [vmem:[%s1 + $0x180] sm:$0xff]
        %v647 = vld [vmem:[%s1 + $0x188] sm:$0xff]
        %v648 = vld [vmem:[%s1 + $0x190] sm:$0xff]
        %v649 = vld [vmem:[%s1 + $0x198] sm:$0xff]
        %v650 = vld [vmem:[%s1 + $0x1a0] sm:$0xff]
        %v651 = vld [vmem:[%s1 + $0x1a8] sm:$0xff]
        %v652 = vld [vmem:[%s1 + $0x1b0] sm:$0xff]
        %v653 = vld [vmem:[%s1 + $0x1b8] sm:$0xff]
        %v654 = vld [vmem:[%s1 + $0x1c0] sm:$0xff]
        %v655 = vld [vmem:[%s1 + $0x1c8] sm:$0xff]
        %v656 = vld [vmem:[%s1 + $0x1d0] sm:$0xff]
        %v657 = vld [vmem:[%s1 + $0x1d8] sm:$0xff]
        %v658 = vld [vmem:[%s1 + $0x1e0] sm:$0xff]
        %v659 = vld [vmem:[%s1 + $0x1e8] sm:$0xff]
        %v660 = vld [vmem:[%s1 + $0x1f0] sm:$0xff]
        %v661 = vld [vmem:[%s1 + $0x1f8] sm:$0xff]
        %662 = vmatprep.subr.mxu0 0.0
        %663 = vmatpush1.msra.mxu0 %v646
        %664 = vmatprep.subr.mxu0 0.0
        %665 = vmatpush1.msra.mxu0 %v647
        %666 = vmatprep.subr.mxu0 0.0
        %667 = vmatpush1.msra.mxu0 %v648
        %668 = vmatprep.subr.mxu0 0.0
        %669 = vmatpush1.msra.mxu0 %v649
        %670 = vmatprep.subr.mxu0 0.0
        %671 = vmatpush1.msra.mxu0 %v650
        %672 = vmatprep.subr.mxu0 0.0
        %673 = vmatpush1.msra.mxu0 %v651
        %674 = vmatprep.subr.mxu0 0.0
        %675 = vmatpush1.msra.mxu0 %v652
        %676 = vmatprep.subr.mxu0 0.0
        %677 = vmatpush1.msra.mxu0 %v653
        %678 = vmatprep.subr.mxu0 0.0
        %679 = vmatpush1.msra.mxu0 %v654
        %680 = vmatprep.subr.mxu0 0.0
        %681 = vmatpush1.msra.mxu0 %v655
        %682 = vmatprep.subr.mxu0 0.0
        %683 = vmatpush1.msra.mxu0 %v656
        %684 = vmatprep.subr.mxu0 0.0
        %685 = vmatpush1.msra.mxu0 %v657
        %686 = vmatprep.subr.mxu0 0.0
        %687 = vmatpush1.msra.mxu0 %v658
        %688 = vmatprep.subr.mxu0 0.0
        %689 = vmatpush1.msra.mxu0 %v659
        %690 = vmatprep.subr.mxu0 0.0
        %691 = vmatpush1.msra.mxu0 %v660
        %692 = vmatprep.subr.mxu0 0.0
        %693 = vmatpush1.msra.mxu0 %v661
        %694 = vmatprep.subr.mxu0 0.0
        %695 = vmatpush1.msra.mxu0 0.0
        %696 = vmatprep.subr.mxu0 0.0
        %697 = vmatpush1.msra.mxu0 0.0
        %698 = vmatprep.subr.mxu0 0.0
        %699 = vmatpush1.msra.mxu0 0.0
        %700 = vmatprep.subr.mxu0 0.0
        %701 = vmatpush1.msra.mxu0 0.0
        %702 = vmatprep.subr.mxu0 0.0
        %703 = vmatpush1.msra.mxu0 0.0
        %704 = vmatprep.subr.mxu0 0.0
        %705 = vmatpush1.msra.mxu0 0.0
        %706 = vmatprep.subr.mxu0 0.0
        %707 = vmatpush1.msra.mxu0 0.0
        %708 = vmatprep.subr.mxu0 0.0
        %709 = vmatpush1.msra.mxu0 0.0
        %710 = vmatprep.subr.mxu0 0.0
        %711 = vmatpush1.msra.mxu0 0.0
        %712 = vmatprep.subr.mxu0 0.0
        %713 = vmatpush1.msra.mxu0 0.0
        %714 = vmatprep.subr.mxu0 0.0
        %715 = vmatpush1.msra.mxu0 0.0
        %716 = vmatprep.subr.mxu0 0.0
        %717 = vmatpush1.msra.mxu0 0.0
        %718 = vmatprep.subr.mxu0 0.0
        %719 = vmatpush1.msra.mxu0 0.0
        %720 = vmatprep.subr.mxu0 0.0
        %721 = vmatpush1.msra.mxu0 0.0
        %722 = vmatprep.subr.mxu0 0.0
        %723 = vmatpush1.msra.mxu0 0.0
        %724 = vmatprep.subr.mxu0 0.0
        %725 = vmatpush1.msra.mxu0 0.0
        %726 = vmatprep.mubr.f32.mxu0 0.0
        %727 = vmatmul.mubr.f32.gmra.mrb[0].mxu0 %v598
        %v728 = vpop.f32.mrb[0].mxu0
        %v729 = vadd.f32 0.0, %v728
        %v730 = vpop.f32.mrb[0].mxu0
        %731 = vmatprep.mubr.f32.mxu0 0.0
        %732 = vmatmul.mubr.f32.gmra.mrb[0].mxu0 %v599
        %v733 = vpop.f32.mrb[0].mxu0
        %v734 = vadd.f32 0.0, %v733
        %v735 = vpop.f32.mrb[0].mxu0
        %736 = vmatprep.mubr.f32.mxu0 0.0
        %737 = vmatmul.mubr.f32.gmra.mrb[0].mxu0 %v600
        %v738 = vpop.f32.mrb[0].mxu0
        %v739 = vadd.f32 0.0, %v738
        %v740 = vpop.f32.mrb[0].mxu0
        %741 = vmatprep.mubr.f32.mxu0 0.0
        %742 = vmatmul.mubr.f32.gmra.mrb[0].mxu0 %v601
        %v743 = vpop.f32.mrb[0].mxu0
        %v744 = vadd.f32 0.0, %v743
        %v745 = vpop.f32.mrb[0].mxu0
        %746 = vmatprep.mubr.f32.mxu0 0.0
        %747 = vmatmul.mubr.f32.gmra.mrb[0].mxu0 %v602
        %v748 = vpop.f32.mrb[0].mxu0
        %v749 = vadd.f32 0.0, %v748
        %v750 = vpop.f32.mrb[0].mxu0
        %751 = vmatprep.mubr.f32.mxu0 0.0
        %752 = vmatmul.mubr.f32.gmra.mrb[0].mxu0 %v603
        %v753 = vpop.f32.mrb[0].mxu0
        %v754 = vadd.f32 0.0, %v753
        %v755 = vpop.f32.mrb[0].mxu0
        %756 = vmatprep.mubr.f32.mxu0 0.0
        %757 = vmatmul.mubr.f32.gmra.mrb[0].mxu0 %v604
        %v758 = vpop.f32.mrb[0].mxu0
        %v759 = vadd.f32 0.0, %v758
        %v760 = vpop.f32.mrb[0].mxu0
        %761 = vmatprep.mubr.f32.mxu0 0.0
        %762 = vmatmul.mubr.f32.gmra.mrb[0].mxu0 %v605
        %v763 = vpop.f32.mrb[0].mxu0
        %v764 = vadd.f32 0.0, %v763
        %v765 = vpop.f32.mrb[0].mxu0
        %766 = vmatprep.mubr.f32.mxu0 0.0
        %767 = vmatmul.mubr.f32.gmra.mrb[0].mxu0 %v606
        %v768 = vpop.f32.mrb[0].mxu0
        %v769 = vadd.f32 0.0, %v768
        %v770 = vpop.f32.mrb[0].mxu0
        %771 = vmatprep.mubr.f32.mxu0 0.0
        %772 = vmatmul.mubr.f32.gmra.mrb[0].mxu0 %v607
        %v773 = vpop.f32.mrb[0].mxu0
        %v774 = vadd.f32 0.0, %v773
        %v775 = vpop.f32.mrb[0].mxu0
        %776 = vmatprep.mubr.f32.mxu0 0.0
        %777 = vmatmul.mubr.f32.gmra.mrb[0].mxu0 %v608
        %v778 = vpop.f32.mrb[0].mxu0
        %v779 = vadd.f32 0.0, %v778
        %v780 = vpop.f32.mrb[0].mxu0
        %781 = vmatprep.mubr.f32.mxu0 0.0
        %782 = vmatmul.mubr.f32.gmra.mrb[0].mxu0 %v609
        %v783 = vpop.f32.mrb[0].mxu0
        %v784 = vadd.f32 0.0, %v783
        %v785 = vpop.f32.mrb[0].mxu0
        %786 = vmatprep.mubr.f32.mxu0 0.0
        %787 = vmatmul.mubr.f32.gmra.mrb[0].mxu0 %v610
        %v788 = vpop.f32.mrb[0].mxu0
        %v789 = vadd.f32 0.0, %v788
        %v790 = vpop.f32.mrb[0].mxu0
        %791 = vmatprep.mubr.f32.mxu0 0.0
        %792 = vmatmul.mubr.f32.gmra.mrb[0].mxu0 %v611
        %v793 = vpop.f32.mrb[0].mxu0
        %v794 = vadd.f32 0.0, %v793
        %v795 = vpop.f32.mrb[0].mxu0
        %796 = vmatprep.mubr.f32.mxu0 0.0
        %797 = vmatmul.mubr.f32.gmra.mrb[0].mxu0 %v612
        %v798 = vpop.f32.mrb[0].mxu0
        %v799 = vadd.f32 0.0, %v798
        %v800 = vpop.f32.mrb[0].mxu0
        %801 = vmatprep.mubr.f32.mxu0 0.0
        %802 = vmatmul.mubr.f32.gmra.mrb[0].mxu0 %v613
        %v803 = vpop.f32.mrb[0].mxu0
        %v804 = vadd.f32 0.0, %v803
        %v805 = vpop.f32.mrb[0].mxu0
        %806 = vmatprep.mubr.f32.mxu0 0.0
        %807 = vmatmul.mubr.f32.gmra.mrb[0].mxu0 %v614
        %v808 = vpop.f32.mrb[0].mxu0
        %v809 = vadd.f32 0.0, %v808
        %v810 = vpop.f32.mrb[0].mxu0
        %811 = vmatprep.mubr.f32.mxu0 0.0
        %812 = vmatmul.mubr.f32.gmra.mrb[0].mxu0 %v615
        %v813 = vpop.f32.mrb[0].mxu0
        %v814 = vadd.f32 0.0, %v813
        %v815 = vpop.f32.mrb[0].mxu0
        %816 = vmatprep.mubr.f32.mxu0 0.0
        %817 = vmatmul.mubr.f32.gmra.mrb[0].mxu0 %v616
        %v818 = vpop.f32.mrb[0].mxu0
        %v819 = vadd.f32 0.0, %v818
        %v820 = vpop.f32.mrb[0].mxu0
        %821 = vmatprep.mubr.f32.mxu0 0.0
        %822 = vmatmul.mubr.f32.gmra.mrb[0].mxu0 %v617
        %v823 = vpop.f32.mrb[0].mxu0
        %v824 = vadd.f32 0.0, %v823
        %v825 = vpop.f32.mrb[0].mxu0
        %826 = vmatprep.mubr.f32.mxu0 0.0
        %827 = vmatmul.mubr.f32.gmra.mrb[0].mxu0 %v618
        %v828 = vpop.f32.mrb[0].mxu0
        %v829 = vadd.f32 0.0, %v828
        %v830 = vpop.f32.mrb[0].mxu0
        %831 = vmatprep.mubr.f32.mxu0 0.0
        %832 = vmatmul.mubr.f32.gmra.mrb[0].mxu0 %v619
        %v833 = vpop.f32.mrb[0].mxu0
        %v834 = vadd.f32 0.0, %v833
        %v835 = vpop.f32.mrb[0].mxu0
        %836 = vmatprep.mubr.f32.mxu0 0.0
        %837 = vmatmul.mubr.f32.gmra.mrb[0].mxu0 %v620
        %v838 = vpop.f32.mrb[0].mxu0
        %v839 = vadd.f32 0.0, %v838
        %v840 = vpop.f32.mrb[0].mxu0
        %841 = vmatprep.mubr.f32.mxu0 0.0
        %842 = vmatmul.mubr.f32.gmra.mrb[0].mxu0 %v621
        %v843 = vpop.f32.mrb[0].mxu0
        %v844 = vadd.f32 0.0, %v843
        %v845 = vpop.f32.mrb[0].mxu0
        %846 = vmatprep.mubr.f32.mxu0 0.0
        %847 = vmatmul.mubr.f32.gmra.mrb[0].mxu0 %v622
        %v848 = vpop.f32.mrb[0].mxu0
        %v849 = vadd.f32 0.0, %v848
        %v850 = vpop.f32.mrb[0].mxu0
        %851 = vmatprep.mubr.f32.mxu0 0.0
        %852 = vmatmul.mubr.f32.gmra.mrb[0].mxu0 %v623
        %v853 = vpop.f32.mrb[0].mxu0
        %v854 = vadd.f32 0.0, %v853
        %v855 = vpop.f32.mrb[0].mxu0
        %856 = vmatprep.mubr.f32.mxu0 0.0
        %857 = vmatmul.mubr.f32.gmra.mrb[0].mxu0 %v624
        %v858 = vpop.f32.mrb[0].mxu0
        %v859 = vadd.f32 0.0, %v858
        %v860 = vpop.f32.mrb[0].mxu0
        %861 = vmatprep.mubr.f32.mxu0 0.0
        %862 = vmatmul.mubr.f32.gmra.mrb[0].mxu0 %v625
        %v863 = vpop.f32.mrb[0].mxu0
        %v864 = vadd.f32 0.0, %v863
        %v865 = vpop.f32.mrb[0].mxu0
        %866 = vmatprep.mubr.f32.mxu0 0.0
        %867 = vmatmul.mubr.f32.gmra.mrb[0].mxu0 %v626
        %v868 = vpop.f32.mrb[0].mxu0
        %v869 = vadd.f32 0.0, %v868
        %v870 = vpop.f32.mrb[0].mxu0
        %871 = vmatprep.mubr.f32.mxu0 0.0
        %872 = vmatmul.mubr.f32.gmra.mrb[0].mxu0 %v627
        %v873 = vpop.f32.mrb[0].mxu0
        %v874 = vadd.f32 0.0, %v873
        %v875 = vpop.f32.mrb[0].mxu0
        %876 = vmatprep.mubr.f32.mxu0 0.0
        %877 = vmatmul.mubr.f32.gmra.mrb[0].mxu0 %v644
        %v878 = vpop.f32.mrb[0].mxu0
        %v879 = vadd.f32 0.0, %v878
        %v880 = vpop.f32.mrb[0].mxu0
        %881 = vmatprep.mubr.f32.mxu0 0.0
        %882 = vmatmul.mubr.f32.gmra.mrb[0].mxu0 %v645
        %v883 = vpop.f32.mrb[0].mxu0
        %v884 = vadd.f32 0.0, %v883
        %v885 = vpop.f32.mrb[0].mxu0
        %886 = vdwg.mxu0
        %887 = vmatprep.subr.mxu0 0.0
        %888 = vmatpush1.msra.mxu0 %v628
        %889 = vmatprep.subr.mxu0 0.0
        %890 = vmatpush1.msra.mxu0 %v629
        %891 = vmatprep.subr.mxu0 0.0
        %892 = vmatpush1.msra.mxu0 %v630
        %893 = vmatprep.subr.mxu0 0.0
        %894 = vmatpush1.msra.mxu0 %v631
        %895 = vmatprep.subr.mxu0 0.0
        %896 = vmatpush1.msra.mxu0 %v632
        %897 = vmatprep.subr.mxu0 0.0
        %898 = vmatpush1.msra.mxu0 %v633
        %899 = vmatprep.subr.mxu0 0.0
        %900 = vmatpush1.msra.mxu0 %v634
        %901 = vmatprep.subr.mxu0 0.0
        %902 = vmatpush1.msra.mxu0 %v635
        %903 = vmatprep.subr.mxu0 0.0
        %904 = vmatpush1.msra.mxu0 %v636
        %905 = vmatprep.subr.mxu0 0.0
        %906 = vmatpush1.msra.mxu0 %v637
        %907 = vmatprep.subr.mxu0 0.0
        %908 = vmatpush1.msra.mxu0 %v638
        %909 = vmatprep.subr.mxu0 0.0
        %910 = vmatpush1.msra.mxu0 %v639
        %911 = vmatprep.subr.mxu0 0.0
        %912 = vmatpush1.msra.mxu0 %v640
        %913 = vmatprep.subr.mxu0 0.0
        %914 = vmatpush1.msra.mxu0 %v641
        %915 = vmatprep.subr.mxu0 0.0
        %916 = vmatpush1.msra.mxu0 %v642
        %917 = vmatprep.subr.mxu0 0.0
        %918 = vmatpush1.msra.mxu0 %v643
        %919 = vmatprep.subr.mxu0 0.0
        %920 = vmatpush1.msra.mxu0 0.0
        %921 = vmatprep.subr.mxu0 0.0
        %922 = vmatpush1.msra.mxu0 0.0
        %923 = vmatprep.subr.mxu0 0.0
        %924 = vmatpush1.msra.mxu0 0.0
        %925 = vmatprep.subr.mxu0 0.0
        %926 = vmatpush1.msra.mxu0 0.0
        %927 = vmatprep.subr.mxu0 0.0
        %928 = vmatpush1.msra.mxu0 0.0
        %929 = vmatprep.subr.mxu0 0.0
        %930 = vmatpush1.msra.mxu0 0.0
        %931 = vmatprep.subr.mxu0 0.0
        %932 = vmatpush1.msra.mxu0 0.0
        %933 = vmatprep.subr.mxu0 0.0
        %934 = vmatpush1.msra.mxu0 0.0
        %935 = vmatprep.subr.mxu0 0.0
        %936 = vmatpush1.msra.mxu0 0.0
        %937 = vmatprep.subr.mxu0 0.0
        %938 = vmatpush1.msra.mxu0 0.0
        %939 = vmatprep.subr.mxu0 0.0
        %940 = vmatpush1.msra.mxu0 0.0
        %941 = vmatprep.subr.mxu0 0.0
        %942 = vmatpush1.msra.mxu0 0.0
        %943 = vmatprep.subr.mxu0 0.0
        %944 = vmatpush1.msra.mxu0 0.0
        %945 = vmatprep.subr.mxu0 0.0
        %946 = vmatpush1.msra.mxu0 0.0
        %947 = vmatprep.subr.mxu0 0.0
        %948 = vmatpush1.msra.mxu0 0.0
        %949 = vmatprep.subr.mxu0 0.0
        %950 = vmatpush1.msra.mxu0 0.0
        %951 = vmatprep.mubr.f32.mxu0 0.0
        %952 = vmatmul.mubr.f32.gmra.mrb[0].mxu0 %v596
        %v953 = vpop.f32.mrb[0].mxu0
        %v954 = vadd.f32 %v729, %v953
        %v955 = vpop.f32.mrb[0].mxu0
        %956 = vmatprep.mubr.f32.mxu0 0.0
        %957 = vmatmul.mubr.f32.gmra.mrb[0].mxu0 %v597
        %v958 = vpop.f32.mrb[0].mxu0
        %v959 = vadd.f32 %v734, %v958
        %v960 = vpop.f32.mrb[0].mxu0
        %961 = vmatprep.mubr.f32.mxu0 0.0
        %962 = vmatmul.mubr.f32.gmra.mrb[0].mxu0 %v598
        %v963 = vpop.f32.mrb[0].mxu0
        %v964 = vadd.f32 %v739, %v963
        %v965 = vpop.f32.mrb[0].mxu0
        %966 = vmatprep.mubr.f32.mxu0 0.0
        %967 = vmatmul.mubr.f32.gmra.mrb[0].mxu0 %v599
        %v968 = vpop.f32.mrb[0].mxu0
        %v969 = vadd.f32 %v744, %v968
        %v970 = vpop.f32.mrb[0].mxu0
        %971 = vmatprep.mubr.f32.mxu0 0.0
        %972 = vmatmul.mubr.f32.gmra.mrb[0].mxu0 %v600
        %v973 = vpop.f32.mrb[0].mxu0
        %v974 = vadd.f32 %v749, %v973
        %v975 = vpop.f32.mrb[0].mxu0
        %976 = vmatprep.mubr.f32.mxu0 0.0
        %977 = vmatmul.mubr.f32.gmra.mrb[0].mxu0 %v601
        %v978 = vpop.f32.mrb[0].mxu0
        %v979 = vadd.f32 %v754, %v978
        %v980 = vpop.f32.mrb[0].mxu0
        %981 = vmatprep.mubr.f32.mxu0 0.0
        %982 = vmatmul.mubr.f32.gmra.mrb[0].mxu0 %v602
        %v983 = vpop.f32.mrb[0].mxu0
        %v984 = vadd.f32 %v759, %v983
        %v985 = vpop.f32.mrb[0].mxu0
        %986 = vmatprep.mubr.f32.mxu0 0.0
        %987 = vmatmul.mubr.f32.gmra.mrb[0].mxu0 %v603
        %v988 = vpop.f32.mrb[0].mxu0
        %v989 = vadd.f32 %v764, %v988
        %v990 = vpop.f32.mrb[0].mxu0
        %991 = vmatprep.mubr.f32.mxu0 0.0
        %992 = vmatmul.mubr.f32.gmra.mrb[0].mxu0 %v604
        %v993 = vpop.f32.mrb[0].mxu0
        %v994 = vadd.f32 %v769, %v993
        %v995 = vpop.f32.mrb[0].mxu0
        %996 = vmatprep.mubr.f32.mxu0 0.0
        %997 = vmatmul.mubr.f32.gmra.mrb[0].mxu0 %v605
        %v998 = vpop.f32.mrb[0].mxu0
        %v999 = vadd.f32 %v774, %v998
        %v1000 = vpop.f32.mrb[0].mxu0
        %1001 = vmatprep.mubr.f32.mxu0 0.0
        %1002 = vmatmul.mubr.f32.gmra.mrb[0].mxu0 %v606
        %v1003 = vpop.f32.mrb[0].mxu0
        %v1004 = vadd.f32 %v779, %v1003
        %v1005 = vpop.f32.mrb[0].mxu0
        %1006 = vmatprep.mubr.f32.mxu0 0.0
        %1007 = vmatmul.mubr.f32.gmra.mrb[0].mxu0 %v607
        %v1008 = vpop.f32.mrb[0].mxu0
        %v1009 = vadd.f32 %v784, %v1008
        %v1010 = vpop.f32.mrb[0].mxu0
        %1011 = vmatprep.mubr.f32.mxu0 0.0
        %1012 = vmatmul.mubr.f32.gmra.mrb[0].mxu0 %v608
        %v1013 = vpop.f32.mrb[0].mxu0
        %v1014 = vadd.f32 %v789, %v1013
        %v1015 = vpop.f32.mrb[0].mxu0
        %1016 = vmatprep.mubr.f32.mxu0 0.0
        %1017 = vmatmul.mubr.f32.gmra.mrb[0].mxu0 %v609
        %v1018 = vpop.f32.mrb[0].mxu0
        %v1019 = vadd.f32 %v794, %v1018
        %v1020 = vpop.f32.mrb[0].mxu0
        %1021 = vmatprep.mubr.f32.mxu0 0.0
        %1022 = vmatmul.mubr.f32.gmra.mrb[0].mxu0 %v610
        %v1023 = vpop.f32.mrb[0].mxu0
        %v1024 = vadd.f32 %v799, %v1023
        %v1025 = vpop.f32.mrb[0].mxu0
        %1026 = vmatprep.mubr.f32.mxu0 0.0
        %1027 = vmatmul.mubr.f32.gmra.mrb[0].mxu0 %v611
        %v1028 = vpop.f32.mrb[0].mxu0
        %v1029 = vadd.f32 %v804, %v1028
        %v1030 = vpop.f32.mrb[0].mxu0
        %1031 = vmatprep.mubr.f32.mxu0 0.0
        %1032 = vmatmul.mubr.f32.gmra.mrb[0].mxu0 %v612
        %v1033 = vpop.f32.mrb[0].mxu0
        %v1034 = vadd.f32 %v809, %v1033
        %v1035 = vpop.f32.mrb[0].mxu0
        %1036 = vmatprep.mubr.f32.mxu0 0.0
        %1037 = vmatmul.mubr.f32.gmra.mrb[0].mxu0 %v613
        %v1038 = vpop.f32.mrb[0].mxu0
        %v1039 = vadd.f32 %v814, %v1038
        %v1040 = vpop.f32.mrb[0].mxu0
        %1041 = vmatprep.mubr.f32.mxu0 0.0
        %1042 = vmatmul.mubr.f32.gmra.mrb[0].mxu0 %v614
        %v1043 = vpop.f32.mrb[0].mxu0
        %v1044 = vadd.f32 %v819, %v1043
        %v1045 = vpop.f32.mrb[0].mxu0
        %1046 = vmatprep.mubr.f32.mxu0 0.0
        %1047 = vmatmul.mubr.f32.gmra.mrb[0].mxu0 %v615
        %v1048 = vpop.f32.mrb[0].mxu0
        %v1049 = vadd.f32 %v824, %v1048
        %v1050 = vpop.f32.mrb[0].mxu0
        %1051 = vmatprep.mubr.f32.mxu0 0.0
        %1052 = vmatmul.mubr.f32.gmra.mrb[0].mxu0 %v616
        %v1053 = vpop.f32.mrb[0].mxu0
        %v1054 = vadd.f32 %v829, %v1053
        %v1055 = vpop.f32.mrb[0].mxu0
        %1056 = vmatprep.mubr.f32.mxu0 0.0
        %1057 = vmatmul.mubr.f32.gmra.mrb[0].mxu0 %v617
        %v1058 = vpop.f32.mrb[0].mxu0
        %v1059 = vadd.f32 %v834, %v1058
        %v1060 = vpop.f32.mrb[0].mxu0
        %1061 = vmatprep.mubr.f32.mxu0 0.0
        %1062 = vmatmul.mubr.f32.gmra.mrb[0].mxu0 %v618
        %v1063 = vpop.f32.mrb[0].mxu0
        %v1064 = vadd.f32 %v839, %v1063
        %v1065 = vpop.f32.mrb[0].mxu0
        %1066 = vmatprep.mubr.f32.mxu0 0.0
        %1067 = vmatmul.mubr.f32.gmra.mrb[0].mxu0 %v619
        %v1068 = vpop.f32.mrb[0].mxu0
        %v1069 = vadd.f32 %v844, %v1068
        %v1070 = vpop.f32.mrb[0].mxu0
        %1071 = vmatprep.mubr.f32.mxu0 0.0
        %1072 = vmatmul.mubr.f32.gmra.mrb[0].mxu0 %v620
        %v1073 = vpop.f32.mrb[0].mxu0
        %v1074 = vadd.f32 %v849, %v1073
        %v1075 = vpop.f32.mrb[0].mxu0
        %1076 = vmatprep.mubr.f32.mxu0 0.0
        %1077 = vmatmul.mubr.f32.gmra.mrb[0].mxu0 %v621
        %v1078 = vpop.f32.mrb[0].mxu0
        %v1079 = vadd.f32 %v854, %v1078
        %v1080 = vpop.f32.mrb[0].mxu0
        %1081 = vmatprep.mubr.f32.mxu0 0.0
        %1082 = vmatmul.mubr.f32.gmra.mrb[0].mxu0 %v622
        %v1083 = vpop.f32.mrb[0].mxu0
        %v1084 = vadd.f32 %v859, %v1083
        %v1085 = vpop.f32.mrb[0].mxu0
        %1086 = vmatprep.mubr.f32.mxu0 0.0
        %1087 = vmatmul.mubr.f32.gmra.mrb[0].mxu0 %v623
        %v1088 = vpop.f32.mrb[0].mxu0
        %v1089 = vadd.f32 %v864, %v1088
        %v1090 = vpop.f32.mrb[0].mxu0
        %1091 = vmatprep.mubr.f32.mxu0 0.0
        %1092 = vmatmul.mubr.f32.gmra.mrb[0].mxu0 %v624
        %v1093 = vpop.f32.mrb[0].mxu0
        %v1094 = vadd.f32 %v869, %v1093
        %v1095 = vpop.f32.mrb[0].mxu0
        %1096 = vmatprep.mubr.f32.mxu0 0.0
        %1097 = vmatmul.mubr.f32.gmra.mrb[0].mxu0 %v625
        %v1098 = vpop.f32.mrb[0].mxu0
        %v1099 = vadd.f32 %v874, %v1098
        %v1100 = vpop.f32.mrb[0].mxu0
        %1101 = vmatprep.mubr.f32.mxu0 0.0
        %1102 = vmatmul.mubr.f32.gmra.mrb[0].mxu0 %v626
        %v1103 = vpop.f32.mrb[0].mxu0
        %v1104 = vadd.f32 %v879, %v1103
        %v1105 = vpop.f32.mrb[0].mxu0
        %1106 = vmatprep.mubr.f32.mxu0 0.0
        %1107 = vmatmul.mubr.f32.gmra.mrb[0].mxu0 %v627
        %v1108 = vpop.f32.mrb[0].mxu0
        %v1109 = vadd.f32 %v884, %v1108
        %v1110 = vpop.f32.mrb[0].mxu0
        %1111 = vdwg.mxu0
        %v1112 = vld [vmem:[#allocation2 + $0x20] sm:$0xff]
        %v1113 = vld [vmem:[#allocation2 + $0x28] sm:$0xff]
        %v1114 = vld [vmem:[#allocation2 + $0x30] sm:$0xff]
        %v1115 = vld [vmem:[#allocation2 + $0x38] sm:$0xff]
        %v1116 = vld [vmem:[#allocation2 + $0x40] sm:$0xff]
        %v1117 = vld [vmem:[#allocation2 + $0x48] sm:$0xff]
        %v1118 = vld [vmem:[#allocation2 + $0x50] sm:$0xff]
        %v1119 = vld [vmem:[#allocation2 + $0x58] sm:$0xff]
        %v1120 = vld [vmem:[#allocation2 + $0x60] sm:$0xff]
        %v1121 = vld [vmem:[#allocation2 + $0x68] sm:$0xff]
        %v1122 = vld [vmem:[#allocation2 + $0x70] sm:$0xff]
        %v1123 = vld [vmem:[#allocation2 + $0x78] sm:$0xff]
        %v1124 = vld [vmem:[#allocation2 + $0x80] sm:$0xff]
        %v1125 = vld [vmem:[#allocation2 + $0x88] sm:$0xff]
        %v1126 = vld [vmem:[#allocation2 + $0x90] sm:$0xff]
        %v1127 = vld [vmem:[#allocation2 + $0x98] sm:$0xff]
        %v1128 = vld [vmem:[#allocation2 + $0xa0] sm:$0xff]
        %v1129 = vld [vmem:[#allocation2 + $0xa8] sm:$0xff]
        %v1130 = vld [vmem:[#allocation2 + $0xb0] sm:$0xff]
        %v1131 = vld [vmem:[#allocation2 + $0xb8] sm:$0xff]
        %v1132 = vld [vmem:[#allocation2 + $0xc0] sm:$0xff]
        %v1133 = vld [vmem:[#allocation2 + $0xc8] sm:$0xff]
        %v1134 = vld [vmem:[#allocation2 + $0xd0] sm:$0xff]
        %v1135 = vld [vmem:[#allocation2 + $0xd8] sm:$0xff]
        %v1136 = vld [vmem:[#allocation2 + $0xe0] sm:$0xff]
        %v1137 = vld [vmem:[#allocation2 + $0xe8] sm:$0xff]
        %v1138 = vld [vmem:[#allocation2 + $0xf0] sm:$0xff]
        %v1139 = vld [vmem:[#allocation2 + $0xf8] sm:$0xff]
        %v1140 = vld [vmem:[#allocation2 + $0x100] sm:$0xff]
        %v1141 = vld [vmem:[#allocation2 + $0x108] sm:$0xff]
        %v1142 = vld [vmem:[#allocation2 + $0x110] sm:$0xff]
        %v1143 = vld [vmem:[#allocation2 + $0x118] sm:$0xff]
        %v1144 = vld [vmem:[%s1 + $0x300] sm:$0xff]
        %v1145 = vld [vmem:[%s1 + $0x308] sm:$0xff]
        %v1146 = vld [vmem:[%s1 + $0x310] sm:$0xff]
        %v1147 = vld [vmem:[%s1 + $0x318] sm:$0xff]
        %v1148 = vld [vmem:[%s1 + $0x320] sm:$0xff]
        %v1149 = vld [vmem:[%s1 + $0x328] sm:$0xff]
        %v1150 = vld [vmem:[%s1 + $0x330] sm:$0xff]
        %v1151 = vld [vmem:[%s1 + $0x338] sm:$0xff]
        %v1152 = vld [vmem:[%s1 + $0x340] sm:$0xff]
        %v1153 = vld [vmem:[%s1 + $0x348] sm:$0xff]
        %v1154 = vld [vmem:[%s1 + $0x350] sm:$0xff]
        %v1155 = vld [vmem:[%s1 + $0x358] sm:$0xff]
        %v1156 = vld [vmem:[%s1 + $0x360] sm:$0xff]
        %v1157 = vld [vmem:[%s1 + $0x368] sm:$0xff]
        %v1158 = vld [vmem:[%s1 + $0x370] sm:$0xff]
        %v1159 = vld [vmem:[%s1 + $0x378] sm:$0xff]
        %1160 = vmatprep.subr.mxu0 0.0
        %1161 = vmatpush1.msra.mxu0 %v1144
        %1162 = vmatprep.subr.mxu0 0.0
        %1163 = vmatpush1.msra.mxu0 %v1145
        %1164 = vmatprep.subr.mxu0 0.0
        %1165 = vmatpush1.msra.mxu0 %v1146
        %1166 = vmatprep.subr.mxu0 0.0
        %1167 = vmatpush1.msra.mxu0 %v1147
        %1168 = vmatprep.subr.mxu0 0.0
        %1169 = vmatpush1.msra.mxu0 %v1148
        %1170 = vmatprep.subr.mxu0 0.0
        %1171 = vmatpush1.msra.mxu0 %v1149
        %1172 = vmatprep.subr.mxu0 0.0
        %1173 = vmatpush1.msra.mxu0 %v1150
        %1174 = vmatprep.subr.mxu0 0.0
        %1175 = vmatpush1.msra.mxu0 %v1151
        %1176 = vmatprep.subr.mxu0 0.0
        %1177 = vmatpush1.msra.mxu0 %v1152
        %1178 = vmatprep.subr.mxu0 0.0
        %1179 = vmatpush1.msra.mxu0 %v1153
        %1180 = vmatprep.subr.mxu0 0.0
        %1181 = vmatpush1.msra.mxu0 %v1154
        %1182 = vmatprep.subr.mxu0 0.0
        %1183 = vmatpush1.msra.mxu0 %v1155
        %1184 = vmatprep.subr.mxu0 0.0
        %1185 = vmatpush1.msra.mxu0 %v1156
        %1186 = vmatprep.subr.mxu0 0.0
        %1187 = vmatpush1.msra.mxu0 %v1157
        %1188 = vmatprep.subr.mxu0 0.0
        %1189 = vmatpush1.msra.mxu0 %v1158
        %1190 = vmatprep.subr.mxu0 0.0
        %1191 = vmatpush1.msra.mxu0 %v1159
        %1192 = vmatprep.subr.mxu0 0.0
        %1193 = vmatpush1.msra.mxu0 0.0
        %1194 = vmatprep.subr.mxu0 0.0
        %1195 = vmatpush1.msra.mxu0 0.0
        %1196 = vmatprep.subr.mxu0 0.0
        %1197 = vmatpush1.msra.mxu0 0.0
        %1198 = vmatprep.subr.mxu0 0.0
        %1199 = vmatpush1.msra.mxu0 0.0
        %1200 = vmatprep.subr.mxu0 0.0
        %1201 = vmatpush1.msra.mxu0 0.0
        %1202 = vmatprep.subr.mxu0 0.0
        %1203 = vmatpush1.msra.mxu0 0.0
        %1204 = vmatprep.subr.mxu0 0.0
        %1205 = vmatpush1.msra.mxu0 0.0
        %1206 = vmatprep.subr.mxu0 0.0
        %1207 = vmatpush1.msra.mxu0 0.0
        %1208 = vmatprep.subr.mxu0 0.0
        %1209 = vmatpush1.msra.mxu0 0.0
        %1210 = vmatprep.subr.mxu0 0.0
        %1211 = vmatpush1.msra.mxu0 0.0
        %1212 = vmatprep.subr.mxu0 0.0
        %1213 = vmatpush1.msra.mxu0 0.0
        %1214 = vmatprep.subr.mxu0 0.0
        %1215 = vmatpush1.msra.mxu0 0.0
        %1216 = vmatprep.subr.mxu0 0.0
        %1217 = vmatpush1.msra.mxu0 0.0
        %1218 = vmatprep.subr.mxu0 0.0
        %1219 = vmatpush1.msra.mxu0 0.0
        %1220 = vmatprep.subr.mxu0 0.0
        %1221 = vmatpush1.msra.mxu0 0.0
        %1222 = vmatprep.subr.mxu0 0.0
        %1223 = vmatpush1.msra.mxu0 0.0
        %1224 = vmatprep.mubr.f32.mxu0 0.0
        %1225 = vmatmul.mubr.f32.gmra.mrb[0].mxu0 %v1112
        %v1226 = vpop.f32.mrb[0].mxu0
        %v1227 = vadd.f32 0.0, %v1226
        %v1228 = vpop.f32.mrb[0].mxu0
        %1229 = vmatprep.mubr.f32.mxu0 0.0
        %1230 = vmatmul.mubr.f32.gmra.mrb[0].mxu0 %v1113
        %v1231 = vpop.f32.mrb[0].mxu0
        %v1232 = vadd.f32 0.0, %v1231
        %v1233 = vpop.f32.mrb[0].mxu0
        %1234 = vmatprep.mubr.f32.mxu0 0.0
        %1235 = vmatmul.mubr.f32.gmra.mrb[0].mxu0 %v1114
        %v1236 = vpop.f32.mrb[0].mxu0
        %v1237 = vadd.f32 0.0, %v1236
        %v1238 = vpop.f32.mrb[0].mxu0
        %1239 = vmatprep.mubr.f32.mxu0 0.0
        %1240 = vmatmul.mubr.f32.gmra.mrb[0].mxu0 %v1115
        %v1241 = vpop.f32.mrb[0].mxu0
        %v1242 = vadd.f32 0.0, %v1241
        %v1243 = vpop.f32.mrb[0].mxu0
        %1244 = vmatprep.mubr.f32.mxu0 0.0
        %1245 = vmatmul.mubr.f32.gmra.mrb[0].mxu0 %v1116
        %v1246 = vpop.f32.mrb[0].mxu0
        %v1247 = vadd.f32 0.0, %v1246
        %v1248 = vpop.f32.mrb[0].mxu0
        %1249 = vmatprep.mubr.f32.mxu0 0.0
        %1250 = vmatmul.mubr.f32.gmra.mrb[0].mxu0 %v1117
        %v1251 = vpop.f32.mrb[0].mxu0
        %v1252 = vadd.f32 0.0, %v1251
        %v1253 = vpop.f32.mrb[0].mxu0
        %1254 = vmatprep.mubr.f32.mxu0 0.0
        %1255 = vmatmul.mubr.f32.gmra.mrb[0].mxu0 %v1118
        %v1256 = vpop.f32.mrb[0].mxu0
        %v1257 = vadd.f32 0.0, %v1256
        %v1258 = vpop.f32.mrb[0].mxu0
        %1259 = vmatprep.mubr.f32.mxu0 0.0
        %1260 = vmatmul.mubr.f32.gmra.mrb[0].mxu0 %v1119
        %v1261 = vpop.f32.mrb[0].mxu0
        %v1262 = vadd.f32 0.0, %v1261
        %v1263 = vpop.f32.mrb[0].mxu0
        %1264 = vmatprep.mubr.f32.mxu0 0.0
        %1265 = vmatmul.mubr.f32.gmra.mrb[0].mxu0 %v1120
        %v1266 = vpop.f32.mrb[0].mxu0
        %v1267 = vadd.f32 0.0, %v1266
        %v1268 = vpop.f32.mrb[0].mxu0
        %1269 = vmatprep.mubr.f32.mxu0 0.0
        %1270 = vmatmul.mubr.f32.gmra.mrb[0].mxu0 %v1121
        %v1271 = vpop.f32.mrb[0].mxu0
        %v1272 = vadd.f32 0.0, %v1271
        %v1273 = vpop.f32.mrb[0].mxu0
        %1274 = vmatprep.mubr.f32.mxu0 0.0
        %1275 = vmatmul.mubr.f32.gmra.mrb[0].mxu0 %v1122
        %v1276 = vpop.f32.mrb[0].mxu0
        %v1277 = vadd.f32 0.0, %v1276
        %v1278 = vpop.f32.mrb[0].mxu0
        %1279 = vmatprep.mubr.f32.mxu0 0.0
        %1280 = vmatmul.mubr.f32.gmra.mrb[0].mxu0 %v1123
        %v1281 = vpop.f32.mrb[0].mxu0
        %v1282 = vadd.f32 0.0, %v1281
        %v1283 = vpop.f32.mrb[0].mxu0
        %1284 = vmatprep.mubr.f32.mxu0 0.0
        %1285 = vmatmul.mubr.f32.gmra.mrb[0].mxu0 %v1124
        %v1286 = vpop.f32.mrb[0].mxu0
        %v1287 = vadd.f32 0.0, %v1286
        %v1288 = vpop.f32.mrb[0].mxu0
        %1289 = vmatprep.mubr.f32.mxu0 0.0
        %1290 = vmatmul.mubr.f32.gmra.mrb[0].mxu0 %v1125
        %v1291 = vpop.f32.mrb[0].mxu0
        %v1292 = vadd.f32 0.0, %v1291
        %v1293 = vpop.f32.mrb[0].mxu0
        %1294 = vmatprep.mubr.f32.mxu0 0.0
        %1295 = vmatmul.mubr.f32.gmra.mrb[0].mxu0 %v1126
        %v1296 = vpop.f32.mrb[0].mxu0
        %v1297 = vadd.f32 0.0, %v1296
        %v1298 = vpop.f32.mrb[0].mxu0
        %1299 = vmatprep.mubr.f32.mxu0 0.0
        %1300 = vmatmul.mubr.f32.gmra.mrb[0].mxu0 %v1127
        %v1301 = vpop.f32.mrb[0].mxu0
        %v1302 = vadd.f32 0.0, %v1301
        %v1303 = vpop.f32.mrb[0].mxu0
        %1304 = vmatprep.mubr.f32.mxu0 0.0
        %1305 = vmatmul.mubr.f32.gmra.mrb[0].mxu0 %v1128
        %v1306 = vpop.f32.mrb[0].mxu0
        %v1307 = vadd.f32 0.0, %v1306
        %v1308 = vpop.f32.mrb[0].mxu0
        %1309 = vmatprep.mubr.f32.mxu0 0.0
        %1310 = vmatmul.mubr.f32.gmra.mrb[0].mxu0 %v1129
        %v1311 = vpop.f32.mrb[0].mxu0
        %v1312 = vadd.f32 0.0, %v1311
        %v1313 = vpop.f32.mrb[0].mxu0
        %1314 = vmatprep.mubr.f32.mxu0 0.0
        %1315 = vmatmul.mubr.f32.gmra.mrb[0].mxu0 %v1130
        %v1316 = vpop.f32.mrb[0].mxu0
        %v1317 = vadd.f32 0.0, %v1316
        %v1318 = vpop.f32.mrb[0].mxu0
        %1319 = vmatprep.mubr.f32.mxu0 0.0
        %1320 = vmatmul.mubr.f32.gmra.mrb[0].mxu0 %v1131
        %v1321 = vpop.f32.mrb[0].mxu0
        %v1322 = vadd.f32 0.0, %v1321
        %v1323 = vpop.f32.mrb[0].mxu0
        %1324 = vmatprep.mubr.f32.mxu0 0.0
        %1325 = vmatmul.mubr.f32.gmra.mrb[0].mxu0 %v1132
        %v1326 = vpop.f32.mrb[0].mxu0
        %v1327 = vadd.f32 0.0, %v1326
        %v1328 = vpop.f32.mrb[0].mxu0
        %1329 = vmatprep.mubr.f32.mxu0 0.0
        %1330 = vmatmul.mubr.f32.gmra.mrb[0].mxu0 %v1133
        %v1331 = vpop.f32.mrb[0].mxu0
        %v1332 = vadd.f32 0.0, %v1331
        %v1333 = vpop.f32.mrb[0].mxu0
        %1334 = vmatprep.mubr.f32.mxu0 0.0
        %1335 = vmatmul.mubr.f32.gmra.mrb[0].mxu0 %v1134
        %v1336 = vpop.f32.mrb[0].mxu0
        %v1337 = vadd.f32 0.0, %v1336
        %v1338 = vpop.f32.mrb[0].mxu0
        %1339 = vmatprep.mubr.f32.mxu0 0.0
        %1340 = vmatmul.mubr.f32.gmra.mrb[0].mxu0 %v1135
        %v1341 = vpop.f32.mrb[0].mxu0
        %v1342 = vadd.f32 0.0, %v1341
        %v1343 = vpop.f32.mrb[0].mxu0
        %1344 = vmatprep.mubr.f32.mxu0 0.0
        %1345 = vmatmul.mubr.f32.gmra.mrb[0].mxu0 %v1136
        %v1346 = vpop.f32.mrb[0].mxu0
        %v1347 = vadd.f32 0.0, %v1346
        %v1348 = vpop.f32.mrb[0].mxu0
        %1349 = vmatprep.mubr.f32.mxu0 0.0
        %1350 = vmatmul.mubr.f32.gmra.mrb[0].mxu0 %v1137
        %v1351 = vpop.f32.mrb[0].mxu0
        %v1352 = vadd.f32 0.0, %v1351
        %v1353 = vpop.f32.mrb[0].mxu0
        %1354 = vmatprep.mubr.f32.mxu0 0.0
        %1355 = vmatmul.mubr.f32.gmra.mrb[0].mxu0 %v1138
        %v1356 = vpop.f32.mrb[0].mxu0
        %v1357 = vadd.f32 0.0, %v1356
        %v1358 = vpop.f32.mrb[0].mxu0
        %1359 = vmatprep.mubr.f32.mxu0 0.0
        %1360 = vmatmul.mubr.f32.gmra.mrb[0].mxu0 %v1139
        %v1361 = vpop.f32.mrb[0].mxu0
        %v1362 = vadd.f32 0.0, %v1361
        %v1363 = vpop.f32.mrb[0].mxu0
        %1364 = vmatprep.mubr.f32.mxu0 0.0
        %1365 = vmatmul.mubr.f32.gmra.mrb[0].mxu0 %v1140
        %v1366 = vpop.f32.mrb[0].mxu0
        %v1367 = vadd.f32 0.0, %v1366
        %v1368 = vpop.f32.mrb[0].mxu0
        %1369 = vmatprep.mubr.f32.mxu0 0.0
        %1370 = vmatmul.mubr.f32.gmra.mrb[0].mxu0 %v1141
        %v1371 = vpop.f32.mrb[0].mxu0
        %v1372 = vadd.f32 0.0, %v1371
        %v1373 = vpop.f32.mrb[0].mxu0
        %1374 = vmatprep.mubr.f32.mxu0 0.0
        %1375 = vmatmul.mubr.f32.gmra.mrb[0].mxu0 %v1142
        %v1376 = vpop.f32.mrb[0].mxu0
        %v1377 = vadd.f32 0.0, %v1376
        %v1378 = vpop.f32.mrb[0].mxu0
        %1379 = vmatprep.mubr.f32.mxu0 0.0
        %1380 = vmatmul.mubr.f32.gmra.mrb[0].mxu0 %v1143
        %v1381 = vpop.f32.mrb[0].mxu0
        %v1382 = vadd.f32 0.0, %v1381
        %v1383 = vpop.f32.mrb[0].mxu0
        %1384 = vdwg.mxu0
        %v1385 = vadd.f32 %v954, %v1227
        %v1386 = vadd.f32 %v959, %v1232
        %v1387 = vadd.f32 %v964, %v1237
        %v1388 = vadd.f32 %v969, %v1242
        %v1389 = vadd.f32 %v974, %v1247
        %v1390 = vadd.f32 %v979, %v1252
        %v1391 = vadd.f32 %v984, %v1257
        %v1392 = vadd.f32 %v989, %v1262
        %v1393 = vadd.f32 %v994, %v1267
        %v1394 = vadd.f32 %v999, %v1272
        %v1395 = vadd.f32 %v1004, %v1277
        %v1396 = vadd.f32 %v1009, %v1282
        %v1397 = vadd.f32 %v1014, %v1287
        %v1398 = vadd.f32 %v1019, %v1292
        %v1399 = vadd.f32 %v1024, %v1297
        %v1400 = vadd.f32 %v1029, %v1302
        %v1401 = vadd.f32 %v1034, %v1307
        %v1402 = vadd.f32 %v1039, %v1312
        %v1403 = vadd.f32 %v1044, %v1317
        %v1404 = vadd.f32 %v1049, %v1322
        %v1405 = vadd.f32 %v1054, %v1327
        %v1406 = vadd.f32 %v1059, %v1332
        %v1407 = vadd.f32 %v1064, %v1337
        %v1408 = vadd.f32 %v1069, %v1342
        %v1409 = vadd.f32 %v1074, %v1347
        %v1410 = vadd.f32 %v1079, %v1352
        %v1411 = vadd.f32 %v1084, %v1357
        %v1412 = vadd.f32 %v1089, %v1362
        %v1413 = vadd.f32 %v1094, %v1367
        %v1414 = vadd.f32 %v1099, %v1372
        %v1415 = vadd.f32 %v1104, %v1377
        %v1416 = vadd.f32 %v1109, %v1382
        %v1417 = vsel %vm532, %v1385, 0.0
        %v1418 = vsel %vm533, %v1386, 0.0
        %v1419 = vsel %vm534, %v1387, 0.0
        %v1420 = vsel %vm535, %v1388, 0.0
        %v1421 = vsel %vm536, %v1389, 0.0
        %v1422 = vsel %vm537, %v1390, 0.0
        %v1423 = vsel %vm538, %v1391, 0.0
        %v1424 = vsel %vm539, %v1392, 0.0
        %v1425 = vsel %vm540, %v1393, 0.0
        %v1426 = vsel %vm541, %v1394, 0.0
        %v1427 = vsel %vm542, %v1395, 0.0
        %v1428 = vsel %vm543, %v1396, 0.0
        %v1429 = vsel %vm544, %v1397, 0.0
        %v1430 = vsel %vm545, %v1398, 0.0
        %v1431 = vsel %vm546, %v1399, 0.0
        %v1432 = vsel %vm547, %v1400, 0.0
        %v1433 = vsel %vm548, %v1401, 0.0
        %v1434 = vsel %vm549, %v1402, 0.0
        %v1435 = vsel %vm550, %v1403, 0.0
        %v1436 = vsel %vm551, %v1404, 0.0
        %v1437 = vsel %vm552, %v1405, 0.0
        %v1438 = vsel %vm553, %v1406, 0.0
        %v1439 = vsel %vm554, %v1407, 0.0
        %v1440 = vsel %vm555, %v1408, 0.0
        %v1441 = vsel %vm556, %v1409, 0.0
        %v1442 = vsel %vm557, %v1410, 0.0
        %v1443 = vsel %vm558, %v1411, 0.0
        %v1444 = vsel %vm559, %v1412, 0.0
        %v1445 = vsel %vm560, %v1413, 0.0
        %v1446 = vsel %vm561, %v1414, 0.0
        %v1447 = vsel %vm562, %v1415, 0.0
        %v1448 = vsel %vm563, %v1416, 0.0
        %v1449 = vadd.f32 %v1417, 0.0
        %v1450 = vadd.f32 %v1418, 0.0
        %v1451 = vadd.f32 %v1419, 0.0
        %v1452 = vadd.f32 %v1420, 0.0
        %v1453 = vadd.f32 %v1421, 0.0
        %v1454 = vadd.f32 %v1422, 0.0
        %v1455 = vadd.f32 %v1423, 0.0
        %v1456 = vadd.f32 %v1424, 0.0
        %v1457 = vadd.f32 %v1425, 0.0
        %v1458 = vadd.f32 %v1426, 0.0
        %v1459 = vadd.f32 %v1427, 0.0
        %v1460 = vadd.f32 %v1428, 0.0
        %v1461 = vadd.f32 %v1429, 0.0
        %v1462 = vadd.f32 %v1430, 0.0
        %v1463 = vadd.f32 %v1431, 0.0
        %v1464 = vadd.f32 %v1432, 0.0
        %v1465 = vadd.f32 %v1433, 0.0
        %v1466 = vadd.f32 %v1434, 0.0
        %v1467 = vadd.f32 %v1435, 0.0
        %v1468 = vadd.f32 %v1436, 0.0
        %v1469 = vadd.f32 %v1437, 0.0
        %v1470 = vadd.f32 %v1438, 0.0
        %v1471 = vadd.f32 %v1439, 0.0
        %v1472 = vadd.f32 %v1440, 0.0
        %v1473 = vadd.f32 %v1441, 0.0
        %v1474 = vadd.f32 %v1442, 0.0
        %v1475 = vadd.f32 %v1443, 0.0
        %v1476 = vadd.f32 %v1444, 0.0
        %v1477 = vadd.f32 %v1445, 0.0
        %v1478 = vadd.f32 %v1446, 0.0
        %v1479 = vadd.f32 %v1447, 0.0
        %v1480 = vadd.f32 %v1448, 0.0
        %v1481 = vld [vmem:[#allocation2 + $0x1] sm:$0xff]
        %v1482 = vld [vmem:[#allocation2 + $0x9] sm:$0xff]
        %v1483 = vld [vmem:[#allocation2 + $0x11] sm:$0xff]
        %v1484 = vld [vmem:[#allocation2 + $0x19] sm:$0xff]
        %v1485 = vld [vmem:[#allocation2 + $0x21] sm:$0xff]
        %v1486 = vld [vmem:[#allocation2 + $0x29] sm:$0xff]
        %v1487 = vld [vmem:[#allocation2 + $0x31] sm:$0xff]
        %v1488 = vld [vmem:[#allocation2 + $0x39] sm:$0xff]
        %v1489 = vld [vmem:[#allocation2 + $0x41] sm:$0xff]
        %v1490 = vld [vmem:[#allocation2 + $0x49] sm:$0xff]
        %v1491 = vld [vmem:[#allocation2 + $0x51] sm:$0xff]
        %v1492 = vld [vmem:[#allocation2 + $0x59] sm:$0xff]
        %v1493 = vld [vmem:[#allocation2 + $0x61] sm:$0xff]
        %v1494 = vld [vmem:[#allocation2 + $0x69] sm:$0xff]
        %v1495 = vld [vmem:[#allocation2 + $0x71] sm:$0xff]
        %v1496 = vld [vmem:[#allocation2 + $0x79] sm:$0xff]
        %v1497 = vld [vmem:[#allocation2 + $0x81] sm:$0xff]
        %v1498 = vld [vmem:[#allocation2 + $0x89] sm:$0xff]
        %v1499 = vld [vmem:[#allocation2 + $0x91] sm:$0xff]
        %v1500 = vld [vmem:[#allocation2 + $0x99] sm:$0xff]
        %v1501 = vld [vmem:[#allocation2 + $0xa1] sm:$0xff]
        %v1502 = vld [vmem:[#allocation2 + $0xa9] sm:$0xff]
        %v1503 = vld [vmem:[#allocation2 + $0xb1] sm:$0xff]
        %v1504 = vld [vmem:[#allocation2 + $0xb9] sm:$0xff]
        %v1505 = vld [vmem:[#allocation2 + $0xc1] sm:$0xff]
        %v1506 = vld [vmem:[#allocation2 + $0xc9] sm:$0xff]
        %v1507 = vld [vmem:[#allocation2 + $0xd1] sm:$0xff]
        %v1508 = vld [vmem:[#allocation2 + $0xd9] sm:$0xff]
        %v1509 = vld [vmem:[#allocation2 + $0xe1] sm:$0xff]
        %v1510 = vld [vmem:[#allocation2 + $0xe9] sm:$0xff]
        %v1511 = vld [vmem:[#allocation2 + $0xf1] sm:$0xff]
        %v1512 = vld [vmem:[#allocation2 + $0xf9] sm:$0xff]
        %v1513 = vld [vmem:[%s1 + $0x80] sm:$0xff]
        %v1514 = vld [vmem:[%s1 + $0x88] sm:$0xff]
        %v1515 = vld [vmem:[%s1 + $0x90] sm:$0xff]
        %v1516 = vld [vmem:[%s1 + $0x98] sm:$0xff]
        %v1517 = vld [vmem:[%s1 + $0xa0] sm:$0xff]
        %v1518 = vld [vmem:[%s1 + $0xa8] sm:$0xff]
        %v1519 = vld [vmem:[%s1 + $0xb0] sm:$0xff]
        %v1520 = vld [vmem:[%s1 + $0xb8] sm:$0xff]
        %v1521 = vld [vmem:[%s1 + $0xc0] sm:$0xff]
        %v1522 = vld [vmem:[%s1 + $0xc8] sm:$0xff]
        %v1523 = vld [vmem:[%s1 + $0xd0] sm:$0xff]
        %v1524 = vld [vmem:[%s1 + $0xd8] sm:$0xff]
        %v1525 = vld [vmem:[%s1 + $0xe0] sm:$0xff]
        %v1526 = vld [vmem:[%s1 + $0xe8] sm:$0xff]
        %v1527 = vld [vmem:[%s1 + $0xf0] sm:$0xff]
        %v1528 = vld [vmem:[%s1 + $0xf8] sm:$0xff]
        %v1529 = vld [vmem:[#allocation2 + $0x101] sm:$0xff]
        %v1530 = vld [vmem:[#allocation2 + $0x109] sm:$0xff]
        %v1531 = vld [vmem:[%s1 + $0x200] sm:$0xff]
        %v1532 = vld [vmem:[%s1 + $0x208] sm:$0xff]
        %v1533 = vld [vmem:[%s1 + $0x210] sm:$0xff]
        %v1534 = vld [vmem:[%s1 + $0x218] sm:$0xff]
        %v1535 = vld [vmem:[%s1 + $0x220] sm:$0xff]
        %v1536 = vld [vmem:[%s1 + $0x228] sm:$0xff]
        %v1537 = vld [vmem:[%s1 + $0x230] sm:$0xff]
        %v1538 = vld [vmem:[%s1 + $0x238] sm:$0xff]
        %v1539 = vld [vmem:[%s1 + $0x240] sm:$0xff]
        %v1540 = vld [vmem:[%s1 + $0x248] sm:$0xff]
        %v1541 = vld [vmem:[%s1 + $0x250] sm:$0xff]
        %v1542 = vld [vmem:[%s1 + $0x258] sm:$0xff]
        %v1543 = vld [vmem:[%s1 + $0x260] sm:$0xff]
        %v1544 = vld [vmem:[%s1 + $0x268] sm:$0xff]
        %v1545 = vld [vmem:[%s1 + $0x270] sm:$0xff]
        %v1546 = vld [vmem:[%s1 + $0x278] sm:$0xff]
        %1547 = vmatprep.subr.mxu0 0.0
        %1548 = vmatpush1.msra.mxu0 %v1531
        %1549 = vmatprep.subr.mxu0 0.0
        %1550 = vmatpush1.msra.mxu0 %v1532
        %1551 = vmatprep.subr.mxu0 0.0
        %1552 = vmatpush1.msra.mxu0 %v1533
        %1553 = vmatprep.subr.mxu0 0.0
        %1554 = vmatpush1.msra.mxu0 %v1534
        %1555 = vmatprep.subr.mxu0 0.0
        %1556 = vmatpush1.msra.mxu0 %v1535
        %1557 = vmatprep.subr.mxu0 0.0
        %1558 = vmatpush1.msra.mxu0 %v1536
        %1559 = vmatprep.subr.mxu0 0.0
        %1560 = vmatpush1.msra.mxu0 %v1537
        %1561 = vmatprep.subr.mxu0 0.0
        %1562 = vmatpush1.msra.mxu0 %v1538
        %1563 = vmatprep.subr.mxu0 0.0
        %1564 = vmatpush1.msra.mxu0 %v1539
        %1565 = vmatprep.subr.mxu0 0.0
        %1566 = vmatpush1.msra.mxu0 %v1540
        %1567 = vmatprep.subr.mxu0 0.0
        %1568 = vmatpush1.msra.mxu0 %v1541
        %1569 = vmatprep.subr.mxu0 0.0
        %1570 = vmatpush1.msra.mxu0 %v1542
        %1571 = vmatprep.subr.mxu0 0.0
        %1572 = vmatpush1.msra.mxu0 %v1543
        %1573 = vmatprep.subr.mxu0 0.0
        %1574 = vmatpush1.msra.mxu0 %v1544
        %1575 = vmatprep.subr.mxu0 0.0
        %1576 = vmatpush1.msra.mxu0 %v1545
        %1577 = vmatprep.subr.mxu0 0.0
        %1578 = vmatpush1.msra.mxu0 %v1546
        %1579 = vmatprep.subr.mxu0 0.0
        %1580 = vmatpush1.msra.mxu0 0.0
        %1581 = vmatprep.subr.mxu0 0.0
        %1582 = vmatpush1.msra.mxu0 0.0
        %1583 = vmatprep.subr.mxu0 0.0
        %1584 = vmatpush1.msra.mxu0 0.0
        %1585 = vmatprep.subr.mxu0 0.0
        %1586 = vmatpush1.msra.mxu0 0.0
        %1587 = vmatprep.subr.mxu0 0.0
        %1588 = vmatpush1.msra.mxu0 0.0
        %1589 = vmatprep.subr.mxu0 0.0
        %1590 = vmatpush1.msra.mxu0 0.0
        %1591 = vmatprep.subr.mxu0 0.0
        %1592 = vmatpush1.msra.mxu0 0.0
        %1593 = vmatprep.subr.mxu0 0.0
        %1594 = vmatpush1.msra.mxu0 0.0
        %1595 = vmatprep.subr.mxu0 0.0
        %1596 = vmatpush1.msra.mxu0 0.0
        %1597 = vmatprep.subr.mxu0 0.0
        %1598 = vmatpush1.msra.mxu0 0.0
        %1599 = vmatprep.subr.mxu0 0.0
        %1600 = vmatpush1.msra.mxu0 0.0
        %1601 = vmatprep.subr.mxu0 0.0
        %1602 = vmatpush1.msra.mxu0 0.0
        %1603 = vmatprep.subr.mxu0 0.0
        %1604 = vmatpush1.msra.mxu0 0.0
        %1605 = vmatprep.subr.mxu0 0.0
        %1606 = vmatpush1.msra.mxu0 0.0
        %1607 = vmatprep.subr.mxu0 0.0
        %1608 = vmatpush1.msra.mxu0 0.0
        %1609 = vmatprep.subr.mxu0 0.0
        %1610 = vmatpush1.msra.mxu0 0.0
        %1611 = vmatprep.mubr.f32.mxu0 0.0
        %1612 = vmatmul.mubr.f32.gmra.mrb[0].mxu0 %v1483
        %v1613 = vpop.f32.mrb[0].mxu0
        %v1614 = vadd.f32 0.0, %v1613
        %v1615 = vpop.f32.mrb[0].mxu0
        %1616 = vmatprep.mubr.f32.mxu0 0.0
        %1617 = vmatmul.mubr.f32.gmra.mrb[0].mxu0 %v1484
        %v1618 = vpop.f32.mrb[0].mxu0
        %v1619 = vadd.f32 0.0, %v1618
        %v1620 = vpop.f32.mrb[0].mxu0
        %1621 = vmatprep.mubr.f32.mxu0 0.0
        %1622 = vmatmul.mubr.f32.gmra.mrb[0].mxu0 %v1485
        %v1623 = vpop.f32.mrb[0].mxu0
        %v1624 = vadd.f32 0.0, %v1623
        %v1625 = vpop.f32.mrb[0].mxu0
        %1626 = vmatprep.mubr.f32.mxu0 0.0
        %1627 = vmatmul.mubr.f32.gmra.mrb[0].mxu0 %v1486
        %v1628 = vpop.f32.mrb[0].mxu0
        %v1629 = vadd.f32 0.0, %v1628
        %v1630 = vpop.f32.mrb[0].mxu0
        %1631 = vmatprep.mubr.f32.mxu0 0.0
        %1632 = vmatmul.mubr.f32.gmra.mrb[0].mxu0 %v1487
        %v1633 = vpop.f32.mrb[0].mxu0
        %v1634 = vadd.f32 0.0, %v1633
        %v1635 = vpop.f32.mrb[0].mxu0
        %1636 = vmatprep.mubr.f32.mxu0 0.0
        %1637 = vmatmul.mubr.f32.gmra.mrb[0].mxu0 %v1488
        %v1638 = vpop.f32.mrb[0].mxu0
        %v1639 = vadd.f32 0.0, %v1638
        %v1640 = vpop.f32.mrb[0].mxu0
        %1641 = vmatprep.mubr.f32.mxu0 0.0
        %1642 = vmatmul.mubr.f32.gmra.mrb[0].mxu0 %v1489
        %v1643 = vpop.f32.mrb[0].mxu0
        %v1644 = vadd.f32 0.0, %v1643
        %v1645 = vpop.f32.mrb[0].mxu0
        %1646 = vmatprep.mubr.f32.mxu0 0.0
        %1647 = vmatmul.mubr.f32.gmra.mrb[0].mxu0 %v1490
        %v1648 = vpop.f32.mrb[0].mxu0
        %v1649 = vadd.f32 0.0, %v1648
        %v1650 = vpop.f32.mrb[0].mxu0
        %1651 = vmatprep.mubr.f32.mxu0 0.0
        %1652 = vmatmul.mubr.f32.gmra.mrb[0].mxu0 %v1491
        %v1653 = vpop.f32.mrb[0].mxu0
        %v1654 = vadd.f32 0.0, %v1653
        %v1655 = vpop.f32.mrb[0].mxu0
        %1656 = vmatprep.mubr.f32.mxu0 0.0
        %1657 = vmatmul.mubr.f32.gmra.mrb[0].mxu0 %v1492
        %v1658 = vpop.f32.mrb[0].mxu0
        %v1659 = vadd.f32 0.0, %v1658
        %v1660 = vpop.f32.mrb[0].mxu0
        %1661 = vmatprep.mubr.f32.mxu0 0.0
        %1662 = vmatmul.mubr.f32.gmra.mrb[0].mxu0 %v1493
        %v1663 = vpop.f32.mrb[0].mxu0
        %v1664 = vadd.f32 0.0, %v1663
        %v1665 = vpop.f32.mrb[0].mxu0
        %1666 = vmatprep.mubr.f32.mxu0 0.0
        %1667 = vmatmul.mubr.f32.gmra.mrb[0].mxu0 %v1494
        %v1668 = vpop.f32.mrb[0].mxu0
        %v1669 = vadd.f32 0.0, %v1668
        %v1670 = vpop.f32.mrb[0].mxu0
        %1671 = vmatprep.mubr.f32.mxu0 0.0
        %1672 = vmatmul.mubr.f32.gmra.mrb[0].mxu0 %v1495
        %v1673 = vpop.f32.mrb[0].mxu0
        %v1674 = vadd.f32 0.0, %v1673
        %v1675 = vpop.f32.mrb[0].mxu0
        %1676 = vmatprep.mubr.f32.mxu0 0.0
        %1677 = vmatmul.mubr.f32.gmra.mrb[0].mxu0 %v1496
        %v1678 = vpop.f32.mrb[0].mxu0
        %v1679 = vadd.f32 0.0, %v1678
        %v1680 = vpop.f32.mrb[0].mxu0
        %1681 = vmatprep.mubr.f32.mxu0 0.0
        %1682 = vmatmul.mubr.f32.gmra.mrb[0].mxu0 %v1497
        %v1683 = vpop.f32.mrb[0].mxu0
        %v1684 = vadd.f32 0.0, %v1683
        %v1685 = vpop.f32.mrb[0].mxu0
        %1686 = vmatprep.mubr.f32.mxu0 0.0
        %1687 = vmatmul.mubr.f32.gmra.mrb[0].mxu0 %v1498
        %v1688 = vpop.f32.mrb[0].mxu0
        %v1689 = vadd.f32 0.0, %v1688
        %v1690 = vpop.f32.mrb[0].mxu0
        %1691 = vmatprep.mubr.f32.mxu0 0.0
        %1692 = vmatmul.mubr.f32.gmra.mrb[0].mxu0 %v1499
        %v1693 = vpop.f32.mrb[0].mxu0
        %v1694 = vadd.f32 0.0, %v1693
        %v1695 = vpop.f32.mrb[0].mxu0
        %1696 = vmatprep.mubr.f32.mxu0 0.0
        %1697 = vmatmul.mubr.f32.gmra.mrb[0].mxu0 %v1500
        %v1698 = vpop.f32.mrb[0].mxu0
        %v1699 = vadd.f32 0.0, %v1698
        %v1700 = vpop.f32.mrb[0].mxu0
        %1701 = vmatprep.mubr.f32.mxu0 0.0
        %1702 = vmatmul.mubr.f32.gmra.mrb[0].mxu0 %v1501
        %v1703 = vpop.f32.mrb[0].mxu0
        %v1704 = vadd.f32 0.0, %v1703
        %v1705 = vpop.f32.mrb[0].mxu0
        %1706 = vmatprep.mubr.f32.mxu0 0.0
        %1707 = vmatmul.mubr.f32.gmra.mrb[0].mxu0 %v1502
        %v1708 = vpop.f32.mrb[0].mxu0
        %v1709 = vadd.f32 0.0, %v1708
        %v1710 = vpop.f32.mrb[0].mxu0
        %1711 = vmatprep.mubr.f32.mxu0 0.0
        %1712 = vmatmul.mubr.f32.gmra.mrb[0].mxu0 %v1503
        %v1713 = vpop.f32.mrb[0].mxu0
        %v1714 = vadd.f32 0.0, %v1713
        %v1715 = vpop.f32.mrb[0].mxu0
        %1716 = vmatprep.mubr.f32.mxu0 0.0
        %1717 = vmatmul.mubr.f32.gmra.mrb[0].mxu0 %v1504
        %v1718 = vpop.f32.mrb[0].mxu0
        %v1719 = vadd.f32 0.0, %v1718
        %v1720 = vpop.f32.mrb[0].mxu0
        %1721 = vmatprep.mubr.f32.mxu0 0.0
        %1722 = vmatmul.mubr.f32.gmra.mrb[0].mxu0 %v1505
        %v1723 = vpop.f32.mrb[0].mxu0
        %v1724 = vadd.f32 0.0, %v1723
        %v1725 = vpop.f32.mrb[0].mxu0
        %1726 = vmatprep.mubr.f32.mxu0 0.0
        %1727 = vmatmul.mubr.f32.gmra.mrb[0].mxu0 %v1506
        %v1728 = vpop.f32.mrb[0].mxu0
        %v1729 = vadd.f32 0.0, %v1728
        %v1730 = vpop.f32.mrb[0].mxu0
        %1731 = vmatprep.mubr.f32.mxu0 0.0
        %1732 = vmatmul.mubr.f32.gmra.mrb[0].mxu0 %v1507
        %v1733 = vpop.f32.mrb[0].mxu0
        %v1734 = vadd.f32 0.0, %v1733
        %v1735 = vpop.f32.mrb[0].mxu0
        %1736 = vmatprep.mubr.f32.mxu0 0.0
        %1737 = vmatmul.mubr.f32.gmra.mrb[0].mxu0 %v1508
        %v1738 = vpop.f32.mrb[0].mxu0
        %v1739 = vadd.f32 0.0, %v1738
        %v1740 = vpop.f32.mrb[0].mxu0
        %1741 = vmatprep.mubr.f32.mxu0 0.0
        %1742 = vmatmul.mubr.f32.gmra.mrb[0].mxu0 %v1509
        %v1743 = vpop.f32.mrb[0].mxu0
        %v1744 = vadd.f32 0.0, %v1743
        %v1745 = vpop.f32.mrb[0].mxu0
        %1746 = vmatprep.mubr.f32.mxu0 0.0
        %1747 = vmatmul.mubr.f32.gmra.mrb[0].mxu0 %v1510
        %v1748 = vpop.f32.mrb[0].mxu0
        %v1749 = vadd.f32 0.0, %v1748
        %v1750 = vpop.f32.mrb[0].mxu0
        %1751 = vmatprep.mubr.f32.mxu0 0.0
        %1752 = vmatmul.mubr.f32.gmra.mrb[0].mxu0 %v1511
        %v1753 = vpop.f32.mrb[0].mxu0
        %v1754 = vadd.f32 0.0, %v1753
        %v1755 = vpop.f32.mrb[0].mxu0
        %1756 = vmatprep.mubr.f32.mxu0 0.0
        %1757 = vmatmul.mubr.f32.gmra.mrb[0].mxu0 %v1512
        %v1758 = vpop.f32.mrb[0].mxu0
        %v1759 = vadd.f32 0.0, %v1758
        %v1760 = vpop.f32.mrb[0].mxu0
        %1761 = vmatprep.mubr.f32.mxu0 0.0
        %1762 = vmatmul.mubr.f32.gmra.mrb[0].mxu0 %v1529
        %v1763 = vpop.f32.mrb[0].mxu0
        %v1764 = vadd.f32 0.0, %v1763
        %v1765 = vpop.f32.mrb[0].mxu0
        %1766 = vmatprep.mubr.f32.mxu0 0.0
        %1767 = vmatmul.mubr.f32.gmra.mrb[0].mxu0 %v1530
        %v1768 = vpop.f32.mrb[0].mxu0
        %v1769 = vadd.f32 0.0, %v1768
        %v1770 = vpop.f32.mrb[0].mxu0
        %1771 = vdwg.mxu0
        %1772 = vmatprep.subr.mxu0 0.0
        %1773 = vmatpush1.msra.mxu0 %v1513
        %1774 = vmatprep.subr.mxu0 0.0
        %1775 = vmatpush1.msra.mxu0 %v1514
        %1776 = vmatprep.subr.mxu0 0.0
        %1777 = vmatpush1.msra.mxu0 %v1515
        %1778 = vmatprep.subr.mxu0 0.0
        %1779 = vmatpush1.msra.mxu0 %v1516
        %1780 = vmatprep.subr.mxu0 0.0
        %1781 = vmatpush1.msra.mxu0 %v1517
        %1782 = vmatprep.subr.mxu0 0.0
        %1783 = vmatpush1.msra.mxu0 %v1518
        %1784 = vmatprep.subr.mxu0 0.0
        %1785 = vmatpush1.msra.mxu0 %v1519
        %1786 = vmatprep.subr.mxu0 0.0
        %1787 = vmatpush1.msra.mxu0 %v1520
        %1788 = vmatprep.subr.mxu0 0.0
        %1789 = vmatpush1.msra.mxu0 %v1521
        %1790 = vmatprep.subr.mxu0 0.0
        %1791 = vmatpush1.msra.mxu0 %v1522
        %1792 = vmatprep.subr.mxu0 0.0
        %1793 = vmatpush1.msra.mxu0 %v1523
        %1794 = vmatprep.subr.mxu0 0.0
        %1795 = vmatpush1.msra.mxu0 %v1524
        %1796 = vmatprep.subr.mxu0 0.0
        %1797 = vmatpush1.msra.mxu0 %v1525
        %1798 = vmatprep.subr.mxu0 0.0
        %1799 = vmatpush1.msra.mxu0 %v1526
        %1800 = vmatprep.subr.mxu0 0.0
        %1801 = vmatpush1.msra.mxu0 %v1527
        %1802 = vmatprep.subr.mxu0 0.0
        %1803 = vmatpush1.msra.mxu0 %v1528
        %1804 = vmatprep.subr.mxu0 0.0
        %1805 = vmatpush1.msra.mxu0 0.0
        %1806 = vmatprep.subr.mxu0 0.0
        %1807 = vmatpush1.msra.mxu0 0.0
        %1808 = vmatprep.subr.mxu0 0.0
        %1809 = vmatpush1.msra.mxu0 0.0
        %1810 = vmatprep.subr.mxu0 0.0
        %1811 = vmatpush1.msra.mxu0 0.0
        %1812 = vmatprep.subr.mxu0 0.0
        %1813 = vmatpush1.msra.mxu0 0.0
        %1814 = vmatprep.subr.mxu0 0.0
        %1815 = vmatpush1.msra.mxu0 0.0
        %1816 = vmatprep.subr.mxu0 0.0
        %1817 = vmatpush1.msra.mxu0 0.0
        %1818 = vmatprep.subr.mxu0 0.0
        %1819 = vmatpush1.msra.mxu0 0.0
        %1820 = vmatprep.subr.mxu0 0.0
        %1821 = vmatpush1.msra.mxu0 0.0
        %1822 = vmatprep.subr.mxu0 0.0
        %1823 = vmatpush1.msra.mxu0 0.0
        %1824 = vmatprep.subr.mxu0 0.0
        %1825 = vmatpush1.msra.mxu0 0.0
        %1826 = vmatprep.subr.mxu0 0.0
        %1827 = vmatpush1.msra.mxu0 0.0
        %1828 = vmatprep.subr.mxu0 0.0
        %1829 = vmatpush1.msra.mxu0 0.0
        %1830 = vmatprep.subr.mxu0 0.0
        %1831 = vmatpush1.msra.mxu0 0.0
        %1832 = vmatprep.subr.mxu0 0.0
        %1833 = vmatpush1.msra.mxu0 0.0
        %1834 = vmatprep.subr.mxu0 0.0
        %1835 = vmatpush1.msra.mxu0 0.0
        %1836 = vmatprep.mubr.f32.mxu0 0.0
        %1837 = vmatmul.mubr.f32.gmra.mrb[0].mxu0 %v1481
        %v1838 = vpop.f32.mrb[0].mxu0
        %v1839 = vadd.f32 %v1614, %v1838
        %v1840 = vpop.f32.mrb[0].mxu0
        %1841 = vmatprep.mubr.f32.mxu0 0.0
        %1842 = vmatmul.mubr.f32.gmra.mrb[0].mxu0 %v1482
        %v1843 = vpop.f32.mrb[0].mxu0
        %v1844 = vadd.f32 %v1619, %v1843
        %v1845 = vpop.f32.mrb[0].mxu0
        %1846 = vmatprep.mubr.f32.mxu0 0.0
        %1847 = vmatmul.mubr.f32.gmra.mrb[0].mxu0 %v1483
        %v1848 = vpop.f32.mrb[0].mxu0
        %v1849 = vadd.f32 %v1624, %v1848
        %v1850 = vpop.f32.mrb[0].mxu0
        %1851 = vmatprep.mubr.f32.mxu0 0.0
        %1852 = vmatmul.mubr.f32.gmra.mrb[0].mxu0 %v1484
        %v1853 = vpop.f32.mrb[0].mxu0
        %v1854 = vadd.f32 %v1629, %v1853
        %v1855 = vpop.f32.mrb[0].mxu0
        %1856 = vmatprep.mubr.f32.mxu0 0.0
        %1857 = vmatmul.mubr.f32.gmra.mrb[0].mxu0 %v1485
        %v1858 = vpop.f32.mrb[0].mxu0
        %v1859 = vadd.f32 %v1634, %v1858
        %v1860 = vpop.f32.mrb[0].mxu0
        %1861 = vmatprep.mubr.f32.mxu0 0.0
        %1862 = vmatmul.mubr.f32.gmra.mrb[0].mxu0 %v1486
        %v1863 = vpop.f32.mrb[0].mxu0
        %v1864 = vadd.f32 %v1639, %v1863
        %v1865 = vpop.f32.mrb[0].mxu0
        %1866 = vmatprep.mubr.f32.mxu0 0.0
        %1867 = vmatmul.mubr.f32.gmra.mrb[0].mxu0 %v1487
        %v1868 = vpop.f32.mrb[0].mxu0
        %v1869 = vadd.f32 %v1644, %v1868
        %v1870 = vpop.f32.mrb[0].mxu0
        %1871 = vmatprep.mubr.f32.mxu0 0.0
        %1872 = vmatmul.mubr.f32.gmra.mrb[0].mxu0 %v1488
        %v1873 = vpop.f32.mrb[0].mxu0
        %v1874 = vadd.f32 %v1649, %v1873
        %v1875 = vpop.f32.mrb[0].mxu0
        %1876 = vmatprep.mubr.f32.mxu0 0.0
        %1877 = vmatmul.mubr.f32.gmra.mrb[0].mxu0 %v1489
        %v1878 = vpop.f32.mrb[0].mxu0
        %v1879 = vadd.f32 %v1654, %v1878
        %v1880 = vpop.f32.mrb[0].mxu0
        %1881 = vmatprep.mubr.f32.mxu0 0.0
        %1882 = vmatmul.mubr.f32.gmra.mrb[0].mxu0 %v1490
        %v1883 = vpop.f32.mrb[0].mxu0
        %v1884 = vadd.f32 %v1659, %v1883
        %v1885 = vpop.f32.mrb[0].mxu0
        %1886 = vmatprep.mubr.f32.mxu0 0.0
        %1887 = vmatmul.mubr.f32.gmra.mrb[0].mxu0 %v1491
        %v1888 = vpop.f32.mrb[0].mxu0
        %v1889 = vadd.f32 %v1664, %v1888
        %v1890 = vpop.f32.mrb[0].mxu0
        %1891 = vmatprep.mubr.f32.mxu0 0.0
        %1892 = vmatmul.mubr.f32.gmra.mrb[0].mxu0 %v1492
        %v1893 = vpop.f32.mrb[0].mxu0
        %v1894 = vadd.f32 %v1669, %v1893
        %v1895 = vpop.f32.mrb[0].mxu0
        %1896 = vmatprep.mubr.f32.mxu0 0.0
        %1897 = vmatmul.mubr.f32.gmra.mrb[0].mxu0 %v1493
        %v1898 = vpop.f32.mrb[0].mxu0
        %v1899 = vadd.f32 %v1674, %v1898
        %v1900 = vpop.f32.mrb[0].mxu0
        %1901 = vmatprep.mubr.f32.mxu0 0.0
        %1902 = vmatmul.mubr.f32.gmra.mrb[0].mxu0 %v1494
        %v1903 = vpop.f32.mrb[0].mxu0
        %v1904 = vadd.f32 %v1679, %v1903
        %v1905 = vpop.f32.mrb[0].mxu0
        %1906 = vmatprep.mubr.f32.mxu0 0.0
        %1907 = vmatmul.mubr.f32.gmra.mrb[0].mxu0 %v1495
        %v1908 = vpop.f32.mrb[0].mxu0
        %v1909 = vadd.f32 %v1684, %v1908
        %v1910 = vpop.f32.mrb[0].mxu0
        %1911 = vmatprep.mubr.f32.mxu0 0.0
        %1912 = vmatmul.mubr.f32.gmra.mrb[0].mxu0 %v1496
        %v1913 = vpop.f32.mrb[0].mxu0
        %v1914 = vadd.f32 %v1689, %v1913
        %v1915 = vpop.f32.mrb[0].mxu0
        %1916 = vmatprep.mubr.f32.mxu0 0.0
        %1917 = vmatmul.mubr.f32.gmra.mrb[0].mxu0 %v1497
        %v1918 = vpop.f32.mrb[0].mxu0
        %v1919 = vadd.f32 %v1694, %v1918
        %v1920 = vpop.f32.mrb[0].mxu0
        %1921 = vmatprep.mubr.f32.mxu0 0.0
        %1922 = vmatmul.mubr.f32.gmra.mrb[0].mxu0 %v1498
        %v1923 = vpop.f32.mrb[0].mxu0
        %v1924 = vadd.f32 %v1699, %v1923
        %v1925 = vpop.f32.mrb[0].mxu0
        %1926 = vmatprep.mubr.f32.mxu0 0.0
        %1927 = vmatmul.mubr.f32.gmra.mrb[0].mxu0 %v1499
        %v1928 = vpop.f32.mrb[0].mxu0
        %v1929 = vadd.f32 %v1704, %v1928
        %v1930 = vpop.f32.mrb[0].mxu0
        %1931 = vmatprep.mubr.f32.mxu0 0.0
        %1932 = vmatmul.mubr.f32.gmra.mrb[0].mxu0 %v1500
        %v1933 = vpop.f32.mrb[0].mxu0
        %v1934 = vadd.f32 %v1709, %v1933
        %v1935 = vpop.f32.mrb[0].mxu0
        %1936 = vmatprep.mubr.f32.mxu0 0.0
        %1937 = vmatmul.mubr.f32.gmra.mrb[0].mxu0 %v1501
        %v1938 = vpop.f32.mrb[0].mxu0
        %v1939 = vadd.f32 %v1714, %v1938
        %v1940 = vpop.f32.mrb[0].mxu0
        %1941 = vmatprep.mubr.f32.mxu0 0.0
        %1942 = vmatmul.mubr.f32.gmra.mrb[0].mxu0 %v1502
        %v1943 = vpop.f32.mrb[0].mxu0
        %v1944 = vadd.f32 %v1719, %v1943
        %v1945 = vpop.f32.mrb[0].mxu0
        %1946 = vmatprep.mubr.f32.mxu0 0.0
        %1947 = vmatmul.mubr.f32.gmra.mrb[0].mxu0 %v1503
        %v1948 = vpop.f32.mrb[0].mxu0
        %v1949 = vadd.f32 %v1724, %v1948
        %v1950 = vpop.f32.mrb[0].mxu0
        %1951 = vmatprep.mubr.f32.mxu0 0.0
        %1952 = vmatmul.mubr.f32.gmra.mrb[0].mxu0 %v1504
        %v1953 = vpop.f32.mrb[0].mxu0
        %v1954 = vadd.f32 %v1729, %v1953
        %v1955 = vpop.f32.mrb[0].mxu0
        %1956 = vmatprep.mubr.f32.mxu0 0.0
        %1957 = vmatmul.mubr.f32.gmra.mrb[0].mxu0 %v1505
        %v1958 = vpop.f32.mrb[0].mxu0
        %v1959 = vadd.f32 %v1734, %v1958
        %v1960 = vpop.f32.mrb[0].mxu0
        %1961 = vmatprep.mubr.f32.mxu0 0.0
        %1962 = vmatmul.mubr.f32.gmra.mrb[0].mxu0 %v1506
        %v1963 = vpop.f32.mrb[0].mxu0
        %v1964 = vadd.f32 %v1739, %v1963
        %v1965 = vpop.f32.mrb[0].mxu0
        %1966 = vmatprep.mubr.f32.mxu0 0.0
        %1967 = vmatmul.mubr.f32.gmra.mrb[0].mxu0 %v1507
        %v1968 = vpop.f32.mrb[0].mxu0
        %v1969 = vadd.f32 %v1744, %v1968
        %v1970 = vpop.f32.mrb[0].mxu0
        %1971 = vmatprep.mubr.f32.mxu0 0.0
        %1972 = vmatmul.mubr.f32.gmra.mrb[0].mxu0 %v1508
        %v1973 = vpop.f32.mrb[0].mxu0
        %v1974 = vadd.f32 %v1749, %v1973
        %v1975 = vpop.f32.mrb[0].mxu0
        %1976 = vmatprep.mubr.f32.mxu0 0.0
        %1977 = vmatmul.mubr.f32.gmra.mrb[0].mxu0 %v1509
        %v1978 = vpop.f32.mrb[0].mxu0
        %v1979 = vadd.f32 %v1754, %v1978
        %v1980 = vpop.f32.mrb[0].mxu0
        %1981 = vmatprep.mubr.f32.mxu0 0.0
        %1982 = vmatmul.mubr.f32.gmra.mrb[0].mxu0 %v1510
        %v1983 = vpop.f32.mrb[0].mxu0
        %v1984 = vadd.f32 %v1759, %v1983
        %v1985 = vpop.f32.mrb[0].mxu0
        %1986 = vmatprep.mubr.f32.mxu0 0.0
        %1987 = vmatmul.mubr.f32.gmra.mrb[0].mxu0 %v1511
        %v1988 = vpop.f32.mrb[0].mxu0
        %v1989 = vadd.f32 %v1764, %v1988
        %v1990 = vpop.f32.mrb[0].mxu0
        %1991 = vmatprep.mubr.f32.mxu0 0.0
        %1992 = vmatmul.mubr.f32.gmra.mrb[0].mxu0 %v1512
        %v1993 = vpop.f32.mrb[0].mxu0
        %v1994 = vadd.f32 %v1769, %v1993
        %v1995 = vpop.f32.mrb[0].mxu0
        %1996 = vdwg.mxu0
        %v1997 = vld [vmem:[#allocation2 + $0x21] sm:$0xff]
        %v1998 = vld [vmem:[#allocation2 + $0x29] sm:$0xff]
        %v1999 = vld [vmem:[#allocation2 + $0x31] sm:$0xff]
        %v2000 = vld [vmem:[#allocation2 + $0x39] sm:$0xff]
        %v2001 = vld [vmem:[#allocation2 + $0x41] sm:$0xff]
        %v2002 = vld [vmem:[#allocation2 + $0x49] sm:$0xff]
        %v2003 = vld [vmem:[#allocation2 + $0x51] sm:$0xff]
        %v2004 = vld [vmem:[#allocation2 + $0x59] sm:$0xff]
        %v2005 = vld [vmem:[#allocation2 + $0x61] sm:$0xff]
        %v2006 = vld [vmem:[#allocation2 + $0x69] sm:$0xff]
        %v2007 = vld [vmem:[#allocation2 + $0x71] sm:$0xff]
        %v2008 = vld [vmem:[#allocation2 + $0x79] sm:$0xff]
        %v2009 = vld [vmem:[#allocation2 + $0x81] sm:$0xff]
        %v2010 = vld [vmem:[#allocation2 + $0x89] sm:$0xff]
        %v2011 = vld [vmem:[#allocation2 + $0x91] sm:$0xff]
        %v2012 = vld [vmem:[#allocation2 + $0x99] sm:$0xff]
        %v2013 = vld [vmem:[#allocation2 + $0xa1] sm:$0xff]
        %v2014 = vld [vmem:[#allocation2 + $0xa9] sm:$0xff]
        %v2015 = vld [vmem:[#allocation2 + $0xb1] sm:$0xff]
        %v2016 = vld [vmem:[#allocation2 + $0xb9] sm:$0xff]
        %v2017 = vld [vmem:[#allocation2 + $0xc1] sm:$0xff]
        %v2018 = vld [vmem:[#allocation2 + $0xc9] sm:$0xff]
        %v2019 = vld [vmem:[#allocation2 + $0xd1] sm:$0xff]
        %v2020 = vld [vmem:[#allocation2 + $0xd9] sm:$0xff]
        %v2021 = vld [vmem:[#allocation2 + $0xe1] sm:$0xff]
        %v2022 = vld [vmem:[#allocation2 + $0xe9] sm:$0xff]
        %v2023 = vld [vmem:[#allocation2 + $0xf1] sm:$0xff]
        %v2024 = vld [vmem:[#allocation2 + $0xf9] sm:$0xff]
        %v2025 = vld [vmem:[#allocation2 + $0x101] sm:$0xff]
        %v2026 = vld [vmem:[#allocation2 + $0x109] sm:$0xff]
        %v2027 = vld [vmem:[#allocation2 + $0x111] sm:$0xff]
        %v2028 = vld [vmem:[#allocation2 + $0x119] sm:$0xff]
        %v2029 = vld [vmem:[%s1 + $0x380] sm:$0xff]
        %v2030 = vld [vmem:[%s1 + $0x388] sm:$0xff]
        %v2031 = vld [vmem:[%s1 + $0x390] sm:$0xff]
        %v2032 = vld [vmem:[%s1 + $0x398] sm:$0xff]
        %v2033 = vld [vmem:[%s1 + $0x3a0] sm:$0xff]
        %v2034 = vld [vmem:[%s1 + $0x3a8] sm:$0xff]
        %v2035 = vld [vmem:[%s1 + $0x3b0] sm:$0xff]
        %v2036 = vld [vmem:[%s1 + $0x3b8] sm:$0xff]
        %v2037 = vld [vmem:[%s1 + $0x3c0] sm:$0xff]
        %v2038 = vld [vmem:[%s1 + $0x3c8] sm:$0xff]
        %v2039 = vld [vmem:[%s1 + $0x3d0] sm:$0xff]
        %v2040 = vld [vmem:[%s1 + $0x3d8] sm:$0xff]
        %v2041 = vld [vmem:[%s1 + $0x3e0] sm:$0xff]
        %v2042 = vld [vmem:[%s1 + $0x3e8] sm:$0xff]
        %v2043 = vld [vmem:[%s1 + $0x3f0] sm:$0xff]
        %v2044 = vld [vmem:[%s1 + $0x3f8] sm:$0xff]
        %2045 = vmatprep.subr.mxu0 0.0
        %2046 = vmatpush1.msra.mxu0 %v2029
        %2047 = vmatprep.subr.mxu0 0.0
        %2048 = vmatpush1.msra.mxu0 %v2030
        %2049 = vmatprep.subr.mxu0 0.0
        %2050 = vmatpush1.msra.mxu0 %v2031
        %2051 = vmatprep.subr.mxu0 0.0
        %2052 = vmatpush1.msra.mxu0 %v2032
        %2053 = vmatprep.subr.mxu0 0.0
        %2054 = vmatpush1.msra.mxu0 %v2033
        %2055 = vmatprep.subr.mxu0 0.0
        %2056 = vmatpush1.msra.mxu0 %v2034
        %2057 = vmatprep.subr.mxu0 0.0
        %2058 = vmatpush1.msra.mxu0 %v2035
        %2059 = vmatprep.subr.mxu0 0.0
        %2060 = vmatpush1.msra.mxu0 %v2036
        %2061 = vmatprep.subr.mxu0 0.0
        %2062 = vmatpush1.msra.mxu0 %v2037
        %2063 = vmatprep.subr.mxu0 0.0
        %2064 = vmatpush1.msra.mxu0 %v2038
        %2065 = vmatprep.subr.mxu0 0.0
        %2066 = vmatpush1.msra.mxu0 %v2039
        %2067 = vmatprep.subr.mxu0 0.0
        %2068 = vmatpush1.msra.mxu0 %v2040
        %2069 = vmatprep.subr.mxu0 0.0
        %2070 = vmatpush1.msra.mxu0 %v2041
        %2071 = vmatprep.subr.mxu0 0.0
        %2072 = vmatpush1.msra.mxu0 %v2042
        %2073 = vmatprep.subr.mxu0 0.0
        %2074 = vmatpush1.msra.mxu0 %v2043
        %2075 = vmatprep.subr.mxu0 0.0
        %2076 = vmatpush1.msra.mxu0 %v2044
        %2077 = vmatprep.subr.mxu0 0.0
        %2078 = vmatpush1.msra.mxu0 0.0
        %2079 = vmatprep.subr.mxu0 0.0
        %2080 = vmatpush1.msra.mxu0 0.0
        %2081 = vmatprep.subr.mxu0 0.0
        %2082 = vmatpush1.msra.mxu0 0.0
        %2083 = vmatprep.subr.mxu0 0.0
        %2084 = vmatpush1.msra.mxu0 0.0
        %2085 = vmatprep.subr.mxu0 0.0
        %2086 = vmatpush1.msra.mxu0 0.0
        %2087 = vmatprep.subr.mxu0 0.0
        %2088 = vmatpush1.msra.mxu0 0.0
        %2089 = vmatprep.subr.mxu0 0.0
        %2090 = vmatpush1.msra.mxu0 0.0
        %2091 = vmatprep.subr.mxu0 0.0
        %2092 = vmatpush1.msra.mxu0 0.0
        %2093 = vmatprep.subr.mxu0 0.0
        %2094 = vmatpush1.msra.mxu0 0.0
        %2095 = vmatprep.subr.mxu0 0.0
        %2096 = vmatpush1.msra.mxu0 0.0
        %2097 = vmatprep.subr.mxu0 0.0
        %2098 = vmatpush1.msra.mxu0 0.0
        %2099 = vmatprep.subr.mxu0 0.0
        %2100 = vmatpush1.msra.mxu0 0.0
        %2101 = vmatprep.subr.mxu0 0.0
        %2102 = vmatpush1.msra.mxu0 0.0
        %2103 = vmatprep.subr.mxu0 0.0
        %2104 = vmatpush1.msra.mxu0 0.0
        %2105 = vmatprep.subr.mxu0 0.0
        %2106 = vmatpush1.msra.mxu0 0.0
        %2107 = vmatprep.subr.mxu0 0.0
        %2108 = vmatpush1.msra.mxu0 0.0
        %2109 = vmatprep.mubr.f32.mxu0 0.0
        %2110 = vmatmul.mubr.f32.gmra.mrb[0].mxu0 %v1997
        %v2111 = vpop.f32.mrb[0].mxu0
        %v2112 = vadd.f32 0.0, %v2111
        %v2113 = vpop.f32.mrb[0].mxu0
        %2114 = vmatprep.mubr.f32.mxu0 0.0
        %2115 = vmatmul.mubr.f32.gmra.mrb[0].mxu0 %v1998
        %v2116 = vpop.f32.mrb[0].mxu0
        %v2117 = vadd.f32 0.0, %v2116
        %v2118 = vpop.f32.mrb[0].mxu0
        %2119 = vmatprep.mubr.f32.mxu0 0.0
        %2120 = vmatmul.mubr.f32.gmra.mrb[0].mxu0 %v1999
        %v2121 = vpop.f32.mrb[0].mxu0
        %v2122 = vadd.f32 0.0, %v2121
        %v2123 = vpop.f32.mrb[0].mxu0
        %2124 = vmatprep.mubr.f32.mxu0 0.0
        %2125 = vmatmul.mubr.f32.gmra.mrb[0].mxu0 %v2000
        %v2126 = vpop.f32.mrb[0].mxu0
        %v2127 = vadd.f32 0.0, %v2126
        %v2128 = vpop.f32.mrb[0].mxu0
        %2129 = vmatprep.mubr.f32.mxu0 0.0
        %2130 = vmatmul.mubr.f32.gmra.mrb[0].mxu0 %v2001
        %v2131 = vpop.f32.mrb[0].mxu0
        %v2132 = vadd.f32 0.0, %v2131
        %v2133 = vpop.f32.mrb[0].mxu0
        %2134 = vmatprep.mubr.f32.mxu0 0.0
        %2135 = vmatmul.mubr.f32.gmra.mrb[0].mxu0 %v2002
        %v2136 = vpop.f32.mrb[0].mxu0
        %v2137 = vadd.f32 0.0, %v2136
        %v2138 = vpop.f32.mrb[0].mxu0
        %2139 = vmatprep.mubr.f32.mxu0 0.0
        %2140 = vmatmul.mubr.f32.gmra.mrb[0].mxu0 %v2003
        %v2141 = vpop.f32.mrb[0].mxu0
        %v2142 = vadd.f32 0.0, %v2141
        %v2143 = vpop.f32.mrb[0].mxu0
        %2144 = vmatprep.mubr.f32.mxu0 0.0
        %2145 = vmatmul.mubr.f32.gmra.mrb[0].mxu0 %v2004
        %v2146 = vpop.f32.mrb[0].mxu0
        %v2147 = vadd.f32 0.0, %v2146
        %v2148 = vpop.f32.mrb[0].mxu0
        %2149 = vmatprep.mubr.f32.mxu0 0.0
        %2150 = vmatmul.mubr.f32.gmra.mrb[0].mxu0 %v2005
        %v2151 = vpop.f32.mrb[0].mxu0
        %v2152 = vadd.f32 0.0, %v2151
        %v2153 = vpop.f32.mrb[0].mxu0
        %2154 = vmatprep.mubr.f32.mxu0 0.0
        %2155 = vmatmul.mubr.f32.gmra.mrb[0].mxu0 %v2006
        %v2156 = vpop.f32.mrb[0].mxu0
        %v2157 = vadd.f32 0.0, %v2156
        %v2158 = vpop.f32.mrb[0].mxu0
        %2159 = vmatprep.mubr.f32.mxu0 0.0
        %2160 = vmatmul.mubr.f32.gmra.mrb[0].mxu0 %v2007
        %v2161 = vpop.f32.mrb[0].mxu0
        %v2162 = vadd.f32 0.0, %v2161
        %v2163 = vpop.f32.mrb[0].mxu0
        %2164 = vmatprep.mubr.f32.mxu0 0.0
        %2165 = vmatmul.mubr.f32.gmra.mrb[0].mxu0 %v2008
        %v2166 = vpop.f32.mrb[0].mxu0
        %v2167 = vadd.f32 0.0, %v2166
        %v2168 = vpop.f32.mrb[0].mxu0
        %2169 = vmatprep.mubr.f32.mxu0 0.0
        %2170 = vmatmul.mubr.f32.gmra.mrb[0].mxu0 %v2009
        %v2171 = vpop.f32.mrb[0].mxu0
        %v2172 = vadd.f32 0.0, %v2171
        %v2173 = vpop.f32.mrb[0].mxu0
        %2174 = vmatprep.mubr.f32.mxu0 0.0
        %2175 = vmatmul.mubr.f32.gmra.mrb[0].mxu0 %v2010
        %v2176 = vpop.f32.mrb[0].mxu0
        %v2177 = vadd.f32 0.0, %v2176
        %v2178 = vpop.f32.mrb[0].mxu0
        %2179 = vmatprep.mubr.f32.mxu0 0.0
        %2180 = vmatmul.mubr.f32.gmra.mrb[0].mxu0 %v2011
        %v2181 = vpop.f32.mrb[0].mxu0
        %v2182 = vadd.f32 0.0, %v2181
        %v2183 = vpop.f32.mrb[0].mxu0
        %2184 = vmatprep.mubr.f32.mxu0 0.0
        %2185 = vmatmul.mubr.f32.gmra.mrb[0].mxu0 %v2012
        %v2186 = vpop.f32.mrb[0].mxu0
        %v2187 = vadd.f32 0.0, %v2186
        %v2188 = vpop.f32.mrb[0].mxu0
        %2189 = vmatprep.mubr.f32.mxu0 0.0
        %2190 = vmatmul.mubr.f32.gmra.mrb[0].mxu0 %v2013
        %v2191 = vpop.f32.mrb[0].mxu0
        %v2192 = vadd.f32 0.0, %v2191
        %v2193 = vpop.f32.mrb[0].mxu0
        %2194 = vmatprep.mubr.f32.mxu0 0.0
        %2195 = vmatmul.mubr.f32.gmra.mrb[0].mxu0 %v2014
        %v2196 = vpop.f32.mrb[0].mxu0
        %v2197 = vadd.f32 0.0, %v2196
        %v2198 = vpop.f32.mrb[0].mxu0
        %2199 = vmatprep.mubr.f32.mxu0 0.0
        %2200 = vmatmul.mubr.f32.gmra.mrb[0].mxu0 %v2015
        %v2201 = vpop.f32.mrb[0].mxu0
        %v2202 = vadd.f32 0.0, %v2201
        %v2203 = vpop.f32.mrb[0].mxu0
        %2204 = vmatprep.mubr.f32.mxu0 0.0
        %2205 = vmatmul.mubr.f32.gmra.mrb[0].mxu0 %v2016
        %v2206 = vpop.f32.mrb[0].mxu0
        %v2207 = vadd.f32 0.0, %v2206
        %v2208 = vpop.f32.mrb[0].mxu0
        %2209 = vmatprep.mubr.f32.mxu0 0.0
        %2210 = vmatmul.mubr.f32.gmra.mrb[0].mxu0 %v2017
        %v2211 = vpop.f32.mrb[0].mxu0
        %v2212 = vadd.f32 0.0, %v2211
        %v2213 = vpop.f32.mrb[0].mxu0
        %2214 = vmatprep.mubr.f32.mxu0 0.0
        %2215 = vmatmul.mubr.f32.gmra.mrb[0].mxu0 %v2018
        %v2216 = vpop.f32.mrb[0].mxu0
        %v2217 = vadd.f32 0.0, %v2216
        %v2218 = vpop.f32.mrb[0].mxu0
        %2219 = vmatprep.mubr.f32.mxu0 0.0
        %2220 = vmatmul.mubr.f32.gmra.mrb[0].mxu0 %v2019
        %v2221 = vpop.f32.mrb[0].mxu0
        %v2222 = vadd.f32 0.0, %v2221
        %v2223 = vpop.f32.mrb[0].mxu0
        %2224 = vmatprep.mubr.f32.mxu0 0.0
        %2225 = vmatmul.mubr.f32.gmra.mrb[0].mxu0 %v2020
        %v2226 = vpop.f32.mrb[0].mxu0
        %v2227 = vadd.f32 0.0, %v2226
        %v2228 = vpop.f32.mrb[0].mxu0
        %2229 = vmatprep.mubr.f32.mxu0 0.0
        %2230 = vmatmul.mubr.f32.gmra.mrb[0].mxu0 %v2021
        %v2231 = vpop.f32.mrb[0].mxu0
        %v2232 = vadd.f32 0.0, %v2231
        %v2233 = vpop.f32.mrb[0].mxu0
        %2234 = vmatprep.mubr.f32.mxu0 0.0
        %2235 = vmatmul.mubr.f32.gmra.mrb[0].mxu0 %v2022
        %v2236 = vpop.f32.mrb[0].mxu0
        %v2237 = vadd.f32 0.0, %v2236
        %v2238 = vpop.f32.mrb[0].mxu0
        %2239 = vmatprep.mubr.f32.mxu0 0.0
        %2240 = vmatmul.mubr.f32.gmra.mrb[0].mxu0 %v2023
        %v2241 = vpop.f32.mrb[0].mxu0
        %v2242 = vadd.f32 0.0, %v2241
        %v2243 = vpop.f32.mrb[0].mxu0
        %2244 = vmatprep.mubr.f32.mxu0 0.0
        %2245 = vmatmul.mubr.f32.gmra.mrb[0].mxu0 %v2024
        %v2246 = vpop.f32.mrb[0].mxu0
        %v2247 = vadd.f32 0.0, %v2246
        %v2248 = vpop.f32.mrb[0].mxu0
        %2249 = vmatprep.mubr.f32.mxu0 0.0
        %2250 = vmatmul.mubr.f32.gmra.mrb[0].mxu0 %v2025
        %v2251 = vpop.f32.mrb[0].mxu0
        %v2252 = vadd.f32 0.0, %v2251
        %v2253 = vpop.f32.mrb[0].mxu0
        %2254 = vmatprep.mubr.f32.mxu0 0.0
        %2255 = vmatmul.mubr.f32.gmra.mrb[0].mxu0 %v2026
        %v2256 = vpop.f32.mrb[0].mxu0
        %v2257 = vadd.f32 0.0, %v2256
        %v2258 = vpop.f32.mrb[0].mxu0
        %2259 = vmatprep.mubr.f32.mxu0 0.0
        %2260 = vmatmul.mubr.f32.gmra.mrb[0].mxu0 %v2027
        %v2261 = vpop.f32.mrb[0].mxu0
        %v2262 = vadd.f32 0.0, %v2261
        %v2263 = vpop.f32.mrb[0].mxu0
        %2264 = vmatprep.mubr.f32.mxu0 0.0
        %2265 = vmatmul.mubr.f32.gmra.mrb[0].mxu0 %v2028
        %v2266 = vpop.f32.mrb[0].mxu0
        %v2267 = vadd.f32 0.0, %v2266
        %v2268 = vpop.f32.mrb[0].mxu0
        %2269 = vdwg.mxu0
        %v2270 = vadd.f32 %v1839, %v2112
        %v2271 = vadd.f32 %v1844, %v2117
        %v2272 = vadd.f32 %v1849, %v2122
        %v2273 = vadd.f32 %v1854, %v2127
        %v2274 = vadd.f32 %v1859, %v2132
        %v2275 = vadd.f32 %v1864, %v2137
        %v2276 = vadd.f32 %v1869, %v2142
        %v2277 = vadd.f32 %v1874, %v2147
        %v2278 = vadd.f32 %v1879, %v2152
        %v2279 = vadd.f32 %v1884, %v2157
        %v2280 = vadd.f32 %v1889, %v2162
        %v2281 = vadd.f32 %v1894, %v2167
        %v2282 = vadd.f32 %v1899, %v2172
        %v2283 = vadd.f32 %v1904, %v2177
        %v2284 = vadd.f32 %v1909, %v2182
        %v2285 = vadd.f32 %v1914, %v2187
        %v2286 = vadd.f32 %v1919, %v2192
        %v2287 = vadd.f32 %v1924, %v2197
        %v2288 = vadd.f32 %v1929, %v2202
        %v2289 = vadd.f32 %v1934, %v2207
        %v2290 = vadd.f32 %v1939, %v2212
        %v2291 = vadd.f32 %v1944, %v2217
        %v2292 = vadd.f32 %v1949, %v2222
        %v2293 = vadd.f32 %v1954, %v2227
        %v2294 = vadd.f32 %v1959, %v2232
        %v2295 = vadd.f32 %v1964, %v2237
        %v2296 = vadd.f32 %v1969, %v2242
        %v2297 = vadd.f32 %v1974, %v2247
        %v2298 = vadd.f32 %v1979, %v2252
        %v2299 = vadd.f32 %v1984, %v2257
        %v2300 = vadd.f32 %v1989, %v2262
        %v2301 = vadd.f32 %v1994, %v2267
        %v2302 = vadd.f32 %v1449, %v2270
        %v2303 = vadd.f32 %v1450, %v2271
        %v2304 = vadd.f32 %v1451, %v2272
        %v2305 = vadd.f32 %v1452, %v2273
        %v2306 = vadd.f32 %v1453, %v2274
        %v2307 = vadd.f32 %v1454, %v2275
        %v2308 = vadd.f32 %v1455, %v2276
        %v2309 = vadd.f32 %v1456, %v2277
        %v2310 = vadd.f32 %v1457, %v2278
        %v2311 = vadd.f32 %v1458, %v2279
        %v2312 = vadd.f32 %v1459, %v2280
        %v2313 = vadd.f32 %v1460, %v2281
        %v2314 = vadd.f32 %v1461, %v2282
        %v2315 = vadd.f32 %v1462, %v2283
        %v2316 = vadd.f32 %v1463, %v2284
        %v2317 = vadd.f32 %v1464, %v2285
        %v2318 = vadd.f32 %v1465, %v2286
        %v2319 = vadd.f32 %v1466, %v2287
        %v2320 = vadd.f32 %v1467, %v2288
        %v2321 = vadd.f32 %v1468, %v2289
        %v2322 = vadd.f32 %v1469, %v2290
        %v2323 = vadd.f32 %v1470, %v2291
        %v2324 = vadd.f32 %v1471, %v2292
        %v2325 = vadd.f32 %v1472, %v2293
        %v2326 = vadd.f32 %v1473, %v2294
        %v2327 = vadd.f32 %v1474, %v2295
        %v2328 = vadd.f32 %v1475, %v2296
        %v2329 = vadd.f32 %v1476, %v2297
        %v2330 = vadd.f32 %v1477, %v2298
        %v2331 = vadd.f32 %v1478, %v2299
        %v2332 = vadd.f32 %v1479, %v2300
        %v2333 = vadd.f32 %v1480, %v2301
        %v2334 = vld [vmem:[#allocation2 + $0x2] sm:$0xff]
        %v2335 = vld [vmem:[#allocation2 + $0xa] sm:$0xff]
        %v2336 = vld [vmem:[#allocation2 + $0x12] sm:$0xff]
        %v2337 = vld [vmem:[#allocation2 + $0x1a] sm:$0xff]
        %v2338 = vld [vmem:[#allocation2 + $0x22] sm:$0xff]
        %v2339 = vld [vmem:[#allocation2 + $0x2a] sm:$0xff]
        %v2340 = vld [vmem:[#allocation2 + $0x32] sm:$0xff]
        %v2341 = vld [vmem:[#allocation2 + $0x3a] sm:$0xff]
        %v2342 = vld [vmem:[#allocation2 + $0x42] sm:$0xff]
        %v2343 = vld [vmem:[#allocation2 + $0x4a] sm:$0xff]
        %v2344 = vld [vmem:[#allocation2 + $0x52] sm:$0xff]
        %v2345 = vld [vmem:[#allocation2 + $0x5a] sm:$0xff]
        %v2346 = vld [vmem:[#allocation2 + $0x62] sm:$0xff]
        %v2347 = vld [vmem:[#allocation2 + $0x6a] sm:$0xff]
        %v2348 = vld [vmem:[#allocation2 + $0x72] sm:$0xff]
        %v2349 = vld [vmem:[#allocation2 + $0x7a] sm:$0xff]
        %v2350 = vld [vmem:[#allocation2 + $0x82] sm:$0xff]
        %v2351 = vld [vmem:[#allocation2 + $0x8a] sm:$0xff]
        %v2352 = vld [vmem:[#allocation2 + $0x92] sm:$0xff]
        %v2353 = vld [vmem:[#allocation2 + $0x9a] sm:$0xff]
        %v2354 = vld [vmem:[#allocation2 + $0xa2] sm:$0xff]
        %v2355 = vld [vmem:[#allocation2 + $0xaa] sm:$0xff]
        %v2356 = vld [vmem:[#allocation2 + $0xb2] sm:$0xff]
        %v2357 = vld [vmem:[#allocation2 + $0xba] sm:$0xff]
        %v2358 = vld [vmem:[#allocation2 + $0xc2] sm:$0xff]
        %v2359 = vld [vmem:[#allocation2 + $0xca] sm:$0xff]
        %v2360 = vld [vmem:[#allocation2 + $0xd2] sm:$0xff]
        %v2361 = vld [vmem:[#allocation2 + $0xda] sm:$0xff]
        %v2362 = vld [vmem:[#allocation2 + $0xe2] sm:$0xff]
        %v2363 = vld [vmem:[#allocation2 + $0xea] sm:$0xff]
        %v2364 = vld [vmem:[#allocation2 + $0xf2] sm:$0xff]
        %v2365 = vld [vmem:[#allocation2 + $0xfa] sm:$0xff]
        %v2366 = vld [vmem:[%s1 + $0x100] sm:$0xff]
        %v2367 = vld [vmem:[%s1 + $0x108] sm:$0xff]
        %v2368 = vld [vmem:[%s1 + $0x110] sm:$0xff]
        %v2369 = vld [vmem:[%s1 + $0x118] sm:$0xff]
        %v2370 = vld [vmem:[%s1 + $0x120] sm:$0xff]
        %v2371 = vld [vmem:[%s1 + $0x128] sm:$0xff]
        %v2372 = vld [vmem:[%s1 + $0x130] sm:$0xff]
        %v2373 = vld [vmem:[%s1 + $0x138] sm:$0xff]
        %v2374 = vld [vmem:[%s1 + $0x140] sm:$0xff]
        %v2375 = vld [vmem:[%s1 + $0x148] sm:$0xff]
        %v2376 = vld [vmem:[%s1 + $0x150] sm:$0xff]
        %v2377 = vld [vmem:[%s1 + $0x158] sm:$0xff]
        %v2378 = vld [vmem:[%s1 + $0x160] sm:$0xff]
        %v2379 = vld [vmem:[%s1 + $0x168] sm:$0xff]
        %v2380 = vld [vmem:[%s1 + $0x170] sm:$0xff]
        %v2381 = vld [vmem:[%s1 + $0x178] sm:$0xff]
        %v2382 = vld [vmem:[#allocation2 + $0x102] sm:$0xff]
        %v2383 = vld [vmem:[#allocation2 + $0x10a] sm:$0xff]
        %v2384 = vld [vmem:[%s1 + $0x280] sm:$0xff]
        %v2385 = vld [vmem:[%s1 + $0x288] sm:$0xff]
        %v2386 = vld [vmem:[%s1 + $0x290] sm:$0xff]
        %v2387 = vld [vmem:[%s1 + $0x298] sm:$0xff]
        %v2388 = vld [vmem:[%s1 + $0x2a0] sm:$0xff]
        %v2389 = vld [vmem:[%s1 + $0x2a8] sm:$0xff]
        %v2390 = vld [vmem:[%s1 + $0x2b0] sm:$0xff]
        %v2391 = vld [vmem:[%s1 + $0x2b8] sm:$0xff]
        %v2392 = vld [vmem:[%s1 + $0x2c0] sm:$0xff]
        %v2393 = vld [vmem:[%s1 + $0x2c8] sm:$0xff]
        %v2394 = vld [vmem:[%s1 + $0x2d0] sm:$0xff]
        %v2395 = vld [vmem:[%s1 + $0x2d8] sm:$0xff]
        %v2396 = vld [vmem:[%s1 + $0x2e0] sm:$0xff]
        %v2397 = vld [vmem:[%s1 + $0x2e8] sm:$0xff]
        %v2398 = vld [vmem:[%s1 + $0x2f0] sm:$0xff]
        %v2399 = vld [vmem:[%s1 + $0x2f8] sm:$0xff]
        %2400 = vmatprep.subr.mxu0 0.0
        %2401 = vmatpush1.msra.mxu0 %v2384
        %2402 = vmatprep.subr.mxu0 0.0
        %2403 = vmatpush1.msra.mxu0 %v2385
        %2404 = vmatprep.subr.mxu0 0.0
        %2405 = vmatpush1.msra.mxu0 %v2386
        %2406 = vmatprep.subr.mxu0 0.0
        %2407 = vmatpush1.msra.mxu0 %v2387
        %2408 = vmatprep.subr.mxu0 0.0
        %2409 = vmatpush1.msra.mxu0 %v2388
        %2410 = vmatprep.subr.mxu0 0.0
        %2411 = vmatpush1.msra.mxu0 %v2389
        %2412 = vmatprep.subr.mxu0 0.0
        %2413 = vmatpush1.msra.mxu0 %v2390
        %2414 = vmatprep.subr.mxu0 0.0
        %2415 = vmatpush1.msra.mxu0 %v2391
        %2416 = vmatprep.subr.mxu0 0.0
        %2417 = vmatpush1.msra.mxu0 %v2392
        %2418 = vmatprep.subr.mxu0 0.0
        %2419 = vmatpush1.msra.mxu0 %v2393
        %2420 = vmatprep.subr.mxu0 0.0
        %2421 = vmatpush1.msra.mxu0 %v2394
        %2422 = vmatprep.subr.mxu0 0.0
        %2423 = vmatpush1.msra.mxu0 %v2395
        %2424 = vmatprep.subr.mxu0 0.0
        %2425 = vmatpush1.msra.mxu0 %v2396
        %2426 = vmatprep.subr.mxu0 0.0
        %2427 = vmatpush1.msra.mxu0 %v2397
        %2428 = vmatprep.subr.mxu0 0.0
        %2429 = vmatpush1.msra.mxu0 %v2398
        %2430 = vmatprep.subr.mxu0 0.0
        %2431 = vmatpush1.msra.mxu0 %v2399
        %2432 = vmatprep.subr.mxu0 0.0
        %2433 = vmatpush1.msra.mxu0 0.0
        %2434 = vmatprep.subr.mxu0 0.0
        %2435 = vmatpush1.msra.mxu0 0.0
        %2436 = vmatprep.subr.mxu0 0.0
        %2437 = vmatpush1.msra.mxu0 0.0
        %2438 = vmatprep.subr.mxu0 0.0
        %2439 = vmatpush1.msra.mxu0 0.0
        %2440 = vmatprep.subr.mxu0 0.0
        %2441 = vmatpush1.msra.mxu0 0.0
        %2442 = vmatprep.subr.mxu0 0.0
        %2443 = vmatpush1.msra.mxu0 0.0
        %2444 = vmatprep.subr.mxu0 0.0
        %2445 = vmatpush1.msra.mxu0 0.0
        %2446 = vmatprep.subr.mxu0 0.0
        %2447 = vmatpush1.msra.mxu0 0.0
        %2448 = vmatprep.subr.mxu0 0.0
        %2449 = vmatpush1.msra.mxu0 0.0
        %2450 = vmatprep.subr.mxu0 0.0
        %2451 = vmatpush1.msra.mxu0 0.0
        %2452 = vmatprep.subr.mxu0 0.0
        %2453 = vmatpush1.msra.mxu0 0.0
        %2454 = vmatprep.subr.mxu0 0.0
        %2455 = vmatpush1.msra.mxu0 0.0
        %2456 = vmatprep.subr.mxu0 0.0
        %2457 = vmatpush1.msra.mxu0 0.0
        %2458 = vmatprep.subr.mxu0 0.0
        %2459 = vmatpush1.msra.mxu0 0.0
        %2460 = vmatprep.subr.mxu0 0.0
        %2461 = vmatpush1.msra.mxu0 0.0
        %2462 = vmatprep.subr.mxu0 0.0
        %2463 = vmatpush1.msra.mxu0 0.0
        %2464 = vmatprep.mubr.f32.mxu0 0.0
        %2465 = vmatmul.mubr.f32.gmra.mrb[0].mxu0 %v2336
        %v2466 = vpop.f32.mrb[0].mxu0
        %v2467 = vadd.f32 0.0, %v2466
        %v2468 = vpop.f32.mrb[0].mxu0
        %2469 = vmatprep.mubr.f32.mxu0 0.0
        %2470 = vmatmul.mubr.f32.gmra.mrb[0].mxu0 %v2337
        %v2471 = vpop.f32.mrb[0].mxu0
        %v2472 = vadd.f32 0.0, %v2471
        %v2473 = vpop.f32.mrb[0].mxu0
        %2474 = vmatprep.mubr.f32.mxu0 0.0
        %2475 = vmatmul.mubr.f32.gmra.mrb[0].mxu0 %v2338
        %v2476 = vpop.f32.mrb[0].mxu0
        %v2477 = vadd.f32 0.0, %v2476
        %v2478 = vpop.f32.mrb[0].mxu0
        %2479 = vmatprep.mubr.f32.mxu0 0.0
        %2480 = vmatmul.mubr.f32.gmra.mrb[0].mxu0 %v2339
        %v2481 = vpop.f32.mrb[0].mxu0
        %v2482 = vadd.f32 0.0, %v2481
        %v2483 = vpop.f32.mrb[0].mxu0
        %2484 = vmatprep.mubr.f32.mxu0 0.0
        %2485 = vmatmul.mubr.f32.gmra.mrb[0].mxu0 %v2340
        %v2486 = vpop.f32.mrb[0].mxu0
        %v2487 = vadd.f32 0.0, %v2486
        %v2488 = vpop.f32.mrb[0].mxu0
        %2489 = vmatprep.mubr.f32.mxu0 0.0
        %2490 = vmatmul.mubr.f32.gmra.mrb[0].mxu0 %v2341
        %v2491 = vpop.f32.mrb[0].mxu0
        %v2492 = vadd.f32 0.0, %v2491
        %v2493 = vpop.f32.mrb[0].mxu0
        %2494 = vmatprep.mubr.f32.mxu0 0.0
        %2495 = vmatmul.mubr.f32.gmra.mrb[0].mxu0 %v2342
        %v2496 = vpop.f32.mrb[0].mxu0
        %v2497 = vadd.f32 0.0, %v2496
        %v2498 = vpop.f32.mrb[0].mxu0
        %2499 = vmatprep.mubr.f32.mxu0 0.0
        %2500 = vmatmul.mubr.f32.gmra.mrb[0].mxu0 %v2343
        %v2501 = vpop.f32.mrb[0].mxu0
        %v2502 = vadd.f32 0.0, %v2501
        %v2503 = vpop.f32.mrb[0].mxu0
        %2504 = vmatprep.mubr.f32.mxu0 0.0
        %2505 = vmatmul.mubr.f32.gmra.mrb[0].mxu0 %v2344
        %v2506 = vpop.f32.mrb[0].mxu0
        %v2507 = vadd.f32 0.0, %v2506
        %v2508 = vpop.f32.mrb[0].mxu0
        %2509 = vmatprep.mubr.f32.mxu0 0.0
        %2510 = vmatmul.mubr.f32.gmra.mrb[0].mxu0 %v2345
        %v2511 = vpop.f32.mrb[0].mxu0
        %v2512 = vadd.f32 0.0, %v2511
        %v2513 = vpop.f32.mrb[0].mxu0
        %2514 = vmatprep.mubr.f32.mxu0 0.0
        %2515 = vmatmul.mubr.f32.gmra.mrb[0].mxu0 %v2346
        %v2516 = vpop.f32.mrb[0].mxu0
        %v2517 = vadd.f32 0.0, %v2516
        %v2518 = vpop.f32.mrb[0].mxu0
        %2519 = vmatprep.mubr.f32.mxu0 0.0
        %2520 = vmatmul.mubr.f32.gmra.mrb[0].mxu0 %v2347
        %v2521 = vpop.f32.mrb[0].mxu0
        %v2522 = vadd.f32 0.0, %v2521
        %v2523 = vpop.f32.mrb[0].mxu0
        %2524 = vmatprep.mubr.f32.mxu0 0.0
        %2525 = vmatmul.mubr.f32.gmra.mrb[0].mxu0 %v2348
        %v2526 = vpop.f32.mrb[0].mxu0
        %v2527 = vadd.f32 0.0, %v2526
        %v2528 = vpop.f32.mrb[0].mxu0
        %2529 = vmatprep.mubr.f32.mxu0 0.0
        %2530 = vmatmul.mubr.f32.gmra.mrb[0].mxu0 %v2349
        %v2531 = vpop.f32.mrb[0].mxu0
        %v2532 = vadd.f32 0.0, %v2531
        %v2533 = vpop.f32.mrb[0].mxu0
        %2534 = vmatprep.mubr.f32.mxu0 0.0
        %2535 = vmatmul.mubr.f32.gmra.mrb[0].mxu0 %v2350
        %v2536 = vpop.f32.mrb[0].mxu0
        %v2537 = vadd.f32 0.0, %v2536
        %v2538 = vpop.f32.mrb[0].mxu0
        %2539 = vmatprep.mubr.f32.mxu0 0.0
        %2540 = vmatmul.mubr.f32.gmra.mrb[0].mxu0 %v2351
        %v2541 = vpop.f32.mrb[0].mxu0
        %v2542 = vadd.f32 0.0, %v2541
        %v2543 = vpop.f32.mrb[0].mxu0
        %2544 = vmatprep.mubr.f32.mxu0 0.0
        %2545 = vmatmul.mubr.f32.gmra.mrb[0].mxu0 %v2352
        %v2546 = vpop.f32.mrb[0].mxu0
        %v2547 = vadd.f32 0.0, %v2546
        %v2548 = vpop.f32.mrb[0].mxu0
        %2549 = vmatprep.mubr.f32.mxu0 0.0
        %2550 = vmatmul.mubr.f32.gmra.mrb[0].mxu0 %v2353
        %v2551 = vpop.f32.mrb[0].mxu0
        %v2552 = vadd.f32 0.0, %v2551
        %v2553 = vpop.f32.mrb[0].mxu0
        %2554 = vmatprep.mubr.f32.mxu0 0.0
        %2555 = vmatmul.mubr.f32.gmra.mrb[0].mxu0 %v2354
        %v2556 = vpop.f32.mrb[0].mxu0
        %v2557 = vadd.f32 0.0, %v2556
        %v2558 = vpop.f32.mrb[0].mxu0
        %2559 = vmatprep.mubr.f32.mxu0 0.0
        %2560 = vmatmul.mubr.f32.gmra.mrb[0].mxu0 %v2355
        %v2561 = vpop.f32.mrb[0].mxu0
        %v2562 = vadd.f32 0.0, %v2561
        %v2563 = vpop.f32.mrb[0].mxu0
        %2564 = vmatprep.mubr.f32.mxu0 0.0
        %2565 = vmatmul.mubr.f32.gmra.mrb[0].mxu0 %v2356
        %v2566 = vpop.f32.mrb[0].mxu0
        %v2567 = vadd.f32 0.0, %v2566
        %v2568 = vpop.f32.mrb[0].mxu0
        %2569 = vmatprep.mubr.f32.mxu0 0.0
        %2570 = vmatmul.mubr.f32.gmra.mrb[0].mxu0 %v2357
        %v2571 = vpop.f32.mrb[0].mxu0
        %v2572 = vadd.f32 0.0, %v2571
        %v2573 = vpop.f32.mrb[0].mxu0
        %2574 = vmatprep.mubr.f32.mxu0 0.0
        %2575 = vmatmul.mubr.f32.gmra.mrb[0].mxu0 %v2358
        %v2576 = vpop.f32.mrb[0].mxu0
        %v2577 = vadd.f32 0.0, %v2576
        %v2578 = vpop.f32.mrb[0].mxu0
        %2579 = vmatprep.mubr.f32.mxu0 0.0
        %2580 = vmatmul.mubr.f32.gmra.mrb[0].mxu0 %v2359
        %v2581 = vpop.f32.mrb[0].mxu0
        %v2582 = vadd.f32 0.0, %v2581
        %v2583 = vpop.f32.mrb[0].mxu0
        %2584 = vmatprep.mubr.f32.mxu0 0.0
        %2585 = vmatmul.mubr.f32.gmra.mrb[0].mxu0 %v2360
        %v2586 = vpop.f32.mrb[0].mxu0
        %v2587 = vadd.f32 0.0, %v2586
        %v2588 = vpop.f32.mrb[0].mxu0
        %2589 = vmatprep.mubr.f32.mxu0 0.0
        %2590 = vmatmul.mubr.f32.gmra.mrb[0].mxu0 %v2361
        %v2591 = vpop.f32.mrb[0].mxu0
        %v2592 = vadd.f32 0.0, %v2591
        %v2593 = vpop.f32.mrb[0].mxu0
        %2594 = vmatprep.mubr.f32.mxu0 0.0
        %2595 = vmatmul.mubr.f32.gmra.mrb[0].mxu0 %v2362
        %v2596 = vpop.f32.mrb[0].mxu0
        %v2597 = vadd.f32 0.0, %v2596
        %v2598 = vpop.f32.mrb[0].mxu0
        %2599 = vmatprep.mubr.f32.mxu0 0.0
        %2600 = vmatmul.mubr.f32.gmra.mrb[0].mxu0 %v2363
        %v2601 = vpop.f32.mrb[0].mxu0
        %v2602 = vadd.f32 0.0, %v2601
        %v2603 = vpop.f32.mrb[0].mxu0
        %2604 = vmatprep.mubr.f32.mxu0 0.0
        %2605 = vmatmul.mubr.f32.gmra.mrb[0].mxu0 %v2364
        %v2606 = vpop.f32.mrb[0].mxu0
        %v2607 = vadd.f32 0.0, %v2606
        %v2608 = vpop.f32.mrb[0].mxu0
        %2609 = vmatprep.mubr.f32.mxu0 0.0
        %2610 = vmatmul.mubr.f32.gmra.mrb[0].mxu0 %v2365
        %v2611 = vpop.f32.mrb[0].mxu0
        %v2612 = vadd.f32 0.0, %v2611
        %v2613 = vpop.f32.mrb[0].mxu0
        %2614 = vmatprep.mubr.f32.mxu0 0.0
        %2615 = vmatmul.mubr.f32.gmra.mrb[0].mxu0 %v2382
        %v2616 = vpop.f32.mrb[0].mxu0
        %v2617 = vadd.f32 0.0, %v2616
        %v2618 = vpop.f32.mrb[0].mxu0
        %2619 = vmatprep.mubr.f32.mxu0 0.0
        %2620 = vmatmul.mubr.f32.gmra.mrb[0].mxu0 %v2383
        %v2621 = vpop.f32.mrb[0].mxu0
        %v2622 = vadd.f32 0.0, %v2621
        %v2623 = vpop.f32.mrb[0].mxu0
        %2624 = vdwg.mxu0
        %2625 = vmatprep.subr.mxu0 0.0
        %2626 = vmatpush1.msra.mxu0 %v2366
        %2627 = vmatprep.subr.mxu0 0.0
        %2628 = vmatpush1.msra.mxu0 %v2367
        %2629 = vmatprep.subr.mxu0 0.0
        %2630 = vmatpush1.msra.mxu0 %v2368
        %2631 = vmatprep.subr.mxu0 0.0
        %2632 = vmatpush1.msra.mxu0 %v2369
        %2633 = vmatprep.subr.mxu0 0.0
        %2634 = vmatpush1.msra.mxu0 %v2370
        %2635 = vmatprep.subr.mxu0 0.0
        %2636 = vmatpush1.msra.mxu0 %v2371
        %2637 = vmatprep.subr.mxu0 0.0
        %2638 = vmatpush1.msra.mxu0 %v2372
        %2639 = vmatprep.subr.mxu0 0.0
        %2640 = vmatpush1.msra.mxu0 %v2373
        %2641 = vmatprep.subr.mxu0 0.0
        %2642 = vmatpush1.msra.mxu0 %v2374
        %2643 = vmatprep.subr.mxu0 0.0
        %2644 = vmatpush1.msra.mxu0 %v2375
        %2645 = vmatprep.subr.mxu0 0.0
        %2646 = vmatpush1.msra.mxu0 %v2376
        %2647 = vmatprep.subr.mxu0 0.0
        %2648 = vmatpush1.msra.mxu0 %v2377
        %2649 = vmatprep.subr.mxu0 0.0
        %2650 = vmatpush1.msra.mxu0 %v2378
        %2651 = vmatprep.subr.mxu0 0.0
        %2652 = vmatpush1.msra.mxu0 %v2379
        %2653 = vmatprep.subr.mxu0 0.0
        %2654 = vmatpush1.msra.mxu0 %v2380
        %2655 = vmatprep.subr.mxu0 0.0
        %2656 = vmatpush1.msra.mxu0 %v2381
        %2657 = vmatprep.subr.mxu0 0.0
        %2658 = vmatpush1.msra.mxu0 0.0
        %2659 = vmatprep.subr.mxu0 0.0
        %2660 = vmatpush1.msra.mxu0 0.0
        %2661 = vmatprep.subr.mxu0 0.0
        %2662 = vmatpush1.msra.mxu0 0.0
        %2663 = vmatprep.subr.mxu0 0.0
        %2664 = vmatpush1.msra.mxu0 0.0
        %2665 = vmatprep.subr.mxu0 0.0
        %2666 = vmatpush1.msra.mxu0 0.0
        %2667 = vmatprep.subr.mxu0 0.0
        %2668 = vmatpush1.msra.mxu0 0.0
        %2669 = vmatprep.subr.mxu0 0.0
        %2670 = vmatpush1.msra.mxu0 0.0
        %2671 = vmatprep.subr.mxu0 0.0
        %2672 = vmatpush1.msra.mxu0 0.0
        %2673 = vmatprep.subr.mxu0 0.0
        %2674 = vmatpush1.msra.mxu0 0.0
        %2675 = vmatprep.subr.mxu0 0.0
        %2676 = vmatpush1.msra.mxu0 0.0
        %2677 = vmatprep.subr.mxu0 0.0
        %2678 = vmatpush1.msra.mxu0 0.0
        %2679 = vmatprep.subr.mxu0 0.0
        %2680 = vmatpush1.msra.mxu0 0.0
        %2681 = vmatprep.subr.mxu0 0.0
        %2682 = vmatpush1.msra.mxu0 0.0
        %2683 = vmatprep.subr.mxu0 0.0
        %2684 = vmatpush1.msra.mxu0 0.0
        %2685 = vmatprep.subr.mxu0 0.0
        %2686 = vmatpush1.msra.mxu0 0.0
        %2687 = vmatprep.subr.mxu0 0.0
        %2688 = vmatpush1.msra.mxu0 0.0
        %2689 = vmatprep.mubr.f32.mxu0 0.0
        %2690 = vmatmul.mubr.f32.gmra.mrb[0].mxu0 %v2334
        %v2691 = vpop.f32.mrb[0].mxu0
        %v2692 = vadd.f32 %v2467, %v2691
        %v2693 = vpop.f32.mrb[0].mxu0
        %2694 = vmatprep.mubr.f32.mxu0 0.0
        %2695 = vmatmul.mubr.f32.gmra.mrb[0].mxu0 %v2335
        %v2696 = vpop.f32.mrb[0].mxu0
        %v2697 = vadd.f32 %v2472, %v2696
        %v2698 = vpop.f32.mrb[0].mxu0
        %2699 = vmatprep.mubr.f32.mxu0 0.0
        %2700 = vmatmul.mubr.f32.gmra.mrb[0].mxu0 %v2336
        %v2701 = vpop.f32.mrb[0].mxu0
        %v2702 = vadd.f32 %v2477, %v2701
        %v2703 = vpop.f32.mrb[0].mxu0
        %2704 = vmatprep.mubr.f32.mxu0 0.0
        %2705 = vmatmul.mubr.f32.gmra.mrb[0].mxu0 %v2337
        %v2706 = vpop.f32.mrb[0].mxu0
        %v2707 = vadd.f32 %v2482, %v2706
        %v2708 = vpop.f32.mrb[0].mxu0
        %2709 = vmatprep.mubr.f32.mxu0 0.0
        %2710 = vmatmul.mubr.f32.gmra.mrb[0].mxu0 %v2338
        %v2711 = vpop.f32.mrb[0].mxu0
        %v2712 = vadd.f32 %v2487, %v2711
        %v2713 = vpop.f32.mrb[0].mxu0
        %2714 = vmatprep.mubr.f32.mxu0 0.0
        %2715 = vmatmul.mubr.f32.gmra.mrb[0].mxu0 %v2339
        %v2716 = vpop.f32.mrb[0].mxu0
        %v2717 = vadd.f32 %v2492, %v2716
        %v2718 = vpop.f32.mrb[0].mxu0
        %2719 = vmatprep.mubr.f32.mxu0 0.0
        %2720 = vmatmul.mubr.f32.gmra.mrb[0].mxu0 %v2340
        %v2721 = vpop.f32.mrb[0].mxu0
        %v2722 = vadd.f32 %v2497, %v2721
        %v2723 = vpop.f32.mrb[0].mxu0
        %2724 = vmatprep.mubr.f32.mxu0 0.0
        %2725 = vmatmul.mubr.f32.gmra.mrb[0].mxu0 %v2341
        %v2726 = vpop.f32.mrb[0].mxu0
        %v2727 = vadd.f32 %v2502, %v2726
        %v2728 = vpop.f32.mrb[0].mxu0
        %2729 = vmatprep.mubr.f32.mxu0 0.0
        %2730 = vmatmul.mubr.f32.gmra.mrb[0].mxu0 %v2342
        %v2731 = vpop.f32.mrb[0].mxu0
        %v2732 = vadd.f32 %v2507, %v2731
        %v2733 = vpop.f32.mrb[0].mxu0
        %2734 = vmatprep.mubr.f32.mxu0 0.0
        %2735 = vmatmul.mubr.f32.gmra.mrb[0].mxu0 %v2343
        %v2736 = vpop.f32.mrb[0].mxu0
        %v2737 = vadd.f32 %v2512, %v2736
        %v2738 = vpop.f32.mrb[0].mxu0
        %2739 = vmatprep.mubr.f32.mxu0 0.0
        %2740 = vmatmul.mubr.f32.gmra.mrb[0].mxu0 %v2344
        %v2741 = vpop.f32.mrb[0].mxu0
        %v2742 = vadd.f32 %v2517, %v2741
        %v2743 = vpop.f32.mrb[0].mxu0
        %2744 = vmatprep.mubr.f32.mxu0 0.0
        %2745 = vmatmul.mubr.f32.gmra.mrb[0].mxu0 %v2345
        %v2746 = vpop.f32.mrb[0].mxu0
        %v2747 = vadd.f32 %v2522, %v2746
        %v2748 = vpop.f32.mrb[0].mxu0
        %2749 = vmatprep.mubr.f32.mxu0 0.0
        %2750 = vmatmul.mubr.f32.gmra.mrb[0].mxu0 %v2346
        %v2751 = vpop.f32.mrb[0].mxu0
        %v2752 = vadd.f32 %v2527, %v2751
        %v2753 = vpop.f32.mrb[0].mxu0
        %2754 = vmatprep.mubr.f32.mxu0 0.0
        %2755 = vmatmul.mubr.f32.gmra.mrb[0].mxu0 %v2347
        %v2756 = vpop.f32.mrb[0].mxu0
        %v2757 = vadd.f32 %v2532, %v2756
        %v2758 = vpop.f32.mrb[0].mxu0
        %2759 = vmatprep.mubr.f32.mxu0 0.0
        %2760 = vmatmul.mubr.f32.gmra.mrb[0].mxu0 %v2348
        %v2761 = vpop.f32.mrb[0].mxu0
        %v2762 = vadd.f32 %v2537, %v2761
        %v2763 = vpop.f32.mrb[0].mxu0
        %2764 = vmatprep.mubr.f32.mxu0 0.0
        %2765 = vmatmul.mubr.f32.gmra.mrb[0].mxu0 %v2349
        %v2766 = vpop.f32.mrb[0].mxu0
        %v2767 = vadd.f32 %v2542, %v2766
        %v2768 = vpop.f32.mrb[0].mxu0
        %2769 = vmatprep.mubr.f32.mxu0 0.0
        %2770 = vmatmul.mubr.f32.gmra.mrb[0].mxu0 %v2350
        %v2771 = vpop.f32.mrb[0].mxu0
        %v2772 = vadd.f32 %v2547, %v2771
        %v2773 = vpop.f32.mrb[0].mxu0
        %2774 = vmatprep.mubr.f32.mxu0 0.0
        %2775 = vmatmul.mubr.f32.gmra.mrb[0].mxu0 %v2351
        %v2776 = vpop.f32.mrb[0].mxu0
        %v2777 = vadd.f32 %v2552, %v2776
        %v2778 = vpop.f32.mrb[0].mxu0
        %2779 = vmatprep.mubr.f32.mxu0 0.0
        %2780 = vmatmul.mubr.f32.gmra.mrb[0].mxu0 %v2352
        %v2781 = vpop.f32.mrb[0].mxu0
        %v2782 = vadd.f32 %v2557, %v2781
        %v2783 = vpop.f32.mrb[0].mxu0
        %2784 = vmatprep.mubr.f32.mxu0 0.0
        %2785 = vmatmul.mubr.f32.gmra.mrb[0].mxu0 %v2353
        %v2786 = vpop.f32.mrb[0].mxu0
        %v2787 = vadd.f32 %v2562, %v2786
        %v2788 = vpop.f32.mrb[0].mxu0
        %2789 = vmatprep.mubr.f32.mxu0 0.0
        %2790 = vmatmul.mubr.f32.gmra.mrb[0].mxu0 %v2354
        %v2791 = vpop.f32.mrb[0].mxu0
        %v2792 = vadd.f32 %v2567, %v2791
        %v2793 = vpop.f32.mrb[0].mxu0
        %2794 = vmatprep.mubr.f32.mxu0 0.0
        %2795 = vmatmul.mubr.f32.gmra.mrb[0].mxu0 %v2355
        %v2796 = vpop.f32.mrb[0].mxu0
        %v2797 = vadd.f32 %v2572, %v2796
        %v2798 = vpop.f32.mrb[0].mxu0
        %2799 = vmatprep.mubr.f32.mxu0 0.0
        %2800 = vmatmul.mubr.f32.gmra.mrb[0].mxu0 %v2356
        %v2801 = vpop.f32.mrb[0].mxu0
        %v2802 = vadd.f32 %v2577, %v2801
        %v2803 = vpop.f32.mrb[0].mxu0
        %2804 = vmatprep.mubr.f32.mxu0 0.0
        %2805 = vmatmul.mubr.f32.gmra.mrb[0].mxu0 %v2357
        %v2806 = vpop.f32.mrb[0].mxu0
        %v2807 = vadd.f32 %v2582, %v2806
        %v2808 = vpop.f32.mrb[0].mxu0
        %2809 = vmatprep.mubr.f32.mxu0 0.0
        %2810 = vmatmul.mubr.f32.gmra.mrb[0].mxu0 %v2358
        %v2811 = vpop.f32.mrb[0].mxu0
        %v2812 = vadd.f32 %v2587, %v2811
        %v2813 = vpop.f32.mrb[0].mxu0
        %2814 = vmatprep.mubr.f32.mxu0 0.0
        %2815 = vmatmul.mubr.f32.gmra.mrb[0].mxu0 %v2359
        %v2816 = vpop.f32.mrb[0].mxu0
        %v2817 = vadd.f32 %v2592, %v2816
        %v2818 = vpop.f32.mrb[0].mxu0
        %2819 = vmatprep.mubr.f32.mxu0 0.0
        %2820 = vmatmul.mubr.f32.gmra.mrb[0].mxu0 %v2360
        %v2821 = vpop.f32.mrb[0].mxu0
        %v2822 = vadd.f32 %v2597, %v2821
        %v2823 = vpop.f32.mrb[0].mxu0
        %2824 = vmatprep.mubr.f32.mxu0 0.0
        %2825 = vmatmul.mubr.f32.gmra.mrb[0].mxu0 %v2361
        %v2826 = vpop.f32.mrb[0].mxu0
        %v2827 = vadd.f32 %v2602, %v2826
        %v2828 = vpop.f32.mrb[0].mxu0
        %2829 = vmatprep.mubr.f32.mxu0 0.0
        %2830 = vmatmul.mubr.f32.gmra.mrb[0].mxu0 %v2362
        %v2831 = vpop.f32.mrb[0].mxu0
        %v2832 = vadd.f32 %v2607, %v2831
        %v2833 = vpop.f32.mrb[0].mxu0
        %2834 = vmatprep.mubr.f32.mxu0 0.0
        %2835 = vmatmul.mubr.f32.gmra.mrb[0].mxu0 %v2363
        %v2836 = vpop.f32.mrb[0].mxu0
        %v2837 = vadd.f32 %v2612, %v2836
        %v2838 = vpop.f32.mrb[0].mxu0
        %2839 = vmatprep.mubr.f32.mxu0 0.0
        %2840 = vmatmul.mubr.f32.gmra.mrb[0].mxu0 %v2364
        %v2841 = vpop.f32.mrb[0].mxu0
        %v2842 = vadd.f32 %v2617, %v2841
        %v2843 = vpop.f32.mrb[0].mxu0
        %2844 = vmatprep.mubr.f32.mxu0 0.0
        %2845 = vmatmul.mubr.f32.gmra.mrb[0].mxu0 %v2365
        %v2846 = vpop.f32.mrb[0].mxu0
        %v2847 = vadd.f32 %v2622, %v2846
        %v2848 = vpop.f32.mrb[0].mxu0
        %2849 = vdwg.mxu0
        %v2850 = vld [vmem:[#allocation2 + $0x22] sm:$0xff]
        %v2851 = vld [vmem:[#allocation2 + $0x2a] sm:$0xff]
        %v2852 = vld [vmem:[#allocation2 + $0x32] sm:$0xff]
        %v2853 = vld [vmem:[#allocation2 + $0x3a] sm:$0xff]
        %v2854 = vld [vmem:[#allocation2 + $0x42] sm:$0xff]
        %v2855 = vld [vmem:[#allocation2 + $0x4a] sm:$0xff]
        %v2856 = vld [vmem:[#allocation2 + $0x52] sm:$0xff]
        %v2857 = vld [vmem:[#allocation2 + $0x5a] sm:$0xff]
        %v2858 = vld [vmem:[#allocation2 + $0x62] sm:$0xff]
        %v2859 = vld [vmem:[#allocation2 + $0x6a] sm:$0xff]
        %v2860 = vld [vmem:[#allocation2 + $0x72] sm:$0xff]
        %v2861 = vld [vmem:[#allocation2 + $0x7a] sm:$0xff]
        %v2862 = vld [vmem:[#allocation2 + $0x82] sm:$0xff]
        %v2863 = vld [vmem:[#allocation2 + $0x8a] sm:$0xff]
        %v2864 = vld [vmem:[#allocation2 + $0x92] sm:$0xff]
        %v2865 = vld [vmem:[#allocation2 + $0x9a] sm:$0xff]
        %v2866 = vld [vmem:[#allocation2 + $0xa2] sm:$0xff]
        %v2867 = vld [vmem:[#allocation2 + $0xaa] sm:$0xff]
        %v2868 = vld [vmem:[#allocation2 + $0xb2] sm:$0xff]
        %v2869 = vld [vmem:[#allocation2 + $0xba] sm:$0xff]
        %v2870 = vld [vmem:[#allocation2 + $0xc2] sm:$0xff]
        %v2871 = vld [vmem:[#allocation2 + $0xca] sm:$0xff]
        %v2872 = vld [vmem:[#allocation2 + $0xd2] sm:$0xff]
        %v2873 = vld [vmem:[#allocation2 + $0xda] sm:$0xff]
        %v2874 = vld [vmem:[#allocation2 + $0xe2] sm:$0xff]
        %v2875 = vld [vmem:[#allocation2 + $0xea] sm:$0xff]
        %v2876 = vld [vmem:[#allocation2 + $0xf2] sm:$0xff]
        %v2877 = vld [vmem:[#allocation2 + $0xfa] sm:$0xff]
        %v2878 = vld [vmem:[#allocation2 + $0x102] sm:$0xff]
        %v2879 = vld [vmem:[#allocation2 + $0x10a] sm:$0xff]
        %v2880 = vld [vmem:[#allocation2 + $0x112] sm:$0xff]
        %v2881 = vld [vmem:[#allocation2 + $0x11a] sm:$0xff]
        %v2882 = vld [vmem:[%s1 + $0x400] sm:$0xff]
        %v2883 = vld [vmem:[%s1 + $0x408] sm:$0xff]
        %v2884 = vld [vmem:[%s1 + $0x410] sm:$0xff]
        %v2885 = vld [vmem:[%s1 + $0x418] sm:$0xff]
        %v2886 = vld [vmem:[%s1 + $0x420] sm:$0xff]
        %v2887 = vld [vmem:[%s1 + $0x428] sm:$0xff]
        %v2888 = vld [vmem:[%s1 + $0x430] sm:$0xff]
        %v2889 = vld [vmem:[%s1 + $0x438] sm:$0xff]
        %v2890 = vld [vmem:[%s1 + $0x440] sm:$0xff]
        %v2891 = vld [vmem:[%s1 + $0x448] sm:$0xff]
        %v2892 = vld [vmem:[%s1 + $0x450] sm:$0xff]
        %v2893 = vld [vmem:[%s1 + $0x458] sm:$0xff]
        %v2894 = vld [vmem:[%s1 + $0x460] sm:$0xff]
        %v2895 = vld [vmem:[%s1 + $0x468] sm:$0xff]
        %v2896 = vld [vmem:[%s1 + $0x470] sm:$0xff]
        %v2897 = vld [vmem:[%s1 + $0x478] sm:$0xff]
        %2898 = vmatprep.subr.mxu0 0.0
        %2899 = vmatpush1.msra.mxu0 %v2882
        %2900 = vmatprep.subr.mxu0 0.0
        %2901 = vmatpush1.msra.mxu0 %v2883
        %2902 = vmatprep.subr.mxu0 0.0
        %2903 = vmatpush1.msra.mxu0 %v2884
        %2904 = vmatprep.subr.mxu0 0.0
        %2905 = vmatpush1.msra.mxu0 %v2885
        %2906 = vmatprep.subr.mxu0 0.0
        %2907 = vmatpush1.msra.mxu0 %v2886
        %2908 = vmatprep.subr.mxu0 0.0
        %2909 = vmatpush1.msra.mxu0 %v2887
        %2910 = vmatprep.subr.mxu0 0.0
        %2911 = vmatpush1.msra.mxu0 %v2888
        %2912 = vmatprep.subr.mxu0 0.0
        %2913 = vmatpush1.msra.mxu0 %v2889
        %2914 = vmatprep.subr.mxu0 0.0
        %2915 = vmatpush1.msra.mxu0 %v2890
        %2916 = vmatprep.subr.mxu0 0.0
        %2917 = vmatpush1.msra.mxu0 %v2891
        %2918 = vmatprep.subr.mxu0 0.0
        %2919 = vmatpush1.msra.mxu0 %v2892
        %2920 = vmatprep.subr.mxu0 0.0
        %2921 = vmatpush1.msra.mxu0 %v2893
        %2922 = vmatprep.subr.mxu0 0.0
        %2923 = vmatpush1.msra.mxu0 %v2894
        %2924 = vmatprep.subr.mxu0 0.0
        %2925 = vmatpush1.msra.mxu0 %v2895
        %2926 = vmatprep.subr.mxu0 0.0
        %2927 = vmatpush1.msra.mxu0 %v2896
        %2928 = vmatprep.subr.mxu0 0.0
        %2929 = vmatpush1.msra.mxu0 %v2897
        %2930 = vmatprep.subr.mxu0 0.0
        %2931 = vmatpush1.msra.mxu0 0.0
        %2932 = vmatprep.subr.mxu0 0.0
        %2933 = vmatpush1.msra.mxu0 0.0
        %2934 = vmatprep.subr.mxu0 0.0
        %2935 = vmatpush1.msra.mxu0 0.0
        %2936 = vmatprep.subr.mxu0 0.0
        %2937 = vmatpush1.msra.mxu0 0.0
        %2938 = vmatprep.subr.mxu0 0.0
        %2939 = vmatpush1.msra.mxu0 0.0
        %2940 = vmatprep.subr.mxu0 0.0
        %2941 = vmatpush1.msra.mxu0 0.0
        %2942 = vmatprep.subr.mxu0 0.0
        %2943 = vmatpush1.msra.mxu0 0.0
        %2944 = vmatprep.subr.mxu0 0.0
        %2945 = vmatpush1.msra.mxu0 0.0
        %2946 = vmatprep.subr.mxu0 0.0
        %2947 = vmatpush1.msra.mxu0 0.0
        %2948 = vmatprep.subr.mxu0 0.0
        %2949 = vmatpush1.msra.mxu0 0.0
        %2950 = vmatprep.subr.mxu0 0.0
        %2951 = vmatpush1.msra.mxu0 0.0
        %2952 = vmatprep.subr.mxu0 0.0
        %2953 = vmatpush1.msra.mxu0 0.0
        %2954 = vmatprep.subr.mxu0 0.0
        %2955 = vmatpush1.msra.mxu0 0.0
        %2956 = vmatprep.subr.mxu0 0.0
        %2957 = vmatpush1.msra.mxu0 0.0
        %2958 = vmatprep.subr.mxu0 0.0
        %2959 = vmatpush1.msra.mxu0 0.0
        %2960 = vmatprep.subr.mxu0 0.0
        %2961 = vmatpush1.msra.mxu0 0.0
        %2962 = vmatprep.mubr.f32.mxu0 0.0
        %2963 = vmatmul.mubr.f32.gmra.mrb[0].mxu0 %v2850
        %v2964 = vpop.f32.mrb[0].mxu0
        %v2965 = vadd.f32 0.0, %v2964
        %v2966 = vpop.f32.mrb[0].mxu0
        %2967 = vmatprep.mubr.f32.mxu0 0.0
        %2968 = vmatmul.mubr.f32.gmra.mrb[0].mxu0 %v2851
        %v2969 = vpop.f32.mrb[0].mxu0
        %v2970 = vadd.f32 0.0, %v2969
        %v2971 = vpop.f32.mrb[0].mxu0
        %2972 = vmatprep.mubr.f32.mxu0 0.0
        %2973 = vmatmul.mubr.f32.gmra.mrb[0].mxu0 %v2852
        %v2974 = vpop.f32.mrb[0].mxu0
        %v2975 = vadd.f32 0.0, %v2974
        %v2976 = vpop.f32.mrb[0].mxu0
        %2977 = vmatprep.mubr.f32.mxu0 0.0
        %2978 = vmatmul.mubr.f32.gmra.mrb[0].mxu0 %v2853
        %v2979 = vpop.f32.mrb[0].mxu0
        %v2980 = vadd.f32 0.0, %v2979
        %v2981 = vpop.f32.mrb[0].mxu0
        %2982 = vmatprep.mubr.f32.mxu0 0.0
        %2983 = vmatmul.mubr.f32.gmra.mrb[0].mxu0 %v2854
        %v2984 = vpop.f32.mrb[0].mxu0
        %v2985 = vadd.f32 0.0, %v2984
        %v2986 = vpop.f32.mrb[0].mxu0
        %2987 = vmatprep.mubr.f32.mxu0 0.0
        %2988 = vmatmul.mubr.f32.gmra.mrb[0].mxu0 %v2855
        %v2989 = vpop.f32.mrb[0].mxu0
        %v2990 = vadd.f32 0.0, %v2989
        %v2991 = vpop.f32.mrb[0].mxu0
        %2992 = vmatprep.mubr.f32.mxu0 0.0
        %2993 = vmatmul.mubr.f32.gmra.mrb[0].mxu0 %v2856
        %v2994 = vpop.f32.mrb[0].mxu0
        %v2995 = vadd.f32 0.0, %v2994
        %v2996 = vpop.f32.mrb[0].mxu0
        %2997 = vmatprep.mubr.f32.mxu0 0.0
        %2998 = vmatmul.mubr.f32.gmra.mrb[0].mxu0 %v2857
        %v2999 = vpop.f32.mrb[0].mxu0
        %v3000 = vadd.f32 0.0, %v2999
        %v3001 = vpop.f32.mrb[0].mxu0
        %3002 = vmatprep.mubr.f32.mxu0 0.0
        %3003 = vmatmul.mubr.f32.gmra.mrb[0].mxu0 %v2858
        %v3004 = vpop.f32.mrb[0].mxu0
        %v3005 = vadd.f32 0.0, %v3004
        %v3006 = vpop.f32.mrb[0].mxu0
        %3007 = vmatprep.mubr.f32.mxu0 0.0
        %3008 = vmatmul.mubr.f32.gmra.mrb[0].mxu0 %v2859
        %v3009 = vpop.f32.mrb[0].mxu0
        %v3010 = vadd.f32 0.0, %v3009
        %v3011 = vpop.f32.mrb[0].mxu0
        %3012 = vmatprep.mubr.f32.mxu0 0.0
        %3013 = vmatmul.mubr.f32.gmra.mrb[0].mxu0 %v2860
        %v3014 = vpop.f32.mrb[0].mxu0
        %v3015 = vadd.f32 0.0, %v3014
        %v3016 = vpop.f32.mrb[0].mxu0
        %3017 = vmatprep.mubr.f32.mxu0 0.0
        %3018 = vmatmul.mubr.f32.gmra.mrb[0].mxu0 %v2861
        %v3019 = vpop.f32.mrb[0].mxu0
        %v3020 = vadd.f32 0.0, %v3019
        %v3021 = vpop.f32.mrb[0].mxu0
        %3022 = vmatprep.mubr.f32.mxu0 0.0
        %3023 = vmatmul.mubr.f32.gmra.mrb[0].mxu0 %v2862
        %v3024 = vpop.f32.mrb[0].mxu0
        %v3025 = vadd.f32 0.0, %v3024
        %v3026 = vpop.f32.mrb[0].mxu0
        %3027 = vmatprep.mubr.f32.mxu0 0.0
        %3028 = vmatmul.mubr.f32.gmra.mrb[0].mxu0 %v2863
        %v3029 = vpop.f32.mrb[0].mxu0
        %v3030 = vadd.f32 0.0, %v3029
        %v3031 = vpop.f32.mrb[0].mxu0
        %3032 = vmatprep.mubr.f32.mxu0 0.0
        %3033 = vmatmul.mubr.f32.gmra.mrb[0].mxu0 %v2864
        %v3034 = vpop.f32.mrb[0].mxu0
        %v3035 = vadd.f32 0.0, %v3034
        %v3036 = vpop.f32.mrb[0].mxu0
        %3037 = vmatprep.mubr.f32.mxu0 0.0
        %3038 = vmatmul.mubr.f32.gmra.mrb[0].mxu0 %v2865
        %v3039 = vpop.f32.mrb[0].mxu0
        %v3040 = vadd.f32 0.0, %v3039
        %v3041 = vpop.f32.mrb[0].mxu0
        %3042 = vmatprep.mubr.f32.mxu0 0.0
        %3043 = vmatmul.mubr.f32.gmra.mrb[0].mxu0 %v2866
        %v3044 = vpop.f32.mrb[0].mxu0
        %v3045 = vadd.f32 0.0, %v3044
        %v3046 = vpop.f32.mrb[0].mxu0
        %3047 = vmatprep.mubr.f32.mxu0 0.0
        %3048 = vmatmul.mubr.f32.gmra.mrb[0].mxu0 %v2867
        %v3049 = vpop.f32.mrb[0].mxu0
        %v3050 = vadd.f32 0.0, %v3049
        %v3051 = vpop.f32.mrb[0].mxu0
        %3052 = vmatprep.mubr.f32.mxu0 0.0
        %3053 = vmatmul.mubr.f32.gmra.mrb[0].mxu0 %v2868
        %v3054 = vpop.f32.mrb[0].mxu0
        %v3055 = vadd.f32 0.0, %v3054
        %v3056 = vpop.f32.mrb[0].mxu0
        %3057 = vmatprep.mubr.f32.mxu0 0.0
        %3058 = vmatmul.mubr.f32.gmra.mrb[0].mxu0 %v2869
        %v3059 = vpop.f32.mrb[0].mxu0
        %v3060 = vadd.f32 0.0, %v3059
        %v3061 = vpop.f32.mrb[0].mxu0
        %3062 = vmatprep.mubr.f32.mxu0 0.0
        %3063 = vmatmul.mubr.f32.gmra.mrb[0].mxu0 %v2870
        %v3064 = vpop.f32.mrb[0].mxu0
        %v3065 = vadd.f32 0.0, %v3064
        %v3066 = vpop.f32.mrb[0].mxu0
        %3067 = vmatprep.mubr.f32.mxu0 0.0
        %3068 = vmatmul.mubr.f32.gmra.mrb[0].mxu0 %v2871
        %v3069 = vpop.f32.mrb[0].mxu0
        %v3070 = vadd.f32 0.0, %v3069
        %v3071 = vpop.f32.mrb[0].mxu0
        %3072 = vmatprep.mubr.f32.mxu0 0.0
        %3073 = vmatmul.mubr.f32.gmra.mrb[0].mxu0 %v2872
        %v3074 = vpop.f32.mrb[0].mxu0
        %v3075 = vadd.f32 0.0, %v3074
        %v3076 = vpop.f32.mrb[0].mxu0
        %3077 = vmatprep.mubr.f32.mxu0 0.0
        %3078 = vmatmul.mubr.f32.gmra.mrb[0].mxu0 %v2873
        %v3079 = vpop.f32.mrb[0].mxu0
        %v3080 = vadd.f32 0.0, %v3079
        %v3081 = vpop.f32.mrb[0].mxu0
        %3082 = vmatprep.mubr.f32.mxu0 0.0
        %3083 = vmatmul.mubr.f32.gmra.mrb[0].mxu0 %v2874
        %v3084 = vpop.f32.mrb[0].mxu0
        %v3085 = vadd.f32 0.0, %v3084
        %v3086 = vpop.f32.mrb[0].mxu0
        %3087 = vmatprep.mubr.f32.mxu0 0.0
        %3088 = vmatmul.mubr.f32.gmra.mrb[0].mxu0 %v2875
        %v3089 = vpop.f32.mrb[0].mxu0
        %v3090 = vadd.f32 0.0, %v3089
        %v3091 = vpop.f32.mrb[0].mxu0
        %3092 = vmatprep.mubr.f32.mxu0 0.0
        %3093 = vmatmul.mubr.f32.gmra.mrb[0].mxu0 %v2876
        %v3094 = vpop.f32.mrb[0].mxu0
        %v3095 = vadd.f32 0.0, %v3094
        %v3096 = vpop.f32.mrb[0].mxu0
        %3097 = vmatprep.mubr.f32.mxu0 0.0
        %3098 = vmatmul.mubr.f32.gmra.mrb[0].mxu0 %v2877
        %v3099 = vpop.f32.mrb[0].mxu0
        %v3100 = vadd.f32 0.0, %v3099
        %v3101 = vpop.f32.mrb[0].mxu0
        %3102 = vmatprep.mubr.f32.mxu0 0.0
        %3103 = vmatmul.mubr.f32.gmra.mrb[0].mxu0 %v2878
        %v3104 = vpop.f32.mrb[0].mxu0
        %v3105 = vadd.f32 0.0, %v3104
        %v3106 = vpop.f32.mrb[0].mxu0
        %3107 = vmatprep.mubr.f32.mxu0 0.0
        %3108 = vmatmul.mubr.f32.gmra.mrb[0].mxu0 %v2879
        %v3109 = vpop.f32.mrb[0].mxu0
        %v3110 = vadd.f32 0.0, %v3109
        %v3111 = vpop.f32.mrb[0].mxu0
        %3112 = vmatprep.mubr.f32.mxu0 0.0
        %3113 = vmatmul.mubr.f32.gmra.mrb[0].mxu0 %v2880
        %v3114 = vpop.f32.mrb[0].mxu0
        %v3115 = vadd.f32 0.0, %v3114
        %v3116 = vpop.f32.mrb[0].mxu0
        %3117 = vmatprep.mubr.f32.mxu0 0.0
        %3118 = vmatmul.mubr.f32.gmra.mrb[0].mxu0 %v2881
        %v3119 = vpop.f32.mrb[0].mxu0
        %v3120 = vadd.f32 0.0, %v3119
        %v3121 = vpop.f32.mrb[0].mxu0
        %3122 = vdwg.mxu0
        %v3123 = vadd.f32 %v2692, %v2965
        %v3124 = vadd.f32 %v2697, %v2970
        %v3125 = vadd.f32 %v2702, %v2975
        %v3126 = vadd.f32 %v2707, %v2980
        %v3127 = vadd.f32 %v2712, %v2985
        %v3128 = vadd.f32 %v2717, %v2990
        %v3129 = vadd.f32 %v2722, %v2995
        %v3130 = vadd.f32 %v2727, %v3000
        %v3131 = vadd.f32 %v2732, %v3005
        %v3132 = vadd.f32 %v2737, %v3010
        %v3133 = vadd.f32 %v2742, %v3015
        %v3134 = vadd.f32 %v2747, %v3020
        %v3135 = vadd.f32 %v2752, %v3025
        %v3136 = vadd.f32 %v2757, %v3030
        %v3137 = vadd.f32 %v2762, %v3035
        %v3138 = vadd.f32 %v2767, %v3040
        %v3139 = vadd.f32 %v2772, %v3045
        %v3140 = vadd.f32 %v2777, %v3050
        %v3141 = vadd.f32 %v2782, %v3055
        %v3142 = vadd.f32 %v2787, %v3060
        %v3143 = vadd.f32 %v2792, %v3065
        %v3144 = vadd.f32 %v2797, %v3070
        %v3145 = vadd.f32 %v2802, %v3075
        %v3146 = vadd.f32 %v2807, %v3080
        %v3147 = vadd.f32 %v2812, %v3085
        %v3148 = vadd.f32 %v2817, %v3090
        %v3149 = vadd.f32 %v2822, %v3095
        %v3150 = vadd.f32 %v2827, %v3100
        %v3151 = vadd.f32 %v2832, %v3105
        %v3152 = vadd.f32 %v2837, %v3110
        %v3153 = vadd.f32 %v2842, %v3115
        %v3154 = vadd.f32 %v2847, %v3120
        %v3155 = vsel %vm564, %v3123, 0.0
        %v3156 = vsel %vm565, %v3124, 0.0
        %v3157 = vsel %vm566, %v3125, 0.0
        %v3158 = vsel %vm567, %v3126, 0.0
        %v3159 = vsel %vm568, %v3127, 0.0
        %v3160 = vsel %vm569, %v3128, 0.0
        %v3161 = vsel %vm570, %v3129, 0.0
        %v3162 = vsel %vm571, %v3130, 0.0
        %v3163 = vsel %vm572, %v3131, 0.0
        %v3164 = vsel %vm573, %v3132, 0.0
        %v3165 = vsel %vm574, %v3133, 0.0
        %v3166 = vsel %vm575, %v3134, 0.0
        %v3167 = vsel %vm576, %v3135, 0.0
        %v3168 = vsel %vm577, %v3136, 0.0
        %v3169 = vsel %vm578, %v3137, 0.0
        %v3170 = vsel %vm579, %v3138, 0.0
        %v3171 = vsel %vm580, %v3139, 0.0
        %v3172 = vsel %vm581, %v3140, 0.0
        %v3173 = vsel %vm582, %v3141, 0.0
        %v3174 = vsel %vm583, %v3142, 0.0
        %v3175 = vsel %vm584, %v3143, 0.0
        %v3176 = vsel %vm585, %v3144, 0.0
        %v3177 = vsel %vm586, %v3145, 0.0
        %v3178 = vsel %vm587, %v3146, 0.0
        %v3179 = vsel %vm588, %v3147, 0.0
        %v3180 = vsel %vm589, %v3148, 0.0
        %v3181 = vsel %vm590, %v3149, 0.0
        %v3182 = vsel %vm591, %v3150, 0.0
        %v3183 = vsel %vm592, %v3151, 0.0
        %v3184 = vsel %vm593, %v3152, 0.0
        %v3185 = vsel %vm594, %v3153, 0.0
        %v3186 = vsel %vm595, %v3154, 0.0
        %v3187 = vadd.f32 %v2302, %v3155
        %v3188 = vadd.f32 %v2303, %v3156
        %v3189 = vadd.f32 %v2304, %v3157
        %v3190 = vadd.f32 %v2305, %v3158
        %v3191 = vadd.f32 %v2306, %v3159
        %v3192 = vadd.f32 %v2307, %v3160
        %v3193 = vadd.f32 %v2308, %v3161
        %v3194 = vadd.f32 %v2309, %v3162
        %v3195 = vadd.f32 %v2310, %v3163
        %v3196 = vadd.f32 %v2311, %v3164
        %v3197 = vadd.f32 %v2312, %v3165
        %v3198 = vadd.f32 %v2313, %v3166
        %v3199 = vadd.f32 %v2314, %v3167
        %v3200 = vadd.f32 %v2315, %v3168
        %v3201 = vadd.f32 %v2316, %v3169
        %v3202 = vadd.f32 %v2317, %v3170
        %v3203 = vadd.f32 %v2318, %v3171
        %v3204 = vadd.f32 %v2319, %v3172
        %v3205 = vadd.f32 %v2320, %v3173
        %v3206 = vadd.f32 %v2321, %v3174
        %v3207 = vadd.f32 %v2322, %v3175
        %v3208 = vadd.f32 %v2323, %v3176
        %v3209 = vadd.f32 %v2324, %v3177
        %v3210 = vadd.f32 %v2325, %v3178
        %v3211 = vadd.f32 %v2326, %v3179
        %v3212 = vadd.f32 %v2327, %v3180
        %v3213 = vadd.f32 %v2328, %v3181
        %v3214 = vadd.f32 %v2329, %v3182
        %v3215 = vadd.f32 %v2330, %v3183
        %v3216 = vadd.f32 %v2331, %v3184
        %v3217 = vadd.f32 %v2332, %v3185
        %v3218 = vadd.f32 %v2333, %v3186
        %v3219 = vld [vmem:[%s2] sm:$0x1]
        %v3221 = vlaneseq
        %v3222 = vshrl.u32 %v3221, 7
        %v3223 = vsub.s32 0, %v3222
        %v3224 = vrot.slane %v3219, %v3223
        %v3226 = vadd.f32 %v3187, %v3224
        %v3227 = vadd.f32 %v3188, %v3224
        %v3228 = vadd.f32 %v3189, %v3224
        %v3229 = vadd.f32 %v3190, %v3224
        %v3230 = vadd.f32 %v3191, %v3224
        %v3231 = vadd.f32 %v3192, %v3224
        %v3232 = vadd.f32 %v3193, %v3224
        %v3233 = vadd.f32 %v3194, %v3224
        %v3234 = vadd.f32 %v3195, %v3224
        %v3235 = vadd.f32 %v3196, %v3224
        %v3236 = vadd.f32 %v3197, %v3224
        %v3237 = vadd.f32 %v3198, %v3224
        %v3238 = vadd.f32 %v3199, %v3224
        %v3239 = vadd.f32 %v3200, %v3224
        %v3240 = vadd.f32 %v3201, %v3224
        %v3241 = vadd.f32 %v3202, %v3224
        %v3242 = vadd.f32 %v3203, %v3224
        %v3243 = vadd.f32 %v3204, %v3224
        %v3244 = vadd.f32 %v3205, %v3224
        %v3245 = vadd.f32 %v3206, %v3224
        %v3246 = vadd.f32 %v3207, %v3224
        %v3247 = vadd.f32 %v3208, %v3224
        %v3248 = vadd.f32 %v3209, %v3224
        %v3249 = vadd.f32 %v3210, %v3224
        %v3250 = vadd.f32 %v3211, %v3224
        %v3251 = vadd.f32 %v3212, %v3224
        %v3252 = vadd.f32 %v3213, %v3224
        %v3253 = vadd.f32 %v3214, %v3224
        %v3254 = vadd.f32 %v3215, %v3224
        %v3255 = vadd.f32 %v3216, %v3224
        %v3256 = vadd.f32 %v3217, %v3224
        %v3257 = vadd.f32 %v3218, %v3224
        %v3258 = vmax.f32 %v3226, 0.0
        %v3259 = vmax.f32 %v3227, 0.0
        %v3260 = vmax.f32 %v3228, 0.0
        %v3261 = vmax.f32 %v3229, 0.0
        %v3262 = vmax.f32 %v3230, 0.0
        %v3263 = vmax.f32 %v3231, 0.0
        %v3264 = vmax.f32 %v3232, 0.0
        %v3265 = vmax.f32 %v3233, 0.0
        %v3266 = vmax.f32 %v3234, 0.0
        %v3267 = vmax.f32 %v3235, 0.0
        %v3268 = vmax.f32 %v3236, 0.0
        %v3269 = vmax.f32 %v3237, 0.0
        %v3270 = vmax.f32 %v3238, 0.0
        %v3271 = vmax.f32 %v3239, 0.0
        %v3272 = vmax.f32 %v3240, 0.0
        %v3273 = vmax.f32 %v3241, 0.0
        %v3274 = vmax.f32 %v3242, 0.0
        %v3275 = vmax.f32 %v3243, 0.0
        %v3276 = vmax.f32 %v3244, 0.0
        %v3277 = vmax.f32 %v3245, 0.0
        %v3278 = vmax.f32 %v3246, 0.0
        %v3279 = vmax.f32 %v3247, 0.0
        %v3280 = vmax.f32 %v3248, 0.0
        %v3281 = vmax.f32 %v3249, 0.0
        %v3282 = vmax.f32 %v3250, 0.0
        %v3283 = vmax.f32 %v3251, 0.0
        %v3284 = vmax.f32 %v3252, 0.0
        %v3285 = vmax.f32 %v3253, 0.0
        %v3286 = vmax.f32 %v3254, 0.0
        %v3287 = vmax.f32 %v3255, 0.0
        %v3288 = vmax.f32 %v3256, 0.0
        %v3289 = vmax.f32 %v3257, 0.0
        %3290 = vst [vmem:[#allocation6] sm:$0xff] %v3258
        %3291 = vst [vmem:[#allocation6 + $0x8] sm:$0xff] %v3259
        %3292 = vst [vmem:[#allocation6 + $0x10] sm:$0xff] %v3260
        %3293 = vst [vmem:[#allocation6 + $0x18] sm:$0xff] %v3261
        %3294 = vst [vmem:[#allocation6 + $0x20] sm:$0xff] %v3262
        %3295 = vst [vmem:[#allocation6 + $0x28] sm:$0xff] %v3263
        %3296 = vst [vmem:[#allocation6 + $0x30] sm:$0xff] %v3264
        %3297 = vst [vmem:[#allocation6 + $0x38] sm:$0xff] %v3265
        %3298 = vst [vmem:[#allocation6 + $0x40] sm:$0xff] %v3266
        %3299 = vst [vmem:[#allocation6 + $0x48] sm:$0xff] %v3267
        %3300 = vst [vmem:[#allocation6 + $0x50] sm:$0xff] %v3268
        %3301 = vst [vmem:[#allocation6 + $0x58] sm:$0xff] %v3269
        %3302 = vst [vmem:[#allocation6 + $0x60] sm:$0xff] %v3270
        %3303 = vst [vmem:[#allocation6 + $0x68] sm:$0xff] %v3271
        %3304 = vst [vmem:[#allocation6 + $0x70] sm:$0xff] %v3272
        %3305 = vst [vmem:[#allocation6 + $0x78] sm:$0xff] %v3273
        %3306 = vst [vmem:[#allocation6 + $0x80] sm:$0xff] %v3274
        %3307 = vst [vmem:[#allocation6 + $0x88] sm:$0xff] %v3275
        %3308 = vst [vmem:[#allocation6 + $0x90] sm:$0xff] %v3276
        %3309 = vst [vmem:[#allocation6 + $0x98] sm:$0xff] %v3277
        %3310 = vst [vmem:[#allocation6 + $0xa0] sm:$0xff] %v3278
        %3311 = vst [vmem:[#allocation6 + $0xa8] sm:$0xff] %v3279
        %3312 = vst [vmem:[#allocation6 + $0xb0] sm:$0xff] %v3280
        %3313 = vst [vmem:[#allocation6 + $0xb8] sm:$0xff] %v3281
        %3314 = vst [vmem:[#allocation6 + $0xc0] sm:$0xff] %v3282
        %3315 = vst [vmem:[#allocation6 + $0xc8] sm:$0xff] %v3283
        %3316 = vst [vmem:[#allocation6 + $0xd0] sm:$0xff] %v3284
        %3317 = vst [vmem:[#allocation6 + $0xd8] sm:$0xff] %v3285
        %3318 = vst [vmem:[#allocation6 + $0xe0] sm:$0xff] %v3286
        %3319 = vst [vmem:[#allocation6 + $0xe8] sm:$0xff] %v3287
        %3320 = vst [vmem:[#allocation6 + $0xf0] sm:$0xff] %v3288
        %3321 = vst [vmem:[#allocation6 + $0xf8] sm:$0xff] %v3289
        %v3322 = vld [vmem:[#allocation6] sm:$0xff]
        %v3323 = vld [vmem:[#allocation6 + $0x8] sm:$0xff]
        %v3324 = vld [vmem:[#allocation6 + $0x10] sm:$0xff]
        %v3325 = vld [vmem:[#allocation6 + $0x18] sm:$0xff]
        %v3326 = vld [vmem:[#allocation6 + $0x20] sm:$0xff]
        %v3327 = vld [vmem:[#allocation6 + $0x28] sm:$0xff]
        %v3328 = vld [vmem:[#allocation6 + $0x30] sm:$0xff]
        %v3329 = vld [vmem:[#allocation6 + $0x38] sm:$0xff]
        %v3330 = vld [vmem:[#allocation6 + $0x40] sm:$0xff]
        %v3331 = vld [vmem:[#allocation6 + $0x48] sm:$0xff]
        %v3332 = vld [vmem:[#allocation6 + $0x50] sm:$0xff]
        %v3333 = vld [vmem:[#allocation6 + $0x58] sm:$0xff]
        %v3334 = vld [vmem:[#allocation6 + $0x60] sm:$0xff]
        %v3335 = vld [vmem:[#allocation6 + $0x68] sm:$0xff]
        %v3336 = vld [vmem:[#allocation6 + $0x70] sm:$0xff]
        %v3337 = vld [vmem:[#allocation6 + $0x78] sm:$0xff]
        %v3338 = vld [vmem:[#allocation6 + $0x80] sm:$0xff]
        %v3339 = vld [vmem:[#allocation6 + $0x88] sm:$0xff]
        %v3340 = vld [vmem:[#allocation6 + $0x90] sm:$0xff]
        %v3341 = vld [vmem:[#allocation6 + $0x98] sm:$0xff]
        %v3342 = vld [vmem:[#allocation6 + $0xa0] sm:$0xff]
        %v3343 = vld [vmem:[#allocation6 + $0xa8] sm:$0xff]
        %v3344 = vld [vmem:[#allocation6 + $0xb0] sm:$0xff]
        %v3345 = vld [vmem:[#allocation6 + $0xb8] sm:$0xff]
        %v3346 = vld [vmem:[#allocation6 + $0xc0] sm:$0xff]
        %v3347 = vld [vmem:[#allocation6 + $0xc8] sm:$0xff]
        %v3348 = vld [vmem:[#allocation6 + $0xd0] sm:$0xff]
        %v3349 = vld [vmem:[#allocation6 + $0xd8] sm:$0xff]
        %v3350 = vld [vmem:[#allocation6 + $0xe0] sm:$0xff]
        %v3351 = vld [vmem:[#allocation6 + $0xe8] sm:$0xff]
        %v3352 = vld [vmem:[#allocation6 + $0xf0] sm:$0xff]
        %v3353 = vld [vmem:[#allocation6 + $0xf8] sm:$0xff]
        %v3354 = vld [vmem:[#allocation6 + $0x1] sm:$0xff]
        %v3355 = vld [vmem:[#allocation6 + $0x9] sm:$0xff]
        %v3356 = vld [vmem:[#allocation6 + $0x11] sm:$0xff]
        %v3357 = vld [vmem:[#allocation6 + $0x19] sm:$0xff]
        %v3358 = vld [vmem:[#allocation6 + $0x21] sm:$0xff]
        %v3359 = vld [vmem:[#allocation6 + $0x29] sm:$0xff]
        %v3360 = vld [vmem:[#allocation6 + $0x31] sm:$0xff]
        %v3361 = vld [vmem:[#allocation6 + $0x39] sm:$0xff]
        %v3362 = vld [vmem:[#allocation6 + $0x41] sm:$0xff]
        %v3363 = vld [vmem:[#allocation6 + $0x49] sm:$0xff]
        %v3364 = vld [vmem:[#allocation6 + $0x51] sm:$0xff]
        %v3365 = vld [vmem:[#allocation6 + $0x59] sm:$0xff]
        %v3366 = vld [vmem:[#allocation6 + $0x61] sm:$0xff]
        %v3367 = vld [vmem:[#allocation6 + $0x69] sm:$0xff]
        %v3368 = vld [vmem:[#allocation6 + $0x71] sm:$0xff]
        %v3369 = vld [vmem:[#allocation6 + $0x79] sm:$0xff]
        %v3370 = vld [vmem:[#allocation6 + $0x81] sm:$0xff]
        %v3371 = vld [vmem:[#allocation6 + $0x89] sm:$0xff]
        %v3372 = vld [vmem:[#allocation6 + $0x91] sm:$0xff]
        %v3373 = vld [vmem:[#allocation6 + $0x99] sm:$0xff]
        %v3374 = vld [vmem:[#allocation6 + $0xa1] sm:$0xff]
        %v3375 = vld [vmem:[#allocation6 + $0xa9] sm:$0xff]
        %v3376 = vld [vmem:[#allocation6 + $0xb1] sm:$0xff]
        %v3377 = vld [vmem:[#allocation6 + $0xb9] sm:$0xff]
        %v3378 = vld [vmem:[#allocation6 + $0xc1] sm:$0xff]
        %v3379 = vld [vmem:[#allocation6 + $0xc9] sm:$0xff]
        %v3380 = vld [vmem:[#allocation6 + $0xd1] sm:$0xff]
        %v3381 = vld [vmem:[#allocation6 + $0xd9] sm:$0xff]
        %v3382 = vld [vmem:[#allocation6 + $0xe1] sm:$0xff]
        %v3383 = vld [vmem:[#allocation6 + $0xe9] sm:$0xff]
        %v3384 = vld [vmem:[#allocation6 + $0xf1] sm:$0xff]
        %v3385 = vld [vmem:[#allocation6 + $0xf9] sm:$0xff]
        %v3386 = vmax.f32 %v3322, %v3354
        %v3387 = vmax.f32 %v3323, %v3355
        %v3388 = vmax.f32 %v3324, %v3356
        %v3389 = vmax.f32 %v3325, %v3357
        %v3390 = vmax.f32 %v3326, %v3358
        %v3391 = vmax.f32 %v3327, %v3359
        %v3392 = vmax.f32 %v3328, %v3360
        %v3393 = vmax.f32 %v3329, %v3361
        %v3394 = vmax.f32 %v3330, %v3362
        %v3395 = vmax.f32 %v3331, %v3363
        %v3396 = vmax.f32 %v3332, %v3364
        %v3397 = vmax.f32 %v3333, %v3365
        %v3398 = vmax.f32 %v3334, %v3366
        %v3399 = vmax.f32 %v3335, %v3367
        %v3400 = vmax.f32 %v3336, %v3368
        %v3401 = vmax.f32 %v3337, %v3369
        %v3402 = vmax.f32 %v3338, %v3370
        %v3403 = vmax.f32 %v3339, %v3371
        %v3404 = vmax.f32 %v3340, %v3372
        %v3405 = vmax.f32 %v3341, %v3373
        %v3406 = vmax.f32 %v3342, %v3374
        %v3407 = vmax.f32 %v3343, %v3375
        %v3408 = vmax.f32 %v3344, %v3376
        %v3409 = vmax.f32 %v3345, %v3377
        %v3410 = vmax.f32 %v3346, %v3378
        %v3411 = vmax.f32 %v3347, %v3379
        %v3412 = vmax.f32 %v3348, %v3380
        %v3413 = vmax.f32 %v3349, %v3381
        %v3414 = vmax.f32 %v3350, %v3382
        %v3415 = vmax.f32 %v3351, %v3383
        %v3416 = vmax.f32 %v3352, %v3384
        %v3417 = vmax.f32 %v3353, %v3385
        %v3418 = vld [vmem:[#allocation6 + $0x100] sm:$0xff]
        %v3419 = vld [vmem:[#allocation6 + $0x108] sm:$0xff]
        %v3420 = vld [vmem:[#allocation6 + $0x101] sm:$0xff]
        %v3421 = vld [vmem:[#allocation6 + $0x109] sm:$0xff]
        %v3422 = vmax.f32 %v3418, %v3420
        %v3423 = vmax.f32 %v3419, %v3421
        %v3424 = vmax.f32 %v3386, %v3388
        %v3425 = vmax.f32 %v3387, %v3389
        %v3426 = vmax.f32 %v3388, %v3390
        %v3427 = vmax.f32 %v3389, %v3391
        %v3428 = vmax.f32 %v3390, %v3392
        %v3429 = vmax.f32 %v3391, %v3393
        %v3430 = vmax.f32 %v3392, %v3394
        %v3431 = vmax.f32 %v3393, %v3395
        %v3432 = vmax.f32 %v3394, %v3396
        %v3433 = vmax.f32 %v3395, %v3397
        %v3434 = vmax.f32 %v3396, %v3398
        %v3435 = vmax.f32 %v3397, %v3399
        %v3436 = vmax.f32 %v3398, %v3400
        %v3437 = vmax.f32 %v3399, %v3401
        %v3438 = vmax.f32 %v3400, %v3402
        %v3439 = vmax.f32 %v3401, %v3403
        %v3440 = vmax.f32 %v3402, %v3404
        %v3441 = vmax.f32 %v3403, %v3405
        %v3442 = vmax.f32 %v3404, %v3406
        %v3443 = vmax.f32 %v3405, %v3407
        %v3444 = vmax.f32 %v3406, %v3408
        %v3445 = vmax.f32 %v3407, %v3409
        %v3446 = vmax.f32 %v3408, %v3410
        %v3447 = vmax.f32 %v3409, %v3411
        %v3448 = vmax.f32 %v3410, %v3412
        %v3449 = vmax.f32 %v3411, %v3413
        %v3450 = vmax.f32 %v3412, %v3414
        %v3451 = vmax.f32 %v3413, %v3415
        %v3452 = vmax.f32 %v3414, %v3416
        %v3453 = vmax.f32 %v3415, %v3417
        %v3454 = vmax.f32 %v3416, %v3422
        %v3455 = vmax.f32 %v3417, %v3423
        %v3456 = vlaneseq
        %v3457 = vand.u32 %v3456, 127
        %v3458 = vadd.s32 %v3457, 128
        %v3459 = vshra.s32 %v468, 3
        %v3460 = vshra.s32 %v469, 3
        %v3461 = vshra.s32 %v470, 3
        %v3462 = vshra.s32 %v471, 3
        %v3463 = vshra.s32 %v472, 3
        %v3464 = vshra.s32 %v473, 3
        %v3465 = vshra.s32 %v474, 3
        %v3466 = vshra.s32 %v475, 3
        %v3467 = vshll.u32 %v3459, 5
        %v3468 = vshll.u32 %v3460, 5
        %v3469 = vshll.u32 %v3461, 5
        %v3470 = vshll.u32 %v3462, 5
        %v3471 = vshll.u32 %v3463, 5
        %v3472 = vshll.u32 %v3464, 5
        %v3473 = vshll.u32 %v3465, 5
        %v3474 = vshll.u32 %v3466, 5
        %v3475 = vand.u32 %v468, 7
        %v3476 = vand.u32 %v469, 7
        %v3477 = vand.u32 %v470, 7
        %v3478 = vand.u32 %v471, 7
        %v3479 = vand.u32 %v472, 7
        %v3480 = vand.u32 %v473, 7
        %v3481 = vand.u32 %v474, 7
        %v3482 = vand.u32 %v475, 7
        %v3483 = vshll.u32 %v3475, 1
        %v3484 = vshll.u32 %v3476, 1
        %v3485 = vshll.u32 %v3477, 1
        %v3486 = vshll.u32 %v3478, 1
        %v3487 = vshll.u32 %v3479, 1
        %v3488 = vshll.u32 %v3480, 1
        %v3489 = vshll.u32 %v3481, 1
        %v3490 = vshll.u32 %v3482, 1
        %v3491 = vadd.s32 %v3467, %v3483
        %v3492 = vadd.s32 %v3468, %v3484
        %v3493 = vadd.s32 %v3469, %v3485
        %v3494 = vadd.s32 %v3470, %v3486
        %v3495 = vadd.s32 %v3471, %v3487
        %v3496 = vadd.s32 %v3472, %v3488
        %v3497 = vadd.s32 %v3473, %v3489
        %v3498 = vadd.s32 %v3474, %v3490
        %vm3499 = vcmp.eq.s32.totalorder %v3457, %v3491
        %vm3500 = vcmp.eq.s32.totalorder %v3458, %v3491
        %vm3501 = vcmp.eq.s32.totalorder %v3457, %v3492
        %vm3502 = vcmp.eq.s32.totalorder %v3458, %v3492
        %vm3503 = vcmp.eq.s32.totalorder %v3457, %v3493
        %vm3504 = vcmp.eq.s32.totalorder %v3458, %v3493
        %vm3505 = vcmp.eq.s32.totalorder %v3457, %v3494
        %vm3506 = vcmp.eq.s32.totalorder %v3458, %v3494
        %vm3507 = vcmp.eq.s32.totalorder %v3457, %v3495
        %vm3508 = vcmp.eq.s32.totalorder %v3458, %v3495
        %vm3509 = vcmp.eq.s32.totalorder %v3457, %v3496
        %vm3510 = vcmp.eq.s32.totalorder %v3458, %v3496
        %vm3511 = vcmp.eq.s32.totalorder %v3457, %v3497
        %vm3512 = vcmp.eq.s32.totalorder %v3458, %v3497
        %vm3513 = vcmp.eq.s32.totalorder %v3457, %v3498
        %vm3514 = vcmp.eq.s32.totalorder %v3458, %v3498
        %v3515 = vsel %vm3499, 1, 0
        %v3516 = vsel %vm3500, 1, 0
        %v3517 = vsel %vm3501, 1, 0
        %v3518 = vsel %vm3502, 1, 0
        %v3519 = vsel %vm3503, 1, 0
        %v3520 = vsel %vm3504, 1, 0
        %v3521 = vsel %vm3505, 1, 0
        %v3522 = vsel %vm3506, 1, 0
        %v3523 = vsel %vm3507, 1, 0
        %v3524 = vsel %vm3508, 1, 0
        %v3525 = vsel %vm3509, 1, 0
        %v3526 = vsel %vm3510, 1, 0
        %v3527 = vsel %vm3511, 1, 0
        %v3528 = vsel %vm3512, 1, 0
        %v3529 = vsel %vm3513, 1, 0
        %v3530 = vsel %vm3514, 1, 0
        %v3531 = vcvt.s32.f32 %v3515
        %v3532 = vcvt.s32.f32 %v3516
        %v3533 = vcvt.s32.f32 %v3517
        %v3534 = vcvt.s32.f32 %v3518
        %v3535 = vcvt.s32.f32 %v3519
        %v3536 = vcvt.s32.f32 %v3520
        %v3537 = vcvt.s32.f32 %v3521
        %v3538 = vcvt.s32.f32 %v3522
        %v3539 = vcvt.s32.f32 %v3523
        %v3540 = vcvt.s32.f32 %v3524
        %v3541 = vcvt.s32.f32 %v3525
        %v3542 = vcvt.s32.f32 %v3526
        %v3543 = vcvt.s32.f32 %v3527
        %v3544 = vcvt.s32.f32 %v3528
        %v3545 = vcvt.s32.f32 %v3529
        %v3546 = vcvt.s32.f32 %v3530
        %3547 = vmatprep.subr.mxu0 0.0
        %3548 = vmatpush1.msra.mxu0 %v3424
        %3549 = vmatprep.subr.mxu0 0.0
        %3550 = vmatpush1.msra.mxu0 %v3425
        %3551 = vmatprep.subr.mxu0 0.0
        %3552 = vmatpush1.msra.mxu0 %v3426
        %3553 = vmatprep.subr.mxu0 0.0
        %3554 = vmatpush1.msra.mxu0 %v3427
        %3555 = vmatprep.subr.mxu0 0.0
        %3556 = vmatpush1.msra.mxu0 %v3428
        %3557 = vmatprep.subr.mxu0 0.0
        %3558 = vmatpush1.msra.mxu0 %v3429
        %3559 = vmatprep.subr.mxu0 0.0
        %3560 = vmatpush1.msra.mxu0 %v3430
        %3561 = vmatprep.subr.mxu0 0.0
        %3562 = vmatpush1.msra.mxu0 %v3431
        %3563 = vmatprep.subr.mxu0 0.0
        %3564 = vmatpush1.msra.mxu0 %v3432
        %3565 = vmatprep.subr.mxu0 0.0
        %3566 = vmatpush1.msra.mxu0 %v3433
        %3567 = vmatprep.subr.mxu0 0.0
        %3568 = vmatpush1.msra.mxu0 %v3434
        %3569 = vmatprep.subr.mxu0 0.0
        %3570 = vmatpush1.msra.mxu0 %v3435
        %3571 = vmatprep.subr.mxu0 0.0
        %3572 = vmatpush1.msra.mxu0 %v3436
        %3573 = vmatprep.subr.mxu0 0.0
        %3574 = vmatpush1.msra.mxu0 %v3437
        %3575 = vmatprep.subr.mxu0 0.0
        %3576 = vmatpush1.msra.mxu0 %v3438
        %3577 = vmatprep.subr.mxu0 0.0
        %3578 = vmatpush1.msra.mxu0 %v3439
        %3579 = vmatprep.subr.mxu0 0.0
        %3580 = vmatpush1.msra.mxu0 %v3440
        %3581 = vmatprep.subr.mxu0 0.0
        %3582 = vmatpush1.msra.mxu0 %v3441
        %3583 = vmatprep.subr.mxu0 0.0
        %3584 = vmatpush1.msra.mxu0 %v3442
        %3585 = vmatprep.subr.mxu0 0.0
        %3586 = vmatpush1.msra.mxu0 %v3443
        %3587 = vmatprep.subr.mxu0 0.0
        %3588 = vmatpush1.msra.mxu0 %v3444
        %3589 = vmatprep.subr.mxu0 0.0
        %3590 = vmatpush1.msra.mxu0 %v3445
        %3591 = vmatprep.subr.mxu0 0.0
        %3592 = vmatpush1.msra.mxu0 %v3446
        %3593 = vmatprep.subr.mxu0 0.0
        %3594 = vmatpush1.msra.mxu0 %v3447
        %3595 = vmatprep.subr.mxu0 0.0
        %3596 = vmatpush1.msra.mxu0 %v3448
        %3597 = vmatprep.subr.mxu0 0.0
        %3598 = vmatpush1.msra.mxu0 %v3449
        %3599 = vmatprep.subr.mxu0 0.0
        %3600 = vmatpush1.msra.mxu0 %v3450
        %3601 = vmatprep.subr.mxu0 0.0
        %3602 = vmatpush1.msra.mxu0 %v3451
        %3603 = vmatprep.subr.mxu0 0.0
        %3604 = vmatpush1.msra.mxu0 %v3452
        %3605 = vmatprep.subr.mxu0 0.0
        %3606 = vmatpush1.msra.mxu0 %v3453
        %3607 = vmatprep.subr.mxu0 0.0
        %3608 = vmatpush1.msra.mxu0 %v3454
        %3609 = vmatprep.subr.mxu0 0.0
        %3610 = vmatpush1.msra.mxu0 %v3455
        %3611 = vmatprep.mubr.f32.mxu0 %v3532
        %3612 = vmatmul.mubr.f32.gmra.mrb[0].mxu0 %v3531
        %v3613 = vpop.f32.mrb[0].mxu0
        %v3614 = vadd.f32 0.0, %v3613
        %v3615 = vpop.f32.mrb[0].mxu0
        %3616 = vmatprep.mubr.f32.mxu0 %v3534
        %3617 = vmatmul.mubr.f32.gmra.mrb[0].mxu0 %v3533
        %v3618 = vpop.f32.mrb[0].mxu0
        %v3619 = vadd.f32 0.0, %v3618
        %v3620 = vpop.f32.mrb[0].mxu0
        %3621 = vmatprep.mubr.f32.mxu0 %v3536
        %3622 = vmatmul.mubr.f32.gmra.mrb[0].mxu0 %v3535
        %v3623 = vpop.f32.mrb[0].mxu0
        %v3624 = vadd.f32 0.0, %v3623
        %v3625 = vpop.f32.mrb[0].mxu0
        %3626 = vmatprep.mubr.f32.mxu0 %v3538
        %3627 = vmatmul.mubr.f32.gmra.mrb[0].mxu0 %v3537
        %v3628 = vpop.f32.mrb[0].mxu0
        %v3629 = vadd.f32 0.0, %v3628
        %v3630 = vpop.f32.mrb[0].mxu0
        %3631 = vmatprep.mubr.f32.mxu0 %v3540
        %3632 = vmatmul.mubr.f32.gmra.mrb[0].mxu0 %v3539
        %v3633 = vpop.f32.mrb[0].mxu0
        %v3634 = vadd.f32 0.0, %v3633
        %v3635 = vpop.f32.mrb[0].mxu0
        %3636 = vmatprep.mubr.f32.mxu0 %v3542
        %3637 = vmatmul.mubr.f32.gmra.mrb[0].mxu0 %v3541
        %v3638 = vpop.f32.mrb[0].mxu0
        %v3639 = vadd.f32 0.0, %v3638
        %v3640 = vpop.f32.mrb[0].mxu0
        %3641 = vmatprep.mubr.f32.mxu0 %v3544
        %3642 = vmatmul.mubr.f32.gmra.mrb[0].mxu0 %v3543
        %v3643 = vpop.f32.mrb[0].mxu0
        %v3644 = vadd.f32 0.0, %v3643
        %v3645 = vpop.f32.mrb[0].mxu0
        %3646 = vmatprep.mubr.f32.mxu0 %v3546
        %3647 = vmatmul.mubr.f32.gmra.mrb[0].mxu0 %v3545
        %v3648 = vpop.f32.mrb[0].mxu0
        %v3649 = vadd.f32 0.0, %v3648
        %v3650 = vpop.f32.mrb[0].mxu0
        %3651 = vdwg.mxu0
        %3652 = vst [vmem:[#allocation3 + $0x9] sm:$0xff] %v3614
        %3653 = vst [vmem:[#allocation3 + $0x11] sm:$0xff] %v3619
        %3654 = vst [vmem:[#allocation3 + $0x19] sm:$0xff] %v3624
        %3655 = vst [vmem:[#allocation3 + $0x21] sm:$0xff] %v3629
        %3656 = vst [vmem:[#allocation3 + $0x29] sm:$0xff] %v3634
        %3657 = vst [vmem:[#allocation3 + $0x31] sm:$0xff] %v3639
        %3658 = vst [vmem:[#allocation3 + $0x39] sm:$0xff] %v3644
        %3659 = vst [vmem:[#allocation3 + $0x41] sm:$0xff] %v3649
        %vm3660 = vcmp.ne.s32.totalorder %v3475, 0
        %vm3661 = vcmp.ne.s32.totalorder %v3476, 0
        %vm3662 = vcmp.ne.s32.totalorder %v3477, 0
        %vm3663 = vcmp.ne.s32.totalorder %v3478, 0
        %vm3664 = vcmp.ne.s32.totalorder %v3479, 0
        %vm3665 = vcmp.ne.s32.totalorder %v3480, 0
        %vm3666 = vcmp.ne.s32.totalorder %v3481, 0
        %vm3667 = vcmp.ne.s32.totalorder %v3482, 0
        %vm3668 = vcmp.ne.s32.totalorder %v3475, 7
        %vm3669 = vcmp.ne.s32.totalorder %v3476, 7
        %vm3670 = vcmp.ne.s32.totalorder %v3477, 7
        %vm3671 = vcmp.ne.s32.totalorder %v3478, 7
        %vm3672 = vcmp.ne.s32.totalorder %v3479, 7
        %vm3673 = vcmp.ne.s32.totalorder %v3480, 7
        %vm3674 = vcmp.ne.s32.totalorder %v3481, 7
        %vm3675 = vcmp.ne.s32.totalorder %v3482, 7
        %v3676 = vld [vmem:[#allocation3] sm:$0xff]
        %v3677 = vld [vmem:[#allocation3 + $0x8] sm:$0xff]
        %v3678 = vld [vmem:[#allocation3 + $0x10] sm:$0xff]
        %v3679 = vld [vmem:[#allocation3 + $0x18] sm:$0xff]
        %v3680 = vld [vmem:[#allocation3 + $0x20] sm:$0xff]
        %v3681 = vld [vmem:[#allocation3 + $0x28] sm:$0xff]
        %v3682 = vld [vmem:[#allocation3 + $0x30] sm:$0xff]
        %v3683 = vld [vmem:[#allocation3 + $0x38] sm:$0xff]
        %v3684 = vld [vmem:[%s3] sm:$0xff]
        %v3685 = vld [vmem:[%s3 + $0x8] sm:$0xff]
        %v3686 = vld [vmem:[%s3 + $0x10] sm:$0xff]
        %v3687 = vld [vmem:[%s3 + $0x18] sm:$0xff]
        %v3688 = vld [vmem:[%s3 + $0x20] sm:$0xff]
        %v3689 = vld [vmem:[%s3 + $0x28] sm:$0xff]
        %v3690 = vld [vmem:[%s3 + $0x30] sm:$0xff]
        %v3691 = vld [vmem:[%s3 + $0x38] sm:$0xff]
        %v3692 = vld [vmem:[%s3 + $0x40] sm:$0xff]
        %v3693 = vld [vmem:[%s3 + $0x48] sm:$0xff]
        %v3694 = vld [vmem:[%s3 + $0x50] sm:$0xff]
        %v3695 = vld [vmem:[%s3 + $0x58] sm:$0xff]
        %v3696 = vld [vmem:[%s3 + $0x60] sm:$0xff]
        %v3697 = vld [vmem:[%s3 + $0x68] sm:$0xff]
        %v3698 = vld [vmem:[%s3 + $0x70] sm:$0xff]
        %v3699 = vld [vmem:[%s3 + $0x78] sm:$0xff]
        %v3700 = vld [vmem:[#allocation3 + $0x40] sm:$0xff]
        %v3701 = vld [vmem:[%s3 + $0x180] sm:$0xff]
        %v3702 = vld [vmem:[%s3 + $0x188] sm:$0xff]
        %v3703 = vld [vmem:[%s3 + $0x190] sm:$0xff]
        %v3704 = vld [vmem:[%s3 + $0x198] sm:$0xff]
        %v3705 = vld [vmem:[%s3 + $0x1a0] sm:$0xff]
        %v3706 = vld [vmem:[%s3 + $0x1a8] sm:$0xff]
        %v3707 = vld [vmem:[%s3 + $0x1b0] sm:$0xff]
        %v3708 = vld [vmem:[%s3 + $0x1b8] sm:$0xff]
        %v3709 = vld [vmem:[%s3 + $0x1c0] sm:$0xff]
        %v3710 = vld [vmem:[%s3 + $0x1c8] sm:$0xff]
        %v3711 = vld [vmem:[%s3 + $0x1d0] sm:$0xff]
        %v3712 = vld [vmem:[%s3 + $0x1d8] sm:$0xff]
        %v3713 = vld [vmem:[%s3 + $0x1e0] sm:$0xff]
        %v3714 = vld [vmem:[%s3 + $0x1e8] sm:$0xff]
        %v3715 = vld [vmem:[%s3 + $0x1f0] sm:$0xff]
        %v3716 = vld [vmem:[%s3 + $0x1f8] sm:$0xff]
        %3717 = vmatprep.subr.mxu0 0.0
        %3718 = vmatpush1.msra.mxu0 %v3701
        %3719 = vmatprep.subr.mxu0 0.0
        %3720 = vmatpush1.msra.mxu0 %v3702
        %3721 = vmatprep.subr.mxu0 0.0
        %3722 = vmatpush1.msra.mxu0 %v3703
        %3723 = vmatprep.subr.mxu0 0.0
        %3724 = vmatpush1.msra.mxu0 %v3704
        %3725 = vmatprep.subr.mxu0 0.0
        %3726 = vmatpush1.msra.mxu0 %v3705
        %3727 = vmatprep.subr.mxu0 0.0
        %3728 = vmatpush1.msra.mxu0 %v3706
        %3729 = vmatprep.subr.mxu0 0.0
        %3730 = vmatpush1.msra.mxu0 %v3707
        %3731 = vmatprep.subr.mxu0 0.0
        %3732 = vmatpush1.msra.mxu0 %v3708
        %3733 = vmatprep.subr.mxu0 0.0
        %3734 = vmatpush1.msra.mxu0 %v3709
        %3735 = vmatprep.subr.mxu0 0.0
        %3736 = vmatpush1.msra.mxu0 %v3710
        %3737 = vmatprep.subr.mxu0 0.0
        %3738 = vmatpush1.msra.mxu0 %v3711
        %3739 = vmatprep.subr.mxu0 0.0
        %3740 = vmatpush1.msra.mxu0 %v3712
        %3741 = vmatprep.subr.mxu0 0.0
        %3742 = vmatpush1.msra.mxu0 %v3713
        %3743 = vmatprep.subr.mxu0 0.0
        %3744 = vmatpush1.msra.mxu0 %v3714
        %3745 = vmatprep.subr.mxu0 0.0
        %3746 = vmatpush1.msra.mxu0 %v3715
        %3747 = vmatprep.subr.mxu0 0.0
        %3748 = vmatpush1.msra.mxu0 %v3716
        %3749 = vmatprep.subr.mxu0 0.0
        %3750 = vmatpush1.msra.mxu0 0.0
        %3751 = vmatprep.subr.mxu0 0.0
        %3752 = vmatpush1.msra.mxu0 0.0
        %3753 = vmatprep.subr.mxu0 0.0
        %3754 = vmatpush1.msra.mxu0 0.0
        %3755 = vmatprep.subr.mxu0 0.0
        %3756 = vmatpush1.msra.mxu0 0.0
        %3757 = vmatprep.subr.mxu0 0.0
        %3758 = vmatpush1.msra.mxu0 0.0
        %3759 = vmatprep.subr.mxu0 0.0
        %3760 = vmatpush1.msra.mxu0 0.0
        %3761 = vmatprep.subr.mxu0 0.0
        %3762 = vmatpush1.msra.mxu0 0.0
        %3763 = vmatprep.subr.mxu0 0.0
        %3764 = vmatpush1.msra.mxu0 0.0
        %3765 = vmatprep.subr.mxu0 0.0
        %3766 = vmatpush1.msra.mxu0 0.0
        %3767 = vmatprep.subr.mxu0 0.0
        %3768 = vmatpush1.msra.mxu0 0.0
        %3769 = vmatprep.subr.mxu0 0.0
        %3770 = vmatpush1.msra.mxu0 0.0
        %3771 = vmatprep.subr.mxu0 0.0
        %3772 = vmatpush1.msra.mxu0 0.0
        %3773 = vmatprep.subr.mxu0 0.0
        %3774 = vmatpush1.msra.mxu0 0.0
        %3775 = vmatprep.subr.mxu0 0.0
        %3776 = vmatpush1.msra.mxu0 0.0
        %3777 = vmatprep.subr.mxu0 0.0
        %3778 = vmatpush1.msra.mxu0 0.0
        %3779 = vmatprep.subr.mxu0 0.0
        %3780 = vmatpush1.msra.mxu0 0.0
        %3781 = vmatprep.mubr.f32.mxu0 0.0
        %3782 = vmatmul.mubr.f32.gmra.mrb[0].mxu0 %v3677
        %v3783 = vpop.f32.mrb[0].mxu0
        %v3784 = vadd.f32 0.0, %v3783
        %v3785 = vpop.f32.mrb[0].mxu0
        %3786 = vmatprep.mubr.f32.mxu0 0.0
        %3787 = vmatmul.mubr.f32.gmra.mrb[0].mxu0 %v3678
        %v3788 = vpop.f32.mrb[0].mxu0
        %v3789 = vadd.f32 0.0, %v3788
        %v3790 = vpop.f32.mrb[0].mxu0
        %3791 = vmatprep.mubr.f32.mxu0 0.0
        %3792 = vmatmul.mubr.f32.gmra.mrb[0].mxu0 %v3679
        %v3793 = vpop.f32.mrb[0].mxu0
        %v3794 = vadd.f32 0.0, %v3793
        %v3795 = vpop.f32.mrb[0].mxu0
        %3796 = vmatprep.mubr.f32.mxu0 0.0
        %3797 = vmatmul.mubr.f32.gmra.mrb[0].mxu0 %v3680
        %v3798 = vpop.f32.mrb[0].mxu0
        %v3799 = vadd.f32 0.0, %v3798
        %v3800 = vpop.f32.mrb[0].mxu0
        %3801 = vmatprep.mubr.f32.mxu0 0.0
        %3802 = vmatmul.mubr.f32.gmra.mrb[0].mxu0 %v3681
        %v3803 = vpop.f32.mrb[0].mxu0
        %v3804 = vadd.f32 0.0, %v3803
        %v3805 = vpop.f32.mrb[0].mxu0
        %3806 = vmatprep.mubr.f32.mxu0 0.0
        %3807 = vmatmul.mubr.f32.gmra.mrb[0].mxu0 %v3682
        %v3808 = vpop.f32.mrb[0].mxu0
        %v3809 = vadd.f32 0.0, %v3808
        %v3810 = vpop.f32.mrb[0].mxu0
        %3811 = vmatprep.mubr.f32.mxu0 0.0
        %3812 = vmatmul.mubr.f32.gmra.mrb[0].mxu0 %v3683
        %v3813 = vpop.f32.mrb[0].mxu0
        %v3814 = vadd.f32 0.0, %v3813
        %v3815 = vpop.f32.mrb[0].mxu0
        %3816 = vmatprep.mubr.f32.mxu0 0.0
        %3817 = vmatmul.mubr.f32.gmra.mrb[0].mxu0 %v3700
        %v3818 = vpop.f32.mrb[0].mxu0
        %v3819 = vadd.f32 0.0, %v3818
        %v3820 = vpop.f32.mrb[0].mxu0
        %3821 = vdwg.mxu0
        %3822 = vmatprep.subr.mxu0 0.0
        %3823 = vmatpush1.msra.mxu0 %v3684
        %3824 = vmatprep.subr.mxu0 0.0
        %3825 = vmatpush1.msra.mxu0 %v3685
        %3826 = vmatprep.subr.mxu0 0.0
        %3827 = vmatpush1.msra.mxu0 %v3686
        %3828 = vmatprep.subr.mxu0 0.0
        %3829 = vmatpush1.msra.mxu0 %v3687
        %3830 = vmatprep.subr.mxu0 0.0
        %3831 = vmatpush1.msra.mxu0 %v3688
        %3832 = vmatprep.subr.mxu0 0.0
        %3833 = vmatpush1.msra.mxu0 %v3689
        %3834 = vmatprep.subr.mxu0 0.0
        %3835 = vmatpush1.msra.mxu0 %v3690
        %3836 = vmatprep.subr.mxu0 0.0
        %3837 = vmatpush1.msra.mxu0 %v3691
        %3838 = vmatprep.subr.mxu0 0.0
        %3839 = vmatpush1.msra.mxu0 %v3692
        %3840 = vmatprep.subr.mxu0 0.0
        %3841 = vmatpush1.msra.mxu0 %v3693
        %3842 = vmatprep.subr.mxu0 0.0
        %3843 = vmatpush1.msra.mxu0 %v3694
        %3844 = vmatprep.subr.mxu0 0.0
        %3845 = vmatpush1.msra.mxu0 %v3695
        %3846 = vmatprep.subr.mxu0 0.0
        %3847 = vmatpush1.msra.mxu0 %v3696
        %3848 = vmatprep.subr.mxu0 0.0
        %3849 = vmatpush1.msra.mxu0 %v3697
        %3850 = vmatprep.subr.mxu0 0.0
        %3851 = vmatpush1.msra.mxu0 %v3698
        %3852 = vmatprep.subr.mxu0 0.0
        %3853 = vmatpush1.msra.mxu0 %v3699
        %3854 = vmatprep.subr.mxu0 0.0
        %3855 = vmatpush1.msra.mxu0 0.0
        %3856 = vmatprep.subr.mxu0 0.0
        %3857 = vmatpush1.msra.mxu0 0.0
        %3858 = vmatprep.subr.mxu0 0.0
        %3859 = vmatpush1.msra.mxu0 0.0
        %3860 = vmatprep.subr.mxu0 0.0
        %3861 = vmatpush1.msra.mxu0 0.0
        %3862 = vmatprep.subr.mxu0 0.0
        %3863 = vmatpush1.msra.mxu0 0.0
        %3864 = vmatprep.subr.mxu0 0.0
        %3865 = vmatpush1.msra.mxu0 0.0
        %3866 = vmatprep.subr.mxu0 0.0
        %3867 = vmatpush1.msra.mxu0 0.0
        %3868 = vmatprep.subr.mxu0 0.0
        %3869 = vmatpush1.msra.mxu0 0.0
        %3870 = vmatprep.subr.mxu0 0.0
        %3871 = vmatpush1.msra.mxu0 0.0
        %3872 = vmatprep.subr.mxu0 0.0
        %3873 = vmatpush1.msra.mxu0 0.0
        %3874 = vmatprep.subr.mxu0 0.0
        %3875 = vmatpush1.msra.mxu0 0.0
        %3876 = vmatprep.subr.mxu0 0.0
        %3877 = vmatpush1.msra.mxu0 0.0
        %3878 = vmatprep.subr.mxu0 0.0
        %3879 = vmatpush1.msra.mxu0 0.0
        %3880 = vmatprep.subr.mxu0 0.0
        %3881 = vmatpush1.msra.mxu0 0.0
        %3882 = vmatprep.subr.mxu0 0.0
        %3883 = vmatpush1.msra.mxu0 0.0
        %3884 = vmatprep.subr.mxu0 0.0
        %3885 = vmatpush1.msra.mxu0 0.0
        %3886 = vmatprep.mubr.f32.mxu0 0.0
        %3887 = vmatmul.mubr.f32.gmra.mrb[0].mxu0 %v3676
        %v3888 = vpop.f32.mrb[0].mxu0
        %v3889 = vadd.f32 %v3784, %v3888
        %v3890 = vpop.f32.mrb[0].mxu0
        %3891 = vmatprep.mubr.f32.mxu0 0.0
        %3892 = vmatmul.mubr.f32.gmra.mrb[0].mxu0 %v3677
        %v3893 = vpop.f32.mrb[0].mxu0
        %v3894 = vadd.f32 %v3789, %v3893
        %v3895 = vpop.f32.mrb[0].mxu0
        %3896 = vmatprep.mubr.f32.mxu0 0.0
        %3897 = vmatmul.mubr.f32.gmra.mrb[0].mxu0 %v3678
        %v3898 = vpop.f32.mrb[0].mxu0
        %v3899 = vadd.f32 %v3794, %v3898
        %v3900 = vpop.f32.mrb[0].mxu0
        %3901 = vmatprep.mubr.f32.mxu0 0.0
        %3902 = vmatmul.mubr.f32.gmra.mrb[0].mxu0 %v3679
        %v3903 = vpop.f32.mrb[0].mxu0
        %v3904 = vadd.f32 %v3799, %v3903
        %v3905 = vpop.f32.mrb[0].mxu0
        %3906 = vmatprep.mubr.f32.mxu0 0.0
        %3907 = vmatmul.mubr.f32.gmra.mrb[0].mxu0 %v3680
        %v3908 = vpop.f32.mrb[0].mxu0
        %v3909 = vadd.f32 %v3804, %v3908
        %v3910 = vpop.f32.mrb[0].mxu0
        %3911 = vmatprep.mubr.f32.mxu0 0.0
        %3912 = vmatmul.mubr.f32.gmra.mrb[0].mxu0 %v3681
        %v3913 = vpop.f32.mrb[0].mxu0
        %v3914 = vadd.f32 %v3809, %v3913
        %v3915 = vpop.f32.mrb[0].mxu0
        %3916 = vmatprep.mubr.f32.mxu0 0.0
        %3917 = vmatmul.mubr.f32.gmra.mrb[0].mxu0 %v3682
        %v3918 = vpop.f32.mrb[0].mxu0
        %v3919 = vadd.f32 %v3814, %v3918
        %v3920 = vpop.f32.mrb[0].mxu0
        %3921 = vmatprep.mubr.f32.mxu0 0.0
        %3922 = vmatmul.mubr.f32.gmra.mrb[0].mxu0 %v3683
        %v3923 = vpop.f32.mrb[0].mxu0
        %v3924 = vadd.f32 %v3819, %v3923
        %v3925 = vpop.f32.mrb[0].mxu0
        %3926 = vdwg.mxu0
        %v3927 = vld [vmem:[#allocation3 + $0x10] sm:$0xff]
        %v3928 = vld [vmem:[#allocation3 + $0x18] sm:$0xff]
        %v3929 = vld [vmem:[#allocation3 + $0x20] sm:$0xff]
        %v3930 = vld [vmem:[#allocation3 + $0x28] sm:$0xff]
        %v3931 = vld [vmem:[#allocation3 + $0x30] sm:$0xff]
        %v3932 = vld [vmem:[#allocation3 + $0x38] sm:$0xff]
        %v3933 = vld [vmem:[#allocation3 + $0x40] sm:$0xff]
        %v3934 = vld [vmem:[#allocation3 + $0x48] sm:$0xff]
        %v3935 = vld [vmem:[%s3 + $0x300] sm:$0xff]
        %v3936 = vld [vmem:[%s3 + $0x308] sm:$0xff]
        %v3937 = vld [vmem:[%s3 + $0x310] sm:$0xff]
        %v3938 = vld [vmem:[%s3 + $0x318] sm:$0xff]
        %v3939 = vld [vmem:[%s3 + $0x320] sm:$0xff]
        %v3940 = vld [vmem:[%s3 + $0x328] sm:$0xff]
        %v3941 = vld [vmem:[%s3 + $0x330] sm:$0xff]
        %v3942 = vld [vmem:[%s3 + $0x338] sm:$0xff]
        %v3943 = vld [vmem:[%s3 + $0x340] sm:$0xff]
        %v3944 = vld [vmem:[%s3 + $0x348] sm:$0xff]
        %v3945 = vld [vmem:[%s3 + $0x350] sm:$0xff]
        %v3946 = vld [vmem:[%s3 + $0x358] sm:$0xff]
        %v3947 = vld [vmem:[%s3 + $0x360] sm:$0xff]
        %v3948 = vld [vmem:[%s3 + $0x368] sm:$0xff]
        %v3949 = vld [vmem:[%s3 + $0x370] sm:$0xff]
        %v3950 = vld [vmem:[%s3 + $0x378] sm:$0xff]
        %3951 = vmatprep.subr.mxu0 0.0
        %3952 = vmatpush1.msra.mxu0 %v3935
        %3953 = vmatprep.subr.mxu0 0.0
        %3954 = vmatpush1.msra.mxu0 %v3936
        %3955 = vmatprep.subr.mxu0 0.0
        %3956 = vmatpush1.msra.mxu0 %v3937
        %3957 = vmatprep.subr.mxu0 0.0
        %3958 = vmatpush1.msra.mxu0 %v3938
        %3959 = vmatprep.subr.mxu0 0.0
        %3960 = vmatpush1.msra.mxu0 %v3939
        %3961 = vmatprep.subr.mxu0 0.0
        %3962 = vmatpush1.msra.mxu0 %v3940
        %3963 = vmatprep.subr.mxu0 0.0
        %3964 = vmatpush1.msra.mxu0 %v3941
        %3965 = vmatprep.subr.mxu0 0.0
        %3966 = vmatpush1.msra.mxu0 %v3942
        %3967 = vmatprep.subr.mxu0 0.0
        %3968 = vmatpush1.msra.mxu0 %v3943
        %3969 = vmatprep.subr.mxu0 0.0
        %3970 = vmatpush1.msra.mxu0 %v3944
        %3971 = vmatprep.subr.mxu0 0.0
        %3972 = vmatpush1.msra.mxu0 %v3945
        %3973 = vmatprep.subr.mxu0 0.0
        %3974 = vmatpush1.msra.mxu0 %v3946
        %3975 = vmatprep.subr.mxu0 0.0
        %3976 = vmatpush1.msra.mxu0 %v3947
        %3977 = vmatprep.subr.mxu0 0.0
        %3978 = vmatpush1.msra.mxu0 %v3948
        %3979 = vmatprep.subr.mxu0 0.0
        %3980 = vmatpush1.msra.mxu0 %v3949
        %3981 = vmatprep.subr.mxu0 0.0
        %3982 = vmatpush1.msra.mxu0 %v3950
        %3983 = vmatprep.subr.mxu0 0.0
        %3984 = vmatpush1.msra.mxu0 0.0
        %3985 = vmatprep.subr.mxu0 0.0
        %3986 = vmatpush1.msra.mxu0 0.0
        %3987 = vmatprep.subr.mxu0 0.0
        %3988 = vmatpush1.msra.mxu0 0.0
        %3989 = vmatprep.subr.mxu0 0.0
        %3990 = vmatpush1.msra.mxu0 0.0
        %3991 = vmatprep.subr.mxu0 0.0
        %3992 = vmatpush1.msra.mxu0 0.0
        %3993 = vmatprep.subr.mxu0 0.0
        %3994 = vmatpush1.msra.mxu0 0.0
        %3995 = vmatprep.subr.mxu0 0.0
        %3996 = vmatpush1.msra.mxu0 0.0
        %3997 = vmatprep.subr.mxu0 0.0
        %3998 = vmatpush1.msra.mxu0 0.0
        %3999 = vmatprep.subr.mxu0 0.0
        %4000 = vmatpush1.msra.mxu0 0.0
        %4001 = vmatprep.subr.mxu0 0.0
        %4002 = vmatpush1.msra.mxu0 0.0
        %4003 = vmatprep.subr.mxu0 0.0
        %4004 = vmatpush1.msra.mxu0 0.0
        %4005 = vmatprep.subr.mxu0 0.0
        %4006 = vmatpush1.msra.mxu0 0.0
        %4007 = vmatprep.subr.mxu0 0.0
        %4008 = vmatpush1.msra.mxu0 0.0
        %4009 = vmatprep.subr.mxu0 0.0
        %4010 = vmatpush1.msra.mxu0 0.0
        %4011 = vmatprep.subr.mxu0 0.0
        %4012 = vmatpush1.msra.mxu0 0.0
        %4013 = vmatprep.subr.mxu0 0.0
        %4014 = vmatpush1.msra.mxu0 0.0
        %4015 = vmatprep.mubr.f32.mxu0 0.0
        %4016 = vmatmul.mubr.f32.gmra.mrb[0].mxu0 %v3927
        %v4017 = vpop.f32.mrb[0].mxu0
        %v4018 = vadd.f32 0.0, %v4017
        %v4019 = vpop.f32.mrb[0].mxu0
        %4020 = vmatprep.mubr.f32.mxu0 0.0
        %4021 = vmatmul.mubr.f32.gmra.mrb[0].mxu0 %v3928
        %v4022 = vpop.f32.mrb[0].mxu0
        %v4023 = vadd.f32 0.0, %v4022
        %v4024 = vpop.f32.mrb[0].mxu0
        %4025 = vmatprep.mubr.f32.mxu0 0.0
        %4026 = vmatmul.mubr.f32.gmra.mrb[0].mxu0 %v3929
        %v4027 = vpop.f32.mrb[0].mxu0
        %v4028 = vadd.f32 0.0, %v4027
        %v4029 = vpop.f32.mrb[0].mxu0
        %4030 = vmatprep.mubr.f32.mxu0 0.0
        %4031 = vmatmul.mubr.f32.gmra.mrb[0].mxu0 %v3930
        %v4032 = vpop.f32.mrb[0].mxu0
        %v4033 = vadd.f32 0.0, %v4032
        %v4034 = vpop.f32.mrb[0].mxu0
        %4035 = vmatprep.mubr.f32.mxu0 0.0
        %4036 = vmatmul.mubr.f32.gmra.mrb[0].mxu0 %v3931
        %v4037 = vpop.f32.mrb[0].mxu0
        %v4038 = vadd.f32 0.0, %v4037
        %v4039 = vpop.f32.mrb[0].mxu0
        %4040 = vmatprep.mubr.f32.mxu0 0.0
        %4041 = vmatmul.mubr.f32.gmra.mrb[0].mxu0 %v3932
        %v4042 = vpop.f32.mrb[0].mxu0
        %v4043 = vadd.f32 0.0, %v4042
        %v4044 = vpop.f32.mrb[0].mxu0
        %4045 = vmatprep.mubr.f32.mxu0 0.0
        %4046 = vmatmul.mubr.f32.gmra.mrb[0].mxu0 %v3933
        %v4047 = vpop.f32.mrb[0].mxu0
        %v4048 = vadd.f32 0.0, %v4047
        %v4049 = vpop.f32.mrb[0].mxu0
        %4050 = vmatprep.mubr.f32.mxu0 0.0
        %4051 = vmatmul.mubr.f32.gmra.mrb[0].mxu0 %v3934
        %v4052 = vpop.f32.mrb[0].mxu0
        %v4053 = vadd.f32 0.0, %v4052
        %v4054 = vpop.f32.mrb[0].mxu0
        %4055 = vdwg.mxu0
        %v4056 = vadd.f32 %v3889, %v4018
        %v4057 = vadd.f32 %v3894, %v4023
        %v4058 = vadd.f32 %v3899, %v4028
        %v4059 = vadd.f32 %v3904, %v4033
        %v4060 = vadd.f32 %v3909, %v4038
        %v4061 = vadd.f32 %v3914, %v4043
        %v4062 = vadd.f32 %v3919, %v4048
        %v4063 = vadd.f32 %v3924, %v4053
        %v4064 = vsel %vm3660, %v4056, 0.0
        %v4065 = vsel %vm3661, %v4057, 0.0
        %v4066 = vsel %vm3662, %v4058, 0.0
        %v4067 = vsel %vm3663, %v4059, 0.0
        %v4068 = vsel %vm3664, %v4060, 0.0
        %v4069 = vsel %vm3665, %v4061, 0.0
        %v4070 = vsel %vm3666, %v4062, 0.0
        %v4071 = vsel %vm3667, %v4063, 0.0
        %v4072 = vadd.f32 %v4064, 0.0
        %v4073 = vadd.f32 %v4065, 0.0
        %v4074 = vadd.f32 %v4066, 0.0
        %v4075 = vadd.f32 %v4067, 0.0
        %v4076 = vadd.f32 %v4068, 0.0
        %v4077 = vadd.f32 %v4069, 0.0
        %v4078 = vadd.f32 %v4070, 0.0
        %v4079 = vadd.f32 %v4071, 0.0
        %v4080 = vld [vmem:[#allocation3 + $0x1] sm:$0xff]
        %v4081 = vld [vmem:[#allocation3 + $0x9] sm:$0xff]
        %v4082 = vld [vmem:[#allocation3 + $0x11] sm:$0xff]
        %v4083 = vld [vmem:[#allocation3 + $0x19] sm:$0xff]
        %v4084 = vld [vmem:[#allocation3 + $0x21] sm:$0xff]
        %v4085 = vld [vmem:[#allocation3 + $0x29] sm:$0xff]
        %v4086 = vld [vmem:[#allocation3 + $0x31] sm:$0xff]
        %v4087 = vld [vmem:[#allocation3 + $0x39] sm:$0xff]
        %v4088 = vld [vmem:[%s3 + $0x80] sm:$0xff]
        %v4089 = vld [vmem:[%s3 + $0x88] sm:$0xff]
        %v4090 = vld [vmem:[%s3 + $0x90] sm:$0xff]
        %v4091 = vld [vmem:[%s3 + $0x98] sm:$0xff]
        %v4092 = vld [vmem:[%s3 + $0xa0] sm:$0xff]
        %v4093 = vld [vmem:[%s3 + $0xa8] sm:$0xff]
        %v4094 = vld [vmem:[%s3 + $0xb0] sm:$0xff]
        %v4095 = vld [vmem:[%s3 + $0xb8] sm:$0xff]
        %v4096 = vld [vmem:[%s3 + $0xc0] sm:$0xff]
        %v4097 = vld [vmem:[%s3 + $0xc8] sm:$0xff]
        %v4098 = vld [vmem:[%s3 + $0xd0] sm:$0xff]
        %v4099 = vld [vmem:[%s3 + $0xd8] sm:$0xff]
        %v4100 = vld [vmem:[%s3 + $0xe0] sm:$0xff]
        %v4101 = vld [vmem:[%s3 + $0xe8] sm:$0xff]
        %v4102 = vld [vmem:[%s3 + $0xf0] sm:$0xff]
        %v4103 = vld [vmem:[%s3 + $0xf8] sm:$0xff]
        %v4104 = vld [vmem:[#allocation3 + $0x41] sm:$0xff]
        %v4105 = vld [vmem:[%s3 + $0x200] sm:$0xff]
        %v4106 = vld [vmem:[%s3 + $0x208] sm:$0xff]
        %v4107 = vld [vmem:[%s3 + $0x210] sm:$0xff]
        %v4108 = vld [vmem:[%s3 + $0x218] sm:$0xff]
        %v4109 = vld [vmem:[%s3 + $0x220] sm:$0xff]
        %v4110 = vld [vmem:[%s3 + $0x228] sm:$0xff]
        %v4111 = vld [vmem:[%s3 + $0x230] sm:$0xff]
        %v4112 = vld [vmem:[%s3 + $0x238] sm:$0xff]
        %v4113 = vld [vmem:[%s3 + $0x240] sm:$0xff]
        %v4114 = vld [vmem:[%s3 + $0x248] sm:$0xff]
        %v4115 = vld [vmem:[%s3 + $0x250] sm:$0xff]
        %v4116 = vld [vmem:[%s3 + $0x258] sm:$0xff]
        %v4117 = vld [vmem:[%s3 + $0x260] sm:$0xff]
        %v4118 = vld [vmem:[%s3 + $0x268] sm:$0xff]
        %v4119 = vld [vmem:[%s3 + $0x270] sm:$0xff]
        %v4120 = vld [vmem:[%s3 + $0x278] sm:$0xff]
        %4121 = vmatprep.subr.mxu0 0.0
        %4122 = vmatpush1.msra.mxu0 %v4105
        %4123 = vmatprep.subr.mxu0 0.0
        %4124 = vmatpush1.msra.mxu0 %v4106
        %4125 = vmatprep.subr.mxu0 0.0
        %4126 = vmatpush1.msra.mxu0 %v4107
        %4127 = vmatprep.subr.mxu0 0.0
        %4128 = vmatpush1.msra.mxu0 %v4108
        %4129 = vmatprep.subr.mxu0 0.0
        %4130 = vmatpush1.msra.mxu0 %v4109
        %4131 = vmatprep.subr.mxu0 0.0
        %4132 = vmatpush1.msra.mxu0 %v4110
        %4133 = vmatprep.subr.mxu0 0.0
        %4134 = vmatpush1.msra.mxu0 %v4111
        %4135 = vmatprep.subr.mxu0 0.0
        %4136 = vmatpush1.msra.mxu0 %v4112
        %4137 = vmatprep.subr.mxu0 0.0
        %4138 = vmatpush1.msra.mxu0 %v4113
        %4139 = vmatprep.subr.mxu0 0.0
        %4140 = vmatpush1.msra.mxu0 %v4114
        %4141 = vmatprep.subr.mxu0 0.0
        %4142 = vmatpush1.msra.mxu0 %v4115
        %4143 = vmatprep.subr.mxu0 0.0
        %4144 = vmatpush1.msra.mxu0 %v4116
        %4145 = vmatprep.subr.mxu0 0.0
        %4146 = vmatpush1.msra.mxu0 %v4117
        %4147 = vmatprep.subr.mxu0 0.0
        %4148 = vmatpush1.msra.mxu0 %v4118
        %4149 = vmatprep.subr.mxu0 0.0
        %4150 = vmatpush1.msra.mxu0 %v4119
        %4151 = vmatprep.subr.mxu0 0.0
        %4152 = vmatpush1.msra.mxu0 %v4120
        %4153 = vmatprep.subr.mxu0 0.0
        %4154 = vmatpush1.msra.mxu0 0.0
        %4155 = vmatprep.subr.mxu0 0.0
        %4156 = vmatpush1.msra.mxu0 0.0
        %4157 = vmatprep.subr.mxu0 0.0
        %4158 = vmatpush1.msra.mxu0 0.0
        %4159 = vmatprep.subr.mxu0 0.0
        %4160 = vmatpush1.msra.mxu0 0.0
        %4161 = vmatprep.subr.mxu0 0.0
        %4162 = vmatpush1.msra.mxu0 0.0
        %4163 = vmatprep.subr.mxu0 0.0
        %4164 = vmatpush1.msra.mxu0 0.0
        %4165 = vmatprep.subr.mxu0 0.0
        %4166 = vmatpush1.msra.mxu0 0.0
        %4167 = vmatprep.subr.mxu0 0.0
        %4168 = vmatpush1.msra.mxu0 0.0
        %4169 = vmatprep.subr.mxu0 0.0
        %4170 = vmatpush1.msra.mxu0 0.0
        %4171 = vmatprep.subr.mxu0 0.0
        %4172 = vmatpush1.msra.mxu0 0.0
        %4173 = vmatprep.subr.mxu0 0.0
        %4174 = vmatpush1.msra.mxu0 0.0
        %4175 = vmatprep.subr.mxu0 0.0
        %4176 = vmatpush1.msra.mxu0 0.0
        %4177 = vmatprep.subr.mxu0 0.0
        %4178 = vmatpush1.msra.mxu0 0.0
        %4179 = vmatprep.subr.mxu0 0.0
        %4180 = vmatpush1.msra.mxu0 0.0
        %4181 = vmatprep.subr.mxu0 0.0
        %4182 = vmatpush1.msra.mxu0 0.0
        %4183 = vmatprep.subr.mxu0 0.0
        %4184 = vmatpush1.msra.mxu0 0.0
        %4185 = vmatprep.mubr.f32.mxu0 0.0
        %4186 = vmatmul.mubr.f32.gmra.mrb[0].mxu0 %v4081
        %v4187 = vpop.f32.mrb[0].mxu0
        %v4188 = vadd.f32 0.0, %v4187
        %v4189 = vpop.f32.mrb[0].mxu0
        %4190 = vmatprep.mubr.f32.mxu0 0.0
        %4191 = vmatmul.mubr.f32.gmra.mrb[0].mxu0 %v4082
        %v4192 = vpop.f32.mrb[0].mxu0
        %v4193 = vadd.f32 0.0, %v4192
        %v4194 = vpop.f32.mrb[0].mxu0
        %4195 = vmatprep.mubr.f32.mxu0 0.0
        %4196 = vmatmul.mubr.f32.gmra.mrb[0].mxu0 %v4083
        %v4197 = vpop.f32.mrb[0].mxu0
        %v4198 = vadd.f32 0.0, %v4197
        %v4199 = vpop.f32.mrb[0].mxu0
        %4200 = vmatprep.mubr.f32.mxu0 0.0
        %4201 = vmatmul.mubr.f32.gmra.mrb[0].mxu0 %v4084
        %v4202 = vpop.f32.mrb[0].mxu0
        %v4203 = vadd.f32 0.0, %v4202
        %v4204 = vpop.f32.mrb[0].mxu0
        %4205 = vmatprep.mubr.f32.mxu0 0.0
        %4206 = vmatmul.mubr.f32.gmra.mrb[0].mxu0 %v4085
        %v4207 = vpop.f32.mrb[0].mxu0
        %v4208 = vadd.f32 0.0, %v4207
        %v4209 = vpop.f32.mrb[0].mxu0
        %4210 = vmatprep.mubr.f32.mxu0 0.0
        %4211 = vmatmul.mubr.f32.gmra.mrb[0].mxu0 %v4086
        %v4212 = vpop.f32.mrb[0].mxu0
        %v4213 = vadd.f32 0.0, %v4212
        %v4214 = vpop.f32.mrb[0].mxu0
        %4215 = vmatprep.mubr.f32.mxu0 0.0
        %4216 = vmatmul.mubr.f32.gmra.mrb[0].mxu0 %v4087
        %v4217 = vpop.f32.mrb[0].mxu0
        %v4218 = vadd.f32 0.0, %v4217
        %v4219 = vpop.f32.mrb[0].mxu0
        %4220 = vmatprep.mubr.f32.mxu0 0.0
        %4221 = vmatmul.mubr.f32.gmra.mrb[0].mxu0 %v4104
        %v4222 = vpop.f32.mrb[0].mxu0
        %v4223 = vadd.f32 0.0, %v4222
        %v4224 = vpop.f32.mrb[0].mxu0
        %4225 = vdwg.mxu0
        %4226 = vmatprep.subr.mxu0 0.0
        %4227 = vmatpush1.msra.mxu0 %v4088
        %4228 = vmatprep.subr.mxu0 0.0
        %4229 = vmatpush1.msra.mxu0 %v4089
        %4230 = vmatprep.subr.mxu0 0.0
        %4231 = vmatpush1.msra.mxu0 %v4090
        %4232 = vmatprep.subr.mxu0 0.0
        %4233 = vmatpush1.msra.mxu0 %v4091
        %4234 = vmatprep.subr.mxu0 0.0
        %4235 = vmatpush1.msra.mxu0 %v4092
        %4236 = vmatprep.subr.mxu0 0.0
        %4237 = vmatpush1.msra.mxu0 %v4093
        %4238 = vmatprep.subr.mxu0 0.0
        %4239 = vmatpush1.msra.mxu0 %v4094
        %4240 = vmatprep.subr.mxu0 0.0
        %4241 = vmatpush1.msra.mxu0 %v4095
        %4242 = vmatprep.subr.mxu0 0.0
        %4243 = vmatpush1.msra.mxu0 %v4096
        %4244 = vmatprep.subr.mxu0 0.0
        %4245 = vmatpush1.msra.mxu0 %v4097
        %4246 = vmatprep.subr.mxu0 0.0
        %4247 = vmatpush1.msra.mxu0 %v4098
        %4248 = vmatprep.subr.mxu0 0.0
        %4249 = vmatpush1.msra.mxu0 %v4099
        %4250 = vmatprep.subr.mxu0 0.0
        %4251 = vmatpush1.msra.mxu0 %v4100
        %4252 = vmatprep.subr.mxu0 0.0
        %4253 = vmatpush1.msra.mxu0 %v4101
        %4254 = vmatprep.subr.mxu0 0.0
        %4255 = vmatpush1.msra.mxu0 %v4102
        %4256 = vmatprep.subr.mxu0 0.0
        %4257 = vmatpush1.msra.mxu0 %v4103
        %4258 = vmatprep.subr.mxu0 0.0
        %4259 = vmatpush1.msra.mxu0 0.0
        %4260 = vmatprep.subr.mxu0 0.0
        %4261 = vmatpush1.msra.mxu0 0.0
        %4262 = vmatprep.subr.mxu0 0.0
        %4263 = vmatpush1.msra.mxu0 0.0
        %4264 = vmatprep.subr.mxu0 0.0
        %4265 = vmatpush1.msra.mxu0 0.0
        %4266 = vmatprep.subr.mxu0 0.0
        %4267 = vmatpush1.msra.mxu0 0.0
        %4268 = vmatprep.subr.mxu0 0.0
        %4269 = vmatpush1.msra.mxu0 0.0
        %4270 = vmatprep.subr.mxu0 0.0
        %4271 = vmatpush1.msra.mxu0 0.0
        %4272 = vmatprep.subr.mxu0 0.0
        %4273 = vmatpush1.msra.mxu0 0.0
        %4274 = vmatprep.subr.mxu0 0.0
        %4275 = vmatpush1.msra.mxu0 0.0
        %4276 = vmatprep.subr.mxu0 0.0
        %4277 = vmatpush1.msra.mxu0 0.0
        %4278 = vmatprep.subr.mxu0 0.0
        %4279 = vmatpush1.msra.mxu0 0.0
        %4280 = vmatprep.subr.mxu0 0.0
        %4281 = vmatpush1.msra.mxu0 0.0
        %4282 = vmatprep.subr.mxu0 0.0
        %4283 = vmatpush1.msra.mxu0 0.0
        %4284 = vmatprep.subr.mxu0 0.0
        %4285 = vmatpush1.msra.mxu0 0.0
        %4286 = vmatprep.subr.mxu0 0.0
        %4287 = vmatpush1.msra.mxu0 0.0
        %4288 = vmatprep.subr.mxu0 0.0
        %4289 = vmatpush1.msra.mxu0 0.0
        %4290 = vmatprep.mubr.f32.mxu0 0.0
        %4291 = vmatmul.mubr.f32.gmra.mrb[0].mxu0 %v4080
        %v4292 = vpop.f32.mrb[0].mxu0
        %v4293 = vadd.f32 %v4188, %v4292
        %v4294 = vpop.f32.mrb[0].mxu0
        %4295 = vmatprep.mubr.f32.mxu0 0.0
        %4296 = vmatmul.mubr.f32.gmra.mrb[0].mxu0 %v4081
        %v4297 = vpop.f32.mrb[0].mxu0
        %v4298 = vadd.f32 %v4193, %v4297
        %v4299 = vpop.f32.mrb[0].mxu0
        %4300 = vmatprep.mubr.f32.mxu0 0.0
        %4301 = vmatmul.mubr.f32.gmra.mrb[0].mxu0 %v4082
        %v4302 = vpop.f32.mrb[0].mxu0
        %v4303 = vadd.f32 %v4198, %v4302
        %v4304 = vpop.f32.mrb[0].mxu0
        %4305 = vmatprep.mubr.f32.mxu0 0.0
        %4306 = vmatmul.mubr.f32.gmra.mrb[0].mxu0 %v4083
        %v4307 = vpop.f32.mrb[0].mxu0
        %v4308 = vadd.f32 %v4203, %v4307
        %v4309 = vpop.f32.mrb[0].mxu0
        %4310 = vmatprep.mubr.f32.mxu0 0.0
        %4311 = vmatmul.mubr.f32.gmra.mrb[0].mxu0 %v4084
        %v4312 = vpop.f32.mrb[0].mxu0
        %v4313 = vadd.f32 %v4208, %v4312
        %v4314 = vpop.f32.mrb[0].mxu0
        %4315 = vmatprep.mubr.f32.mxu0 0.0
        %4316 = vmatmul.mubr.f32.gmra.mrb[0].mxu0 %v4085
        %v4317 = vpop.f32.mrb[0].mxu0
        %v4318 = vadd.f32 %v4213, %v4317
        %v4319 = vpop.f32.mrb[0].mxu0
        %4320 = vmatprep.mubr.f32.mxu0 0.0
        %4321 = vmatmul.mubr.f32.gmra.mrb[0].mxu0 %v4086
        %v4322 = vpop.f32.mrb[0].mxu0
        %v4323 = vadd.f32 %v4218, %v4322
        %v4324 = vpop.f32.mrb[0].mxu0
        %4325 = vmatprep.mubr.f32.mxu0 0.0
        %4326 = vmatmul.mubr.f32.gmra.mrb[0].mxu0 %v4087
        %v4327 = vpop.f32.mrb[0].mxu0
        %v4328 = vadd.f32 %v4223, %v4327
        %v4329 = vpop.f32.mrb[0].mxu0
        %4330 = vdwg.mxu0
        %v4331 = vld [vmem:[#allocation3 + $0x11] sm:$0xff]
        %v4332 = vld [vmem:[#allocation3 + $0x19] sm:$0xff]
        %v4333 = vld [vmem:[#allocation3 + $0x21] sm:$0xff]
        %v4334 = vld [vmem:[#allocation3 + $0x29] sm:$0xff]
        %v4335 = vld [vmem:[#allocation3 + $0x31] sm:$0xff]
        %v4336 = vld [vmem:[#allocation3 + $0x39] sm:$0xff]
        %v4337 = vld [vmem:[#allocation3 + $0x41] sm:$0xff]
        %v4338 = vld [vmem:[#allocation3 + $0x49] sm:$0xff]
        %v4339 = vld [vmem:[%s3 + $0x380] sm:$0xff]
        %v4340 = vld [vmem:[%s3 + $0x388] sm:$0xff]
        %v4341 = vld [vmem:[%s3 + $0x390] sm:$0xff]
        %v4342 = vld [vmem:[%s3 + $0x398] sm:$0xff]
        %v4343 = vld [vmem:[%s3 + $0x3a0] sm:$0xff]
        %v4344 = vld [vmem:[%s3 + $0x3a8] sm:$0xff]
        %v4345 = vld [vmem:[%s3 + $0x3b0] sm:$0xff]
        %v4346 = vld [vmem:[%s3 + $0x3b8] sm:$0xff]
        %v4347 = vld [vmem:[%s3 + $0x3c0] sm:$0xff]
        %v4348 = vld [vmem:[%s3 + $0x3c8] sm:$0xff]
        %v4349 = vld [vmem:[%s3 + $0x3d0] sm:$0xff]
        %v4350 = vld [vmem:[%s3 + $0x3d8] sm:$0xff]
        %v4351 = vld [vmem:[%s3 + $0x3e0] sm:$0xff]
        %v4352 = vld [vmem:[%s3 + $0x3e8] sm:$0xff]
        %v4353 = vld [vmem:[%s3 + $0x3f0] sm:$0xff]
        %v4354 = vld [vmem:[%s3 + $0x3f8] sm:$0xff]
        %4355 = vmatprep.subr.mxu0 0.0
        %4356 = vmatpush1.msra.mxu0 %v4339
        %4357 = vmatprep.subr.mxu0 0.0
        %4358 = vmatpush1.msra.mxu0 %v4340
        %4359 = vmatprep.subr.mxu0 0.0
        %4360 = vmatpush1.msra.mxu0 %v4341
        %4361 = vmatprep.subr.mxu0 0.0
        %4362 = vmatpush1.msra.mxu0 %v4342
        %4363 = vmatprep.subr.mxu0 0.0
        %4364 = vmatpush1.msra.mxu0 %v4343
        %4365 = vmatprep.subr.mxu0 0.0
        %4366 = vmatpush1.msra.mxu0 %v4344
        %4367 = vmatprep.subr.mxu0 0.0
        %4368 = vmatpush1.msra.mxu0 %v4345
        %4369 = vmatprep.subr.mxu0 0.0
        %4370 = vmatpush1.msra.mxu0 %v4346
        %4371 = vmatprep.subr.mxu0 0.0
        %4372 = vmatpush1.msra.mxu0 %v4347
        %4373 = vmatprep.subr.mxu0 0.0
        %4374 = vmatpush1.msra.mxu0 %v4348
        %4375 = vmatprep.subr.mxu0 0.0
        %4376 = vmatpush1.msra.mxu0 %v4349
        %4377 = vmatprep.subr.mxu0 0.0
        %4378 = vmatpush1.msra.mxu0 %v4350
        %4379 = vmatprep.subr.mxu0 0.0
        %4380 = vmatpush1.msra.mxu0 %v4351
        %4381 = vmatprep.subr.mxu0 0.0
        %4382 = vmatpush1.msra.mxu0 %v4352
        %4383 = vmatprep.subr.mxu0 0.0
        %4384 = vmatpush1.msra.mxu0 %v4353
        %4385 = vmatprep.subr.mxu0 0.0
        %4386 = vmatpush1.msra.mxu0 %v4354
        %4387 = vmatprep.subr.mxu0 0.0
        %4388 = vmatpush1.msra.mxu0 0.0
        %4389 = vmatprep.subr.mxu0 0.0
        %4390 = vmatpush1.msra.mxu0 0.0
        %4391 = vmatprep.subr.mxu0 0.0
        %4392 = vmatpush1.msra.mxu0 0.0
        %4393 = vmatprep.subr.mxu0 0.0
        %4394 = vmatpush1.msra.mxu0 0.0
        %4395 = vmatprep.subr.mxu0 0.0
        %4396 = vmatpush1.msra.mxu0 0.0
        %4397 = vmatprep.subr.mxu0 0.0
        %4398 = vmatpush1.msra.mxu0 0.0
        %4399 = vmatprep.subr.mxu0 0.0
        %4400 = vmatpush1.msra.mxu0 0.0
        %4401 = vmatprep.subr.mxu0 0.0
        %4402 = vmatpush1.msra.mxu0 0.0
        %4403 = vmatprep.subr.mxu0 0.0
        %4404 = vmatpush1.msra.mxu0 0.0
        %4405 = vmatprep.subr.mxu0 0.0
        %4406 = vmatpush1.msra.mxu0 0.0
        %4407 = vmatprep.subr.mxu0 0.0
        %4408 = vmatpush1.msra.mxu0 0.0
        %4409 = vmatprep.subr.mxu0 0.0
        %4410 = vmatpush1.msra.mxu0 0.0
        %4411 = vmatprep.subr.mxu0 0.0
        %4412 = vmatpush1.msra.mxu0 0.0
        %4413 = vmatprep.subr.mxu0 0.0
        %4414 = vmatpush1.msra.mxu0 0.0
        %4415 = vmatprep.subr.mxu0 0.0
        %4416 = vmatpush1.msra.mxu0 0.0
        %4417 = vmatprep.subr.mxu0 0.0
        %4418 = vmatpush1.msra.mxu0 0.0
        %4419 = vmatprep.mubr.f32.mxu0 0.0
        %4420 = vmatmul.mubr.f32.gmra.mrb[0].mxu0 %v4331
        %v4421 = vpop.f32.mrb[0].mxu0
        %v4422 = vadd.f32 0.0, %v4421
        %v4423 = vpop.f32.mrb[0].mxu0
        %4424 = vmatprep.mubr.f32.mxu0 0.0
        %4425 = vmatmul.mubr.f32.gmra.mrb[0].mxu0 %v4332
        %v4426 = vpop.f32.mrb[0].mxu0
        %v4427 = vadd.f32 0.0, %v4426
        %v4428 = vpop.f32.mrb[0].mxu0
        %4429 = vmatprep.mubr.f32.mxu0 0.0
        %4430 = vmatmul.mubr.f32.gmra.mrb[0].mxu0 %v4333
        %v4431 = vpop.f32.mrb[0].mxu0
        %v4432 = vadd.f32 0.0, %v4431
        %v4433 = vpop.f32.mrb[0].mxu0
        %4434 = vmatprep.mubr.f32.mxu0 0.0
        %4435 = vmatmul.mubr.f32.gmra.mrb[0].mxu0 %v4334
        %v4436 = vpop.f32.mrb[0].mxu0
        %v4437 = vadd.f32 0.0, %v4436
        %v4438 = vpop.f32.mrb[0].mxu0
        %4439 = vmatprep.mubr.f32.mxu0 0.0
        %4440 = vmatmul.mubr.f32.gmra.mrb[0].mxu0 %v4335
        %v4441 = vpop.f32.mrb[0].mxu0
        %v4442 = vadd.f32 0.0, %v4441
        %v4443 = vpop.f32.mrb[0].mxu0
        %4444 = vmatprep.mubr.f32.mxu0 0.0
        %4445 = vmatmul.mubr.f32.gmra.mrb[0].mxu0 %v4336
        %v4446 = vpop.f32.mrb[0].mxu0
        %v4447 = vadd.f32 0.0, %v4446
        %v4448 = vpop.f32.mrb[0].mxu0
        %4449 = vmatprep.mubr.f32.mxu0 0.0
        %4450 = vmatmul.mubr.f32.gmra.mrb[0].mxu0 %v4337
        %v4451 = vpop.f32.mrb[0].mxu0
        %v4452 = vadd.f32 0.0, %v4451
        %v4453 = vpop.f32.mrb[0].mxu0
        %4454 = vmatprep.mubr.f32.mxu0 0.0
        %4455 = vmatmul.mubr.f32.gmra.mrb[0].mxu0 %v4338
        %v4456 = vpop.f32.mrb[0].mxu0
        %v4457 = vadd.f32 0.0, %v4456
        %v4458 = vpop.f32.mrb[0].mxu0
        %4459 = vdwg.mxu0
        %v4460 = vadd.f32 %v4293, %v4422
        %v4461 = vadd.f32 %v4298, %v4427
        %v4462 = vadd.f32 %v4303, %v4432
        %v4463 = vadd.f32 %v4308, %v4437
        %v4464 = vadd.f32 %v4313, %v4442
        %v4465 = vadd.f32 %v4318, %v4447
        %v4466 = vadd.f32 %v4323, %v4452
        %v4467 = vadd.f32 %v4328, %v4457
        %v4468 = vadd.f32 %v4072, %v4460
        %v4469 = vadd.f32 %v4073, %v4461
        %v4470 = vadd.f32 %v4074, %v4462
        %v4471 = vadd.f32 %v4075, %v4463
        %v4472 = vadd.f32 %v4076, %v4464
        %v4473 = vadd.f32 %v4077, %v4465
        %v4474 = vadd.f32 %v4078, %v4466
        %v4475 = vadd.f32 %v4079, %v4467
        %v4476 = vld [vmem:[#allocation3 + $0x2] sm:$0xff]
        %v4477 = vld [vmem:[#allocation3 + $0xa] sm:$0xff]
        %v4478 = vld [vmem:[#allocation3 + $0x12] sm:$0xff]
        %v4479 = vld [vmem:[#allocation3 + $0x1a] sm:$0xff]
        %v4480 = vld [vmem:[#allocation3 + $0x22] sm:$0xff]
        %v4481 = vld [vmem:[#allocation3 + $0x2a] sm:$0xff]
        %v4482 = vld [vmem:[#allocation3 + $0x32] sm:$0xff]
        %v4483 = vld [vmem:[#allocation3 + $0x3a] sm:$0xff]
        %v4484 = vld [vmem:[%s3 + $0x100] sm:$0xff]
        %v4485 = vld [vmem:[%s3 + $0x108] sm:$0xff]
        %v4486 = vld [vmem:[%s3 + $0x110] sm:$0xff]
        %v4487 = vld [vmem:[%s3 + $0x118] sm:$0xff]
        %v4488 = vld [vmem:[%s3 + $0x120] sm:$0xff]
        %v4489 = vld [vmem:[%s3 + $0x128] sm:$0xff]
        %v4490 = vld [vmem:[%s3 + $0x130] sm:$0xff]
        %v4491 = vld [vmem:[%s3 + $0x138] sm:$0xff]
        %v4492 = vld [vmem:[%s3 + $0x140] sm:$0xff]
        %v4493 = vld [vmem:[%s3 + $0x148] sm:$0xff]
        %v4494 = vld [vmem:[%s3 + $0x150] sm:$0xff]
        %v4495 = vld [vmem:[%s3 + $0x158] sm:$0xff]
        %v4496 = vld [vmem:[%s3 + $0x160] sm:$0xff]
        %v4497 = vld [vmem:[%s3 + $0x168] sm:$0xff]
        %v4498 = vld [vmem:[%s3 + $0x170] sm:$0xff]
        %v4499 = vld [vmem:[%s3 + $0x178] sm:$0xff]
        %v4500 = vld [vmem:[#allocation3 + $0x42] sm:$0xff]
        %v4501 = vld [vmem:[%s3 + $0x280] sm:$0xff]
        %v4502 = vld [vmem:[%s3 + $0x288] sm:$0xff]
        %v4503 = vld [vmem:[%s3 + $0x290] sm:$0xff]
        %v4504 = vld [vmem:[%s3 + $0x298] sm:$0xff]
        %v4505 = vld [vmem:[%s3 + $0x2a0] sm:$0xff]
        %v4506 = vld [vmem:[%s3 + $0x2a8] sm:$0xff]
        %v4507 = vld [vmem:[%s3 + $0x2b0] sm:$0xff]
        %v4508 = vld [vmem:[%s3 + $0x2b8] sm:$0xff]
        %v4509 = vld [vmem:[%s3 + $0x2c0] sm:$0xff]
        %v4510 = vld [vmem:[%s3 + $0x2c8] sm:$0xff]
        %v4511 = vld [vmem:[%s3 + $0x2d0] sm:$0xff]
        %v4512 = vld [vmem:[%s3 + $0x2d8] sm:$0xff]
        %v4513 = vld [vmem:[%s3 + $0x2e0] sm:$0xff]
        %v4514 = vld [vmem:[%s3 + $0x2e8] sm:$0xff]
        %v4515 = vld [vmem:[%s3 + $0x2f0] sm:$0xff]
        %v4516 = vld [vmem:[%s3 + $0x2f8] sm:$0xff]
        %4517 = vmatprep.subr.mxu0 0.0
        %4518 = vmatpush1.msra.mxu0 %v4501
        %4519 = vmatprep.subr.mxu0 0.0
        %4520 = vmatpush1.msra.mxu0 %v4502
        %4521 = vmatprep.subr.mxu0 0.0
        %4522 = vmatpush1.msra.mxu0 %v4503
        %4523 = vmatprep.subr.mxu0 0.0
        %4524 = vmatpush1.msra.mxu0 %v4504
        %4525 = vmatprep.subr.mxu0 0.0
        %4526 = vmatpush1.msra.mxu0 %v4505
        %4527 = vmatprep.subr.mxu0 0.0
        %4528 = vmatpush1.msra.mxu0 %v4506
        %4529 = vmatprep.subr.mxu0 0.0
        %4530 = vmatpush1.msra.mxu0 %v4507
        %4531 = vmatprep.subr.mxu0 0.0
        %4532 = vmatpush1.msra.mxu0 %v4508
        %4533 = vmatprep.subr.mxu0 0.0
        %4534 = vmatpush1.msra.mxu0 %v4509
        %4535 = vmatprep.subr.mxu0 0.0
        %4536 = vmatpush1.msra.mxu0 %v4510
        %4537 = vmatprep.subr.mxu0 0.0
        %4538 = vmatpush1.msra.mxu0 %v4511
        %4539 = vmatprep.subr.mxu0 0.0
        %4540 = vmatpush1.msra.mxu0 %v4512
        %4541 = vmatprep.subr.mxu0 0.0
        %4542 = vmatpush1.msra.mxu0 %v4513
        %4543 = vmatprep.subr.mxu0 0.0
        %4544 = vmatpush1.msra.mxu0 %v4514
        %4545 = vmatprep.subr.mxu0 0.0
        %4546 = vmatpush1.msra.mxu0 %v4515
        %4547 = vmatprep.subr.mxu0 0.0
        %4548 = vmatpush1.msra.mxu0 %v4516
        %4549 = vmatprep.subr.mxu0 0.0
        %4550 = vmatpush1.msra.mxu0 0.0
        %4551 = vmatprep.subr.mxu0 0.0
        %4552 = vmatpush1.msra.mxu0 0.0
        %4553 = vmatprep.subr.mxu0 0.0
        %4554 = vmatpush1.msra.mxu0 0.0
        %4555 = vmatprep.subr.mxu0 0.0
        %4556 = vmatpush1.msra.mxu0 0.0
        %4557 = vmatprep.subr.mxu0 0.0
        %4558 = vmatpush1.msra.mxu0 0.0
        %4559 = vmatprep.subr.mxu0 0.0
        %4560 = vmatpush1.msra.mxu0 0.0
        %4561 = vmatprep.subr.mxu0 0.0
        %4562 = vmatpush1.msra.mxu0 0.0
        %4563 = vmatprep.subr.mxu0 0.0
        %4564 = vmatpush1.msra.mxu0 0.0
        %4565 = vmatprep.subr.mxu0 0.0
        %4566 = vmatpush1.msra.mxu0 0.0
        %4567 = vmatprep.subr.mxu0 0.0
        %4568 = vmatpush1.msra.mxu0 0.0
        %4569 = vmatprep.subr.mxu0 0.0
        %4570 = vmatpush1.msra.mxu0 0.0
        %4571 = vmatprep.subr.mxu0 0.0
        %4572 = vmatpush1.msra.mxu0 0.0
        %4573 = vmatprep.subr.mxu0 0.0
        %4574 = vmatpush1.msra.mxu0 0.0
        %4575 = vmatprep.subr.mxu0 0.0
        %4576 = vmatpush1.msra.mxu0 0.0
        %4577 = vmatprep.subr.mxu0 0.0
        %4578 = vmatpush1.msra.mxu0 0.0
        %4579 = vmatprep.subr.mxu0 0.0
        %4580 = vmatpush1.msra.mxu0 0.0
        %4581 = vmatprep.mubr.f32.mxu0 0.0
        %4582 = vmatmul.mubr.f32.gmra.mrb[0].mxu0 %v4477
        %v4583 = vpop.f32.mrb[0].mxu0
        %v4584 = vadd.f32 0.0, %v4583
        %v4585 = vpop.f32.mrb[0].mxu0
        %4586 = vmatprep.mubr.f32.mxu0 0.0
        %4587 = vmatmul.mubr.f32.gmra.mrb[0].mxu0 %v4478
        %v4588 = vpop.f32.mrb[0].mxu0
        %v4589 = vadd.f32 0.0, %v4588
        %v4590 = vpop.f32.mrb[0].mxu0
        %4591 = vmatprep.mubr.f32.mxu0 0.0
        %4592 = vmatmul.mubr.f32.gmra.mrb[0].mxu0 %v4479
        %v4593 = vpop.f32.mrb[0].mxu0
        %v4594 = vadd.f32 0.0, %v4593
        %v4595 = vpop.f32.mrb[0].mxu0
        %4596 = vmatprep.mubr.f32.mxu0 0.0
        %4597 = vmatmul.mubr.f32.gmra.mrb[0].mxu0 %v4480
        %v4598 = vpop.f32.mrb[0].mxu0
        %v4599 = vadd.f32 0.0, %v4598
        %v4600 = vpop.f32.mrb[0].mxu0
        %4601 = vmatprep.mubr.f32.mxu0 0.0
        %4602 = vmatmul.mubr.f32.gmra.mrb[0].mxu0 %v4481
        %v4603 = vpop.f32.mrb[0].mxu0
        %v4604 = vadd.f32 0.0, %v4603
        %v4605 = vpop.f32.mrb[0].mxu0
        %4606 = vmatprep.mubr.f32.mxu0 0.0
        %4607 = vmatmul.mubr.f32.gmra.mrb[0].mxu0 %v4482
        %v4608 = vpop.f32.mrb[0].mxu0
        %v4609 = vadd.f32 0.0, %v4608
        %v4610 = vpop.f32.mrb[0].mxu0
        %4611 = vmatprep.mubr.f32.mxu0 0.0
        %4612 = vmatmul.mubr.f32.gmra.mrb[0].mxu0 %v4483
        %v4613 = vpop.f32.mrb[0].mxu0
        %v4614 = vadd.f32 0.0, %v4613
        %v4615 = vpop.f32.mrb[0].mxu0
        %4616 = vmatprep.mubr.f32.mxu0 0.0
        %4617 = vmatmul.mubr.f32.gmra.mrb[0].mxu0 %v4500
        %v4618 = vpop.f32.mrb[0].mxu0
        %v4619 = vadd.f32 0.0, %v4618
        %v4620 = vpop.f32.mrb[0].mxu0
        %4621 = vdwg.mxu0
        %4622 = vmatprep.subr.mxu0 0.0
        %4623 = vmatpush1.msra.mxu0 %v4484
        %4624 = vmatprep.subr.mxu0 0.0
        %4625 = vmatpush1.msra.mxu0 %v4485
        %4626 = vmatprep.subr.mxu0 0.0
        %4627 = vmatpush1.msra.mxu0 %v4486
        %4628 = vmatprep.subr.mxu0 0.0
        %4629 = vmatpush1.msra.mxu0 %v4487
        %4630 = vmatprep.subr.mxu0 0.0
        %4631 = vmatpush1.msra.mxu0 %v4488
        %4632 = vmatprep.subr.mxu0 0.0
        %4633 = vmatpush1.msra.mxu0 %v4489
        %4634 = vmatprep.subr.mxu0 0.0
        %4635 = vmatpush1.msra.mxu0 %v4490
        %4636 = vmatprep.subr.mxu0 0.0
        %4637 = vmatpush1.msra.mxu0 %v4491
        %4638 = vmatprep.subr.mxu0 0.0
        %4639 = vmatpush1.msra.mxu0 %v4492
        %4640 = vmatprep.subr.mxu0 0.0
        %4641 = vmatpush1.msra.mxu0 %v4493
        %4642 = vmatprep.subr.mxu0 0.0
        %4643 = vmatpush1.msra.mxu0 %v4494
        %4644 = vmatprep.subr.mxu0 0.0
        %4645 = vmatpush1.msra.mxu0 %v4495
        %4646 = vmatprep.subr.mxu0 0.0
        %4647 = vmatpush1.msra.mxu0 %v4496
        %4648 = vmatprep.subr.mxu0 0.0
        %4649 = vmatpush1.msra.mxu0 %v4497
        %4650 = vmatprep.subr.mxu0 0.0
        %4651 = vmatpush1.msra.mxu0 %v4498
        %4652 = vmatprep.subr.mxu0 0.0
        %4653 = vmatpush1.msra.mxu0 %v4499
        %4654 = vmatprep.subr.mxu0 0.0
        %4655 = vmatpush1.msra.mxu0 0.0
        %4656 = vmatprep.subr.mxu0 0.0
        %4657 = vmatpush1.msra.mxu0 0.0
        %4658 = vmatprep.subr.mxu0 0.0
        %4659 = vmatpush1.msra.mxu0 0.0
        %4660 = vmatprep.subr.mxu0 0.0
        %4661 = vmatpush1.msra.mxu0 0.0
        %4662 = vmatprep.subr.mxu0 0.0
        %4663 = vmatpush1.msra.mxu0 0.0
        %4664 = vmatprep.subr.mxu0 0.0
        %4665 = vmatpush1.msra.mxu0 0.0
        %4666 = vmatprep.subr.mxu0 0.0
        %4667 = vmatpush1.msra.mxu0 0.0
        %4668 = vmatprep.subr.mxu0 0.0
        %4669 = vmatpush1.msra.mxu0 0.0
        %4670 = vmatprep.subr.mxu0 0.0
        %4671 = vmatpush1.msra.mxu0 0.0
        %4672 = vmatprep.subr.mxu0 0.0
        %4673 = vmatpush1.msra.mxu0 0.0
        %4674 = vmatprep.subr.mxu0 0.0
        %4675 = vmatpush1.msra.mxu0 0.0
        %4676 = vmatprep.subr.mxu0 0.0
        %4677 = vmatpush1.msra.mxu0 0.0
        %4678 = vmatprep.subr.mxu0 0.0
        %4679 = vmatpush1.msra.mxu0 0.0
        %4680 = vmatprep.subr.mxu0 0.0
        %4681 = vmatpush1.msra.mxu0 0.0
        %4682 = vmatprep.subr.mxu0 0.0
        %4683 = vmatpush1.msra.mxu0 0.0
        %4684 = vmatprep.subr.mxu0 0.0
        %4685 = vmatpush1.msra.mxu0 0.0
        %4686 = vmatprep.mubr.f32.mxu0 0.0
        %4687 = vmatmul.mubr.f32.gmra.mrb[0].mxu0 %v4476
        %v4688 = vpop.f32.mrb[0].mxu0
        %v4689 = vadd.f32 %v4584, %v4688
        %v4690 = vpop.f32.mrb[0].mxu0
        %4691 = vmatprep.mubr.f32.mxu0 0.0
        %4692 = vmatmul.mubr.f32.gmra.mrb[0].mxu0 %v4477
        %v4693 = vpop.f32.mrb[0].mxu0
        %v4694 = vadd.f32 %v4589, %v4693
        %v4695 = vpop.f32.mrb[0].mxu0
        %4696 = vmatprep.mubr.f32.mxu0 0.0
        %4697 = vmatmul.mubr.f32.gmra.mrb[0].mxu0 %v4478
        %v4698 = vpop.f32.mrb[0].mxu0
        %v4699 = vadd.f32 %v4594, %v4698
        %v4700 = vpop.f32.mrb[0].mxu0
        %4701 = vmatprep.mubr.f32.mxu0 0.0
        %4702 = vmatmul.mubr.f32.gmra.mrb[0].mxu0 %v4479
        %v4703 = vpop.f32.mrb[0].mxu0
        %v4704 = vadd.f32 %v4599, %v4703
        %v4705 = vpop.f32.mrb[0].mxu0
        %4706 = vmatprep.mubr.f32.mxu0 0.0
        %4707 = vmatmul.mubr.f32.gmra.mrb[0].mxu0 %v4480
        %v4708 = vpop.f32.mrb[0].mxu0
        %v4709 = vadd.f32 %v4604, %v4708
        %v4710 = vpop.f32.mrb[0].mxu0
        %4711 = vmatprep.mubr.f32.mxu0 0.0
        %4712 = vmatmul.mubr.f32.gmra.mrb[0].mxu0 %v4481
        %v4713 = vpop.f32.mrb[0].mxu0
        %v4714 = vadd.f32 %v4609, %v4713
        %v4715 = vpop.f32.mrb[0].mxu0
        %4716 = vmatprep.mubr.f32.mxu0 0.0
        %4717 = vmatmul.mubr.f32.gmra.mrb[0].mxu0 %v4482
        %v4718 = vpop.f32.mrb[0].mxu0
        %v4719 = vadd.f32 %v4614, %v4718
        %v4720 = vpop.f32.mrb[0].mxu0
        %4721 = vmatprep.mubr.f32.mxu0 0.0
        %4722 = vmatmul.mubr.f32.gmra.mrb[0].mxu0 %v4483
        %v4723 = vpop.f32.mrb[0].mxu0
        %v4724 = vadd.f32 %v4619, %v4723
        %v4725 = vpop.f32.mrb[0].mxu0
        %4726 = vdwg.mxu0
        %v4727 = vld [vmem:[#allocation3 + $0x12] sm:$0xff]
        %v4728 = vld [vmem:[#allocation3 + $0x1a] sm:$0xff]
        %v4729 = vld [vmem:[#allocation3 + $0x22] sm:$0xff]
        %v4730 = vld [vmem:[#allocation3 + $0x2a] sm:$0xff]
        %v4731 = vld [vmem:[#allocation3 + $0x32] sm:$0xff]
        %v4732 = vld [vmem:[#allocation3 + $0x3a] sm:$0xff]
        %v4733 = vld [vmem:[#allocation3 + $0x42] sm:$0xff]
        %v4734 = vld [vmem:[#allocation3 + $0x4a] sm:$0xff]
        %v4735 = vld [vmem:[%s3 + $0x400] sm:$0xff]
        %v4736 = vld [vmem:[%s3 + $0x408] sm:$0xff]
        %v4737 = vld [vmem:[%s3 + $0x410] sm:$0xff]
        %v4738 = vld [vmem:[%s3 + $0x418] sm:$0xff]
        %v4739 = vld [vmem:[%s3 + $0x420] sm:$0xff]
        %v4740 = vld [vmem:[%s3 + $0x428] sm:$0xff]
        %v4741 = vld [vmem:[%s3 + $0x430] sm:$0xff]
        %v4742 = vld [vmem:[%s3 + $0x438] sm:$0xff]
        %v4743 = vld [vmem:[%s3 + $0x440] sm:$0xff]
        %v4744 = vld [vmem:[%s3 + $0x448] sm:$0xff]
        %v4745 = vld [vmem:[%s3 + $0x450] sm:$0xff]
        %v4746 = vld [vmem:[%s3 + $0x458] sm:$0xff]
        %v4747 = vld [vmem:[%s3 + $0x460] sm:$0xff]
        %v4748 = vld [vmem:[%s3 + $0x468] sm:$0xff]
        %v4749 = vld [vmem:[%s3 + $0x470] sm:$0xff]
        %v4750 = vld [vmem:[%s3 + $0x478] sm:$0xff]
        %4751 = vmatprep.subr.mxu0 0.0
        %4752 = vmatpush1.msra.mxu0 %v4735
        %4753 = vmatprep.subr.mxu0 0.0
        %4754 = vmatpush1.msra.mxu0 %v4736
        %4755 = vmatprep.subr.mxu0 0.0
        %4756 = vmatpush1.msra.mxu0 %v4737
        %4757 = vmatprep.subr.mxu0 0.0
        %4758 = vmatpush1.msra.mxu0 %v4738
        %4759 = vmatprep.subr.mxu0 0.0
        %4760 = vmatpush1.msra.mxu0 %v4739
        %4761 = vmatprep.subr.mxu0 0.0
        %4762 = vmatpush1.msra.mxu0 %v4740
        %4763 = vmatprep.subr.mxu0 0.0
        %4764 = vmatpush1.msra.mxu0 %v4741
        %4765 = vmatprep.subr.mxu0 0.0
        %4766 = vmatpush1.msra.mxu0 %v4742
        %4767 = vmatprep.subr.mxu0 0.0
        %4768 = vmatpush1.msra.mxu0 %v4743
        %4769 = vmatprep.subr.mxu0 0.0
        %4770 = vmatpush1.msra.mxu0 %v4744
        %4771 = vmatprep.subr.mxu0 0.0
        %4772 = vmatpush1.msra.mxu0 %v4745
        %4773 = vmatprep.subr.mxu0 0.0
        %4774 = vmatpush1.msra.mxu0 %v4746
        %4775 = vmatprep.subr.mxu0 0.0
        %4776 = vmatpush1.msra.mxu0 %v4747
        %4777 = vmatprep.subr.mxu0 0.0
        %4778 = vmatpush1.msra.mxu0 %v4748
        %4779 = vmatprep.subr.mxu0 0.0
        %4780 = vmatpush1.msra.mxu0 %v4749
        %4781 = vmatprep.subr.mxu0 0.0
        %4782 = vmatpush1.msra.mxu0 %v4750
        %4783 = vmatprep.subr.mxu0 0.0
        %4784 = vmatpush1.msra.mxu0 0.0
        %4785 = vmatprep.subr.mxu0 0.0
        %4786 = vmatpush1.msra.mxu0 0.0
        %4787 = vmatprep.subr.mxu0 0.0
        %4788 = vmatpush1.msra.mxu0 0.0
        %4789 = vmatprep.subr.mxu0 0.0
        %4790 = vmatpush1.msra.mxu0 0.0
        %4791 = vmatprep.subr.mxu0 0.0
        %4792 = vmatpush1.msra.mxu0 0.0
        %4793 = vmatprep.subr.mxu0 0.0
        %4794 = vmatpush1.msra.mxu0 0.0
        %4795 = vmatprep.subr.mxu0 0.0
        %4796 = vmatpush1.msra.mxu0 0.0
        %4797 = vmatprep.subr.mxu0 0.0
        %4798 = vmatpush1.msra.mxu0 0.0
        %4799 = vmatprep.subr.mxu0 0.0
        %4800 = vmatpush1.msra.mxu0 0.0
        %4801 = vmatprep.subr.mxu0 0.0
        %4802 = vmatpush1.msra.mxu0 0.0
        %4803 = vmatprep.subr.mxu0 0.0
        %4804 = vmatpush1.msra.mxu0 0.0
        %4805 = vmatprep.subr.mxu0 0.0
        %4806 = vmatpush1.msra.mxu0 0.0
        %4807 = vmatprep.subr.mxu0 0.0
        %4808 = vmatpush1.msra.mxu0 0.0
        %4809 = vmatprep.subr.mxu0 0.0
        %4810 = vmatpush1.msra.mxu0 0.0
        %4811 = vmatprep.subr.mxu0 0.0
        %4812 = vmatpush1.msra.mxu0 0.0
        %4813 = vmatprep.subr.mxu0 0.0
        %4814 = vmatpush1.msra.mxu0 0.0
        %4815 = vmatprep.mubr.f32.mxu0 0.0
        %4816 = vmatmul.mubr.f32.gmra.mrb[0].mxu0 %v4727
        %v4817 = vpop.f32.mrb[0].mxu0
        %v4818 = vadd.f32 0.0, %v4817
        %v4819 = vpop.f32.mrb[0].mxu0
        %4820 = vmatprep.mubr.f32.mxu0 0.0
        %4821 = vmatmul.mubr.f32.gmra.mrb[0].mxu0 %v4728
        %v4822 = vpop.f32.mrb[0].mxu0
        %v4823 = vadd.f32 0.0, %v4822
        %v4824 = vpop.f32.mrb[0].mxu0
        %4825 = vmatprep.mubr.f32.mxu0 0.0
        %4826 = vmatmul.mubr.f32.gmra.mrb[0].mxu0 %v4729
        %v4827 = vpop.f32.mrb[0].mxu0
        %v4828 = vadd.f32 0.0, %v4827
        %v4829 = vpop.f32.mrb[0].mxu0
        %4830 = vmatprep.mubr.f32.mxu0 0.0
        %4831 = vmatmul.mubr.f32.gmra.mrb[0].mxu0 %v4730
        %v4832 = vpop.f32.mrb[0].mxu0
        %v4833 = vadd.f32 0.0, %v4832
        %v4834 = vpop.f32.mrb[0].mxu0
        %4835 = vmatprep.mubr.f32.mxu0 0.0
        %4836 = vmatmul.mubr.f32.gmra.mrb[0].mxu0 %v4731
        %v4837 = vpop.f32.mrb[0].mxu0
        %v4838 = vadd.f32 0.0, %v4837
        %v4839 = vpop.f32.mrb[0].mxu0
        %4840 = vmatprep.mubr.f32.mxu0 0.0
        %4841 = vmatmul.mubr.f32.gmra.mrb[0].mxu0 %v4732
        %v4842 = vpop.f32.mrb[0].mxu0
        %v4843 = vadd.f32 0.0, %v4842
        %v4844 = vpop.f32.mrb[0].mxu0
        %4845 = vmatprep.mubr.f32.mxu0 0.0
        %4846 = vmatmul.mubr.f32.gmra.mrb[0].mxu0 %v4733
        %v4847 = vpop.f32.mrb[0].mxu0
        %v4848 = vadd.f32 0.0, %v4847
        %v4849 = vpop.f32.mrb[0].mxu0
        %4850 = vmatprep.mubr.f32.mxu0 0.0
        %4851 = vmatmul.mubr.f32.gmra.mrb[0].mxu0 %v4734
        %v4852 = vpop.f32.mrb[0].mxu0
        %v4853 = vadd.f32 0.0, %v4852
        %v4854 = vpop.f32.mrb[0].mxu0
        %4855 = vdwg.mxu0
        %v4856 = vadd.f32 %v4689, %v4818
        %v4857 = vadd.f32 %v4694, %v4823
        %v4858 = vadd.f32 %v4699, %v4828
        %v4859 = vadd.f32 %v4704, %v4833
        %v4860 = vadd.f32 %v4709, %v4838
        %v4861 = vadd.f32 %v4714, %v4843
        %v4862 = vadd.f32 %v4719, %v4848
        %v4863 = vadd.f32 %v4724, %v4853
        %v4864 = vsel %vm3668, %v4856, 0.0
        %v4865 = vsel %vm3669, %v4857, 0.0
        %v4866 = vsel %vm3670, %v4858, 0.0
        %v4867 = vsel %vm3671, %v4859, 0.0
        %v4868 = vsel %vm3672, %v4860, 0.0
        %v4869 = vsel %vm3673, %v4861, 0.0
        %v4870 = vsel %vm3674, %v4862, 0.0
        %v4871 = vsel %vm3675, %v4863, 0.0
        %v4872 = vadd.f32 %v4468, %v4864
        %v4873 = vadd.f32 %v4469, %v4865
        %v4874 = vadd.f32 %v4470, %v4866
        %v4875 = vadd.f32 %v4471, %v4867
        %v4876 = vadd.f32 %v4472, %v4868
        %v4877 = vadd.f32 %v4473, %v4869
        %v4878 = vadd.f32 %v4474, %v4870
        %v4879 = vadd.f32 %v4475, %v4871
        %v4880 = vld [vmem:[%s4] sm:$0x1]
        %v4882 = vlaneseq
        %v4883 = vshrl.u32 %v4882, 7
        %v4884 = vsub.s32 0, %v4883
        %v4885 = vrot.slane %v4880, %v4884
        %v4887 = vadd.f32 %v4872, %v4885
        %v4888 = vadd.f32 %v4873, %v4885
        %v4889 = vadd.f32 %v4874, %v4885
        %v4890 = vadd.f32 %v4875, %v4885
        %v4891 = vadd.f32 %v4876, %v4885
        %v4892 = vadd.f32 %v4877, %v4885
        %v4893 = vadd.f32 %v4878, %v4885
        %v4894 = vadd.f32 %v4879, %v4885
        %v4895 = vmax.f32 %v4887, 0.0
        %v4896 = vmax.f32 %v4888, 0.0
        %v4897 = vmax.f32 %v4889, 0.0
        %v4898 = vmax.f32 %v4890, 0.0
        %v4899 = vmax.f32 %v4891, 0.0
        %v4900 = vmax.f32 %v4892, 0.0
        %v4901 = vmax.f32 %v4893, 0.0
        %v4902 = vmax.f32 %v4894, 0.0
        %4903 = vst [vmem:[#allocation6] sm:$0xff] %v4895
        %4904 = vst [vmem:[#allocation6 + $0x8] sm:$0xff] %v4896
        %4905 = vst [vmem:[#allocation6 + $0x10] sm:$0xff] %v4897
        %4906 = vst [vmem:[#allocation6 + $0x18] sm:$0xff] %v4898
        %4907 = vst [vmem:[#allocation6 + $0x20] sm:$0xff] %v4899
        %4908 = vst [vmem:[#allocation6 + $0x28] sm:$0xff] %v4900
        %4909 = vst [vmem:[#allocation6 + $0x30] sm:$0xff] %v4901
        %4910 = vst [vmem:[#allocation6 + $0x38] sm:$0xff] %v4902
        %v4911 = vld [vmem:[#allocation6] sm:$0xff]
        %v4912 = vld [vmem:[#allocation6 + $0x8] sm:$0xff]
        %v4913 = vld [vmem:[#allocation6 + $0x10] sm:$0xff]
        %v4914 = vld [vmem:[#allocation6 + $0x18] sm:$0xff]
        %v4915 = vld [vmem:[#allocation6 + $0x20] sm:$0xff]
        %v4916 = vld [vmem:[#allocation6 + $0x28] sm:$0xff]
        %v4917 = vld [vmem:[#allocation6 + $0x30] sm:$0xff]
        %v4918 = vld [vmem:[#allocation6 + $0x38] sm:$0xff]
        %v4919 = vld [vmem:[#allocation6 + $0x1] sm:$0xff]
        %v4920 = vld [vmem:[#allocation6 + $0x9] sm:$0xff]
        %v4921 = vld [vmem:[#allocation6 + $0x11] sm:$0xff]
        %v4922 = vld [vmem:[#allocation6 + $0x19] sm:$0xff]
        %v4923 = vld [vmem:[#allocation6 + $0x21] sm:$0xff]
        %v4924 = vld [vmem:[#allocation6 + $0x29] sm:$0xff]
        %v4925 = vld [vmem:[#allocation6 + $0x31] sm:$0xff]
        %v4926 = vld [vmem:[#allocation6 + $0x39] sm:$0xff]
        %v4927 = vmax.f32 %v4911, %v4919
        %v4928 = vmax.f32 %v4912, %v4920
        %v4929 = vmax.f32 %v4913, %v4921
        %v4930 = vmax.f32 %v4914, %v4922
        %v4931 = vmax.f32 %v4915, %v4923
        %v4932 = vmax.f32 %v4916, %v4924
        %v4933 = vmax.f32 %v4917, %v4925
        %v4934 = vmax.f32 %v4918, %v4926
        %v4935 = vld [vmem:[#allocation6 + $0x40] sm:$0xff]
        %v4936 = vld [vmem:[#allocation6 + $0x41] sm:$0xff]
        %v4937 = vmax.f32 %v4935, %v4936
        %v4938 = vmax.f32 %v4927, %v4928
        %v4939 = vmax.f32 %v4928, %v4929
        %v4940 = vmax.f32 %v4929, %v4930
        %v4941 = vmax.f32 %v4930, %v4931
        %v4942 = vmax.f32 %v4931, %v4932
        %v4943 = vmax.f32 %v4932, %v4933
        %v4944 = vmax.f32 %v4933, %v4934
        %v4945 = vmax.f32 %v4934, %v4937
        %v4946 = vshra.s32 %v468, 2
        %v4947 = vshra.s32 %v469, 2
        %v4948 = vshll.u32 %v4946, 4
        %v4949 = vshll.u32 %v4947, 4
        %v4950 = vand.u32 %v468, 3
        %v4951 = vand.u32 %v469, 3
        %v4952 = vshll.u32 %v4950, 1
        %v4953 = vshll.u32 %v4951, 1
        %v4954 = vadd.s32 %v4948, %v4952
        %v4955 = vadd.s32 %v4949, %v4953
        %vm4956 = vcmp.eq.s32.totalorder %v3457, %v4954
        %vm4957 = vcmp.eq.s32.totalorder %v3457, %v4955
        %v4958 = vsel %vm4956, 1, 0
        %v4959 = vsel %vm4957, 1, 0
        %v4960 = vcvt.s32.f32 %v4958
        %v4961 = vcvt.s32.f32 %v4959
        %vm4962 = vcmask 523264
        %v4964 = vsel %vm4962, %v4960, 0
        %v4967 = vsel %vm4962, %v4961, 0
        %4969 = vmatprep.subr.mxu0 0.0
        %4970 = vmatpush1.msra.mxu0 %v4938
        %4971 = vmatprep.subr.mxu0 0.0
        %4972 = vmatpush1.msra.mxu0 %v4939
        %4973 = vmatprep.subr.mxu0 0.0
        %4974 = vmatpush1.msra.mxu0 %v4940
        %4975 = vmatprep.subr.mxu0 0.0
        %4976 = vmatpush1.msra.mxu0 %v4941
        %4977 = vmatprep.subr.mxu0 0.0
        %4978 = vmatpush1.msra.mxu0 %v4942
        %4979 = vmatprep.subr.mxu0 0.0
        %4980 = vmatpush1.msra.mxu0 %v4943
        %4981 = vmatprep.subr.mxu0 0.0
        %4982 = vmatpush1.msra.mxu0 %v4944
        %4983 = vmatprep.subr.mxu0 0.0
        %4984 = vmatpush1.msra.mxu0 %v4945
        %4985 = vmatprep.subr.mxu0 0.0
        %4986 = vmatpush1.msra.mxu0 0.0
        %4987 = vmatprep.subr.mxu0 0.0
        %4988 = vmatpush1.msra.mxu0 0.0
        %4989 = vmatprep.subr.mxu0 0.0
        %4990 = vmatpush1.msra.mxu0 0.0
        %4991 = vmatprep.subr.mxu0 0.0
        %4992 = vmatpush1.msra.mxu0 0.0
        %4993 = vmatprep.subr.mxu0 0.0
        %4994 = vmatpush1.msra.mxu0 0.0
        %4995 = vmatprep.subr.mxu0 0.0
        %4996 = vmatpush1.msra.mxu0 0.0
        %4997 = vmatprep.subr.mxu0 0.0
        %4998 = vmatpush1.msra.mxu0 0.0
        %4999 = vmatprep.subr.mxu0 0.0
        %5000 = vmatpush1.msra.mxu0 0.0
        %5001 = vmatprep.subr.mxu0 0.0
        %5002 = vmatpush1.msra.mxu0 0.0
        %5003 = vmatprep.subr.mxu0 0.0
        %5004 = vmatpush1.msra.mxu0 0.0
        %5005 = vmatprep.subr.mxu0 0.0
        %5006 = vmatpush1.msra.mxu0 0.0
        %5007 = vmatprep.subr.mxu0 0.0
        %5008 = vmatpush1.msra.mxu0 0.0
        %5009 = vmatprep.subr.mxu0 0.0
        %5010 = vmatpush1.msra.mxu0 0.0
        %5011 = vmatprep.subr.mxu0 0.0
        %5012 = vmatpush1.msra.mxu0 0.0
        %5013 = vmatprep.subr.mxu0 0.0
        %5014 = vmatpush1.msra.mxu0 0.0
        %5015 = vmatprep.subr.mxu0 0.0
        %5016 = vmatpush1.msra.mxu0 0.0
        %5017 = vmatprep.subr.mxu0 0.0
        %5018 = vmatpush1.msra.mxu0 0.0
        %5019 = vmatprep.subr.mxu0 0.0
        %5020 = vmatpush1.msra.mxu0 0.0
        %5021 = vmatprep.subr.mxu0 0.0
        %5022 = vmatpush1.msra.mxu0 0.0
        %5023 = vmatprep.subr.mxu0 0.0
        %5024 = vmatpush1.msra.mxu0 0.0
        %5025 = vmatprep.subr.mxu0 0.0
        %5026 = vmatpush1.msra.mxu0 0.0
        %5027 = vmatprep.subr.mxu0 0.0
        %5028 = vmatpush1.msra.mxu0 0.0
        %5029 = vmatprep.subr.mxu0 0.0
        %5030 = vmatpush1.msra.mxu0 0.0
        %5031 = vmatprep.subr.mxu0 0.0
        %5032 = vmatpush1.msra.mxu0 0.0
        %5033 = vmatprep.mubr.f32.mxu0 0.0
        %5034 = vmatmul.mubr.f32.gmra.mrb[0].mxu0 %v4964
        %v5035 = vpop.f32.mrb[0].mxu0
        %v5036 = vadd.f32 0.0, %v5035
        %v5037 = vpop.f32.mrb[0].mxu0
        %5038 = vmatprep.mubr.f32.mxu0 0.0
        %5039 = vmatmul.mubr.f32.gmra.mrb[0].mxu0 %v4967
        %v5040 = vpop.f32.mrb[0].mxu0
        %v5041 = vadd.f32 0.0, %v5040
        %v5042 = vpop.f32.mrb[0].mxu0
        %5043 = vdwg.mxu0
        %5044 = vst [vmem:[#allocation4 + $0x5] sm:$0xff] %v5036
        %5045 = vst [vmem:[#allocation4 + $0xd] sm:$0xff] %v5041
        %vm5046 = vcmp.ne.s32.totalorder %v4950, 0
        %vm5047 = vcmp.ne.s32.totalorder %v4951, 0
        %vm5048 = vcmp.ne.s32.totalorder %v4950, 3
        %vm5049 = vcmp.ne.s32.totalorder %v4951, 3
        %v5050 = vld [vmem:[#allocation4] sm:$0xff]
        %v5051 = vld [vmem:[#allocation4 + $0x8] sm:$0xff]
        %v5052 = vld [vmem:[%s5] sm:$0xff]
        %v5053 = vld [vmem:[%s5 + $0x8] sm:$0xff]
        %v5054 = vld [vmem:[%s5 + $0x10] sm:$0xff]
        %v5055 = vld [vmem:[%s5 + $0x18] sm:$0xff]
        %v5056 = vld [vmem:[%s5 + $0x20] sm:$0xff]
        %v5057 = vld [vmem:[%s5 + $0x28] sm:$0xff]
        %v5058 = vld [vmem:[%s5 + $0x30] sm:$0xff]
        %v5059 = vld [vmem:[%s5 + $0x38] sm:$0xff]
        %v5060 = vld [vmem:[%s5 + $0x40] sm:$0xff]
        %v5061 = vld [vmem:[%s5 + $0x48] sm:$0xff]
        %v5062 = vld [vmem:[%s5 + $0x50] sm:$0xff]
        %v5063 = vld [vmem:[%s5 + $0x58] sm:$0xff]
        %v5064 = vld [vmem:[%s5 + $0x60] sm:$0xff]
        %v5065 = vld [vmem:[%s5 + $0x68] sm:$0xff]
        %v5066 = vld [vmem:[%s5 + $0x70] sm:$0xff]
        %v5067 = vld [vmem:[%s5 + $0x78] sm:$0xff]
        %v5068 = vld [vmem:[#allocation4 + $0x4] sm:$0xff]
        %v5069 = vld [vmem:[#allocation4 + $0xc] sm:$0xff]
        %v5070 = vld [vmem:[%s5 + $0x180] sm:$0xff]
        %v5071 = vld [vmem:[%s5 + $0x188] sm:$0xff]
        %v5072 = vld [vmem:[%s5 + $0x190] sm:$0xff]
        %v5073 = vld [vmem:[%s5 + $0x198] sm:$0xff]
        %v5074 = vld [vmem:[%s5 + $0x1a0] sm:$0xff]
        %v5075 = vld [vmem:[%s5 + $0x1a8] sm:$0xff]
        %v5076 = vld [vmem:[%s5 + $0x1b0] sm:$0xff]
        %v5077 = vld [vmem:[%s5 + $0x1b8] sm:$0xff]
        %v5078 = vld [vmem:[%s5 + $0x1c0] sm:$0xff]
        %v5079 = vld [vmem:[%s5 + $0x1c8] sm:$0xff]
        %v5080 = vld [vmem:[%s5 + $0x1d0] sm:$0xff]
        %v5081 = vld [vmem:[%s5 + $0x1d8] sm:$0xff]
        %v5082 = vld [vmem:[%s5 + $0x1e0] sm:$0xff]
        %v5083 = vld [vmem:[%s5 + $0x1e8] sm:$0xff]
        %v5084 = vld [vmem:[%s5 + $0x1f0] sm:$0xff]
        %v5085 = vld [vmem:[%s5 + $0x1f8] sm:$0xff]
        %5086 = vmatprep.subr.mxu0 0.0
        %5087 = vmatpush1.msra.mxu0 %v5070
        %5088 = vmatprep.subr.mxu0 0.0
        %5089 = vmatpush1.msra.mxu0 %v5071
        %5090 = vmatprep.subr.mxu0 0.0
        %5091 = vmatpush1.msra.mxu0 %v5072
        %5092 = vmatprep.subr.mxu0 0.0
        %5093 = vmatpush1.msra.mxu0 %v5073
        %5094 = vmatprep.subr.mxu0 0.0
        %5095 = vmatpush1.msra.mxu0 %v5074
        %5096 = vmatprep.subr.mxu0 0.0
        %5097 = vmatpush1.msra.mxu0 %v5075
        %5098 = vmatprep.subr.mxu0 0.0
        %5099 = vmatpush1.msra.mxu0 %v5076
        %5100 = vmatprep.subr.mxu0 0.0
        %5101 = vmatpush1.msra.mxu0 %v5077
        %5102 = vmatprep.subr.mxu0 0.0
        %5103 = vmatpush1.msra.mxu0 %v5078
        %5104 = vmatprep.subr.mxu0 0.0
        %5105 = vmatpush1.msra.mxu0 %v5079
        %5106 = vmatprep.subr.mxu0 0.0
        %5107 = vmatpush1.msra.mxu0 %v5080
        %5108 = vmatprep.subr.mxu0 0.0
        %5109 = vmatpush1.msra.mxu0 %v5081
        %5110 = vmatprep.subr.mxu0 0.0
        %5111 = vmatpush1.msra.mxu0 %v5082
        %5112 = vmatprep.subr.mxu0 0.0
        %5113 = vmatpush1.msra.mxu0 %v5083
        %5114 = vmatprep.subr.mxu0 0.0
        %5115 = vmatpush1.msra.mxu0 %v5084
        %5116 = vmatprep.subr.mxu0 0.0
        %5117 = vmatpush1.msra.mxu0 %v5085
        %5118 = vmatprep.subr.mxu0 0.0
        %5119 = vmatpush1.msra.mxu0 0.0
        %5120 = vmatprep.subr.mxu0 0.0
        %5121 = vmatpush1.msra.mxu0 0.0
        %5122 = vmatprep.subr.mxu0 0.0
        %5123 = vmatpush1.msra.mxu0 0.0
        %5124 = vmatprep.subr.mxu0 0.0
        %5125 = vmatpush1.msra.mxu0 0.0
        %5126 = vmatprep.subr.mxu0 0.0
        %5127 = vmatpush1.msra.mxu0 0.0
        %5128 = vmatprep.subr.mxu0 0.0
        %5129 = vmatpush1.msra.mxu0 0.0
        %5130 = vmatprep.subr.mxu0 0.0
        %5131 = vmatpush1.msra.mxu0 0.0
        %5132 = vmatprep.subr.mxu0 0.0
        %5133 = vmatpush1.msra.mxu0 0.0
        %5134 = vmatprep.subr.mxu0 0.0
        %5135 = vmatpush1.msra.mxu0 0.0
        %5136 = vmatprep.subr.mxu0 0.0
        %5137 = vmatpush1.msra.mxu0 0.0
        %5138 = vmatprep.subr.mxu0 0.0
        %5139 = vmatpush1.msra.mxu0 0.0
        %5140 = vmatprep.subr.mxu0 0.0
        %5141 = vmatpush1.msra.mxu0 0.0
        %5142 = vmatprep.subr.mxu0 0.0
        %5143 = vmatpush1.msra.mxu0 0.0
        %5144 = vmatprep.subr.mxu0 0.0
        %5145 = vmatpush1.msra.mxu0 0.0
        %5146 = vmatprep.subr.mxu0 0.0
        %5147 = vmatpush1.msra.mxu0 0.0
        %5148 = vmatprep.subr.mxu0 0.0
        %5149 = vmatpush1.msra.mxu0 0.0
        %5150 = vmatprep.mubr.f32.mxu0 0.0
        %5151 = vmatmul.mubr.f32.gmra.mrb[0].mxu0 %v5068
        %v5152 = vpop.f32.mrb[0].mxu0
        %v5153 = vadd.f32 0.0, %v5152
        %v5154 = vpop.f32.mrb[0].mxu0
        %5155 = vmatprep.mubr.f32.mxu0 0.0
        %5156 = vmatmul.mubr.f32.gmra.mrb[0].mxu0 %v5069
        %v5157 = vpop.f32.mrb[0].mxu0
        %v5158 = vadd.f32 0.0, %v5157
        %v5159 = vpop.f32.mrb[0].mxu0
        %5160 = vdwg.mxu0
        %5161 = vmatprep.subr.mxu0 0.0
        %5162 = vmatpush1.msra.mxu0 %v5052
        %5163 = vmatprep.subr.mxu0 0.0
        %5164 = vmatpush1.msra.mxu0 %v5053
        %5165 = vmatprep.subr.mxu0 0.0
        %5166 = vmatpush1.msra.mxu0 %v5054
        %5167 = vmatprep.subr.mxu0 0.0
        %5168 = vmatpush1.msra.mxu0 %v5055
        %5169 = vmatprep.subr.mxu0 0.0
        %5170 = vmatpush1.msra.mxu0 %v5056
        %5171 = vmatprep.subr.mxu0 0.0
        %5172 = vmatpush1.msra.mxu0 %v5057
        %5173 = vmatprep.subr.mxu0 0.0
        %5174 = vmatpush1.msra.mxu0 %v5058
        %5175 = vmatprep.subr.mxu0 0.0
        %5176 = vmatpush1.msra.mxu0 %v5059
        %5177 = vmatprep.subr.mxu0 0.0
        %5178 = vmatpush1.msra.mxu0 %v5060
        %5179 = vmatprep.subr.mxu0 0.0
        %5180 = vmatpush1.msra.mxu0 %v5061
        %5181 = vmatprep.subr.mxu0 0.0
        %5182 = vmatpush1.msra.mxu0 %v5062
        %5183 = vmatprep.subr.mxu0 0.0
        %5184 = vmatpush1.msra.mxu0 %v5063
        %5185 = vmatprep.subr.mxu0 0.0
        %5186 = vmatpush1.msra.mxu0 %v5064
        %5187 = vmatprep.subr.mxu0 0.0
        %5188 = vmatpush1.msra.mxu0 %v5065
        %5189 = vmatprep.subr.mxu0 0.0
        %5190 = vmatpush1.msra.mxu0 %v5066
        %5191 = vmatprep.subr.mxu0 0.0
        %5192 = vmatpush1.msra.mxu0 %v5067
        %5193 = vmatprep.subr.mxu0 0.0
        %5194 = vmatpush1.msra.mxu0 0.0
        %5195 = vmatprep.subr.mxu0 0.0
        %5196 = vmatpush1.msra.mxu0 0.0
        %5197 = vmatprep.subr.mxu0 0.0
        %5198 = vmatpush1.msra.mxu0 0.0
        %5199 = vmatprep.subr.mxu0 0.0
        %5200 = vmatpush1.msra.mxu0 0.0
        %5201 = vmatprep.subr.mxu0 0.0
        %5202 = vmatpush1.msra.mxu0 0.0
        %5203 = vmatprep.subr.mxu0 0.0
        %5204 = vmatpush1.msra.mxu0 0.0
        %5205 = vmatprep.subr.mxu0 0.0
        %5206 = vmatpush1.msra.mxu0 0.0
        %5207 = vmatprep.subr.mxu0 0.0
        %5208 = vmatpush1.msra.mxu0 0.0
        %5209 = vmatprep.subr.mxu0 0.0
        %5210 = vmatpush1.msra.mxu0 0.0
        %5211 = vmatprep.subr.mxu0 0.0
        %5212 = vmatpush1.msra.mxu0 0.0
        %5213 = vmatprep.subr.mxu0 0.0
        %5214 = vmatpush1.msra.mxu0 0.0
        %5215 = vmatprep.subr.mxu0 0.0
        %5216 = vmatpush1.msra.mxu0 0.0
        %5217 = vmatprep.subr.mxu0 0.0
        %5218 = vmatpush1.msra.mxu0 0.0
        %5219 = vmatprep.subr.mxu0 0.0
        %5220 = vmatpush1.msra.mxu0 0.0
        %5221 = vmatprep.subr.mxu0 0.0
        %5222 = vmatpush1.msra.mxu0 0.0
        %5223 = vmatprep.subr.mxu0 0.0
        %5224 = vmatpush1.msra.mxu0 0.0
        %5225 = vmatprep.mubr.f32.mxu0 0.0
        %5226 = vmatmul.mubr.f32.gmra.mrb[0].mxu0 %v5050
        %v5227 = vpop.f32.mrb[0].mxu0
        %v5228 = vadd.f32 %v5153, %v5227
        %v5229 = vpop.f32.mrb[0].mxu0
        %5230 = vmatprep.mubr.f32.mxu0 0.0
        %5231 = vmatmul.mubr.f32.gmra.mrb[0].mxu0 %v5051
        %v5232 = vpop.f32.mrb[0].mxu0
        %v5233 = vadd.f32 %v5158, %v5232
        %v5234 = vpop.f32.mrb[0].mxu0
        %5235 = vdwg.mxu0
        %v5236 = vld [vmem:[#allocation4 + $0x8] sm:$0xff]
        %v5237 = vld [vmem:[#allocation4 + $0x10] sm:$0xff]
        %v5238 = vld [vmem:[%s5 + $0x300] sm:$0xff]
        %v5239 = vld [vmem:[%s5 + $0x308] sm:$0xff]
        %v5240 = vld [vmem:[%s5 + $0x310] sm:$0xff]
        %v5241 = vld [vmem:[%s5 + $0x318] sm:$0xff]
        %v5242 = vld [vmem:[%s5 + $0x320] sm:$0xff]
        %v5243 = vld [vmem:[%s5 + $0x328] sm:$0xff]
        %v5244 = vld [vmem:[%s5 + $0x330] sm:$0xff]
        %v5245 = vld [vmem:[%s5 + $0x338] sm:$0xff]
        %v5246 = vld [vmem:[%s5 + $0x340] sm:$0xff]
        %v5247 = vld [vmem:[%s5 + $0x348] sm:$0xff]
        %v5248 = vld [vmem:[%s5 + $0x350] sm:$0xff]
        %v5249 = vld [vmem:[%s5 + $0x358] sm:$0xff]
        %v5250 = vld [vmem:[%s5 + $0x360] sm:$0xff]
        %v5251 = vld [vmem:[%s5 + $0x368] sm:$0xff]
        %v5252 = vld [vmem:[%s5 + $0x370] sm:$0xff]
        %v5253 = vld [vmem:[%s5 + $0x378] sm:$0xff]
        %5254 = vmatprep.subr.mxu0 0.0
        %5255 = vmatpush1.msra.mxu0 %v5238
        %5256 = vmatprep.subr.mxu0 0.0
        %5257 = vmatpush1.msra.mxu0 %v5239
        %5258 = vmatprep.subr.mxu0 0.0
        %5259 = vmatpush1.msra.mxu0 %v5240
        %5260 = vmatprep.subr.mxu0 0.0
        %5261 = vmatpush1.msra.mxu0 %v5241
        %5262 = vmatprep.subr.mxu0 0.0
        %5263 = vmatpush1.msra.mxu0 %v5242
        %5264 = vmatprep.subr.mxu0 0.0
        %5265 = vmatpush1.msra.mxu0 %v5243
        %5266 = vmatprep.subr.mxu0 0.0
        %5267 = vmatpush1.msra.mxu0 %v5244
        %5268 = vmatprep.subr.mxu0 0.0
        %5269 = vmatpush1.msra.mxu0 %v5245
        %5270 = vmatprep.subr.mxu0 0.0
        %5271 = vmatpush1.msra.mxu0 %v5246
        %5272 = vmatprep.subr.mxu0 0.0
        %5273 = vmatpush1.msra.mxu0 %v5247
        %5274 = vmatprep.subr.mxu0 0.0
        %5275 = vmatpush1.msra.mxu0 %v5248
        %5276 = vmatprep.subr.mxu0 0.0
        %5277 = vmatpush1.msra.mxu0 %v5249
        %5278 = vmatprep.subr.mxu0 0.0
        %5279 = vmatpush1.msra.mxu0 %v5250
        %5280 = vmatprep.subr.mxu0 0.0
        %5281 = vmatpush1.msra.mxu0 %v5251
        %5282 = vmatprep.subr.mxu0 0.0
        %5283 = vmatpush1.msra.mxu0 %v5252
        %5284 = vmatprep.subr.mxu0 0.0
        %5285 = vmatpush1.msra.mxu0 %v5253
        %5286 = vmatprep.subr.mxu0 0.0
        %5287 = vmatpush1.msra.mxu0 0.0
        %5288 = vmatprep.subr.mxu0 0.0
        %5289 = vmatpush1.msra.mxu0 0.0
        %5290 = vmatprep.subr.mxu0 0.0
        %5291 = vmatpush1.msra.mxu0 0.0
        %5292 = vmatprep.subr.mxu0 0.0
        %5293 = vmatpush1.msra.mxu0 0.0
        %5294 = vmatprep.subr.mxu0 0.0
        %5295 = vmatpush1.msra.mxu0 0.0
        %5296 = vmatprep.subr.mxu0 0.0
        %5297 = vmatpush1.msra.mxu0 0.0
        %5298 = vmatprep.subr.mxu0 0.0
        %5299 = vmatpush1.msra.mxu0 0.0
        %5300 = vmatprep.subr.mxu0 0.0
        %5301 = vmatpush1.msra.mxu0 0.0
        %5302 = vmatprep.subr.mxu0 0.0
        %5303 = vmatpush1.msra.mxu0 0.0
        %5304 = vmatprep.subr.mxu0 0.0
        %5305 = vmatpush1.msra.mxu0 0.0
        %5306 = vmatprep.subr.mxu0 0.0
        %5307 = vmatpush1.msra.mxu0 0.0
        %5308 = vmatprep.subr.mxu0 0.0
        %5309 = vmatpush1.msra.mxu0 0.0
        %5310 = vmatprep.subr.mxu0 0.0
        %5311 = vmatpush1.msra.mxu0 0.0
        %5312 = vmatprep.subr.mxu0 0.0
        %5313 = vmatpush1.msra.mxu0 0.0
        %5314 = vmatprep.subr.mxu0 0.0
        %5315 = vmatpush1.msra.mxu0 0.0
        %5316 = vmatprep.subr.mxu0 0.0
        %5317 = vmatpush1.msra.mxu0 0.0
        %5318 = vmatprep.mubr.f32.mxu0 0.0
        %5319 = vmatmul.mubr.f32.gmra.mrb[0].mxu0 %v5236
        %v5320 = vpop.f32.mrb[0].mxu0
        %v5321 = vadd.f32 0.0, %v5320
        %v5322 = vpop.f32.mrb[0].mxu0
        %5323 = vmatprep.mubr.f32.mxu0 0.0
        %5324 = vmatmul.mubr.f32.gmra.mrb[0].mxu0 %v5237
        %v5325 = vpop.f32.mrb[0].mxu0
        %v5326 = vadd.f32 0.0, %v5325
        %v5327 = vpop.f32.mrb[0].mxu0
        %5328 = vdwg.mxu0
        %v5329 = vadd.f32 %v5228, %v5321
        %v5330 = vadd.f32 %v5233, %v5326
        %v5331 = vsel %vm5046, %v5329, 0.0
        %v5332 = vsel %vm5047, %v5330, 0.0
        %v5333 = vadd.f32 %v5331, 0.0
        %v5334 = vadd.f32 %v5332, 0.0
        %v5335 = vld [vmem:[#allocation4 + $0x1] sm:$0xff]
        %v5336 = vld [vmem:[#allocation4 + $0x9] sm:$0xff]
        %v5337 = vld [vmem:[%s5 + $0x80] sm:$0xff]
        %v5338 = vld [vmem:[%s5 + $0x88] sm:$0xff]
        %v5339 = vld [vmem:[%s5 + $0x90] sm:$0xff]
        %v5340 = vld [vmem:[%s5 + $0x98] sm:$0xff]
        %v5341 = vld [vmem:[%s5 + $0xa0] sm:$0xff]
        %v5342 = vld [vmem:[%s5 + $0xa8] sm:$0xff]
        %v5343 = vld [vmem:[%s5 + $0xb0] sm:$0xff]
        %v5344 = vld [vmem:[%s5 + $0xb8] sm:$0xff]
        %v5345 = vld [vmem:[%s5 + $0xc0] sm:$0xff]
        %v5346 = vld [vmem:[%s5 + $0xc8] sm:$0xff]
        %v5347 = vld [vmem:[%s5 + $0xd0] sm:$0xff]
        %v5348 = vld [vmem:[%s5 + $0xd8] sm:$0xff]
        %v5349 = vld [vmem:[%s5 + $0xe0] sm:$0xff]
        %v5350 = vld [vmem:[%s5 + $0xe8] sm:$0xff]
        %v5351 = vld [vmem:[%s5 + $0xf0] sm:$0xff]
        %v5352 = vld [vmem:[%s5 + $0xf8] sm:$0xff]
        %v5353 = vld [vmem:[#allocation4 + $0x5] sm:$0xff]
        %v5354 = vld [vmem:[#allocation4 + $0xd] sm:$0xff]
        %v5355 = vld [vmem:[%s5 + $0x200] sm:$0xff]
        %v5356 = vld [vmem:[%s5 + $0x208] sm:$0xff]
        %v5357 = vld [vmem:[%s5 + $0x210] sm:$0xff]
        %v5358 = vld [vmem:[%s5 + $0x218] sm:$0xff]
        %v5359 = vld [vmem:[%s5 + $0x220] sm:$0xff]
        %v5360 = vld [vmem:[%s5 + $0x228] sm:$0xff]
        %v5361 = vld [vmem:[%s5 + $0x230] sm:$0xff]
        %v5362 = vld [vmem:[%s5 + $0x238] sm:$0xff]
        %v5363 = vld [vmem:[%s5 + $0x240] sm:$0xff]
        %v5364 = vld [vmem:[%s5 + $0x248] sm:$0xff]
        %v5365 = vld [vmem:[%s5 + $0x250] sm:$0xff]
        %v5366 = vld [vmem:[%s5 + $0x258] sm:$0xff]
        %v5367 = vld [vmem:[%s5 + $0x260] sm:$0xff]
        %v5368 = vld [vmem:[%s5 + $0x268] sm:$0xff]
        %v5369 = vld [vmem:[%s5 + $0x270] sm:$0xff]
        %v5370 = vld [vmem:[%s5 + $0x278] sm:$0xff]
        %5371 = vmatprep.subr.mxu0 0.0
        %5372 = vmatpush1.msra.mxu0 %v5355
        %5373 = vmatprep.subr.mxu0 0.0
        %5374 = vmatpush1.msra.mxu0 %v5356
        %5375 = vmatprep.subr.mxu0 0.0
        %5376 = vmatpush1.msra.mxu0 %v5357
        %5377 = vmatprep.subr.mxu0 0.0
        %5378 = vmatpush1.msra.mxu0 %v5358
        %5379 = vmatprep.subr.mxu0 0.0
        %5380 = vmatpush1.msra.mxu0 %v5359
        %5381 = vmatprep.subr.mxu0 0.0
        %5382 = vmatpush1.msra.mxu0 %v5360
        %5383 = vmatprep.subr.mxu0 0.0
        %5384 = vmatpush1.msra.mxu0 %v5361
        %5385 = vmatprep.subr.mxu0 0.0
        %5386 = vmatpush1.msra.mxu0 %v5362
        %5387 = vmatprep.subr.mxu0 0.0
        %5388 = vmatpush1.msra.mxu0 %v5363
        %5389 = vmatprep.subr.mxu0 0.0
        %5390 = vmatpush1.msra.mxu0 %v5364
        %5391 = vmatprep.subr.mxu0 0.0
        %5392 = vmatpush1.msra.mxu0 %v5365
        %5393 = vmatprep.subr.mxu0 0.0
        %5394 = vmatpush1.msra.mxu0 %v5366
        %5395 = vmatprep.subr.mxu0 0.0
        %5396 = vmatpush1.msra.mxu0 %v5367
        %5397 = vmatprep.subr.mxu0 0.0
        %5398 = vmatpush1.msra.mxu0 %v5368
        %5399 = vmatprep.subr.mxu0 0.0
        %5400 = vmatpush1.msra.mxu0 %v5369
        %5401 = vmatprep.subr.mxu0 0.0
        %5402 = vmatpush1.msra.mxu0 %v5370
        %5403 = vmatprep.subr.mxu0 0.0
        %5404 = vmatpush1.msra.mxu0 0.0
        %5405 = vmatprep.subr.mxu0 0.0
        %5406 = vmatpush1.msra.mxu0 0.0
        %5407 = vmatprep.subr.mxu0 0.0
        %5408 = vmatpush1.msra.mxu0 0.0
        %5409 = vmatprep.subr.mxu0 0.0
        %5410 = vmatpush1.msra.mxu0 0.0
        %5411 = vmatprep.subr.mxu0 0.0
        %5412 = vmatpush1.msra.mxu0 0.0
        %5413 = vmatprep.subr.mxu0 0.0
        %5414 = vmatpush1.msra.mxu0 0.0
        %5415 = vmatprep.subr.mxu0 0.0
        %5416 = vmatpush1.msra.mxu0 0.0
        %5417 = vmatprep.subr.mxu0 0.0
        %5418 = vmatpush1.msra.mxu0 0.0
        %5419 = vmatprep.subr.mxu0 0.0
        %5420 = vmatpush1.msra.mxu0 0.0
        %5421 = vmatprep.subr.mxu0 0.0
        %5422 = vmatpush1.msra.mxu0 0.0
        %5423 = vmatprep.subr.mxu0 0.0
        %5424 = vmatpush1.msra.mxu0 0.0
        %5425 = vmatprep.subr.mxu0 0.0
        %5426 = vmatpush1.msra.mxu0 0.0
        %5427 = vmatprep.subr.mxu0 0.0
        %5428 = vmatpush1.msra.mxu0 0.0
        %5429 = vmatprep.subr.mxu0 0.0
        %5430 = vmatpush1.msra.mxu0 0.0
        %5431 = vmatprep.subr.mxu0 0.0
        %5432 = vmatpush1.msra.mxu0 0.0
        %5433 = vmatprep.subr.mxu0 0.0
        %5434 = vmatpush1.msra.mxu0 0.0
        %5435 = vmatprep.mubr.f32.mxu0 0.0
        %5436 = vmatmul.mubr.f32.gmra.mrb[0].mxu0 %v5353
        %v5437 = vpop.f32.mrb[0].mxu0
        %v5438 = vadd.f32 0.0, %v5437
        %v5439 = vpop.f32.mrb[0].mxu0
        %5440 = vmatprep.mubr.f32.mxu0 0.0
        %5441 = vmatmul.mubr.f32.gmra.mrb[0].mxu0 %v5354
        %v5442 = vpop.f32.mrb[0].mxu0
        %v5443 = vadd.f32 0.0, %v5442
        %v5444 = vpop.f32.mrb[0].mxu0
        %5445 = vdwg.mxu0
        %5446 = vmatprep.subr.mxu0 0.0
        %5447 = vmatpush1.msra.mxu0 %v5337
        %5448 = vmatprep.subr.mxu0 0.0
        %5449 = vmatpush1.msra.mxu0 %v5338
        %5450 = vmatprep.subr.mxu0 0.0
        %5451 = vmatpush1.msra.mxu0 %v5339
        %5452 = vmatprep.subr.mxu0 0.0
        %5453 = vmatpush1.msra.mxu0 %v5340
        %5454 = vmatprep.subr.mxu0 0.0
        %5455 = vmatpush1.msra.mxu0 %v5341
        %5456 = vmatprep.subr.mxu0 0.0
        %5457 = vmatpush1.msra.mxu0 %v5342
        %5458 = vmatprep.subr.mxu0 0.0
        %5459 = vmatpush1.msra.mxu0 %v5343
        %5460 = vmatprep.subr.mxu0 0.0
        %5461 = vmatpush1.msra.mxu0 %v5344
        %5462 = vmatprep.subr.mxu0 0.0
        %5463 = vmatpush1.msra.mxu0 %v5345
        %5464 = vmatprep.subr.mxu0 0.0
        %5465 = vmatpush1.msra.mxu0 %v5346
        %5466 = vmatprep.subr.mxu0 0.0
        %5467 = vmatpush1.msra.mxu0 %v5347
        %5468 = vmatprep.subr.mxu0 0.0
        %5469 = vmatpush1.msra.mxu0 %v5348
        %5470 = vmatprep.subr.mxu0 0.0
        %5471 = vmatpush1.msra.mxu0 %v5349
        %5472 = vmatprep.subr.mxu0 0.0
        %5473 = vmatpush1.msra.mxu0 %v5350
        %5474 = vmatprep.subr.mxu0 0.0
        %5475 = vmatpush1.msra.mxu0 %v5351
        %5476 = vmatprep.subr.mxu0 0.0
        %5477 = vmatpush1.msra.mxu0 %v5352
        %5478 = vmatprep.subr.mxu0 0.0
        %5479 = vmatpush1.msra.mxu0 0.0
        %5480 = vmatprep.subr.mxu0 0.0
        %5481 = vmatpush1.msra.mxu0 0.0
        %5482 = vmatprep.subr.mxu0 0.0
        %5483 = vmatpush1.msra.mxu0 0.0
        %5484 = vmatprep.subr.mxu0 0.0
        %5485 = vmatpush1.msra.mxu0 0.0
        %5486 = vmatprep.subr.mxu0 0.0
        %5487 = vmatpush1.msra.mxu0 0.0
        %5488 = vmatprep.subr.mxu0 0.0
        %5489 = vmatpush1.msra.mxu0 0.0
        %5490 = vmatprep.subr.mxu0 0.0
        %5491 = vmatpush1.msra.mxu0 0.0
        %5492 = vmatprep.subr.mxu0 0.0
        %5493 = vmatpush1.msra.mxu0 0.0
        %5494 = vmatprep.subr.mxu0 0.0
        %5495 = vmatpush1.msra.mxu0 0.0
        %5496 = vmatprep.subr.mxu0 0.0
        %5497 = vmatpush1.msra.mxu0 0.0
        %5498 = vmatprep.subr.mxu0 0.0
        %5499 = vmatpush1.msra.mxu0 0.0
        %5500 = vmatprep.subr.mxu0 0.0
        %5501 = vmatpush1.msra.mxu0 0.0
        %5502 = vmatprep.subr.mxu0 0.0
        %5503 = vmatpush1.msra.mxu0 0.0
        %5504 = vmatprep.subr.mxu0 0.0
        %5505 = vmatpush1.msra.mxu0 0.0
        %5506 = vmatprep.subr.mxu0 0.0
        %5507 = vmatpush1.msra.mxu0 0.0
        %5508 = vmatprep.subr.mxu0 0.0
        %5509 = vmatpush1.msra.mxu0 0.0
        %5510 = vmatprep.mubr.f32.mxu0 0.0
        %5511 = vmatmul.mubr.f32.gmra.mrb[0].mxu0 %v5335
        %v5512 = vpop.f32.mrb[0].mxu0
        %v5513 = vadd.f32 %v5438, %v5512
        %v5514 = vpop.f32.mrb[0].mxu0
        %5515 = vmatprep.mubr.f32.mxu0 0.0
        %5516 = vmatmul.mubr.f32.gmra.mrb[0].mxu0 %v5336
        %v5517 = vpop.f32.mrb[0].mxu0
        %v5518 = vadd.f32 %v5443, %v5517
        %v5519 = vpop.f32.mrb[0].mxu0
        %5520 = vdwg.mxu0
        %v5521 = vld [vmem:[#allocation4 + $0x9] sm:$0xff]
        %v5522 = vld [vmem:[#allocation4 + $0x11] sm:$0xff]
        %v5523 = vld [vmem:[%s5 + $0x380] sm:$0xff]
        %v5524 = vld [vmem:[%s5 + $0x388] sm:$0xff]
        %v5525 = vld [vmem:[%s5 + $0x390] sm:$0xff]
        %v5526 = vld [vmem:[%s5 + $0x398] sm:$0xff]
        %v5527 = vld [vmem:[%s5 + $0x3a0] sm:$0xff]
        %v5528 = vld [vmem:[%s5 + $0x3a8] sm:$0xff]
        %v5529 = vld [vmem:[%s5 + $0x3b0] sm:$0xff]
        %v5530 = vld [vmem:[%s5 + $0x3b8] sm:$0xff]
        %v5531 = vld [vmem:[%s5 + $0x3c0] sm:$0xff]
        %v5532 = vld [vmem:[%s5 + $0x3c8] sm:$0xff]
        %v5533 = vld [vmem:[%s5 + $0x3d0] sm:$0xff]
        %v5534 = vld [vmem:[%s5 + $0x3d8] sm:$0xff]
        %v5535 = vld [vmem:[%s5 + $0x3e0] sm:$0xff]
        %v5536 = vld [vmem:[%s5 + $0x3e8] sm:$0xff]
        %v5537 = vld [vmem:[%s5 + $0x3f0] sm:$0xff]
        %v5538 = vld [vmem:[%s5 + $0x3f8] sm:$0xff]
        %5539 = vmatprep.subr.mxu0 0.0
        %5540 = vmatpush1.msra.mxu0 %v5523
        %5541 = vmatprep.subr.mxu0 0.0
        %5542 = vmatpush1.msra.mxu0 %v5524
        %5543 = vmatprep.subr.mxu0 0.0
        %5544 = vmatpush1.msra.mxu0 %v5525
        %5545 = vmatprep.subr.mxu0 0.0
        %5546 = vmatpush1.msra.mxu0 %v5526
        %5547 = vmatprep.subr.mxu0 0.0
        %5548 = vmatpush1.msra.mxu0 %v5527
        %5549 = vmatprep.subr.mxu0 0.0
        %5550 = vmatpush1.msra.mxu0 %v5528
        %5551 = vmatprep.subr.mxu0 0.0
        %5552 = vmatpush1.msra.mxu0 %v5529
        %5553 = vmatprep.subr.mxu0 0.0
        %5554 = vmatpush1.msra.mxu0 %v5530
        %5555 = vmatprep.subr.mxu0 0.0
        %5556 = vmatpush1.msra.mxu0 %v5531
        %5557 = vmatprep.subr.mxu0 0.0
        %5558 = vmatpush1.msra.mxu0 %v5532
        %5559 = vmatprep.subr.mxu0 0.0
        %5560 = vmatpush1.msra.mxu0 %v5533
        %5561 = vmatprep.subr.mxu0 0.0
        %5562 = vmatpush1.msra.mxu0 %v5534
        %5563 = vmatprep.subr.mxu0 0.0
        %5564 = vmatpush1.msra.mxu0 %v5535
        %5565 = vmatprep.subr.mxu0 0.0
        %5566 = vmatpush1.msra.mxu0 %v5536
        %5567 = vmatprep.subr.mxu0 0.0
        %5568 = vmatpush1.msra.mxu0 %v5537
        %5569 = vmatprep.subr.mxu0 0.0
        %5570 = vmatpush1.msra.mxu0 %v5538
        %5571 = vmatprep.subr.mxu0 0.0
        %5572 = vmatpush1.msra.mxu0 0.0
        %5573 = vmatprep.subr.mxu0 0.0
        %5574 = vmatpush1.msra.mxu0 0.0
        %5575 = vmatprep.subr.mxu0 0.0
        %5576 = vmatpush1.msra.mxu0 0.0
        %5577 = vmatprep.subr.mxu0 0.0
        %5578 = vmatpush1.msra.mxu0 0.0
        %5579 = vmatprep.subr.mxu0 0.0
        %5580 = vmatpush1.msra.mxu0 0.0
        %5581 = vmatprep.subr.mxu0 0.0
        %5582 = vmatpush1.msra.mxu0 0.0
        %5583 = vmatprep.subr.mxu0 0.0
        %5584 = vmatpush1.msra.mxu0 0.0
        %5585 = vmatprep.subr.mxu0 0.0
        %5586 = vmatpush1.msra.mxu0 0.0
        %5587 = vmatprep.subr.mxu0 0.0
        %5588 = vmatpush1.msra.mxu0 0.0
        %5589 = vmatprep.subr.mxu0 0.0
        %5590 = vmatpush1.msra.mxu0 0.0
        %5591 = vmatprep.subr.mxu0 0.0
        %5592 = vmatpush1.msra.mxu0 0.0
        %5593 = vmatprep.subr.mxu0 0.0
        %5594 = vmatpush1.msra.mxu0 0.0
        %5595 = vmatprep.subr.mxu0 0.0
        %5596 = vmatpush1.msra.mxu0 0.0
        %5597 = vmatprep.subr.mxu0 0.0
        %5598 = vmatpush1.msra.mxu0 0.0
        %5599 = vmatprep.subr.mxu0 0.0
        %5600 = vmatpush1.msra.mxu0 0.0
        %5601 = vmatprep.subr.mxu0 0.0
        %5602 = vmatpush1.msra.mxu0 0.0
        %5603 = vmatprep.mubr.f32.mxu0 0.0
        %5604 = vmatmul.mubr.f32.gmra.mrb[0].mxu0 %v5521
        %v5605 = vpop.f32.mrb[0].mxu0
        %v5606 = vadd.f32 0.0, %v5605
        %v5607 = vpop.f32.mrb[0].mxu0
        %5608 = vmatprep.mubr.f32.mxu0 0.0
        %5609 = vmatmul.mubr.f32.gmra.mrb[0].mxu0 %v5522
        %v5610 = vpop.f32.mrb[0].mxu0
        %v5611 = vadd.f32 0.0, %v5610
        %v5612 = vpop.f32.mrb[0].mxu0
        %5613 = vdwg.mxu0
        %v5614 = vadd.f32 %v5513, %v5606
        %v5615 = vadd.f32 %v5518, %v5611
        %v5616 = vadd.f32 %v5333, %v5614
        %v5617 = vadd.f32 %v5334, %v5615
        %v5618 = vld [vmem:[#allocation4 + $0x2] sm:$0xff]
        %v5619 = vld [vmem:[#allocation4 + $0xa] sm:$0xff]
        %v5620 = vld [vmem:[%s5 + $0x100] sm:$0xff]
        %v5621 = vld [vmem:[%s5 + $0x108] sm:$0xff]
        %v5622 = vld [vmem:[%s5 + $0x110] sm:$0xff]
        %v5623 = vld [vmem:[%s5 + $0x118] sm:$0xff]
        %v5624 = vld [vmem:[%s5 + $0x120] sm:$0xff]
        %v5625 = vld [vmem:[%s5 + $0x128] sm:$0xff]
        %v5626 = vld [vmem:[%s5 + $0x130] sm:$0xff]
        %v5627 = vld [vmem:[%s5 + $0x138] sm:$0xff]
        %v5628 = vld [vmem:[%s5 + $0x140] sm:$0xff]
        %v5629 = vld [vmem:[%s5 + $0x148] sm:$0xff]
        %v5630 = vld [vmem:[%s5 + $0x150] sm:$0xff]
        %v5631 = vld [vmem:[%s5 + $0x158] sm:$0xff]
        %v5632 = vld [vmem:[%s5 + $0x160] sm:$0xff]
        %v5633 = vld [vmem:[%s5 + $0x168] sm:$0xff]
        %v5634 = vld [vmem:[%s5 + $0x170] sm:$0xff]
        %v5635 = vld [vmem:[%s5 + $0x178] sm:$0xff]
        %v5636 = vld [vmem:[#allocation4 + $0x6] sm:$0xff]
        %v5637 = vld [vmem:[#allocation4 + $0xe] sm:$0xff]
        %v5638 = vld [vmem:[%s5 + $0x280] sm:$0xff]
        %v5639 = vld [vmem:[%s5 + $0x288] sm:$0xff]
        %v5640 = vld [vmem:[%s5 + $0x290] sm:$0xff]
        %v5641 = vld [vmem:[%s5 + $0x298] sm:$0xff]
        %v5642 = vld [vmem:[%s5 + $0x2a0] sm:$0xff]
        %v5643 = vld [vmem:[%s5 + $0x2a8] sm:$0xff]
        %v5644 = vld [vmem:[%s5 + $0x2b0] sm:$0xff]
        %v5645 = vld [vmem:[%s5 + $0x2b8] sm:$0xff]
        %v5646 = vld [vmem:[%s5 + $0x2c0] sm:$0xff]
        %v5647 = vld [vmem:[%s5 + $0x2c8] sm:$0xff]
        %v5648 = vld [vmem:[%s5 + $0x2d0] sm:$0xff]
        %v5649 = vld [vmem:[%s5 + $0x2d8] sm:$0xff]
        %v5650 = vld [vmem:[%s5 + $0x2e0] sm:$0xff]
        %v5651 = vld [vmem:[%s5 + $0x2e8] sm:$0xff]
        %v5652 = vld [vmem:[%s5 + $0x2f0] sm:$0xff]
        %v5653 = vld [vmem:[%s5 + $0x2f8] sm:$0xff]
        %5654 = vmatprep.subr.mxu0 0.0
        %5655 = vmatpush1.msra.mxu0 %v5638
        %5656 = vmatprep.subr.mxu0 0.0
        %5657 = vmatpush1.msra.mxu0 %v5639
        %5658 = vmatprep.subr.mxu0 0.0
        %5659 = vmatpush1.msra.mxu0 %v5640
        %5660 = vmatprep.subr.mxu0 0.0
        %5661 = vmatpush1.msra.mxu0 %v5641
        %5662 = vmatprep.subr.mxu0 0.0
        %5663 = vmatpush1.msra.mxu0 %v5642
        %5664 = vmatprep.subr.mxu0 0.0
        %5665 = vmatpush1.msra.mxu0 %v5643
        %5666 = vmatprep.subr.mxu0 0.0
        %5667 = vmatpush1.msra.mxu0 %v5644
        %5668 = vmatprep.subr.mxu0 0.0
        %5669 = vmatpush1.msra.mxu0 %v5645
        %5670 = vmatprep.subr.mxu0 0.0
        %5671 = vmatpush1.msra.mxu0 %v5646
        %5672 = vmatprep.subr.mxu0 0.0
        %5673 = vmatpush1.msra.mxu0 %v5647
        %5674 = vmatprep.subr.mxu0 0.0
        %5675 = vmatpush1.msra.mxu0 %v5648
        %5676 = vmatprep.subr.mxu0 0.0
        %5677 = vmatpush1.msra.mxu0 %v5649
        %5678 = vmatprep.subr.mxu0 0.0
        %5679 = vmatpush1.msra.mxu0 %v5650
        %5680 = vmatprep.subr.mxu0 0.0
        %5681 = vmatpush1.msra.mxu0 %v5651
        %5682 = vmatprep.subr.mxu0 0.0
        %5683 = vmatpush1.msra.mxu0 %v5652
        %5684 = vmatprep.subr.mxu0 0.0
        %5685 = vmatpush1.msra.mxu0 %v5653
        %5686 = vmatprep.subr.mxu0 0.0
        %5687 = vmatpush1.msra.mxu0 0.0
        %5688 = vmatprep.subr.mxu0 0.0
        %5689 = vmatpush1.msra.mxu0 0.0
        %5690 = vmatprep.subr.mxu0 0.0
        %5691 = vmatpush1.msra.mxu0 0.0
        %5692 = vmatprep.subr.mxu0 0.0
        %5693 = vmatpush1.msra.mxu0 0.0
        %5694 = vmatprep.subr.mxu0 0.0
        %5695 = vmatpush1.msra.mxu0 0.0
        %5696 = vmatprep.subr.mxu0 0.0
        %5697 = vmatpush1.msra.mxu0 0.0
        %5698 = vmatprep.subr.mxu0 0.0
        %5699 = vmatpush1.msra.mxu0 0.0
        %5700 = vmatprep.subr.mxu0 0.0
        %5701 = vmatpush1.msra.mxu0 0.0
        %5702 = vmatprep.subr.mxu0 0.0
        %5703 = vmatpush1.msra.mxu0 0.0
        %5704 = vmatprep.subr.mxu0 0.0
        %5705 = vmatpush1.msra.mxu0 0.0
        %5706 = vmatprep.subr.mxu0 0.0
        %5707 = vmatpush1.msra.mxu0 0.0
        %5708 = vmatprep.subr.mxu0 0.0
        %5709 = vmatpush1.msra.mxu0 0.0
        %5710 = vmatprep.subr.mxu0 0.0
        %5711 = vmatpush1.msra.mxu0 0.0
        %5712 = vmatprep.subr.mxu0 0.0
        %5713 = vmatpush1.msra.mxu0 0.0
        %5714 = vmatprep.subr.mxu0 0.0
        %5715 = vmatpush1.msra.mxu0 0.0
        %5716 = vmatprep.subr.mxu0 0.0
        %5717 = vmatpush1.msra.mxu0 0.0
        %5718 = vmatprep.mubr.f32.mxu0 0.0
        %5719 = vmatmul.mubr.f32.gmra.mrb[0].mxu0 %v5636
        %v5720 = vpop.f32.mrb[0].mxu0
        %v5721 = vadd.f32 0.0, %v5720
        %v5722 = vpop.f32.mrb[0].mxu0
        %5723 = vmatprep.mubr.f32.mxu0 0.0
        %5724 = vmatmul.mubr.f32.gmra.mrb[0].mxu0 %v5637
        %v5725 = vpop.f32.mrb[0].mxu0
        %v5726 = vadd.f32 0.0, %v5725
        %v5727 = vpop.f32.mrb[0].mxu0
        %5728 = vdwg.mxu0
        %5729 = vmatprep.subr.mxu0 0.0
        %5730 = vmatpush1.msra.mxu0 %v5620
        %5731 = vmatprep.subr.mxu0 0.0
        %5732 = vmatpush1.msra.mxu0 %v5621
        %5733 = vmatprep.subr.mxu0 0.0
        %5734 = vmatpush1.msra.mxu0 %v5622
        %5735 = vmatprep.subr.mxu0 0.0
        %5736 = vmatpush1.msra.mxu0 %v5623
        %5737 = vmatprep.subr.mxu0 0.0
        %5738 = vmatpush1.msra.mxu0 %v5624
        %5739 = vmatprep.subr.mxu0 0.0
        %5740 = vmatpush1.msra.mxu0 %v5625
        %5741 = vmatprep.subr.mxu0 0.0
        %5742 = vmatpush1.msra.mxu0 %v5626
        %5743 = vmatprep.subr.mxu0 0.0
        %5744 = vmatpush1.msra.mxu0 %v5627
        %5745 = vmatprep.subr.mxu0 0.0
        %5746 = vmatpush1.msra.mxu0 %v5628
        %5747 = vmatprep.subr.mxu0 0.0
        %5748 = vmatpush1.msra.mxu0 %v5629
        %5749 = vmatprep.subr.mxu0 0.0
        %5750 = vmatpush1.msra.mxu0 %v5630
        %5751 = vmatprep.subr.mxu0 0.0
        %5752 = vmatpush1.msra.mxu0 %v5631
        %5753 = vmatprep.subr.mxu0 0.0
        %5754 = vmatpush1.msra.mxu0 %v5632
        %5755 = vmatprep.subr.mxu0 0.0
        %5756 = vmatpush1.msra.mxu0 %v5633
        %5757 = vmatprep.subr.mxu0 0.0
        %5758 = vmatpush1.msra.mxu0 %v5634
        %5759 = vmatprep.subr.mxu0 0.0
        %5760 = vmatpush1.msra.mxu0 %v5635
        %5761 = vmatprep.subr.mxu0 0.0
        %5762 = vmatpush1.msra.mxu0 0.0
        %5763 = vmatprep.subr.mxu0 0.0
        %5764 = vmatpush1.msra.mxu0 0.0
        %5765 = vmatprep.subr.mxu0 0.0
        %5766 = vmatpush1.msra.mxu0 0.0
        %5767 = vmatprep.subr.mxu0 0.0
        %5768 = vmatpush1.msra.mxu0 0.0
        %5769 = vmatprep.subr.mxu0 0.0
        %5770 = vmatpush1.msra.mxu0 0.0
        %5771 = vmatprep.subr.mxu0 0.0
        %5772 = vmatpush1.msra.mxu0 0.0
        %5773 = vmatprep.subr.mxu0 0.0
        %5774 = vmatpush1.msra.mxu0 0.0
        %5775 = vmatprep.subr.mxu0 0.0
        %5776 = vmatpush1.msra.mxu0 0.0
        %5777 = vmatprep.subr.mxu0 0.0
        %5778 = vmatpush1.msra.mxu0 0.0
        %5779 = vmatprep.subr.mxu0 0.0
        %5780 = vmatpush1.msra.mxu0 0.0
        %5781 = vmatprep.subr.mxu0 0.0
        %5782 = vmatpush1.msra.mxu0 0.0
        %5783 = vmatprep.subr.mxu0 0.0
        %5784 = vmatpush1.msra.mxu0 0.0
        %5785 = vmatprep.subr.mxu0 0.0
        %5786 = vmatpush1.msra.mxu0 0.0
        %5787 = vmatprep.subr.mxu0 0.0
        %5788 = vmatpush1.msra.mxu0 0.0
        %5789 = vmatprep.subr.mxu0 0.0
        %5790 = vmatpush1.msra.mxu0 0.0
        %5791 = vmatprep.subr.mxu0 0.0
        %5792 = vmatpush1.msra.mxu0 0.0
        %5793 = vmatprep.mubr.f32.mxu0 0.0
        %5794 = vmatmul.mubr.f32.gmra.mrb[0].mxu0 %v5618
        %v5795 = vpop.f32.mrb[0].mxu0
        %v5796 = vadd.f32 %v5721, %v5795
        %v5797 = vpop.f32.mrb[0].mxu0
        %5798 = vmatprep.mubr.f32.mxu0 0.0
        %5799 = vmatmul.mubr.f32.gmra.mrb[0].mxu0 %v5619
        %v5800 = vpop.f32.mrb[0].mxu0
        %v5801 = vadd.f32 %v5726, %v5800
        %v5802 = vpop.f32.mrb[0].mxu0
        %5803 = vdwg.mxu0
        %v5804 = vld [vmem:[#allocation4 + $0xa] sm:$0xff]
        %v5805 = vld [vmem:[#allocation4 + $0x12] sm:$0xff]
        %v5806 = vld [vmem:[%s5 + $0x400] sm:$0xff]
        %v5807 = vld [vmem:[%s5 + $0x408] sm:$0xff]
        %v5808 = vld [vmem:[%s5 + $0x410] sm:$0xff]
        %v5809 = vld [vmem:[%s5 + $0x418] sm:$0xff]
        %v5810 = vld [vmem:[%s5 + $0x420] sm:$0xff]
        %v5811 = vld [vmem:[%s5 + $0x428] sm:$0xff]
        %v5812 = vld [vmem:[%s5 + $0x430] sm:$0xff]
        %v5813 = vld [vmem:[%s5 + $0x438] sm:$0xff]
        %v5814 = vld [vmem:[%s5 + $0x440] sm:$0xff]
        %v5815 = vld [vmem:[%s5 + $0x448] sm:$0xff]
        %v5816 = vld [vmem:[%s5 + $0x450] sm:$0xff]
        %v5817 = vld [vmem:[%s5 + $0x458] sm:$0xff]
        %v5818 = vld [vmem:[%s5 + $0x460] sm:$0xff]
        %v5819 = vld [vmem:[%s5 + $0x468] sm:$0xff]
        %v5820 = vld [vmem:[%s5 + $0x470] sm:$0xff]
        %v5821 = vld [vmem:[%s5 + $0x478] sm:$0xff]
        %5822 = vmatprep.subr.mxu0 0.0
        %5823 = vmatpush1.msra.mxu0 %v5806
        %5824 = vmatprep.subr.mxu0 0.0
        %5825 = vmatpush1.msra.mxu0 %v5807
        %5826 = vmatprep.subr.mxu0 0.0
        %5827 = vmatpush1.msra.mxu0 %v5808
        %5828 = vmatprep.subr.mxu0 0.0
        %5829 = vmatpush1.msra.mxu0 %v5809
        %5830 = vmatprep.subr.mxu0 0.0
        %5831 = vmatpush1.msra.mxu0 %v5810
        %5832 = vmatprep.subr.mxu0 0.0
        %5833 = vmatpush1.msra.mxu0 %v5811
        %5834 = vmatprep.subr.mxu0 0.0
        %5835 = vmatpush1.msra.mxu0 %v5812
        %5836 = vmatprep.subr.mxu0 0.0
        %5837 = vmatpush1.msra.mxu0 %v5813
        %5838 = vmatprep.subr.mxu0 0.0
        %5839 = vmatpush1.msra.mxu0 %v5814
        %5840 = vmatprep.subr.mxu0 0.0
        %5841 = vmatpush1.msra.mxu0 %v5815
        %5842 = vmatprep.subr.mxu0 0.0
        %5843 = vmatpush1.msra.mxu0 %v5816
        %5844 = vmatprep.subr.mxu0 0.0
        %5845 = vmatpush1.msra.mxu0 %v5817
        %5846 = vmatprep.subr.mxu0 0.0
        %5847 = vmatpush1.msra.mxu0 %v5818
        %5848 = vmatprep.subr.mxu0 0.0
        %5849 = vmatpush1.msra.mxu0 %v5819
        %5850 = vmatprep.subr.mxu0 0.0
        %5851 = vmatpush1.msra.mxu0 %v5820
        %5852 = vmatprep.subr.mxu0 0.0
        %5853 = vmatpush1.msra.mxu0 %v5821
        %5854 = vmatprep.subr.mxu0 0.0
        %5855 = vmatpush1.msra.mxu0 0.0
        %5856 = vmatprep.subr.mxu0 0.0
        %5857 = vmatpush1.msra.mxu0 0.0
        %5858 = vmatprep.subr.mxu0 0.0
        %5859 = vmatpush1.msra.mxu0 0.0
        %5860 = vmatprep.subr.mxu0 0.0
        %5861 = vmatpush1.msra.mxu0 0.0
        %5862 = vmatprep.subr.mxu0 0.0
        %5863 = vmatpush1.msra.mxu0 0.0
        %5864 = vmatprep.subr.mxu0 0.0
        %5865 = vmatpush1.msra.mxu0 0.0
        %5866 = vmatprep.subr.mxu0 0.0
        %5867 = vmatpush1.msra.mxu0 0.0
        %5868 = vmatprep.subr.mxu0 0.0
        %5869 = vmatpush1.msra.mxu0 0.0
        %5870 = vmatprep.subr.mxu0 0.0
        %5871 = vmatpush1.msra.mxu0 0.0
        %5872 = vmatprep.subr.mxu0 0.0
        %5873 = vmatpush1.msra.mxu0 0.0
        %5874 = vmatprep.subr.mxu0 0.0
        %5875 = vmatpush1.msra.mxu0 0.0
        %5876 = vmatprep.subr.mxu0 0.0
        %5877 = vmatpush1.msra.mxu0 0.0
        %5878 = vmatprep.subr.mxu0 0.0
        %5879 = vmatpush1.msra.mxu0 0.0
        %5880 = vmatprep.subr.mxu0 0.0
        %5881 = vmatpush1.msra.mxu0 0.0
        %5882 = vmatprep.subr.mxu0 0.0
        %5883 = vmatpush1.msra.mxu0 0.0
        %5884 = vmatprep.subr.mxu0 0.0
        %5885 = vmatpush1.msra.mxu0 0.0
        %5886 = vmatprep.mubr.f32.mxu0 0.0
        %5887 = vmatmul.mubr.f32.gmra.mrb[0].mxu0 %v5804
        %v5888 = vpop.f32.mrb[0].mxu0
        %v5889 = vadd.f32 0.0, %v5888
        %v5890 = vpop.f32.mrb[0].mxu0
        %5891 = vmatprep.mubr.f32.mxu0 0.0
        %5892 = vmatmul.mubr.f32.gmra.mrb[0].mxu0 %v5805
        %v5893 = vpop.f32.mrb[0].mxu0
        %v5894 = vadd.f32 0.0, %v5893
        %v5895 = vpop.f32.mrb[0].mxu0
        %5896 = vdwg.mxu0
        %v5897 = vadd.f32 %v5796, %v5889
        %v5898 = vadd.f32 %v5801, %v5894
        %v5899 = vsel %vm5048, %v5897, 0.0
        %v5900 = vsel %vm5049, %v5898, 0.0
        %v5901 = vadd.f32 %v5616, %v5899
        %v5902 = vadd.f32 %v5617, %v5900
        %v5903 = vld [vmem:[%s6] sm:$0x1]
        %v5905 = vlaneseq
        %v5906 = vshrl.u32 %v5905, 7
        %v5907 = vsub.s32 0, %v5906
        %v5908 = vrot.slane %v5903, %v5907
        %v5910 = vadd.f32 %v5901, %v5908
        %v5911 = vadd.f32 %v5902, %v5908
        %v5912 = vmax.f32 %v5910, 0.0
        %v5913 = vmax.f32 %v5911, 0.0
        %5914 = vst [vmem:[#allocation6] sm:$0xff] %v5912
        %5915 = vst [vmem:[#allocation6 + $0x8] sm:$0xff] %v5913
        %v5916 = vld [vmem:[#allocation6] sm:$0xff]
        %v5917 = vld [vmem:[#allocation6 + $0x8] sm:$0xff]
        %v5918 = vld [vmem:[#allocation6 + $0x1] sm:$0xff]
        %v5919 = vld [vmem:[#allocation6 + $0x9] sm:$0xff]
        %v5920 = vmax.f32 %v5916, %v5918
        %v5921 = vmax.f32 %v5917, %v5919
        %v5922 = vld [vmem:[#allocation6 + $0x4] sm:$0xff]
        %v5923 = vld [vmem:[#allocation6 + $0xc] sm:$0xff]
        %v5924 = vld [vmem:[#allocation6 + $0x5] sm:$0xff]
        %v5925 = vld [vmem:[#allocation6 + $0xd] sm:$0xff]
        %v5926 = vmax.f32 %v5922, %v5924
        %v5927 = vmax.f32 %v5923, %v5925
        %v5928 = vmax.f32 %v5920, %v5926
        %v5929 = vmax.f32 %v5921, %v5927
        %v5930 = vshra.s32 %v468, 1
        %v5931 = vshll.u32 %v5930, 3
        %v5932 = vand.u32 %v468, 1
        %v5933 = vshll.u32 %v5932, 1
        %v5934 = vadd.s32 %v5931, %v5933
        %vm5935 = vcmp.eq.s32.totalorder %v3457, %v5934
        %v5936 = vsel %vm5935, 1, 0
        %v5937 = vcvt.s32.f32 %v5936
        %vm5938 = vcmask 130048
        %v5940 = vsel %vm5938, %v5937, 0
        %5942 = vmatprep.subr.mxu0 0.0
        %5943 = vmatpush1.msra.mxu0 %v5928
        %5944 = vmatprep.subr.mxu0 0.0
        %5945 = vmatpush1.msra.mxu0 %v5929
        %5946 = vmatprep.subr.mxu0 0.0
        %5947 = vmatpush1.msra.mxu0 0.0
        %5948 = vmatprep.subr.mxu0 0.0
        %5949 = vmatpush1.msra.mxu0 0.0
        %5950 = vmatprep.subr.mxu0 0.0
        %5951 = vmatpush1.msra.mxu0 0.0
        %5952 = vmatprep.subr.mxu0 0.0
        %5953 = vmatpush1.msra.mxu0 0.0
        %5954 = vmatprep.subr.mxu0 0.0
        %5955 = vmatpush1.msra.mxu0 0.0
        %5956 = vmatprep.subr.mxu0 0.0
        %5957 = vmatpush1.msra.mxu0 0.0
        %5958 = vmatprep.subr.mxu0 0.0
        %5959 = vmatpush1.msra.mxu0 0.0
        %5960 = vmatprep.subr.mxu0 0.0
        %5961 = vmatpush1.msra.mxu0 0.0
        %5962 = vmatprep.subr.mxu0 0.0
        %5963 = vmatpush1.msra.mxu0 0.0
        %5964 = vmatprep.subr.mxu0 0.0
        %5965 = vmatpush1.msra.mxu0 0.0
        %5966 = vmatprep.subr.mxu0 0.0
        %5967 = vmatpush1.msra.mxu0 0.0
        %5968 = vmatprep.subr.mxu0 0.0
        %5969 = vmatpush1.msra.mxu0 0.0
        %5970 = vmatprep.subr.mxu0 0.0
        %5971 = vmatpush1.msra.mxu0 0.0
        %5972 = vmatprep.subr.mxu0 0.0
        %5973 = vmatpush1.msra.mxu0 0.0
        %5974 = vmatprep.subr.mxu0 0.0
        %5975 = vmatpush1.msra.mxu0 0.0
        %5976 = vmatprep.subr.mxu0 0.0
        %5977 = vmatpush1.msra.mxu0 0.0
        %5978 = vmatprep.subr.mxu0 0.0
        %5979 = vmatpush1.msra.mxu0 0.0
        %5980 = vmatprep.subr.mxu0 0.0
        %5981 = vmatpush1.msra.mxu0 0.0
        %5982 = vmatprep.subr.mxu0 0.0
        %5983 = vmatpush1.msra.mxu0 0.0
        %5984 = vmatprep.subr.mxu0 0.0
        %5985 = vmatpush1.msra.mxu0 0.0
        %5986 = vmatprep.subr.mxu0 0.0
        %5987 = vmatpush1.msra.mxu0 0.0
        %5988 = vmatprep.subr.mxu0 0.0
        %5989 = vmatpush1.msra.mxu0 0.0
        %5990 = vmatprep.subr.mxu0 0.0
        %5991 = vmatpush1.msra.mxu0 0.0
        %5992 = vmatprep.subr.mxu0 0.0
        %5993 = vmatpush1.msra.mxu0 0.0
        %5994 = vmatprep.subr.mxu0 0.0
        %5995 = vmatpush1.msra.mxu0 0.0
        %5996 = vmatprep.subr.mxu0 0.0
        %5997 = vmatpush1.msra.mxu0 0.0
        %5998 = vmatprep.subr.mxu0 0.0
        %5999 = vmatpush1.msra.mxu0 0.0
        %6000 = vmatprep.subr.mxu0 0.0
        %6001 = vmatpush1.msra.mxu0 0.0
        %6002 = vmatprep.subr.mxu0 0.0
        %6003 = vmatpush1.msra.mxu0 0.0
        %6004 = vmatprep.subr.mxu0 0.0
        %6005 = vmatpush1.msra.mxu0 0.0
        %6006 = vmatprep.mubr.f32.mxu0 0.0
        %6007 = vmatmul.mubr.f32.gmra.mrb[0].mxu0 %v5940
        %v6008 = vpop.f32.mrb[0].mxu0
        %v6009 = vadd.f32 0.0, %v6008
        %v6010 = vpop.f32.mrb[0].mxu0
        %6011 = vdwg.mxu0
        %6012 = vst [vmem:[#allocation5 + $0x3] sm:$0xf] %v6009
        %vm6013 = vcmp.ne.s32.totalorder %v5932, 0
        %vm6014 = vcmp.ne.s32.totalorder %v5932, 1
        %v6015 = vld [vmem:[#allocation5] sm:$0xf]
        %v6016 = vld [vmem:[%s7] sm:$0xff]
        %v6017 = vld [vmem:[%s7 + $0x8] sm:$0xff]
        %v6018 = vld [vmem:[%s7 + $0x10] sm:$0xff]
        %v6019 = vld [vmem:[%s7 + $0x18] sm:$0xff]
        %v6020 = vld [vmem:[%s7 + $0x20] sm:$0xff]
        %v6021 = vld [vmem:[%s7 + $0x28] sm:$0xff]
        %v6022 = vld [vmem:[%s7 + $0x30] sm:$0xff]
        %v6023 = vld [vmem:[%s7 + $0x38] sm:$0xff]
        %v6024 = vld [vmem:[%s7 + $0x40] sm:$0xff]
        %v6025 = vld [vmem:[%s7 + $0x48] sm:$0xff]
        %v6026 = vld [vmem:[%s7 + $0x50] sm:$0xff]
        %v6027 = vld [vmem:[%s7 + $0x58] sm:$0xff]
        %v6028 = vld [vmem:[%s7 + $0x60] sm:$0xff]
        %v6029 = vld [vmem:[%s7 + $0x68] sm:$0xff]
        %v6030 = vld [vmem:[%s7 + $0x70] sm:$0xff]
        %v6031 = vld [vmem:[%s7 + $0x78] sm:$0xff]
        %v6032 = vld [vmem:[#allocation5 + $0x2] sm:$0xf]
        %v6033 = vld [vmem:[%s7 + $0x180] sm:$0xff]
        %v6034 = vld [vmem:[%s7 + $0x188] sm:$0xff]
        %v6035 = vld [vmem:[%s7 + $0x190] sm:$0xff]
        %v6036 = vld [vmem:[%s7 + $0x198] sm:$0xff]
        %v6037 = vld [vmem:[%s7 + $0x1a0] sm:$0xff]
        %v6038 = vld [vmem:[%s7 + $0x1a8] sm:$0xff]
        %v6039 = vld [vmem:[%s7 + $0x1b0] sm:$0xff]
        %v6040 = vld [vmem:[%s7 + $0x1b8] sm:$0xff]
        %v6041 = vld [vmem:[%s7 + $0x1c0] sm:$0xff]
        %v6042 = vld [vmem:[%s7 + $0x1c8] sm:$0xff]
        %v6043 = vld [vmem:[%s7 + $0x1d0] sm:$0xff]
        %v6044 = vld [vmem:[%s7 + $0x1d8] sm:$0xff]
        %v6045 = vld [vmem:[%s7 + $0x1e0] sm:$0xff]
        %v6046 = vld [vmem:[%s7 + $0x1e8] sm:$0xff]
        %v6047 = vld [vmem:[%s7 + $0x1f0] sm:$0xff]
        %v6048 = vld [vmem:[%s7 + $0x1f8] sm:$0xff]
        %6049 = vmatprep.subr.mxu0 0.0
        %6050 = vmatpush1.msra.mxu0 %v6033
        %6051 = vmatprep.subr.mxu0 0.0
        %6052 = vmatpush1.msra.mxu0 %v6034
        %6053 = vmatprep.subr.mxu0 0.0
        %6054 = vmatpush1.msra.mxu0 %v6035
        %6055 = vmatprep.subr.mxu0 0.0
        %6056 = vmatpush1.msra.mxu0 %v6036
        %6057 = vmatprep.subr.mxu0 0.0
        %6058 = vmatpush1.msra.mxu0 %v6037
        %6059 = vmatprep.subr.mxu0 0.0
        %6060 = vmatpush1.msra.mxu0 %v6038
        %6061 = vmatprep.subr.mxu0 0.0
        %6062 = vmatpush1.msra.mxu0 %v6039
        %6063 = vmatprep.subr.mxu0 0.0
        %6064 = vmatpush1.msra.mxu0 %v6040
        %6065 = vmatprep.subr.mxu0 0.0
        %6066 = vmatpush1.msra.mxu0 %v6041
        %6067 = vmatprep.subr.mxu0 0.0
        %6068 = vmatpush1.msra.mxu0 %v6042
        %6069 = vmatprep.subr.mxu0 0.0
        %6070 = vmatpush1.msra.mxu0 %v6043
        %6071 = vmatprep.subr.mxu0 0.0
        %6072 = vmatpush1.msra.mxu0 %v6044
        %6073 = vmatprep.subr.mxu0 0.0
        %6074 = vmatpush1.msra.mxu0 %v6045
        %6075 = vmatprep.subr.mxu0 0.0
        %6076 = vmatpush1.msra.mxu0 %v6046
        %6077 = vmatprep.subr.mxu0 0.0
        %6078 = vmatpush1.msra.mxu0 %v6047
        %6079 = vmatprep.subr.mxu0 0.0
        %6080 = vmatpush1.msra.mxu0 %v6048
        %6081 = vmatprep.subr.mxu0 0.0
        %6082 = vmatpush1.msra.mxu0 0.0
        %6083 = vmatprep.subr.mxu0 0.0
        %6084 = vmatpush1.msra.mxu0 0.0
        %6085 = vmatprep.subr.mxu0 0.0
        %6086 = vmatpush1.msra.mxu0 0.0
        %6087 = vmatprep.subr.mxu0 0.0
        %6088 = vmatpush1.msra.mxu0 0.0
        %6089 = vmatprep.subr.mxu0 0.0
        %6090 = vmatpush1.msra.mxu0 0.0
        %6091 = vmatprep.subr.mxu0 0.0
        %6092 = vmatpush1.msra.mxu0 0.0
        %6093 = vmatprep.subr.mxu0 0.0
        %6094 = vmatpush1.msra.mxu0 0.0
        %6095 = vmatprep.subr.mxu0 0.0
        %6096 = vmatpush1.msra.mxu0 0.0
        %6097 = vmatprep.subr.mxu0 0.0
        %6098 = vmatpush1.msra.mxu0 0.0
        %6099 = vmatprep.subr.mxu0 0.0
        %6100 = vmatpush1.msra.mxu0 0.0
        %6101 = vmatprep.subr.mxu0 0.0
        %6102 = vmatpush1.msra.mxu0 0.0
        %6103 = vmatprep.subr.mxu0 0.0
        %6104 = vmatpush1.msra.mxu0 0.0
        %6105 = vmatprep.subr.mxu0 0.0
        %6106 = vmatpush1.msra.mxu0 0.0
        %6107 = vmatprep.subr.mxu0 0.0
        %6108 = vmatpush1.msra.mxu0 0.0
        %6109 = vmatprep.subr.mxu0 0.0
        %6110 = vmatpush1.msra.mxu0 0.0
        %6111 = vmatprep.subr.mxu0 0.0
        %6112 = vmatpush1.msra.mxu0 0.0
        %6113 = vmatprep.mubr.f32.mxu0 0.0
        %6114 = vmatmul.mubr.f32.gmra.mrb[0].mxu0 %v6032
        %v6115 = vpop.f32.mrb[0].mxu0
        %v6116 = vadd.f32 0.0, %v6115
        %v6117 = vpop.f32.mrb[0].mxu0
        %6118 = vdwg.mxu0
        %6119 = vmatprep.subr.mxu0 0.0
        %6120 = vmatpush1.msra.mxu0 %v6016
        %6121 = vmatprep.subr.mxu0 0.0
        %6122 = vmatpush1.msra.mxu0 %v6017
        %6123 = vmatprep.subr.mxu0 0.0
        %6124 = vmatpush1.msra.mxu0 %v6018
        %6125 = vmatprep.subr.mxu0 0.0
        %6126 = vmatpush1.msra.mxu0 %v6019
        %6127 = vmatprep.subr.mxu0 0.0
        %6128 = vmatpush1.msra.mxu0 %v6020
        %6129 = vmatprep.subr.mxu0 0.0
        %6130 = vmatpush1.msra.mxu0 %v6021
        %6131 = vmatprep.subr.mxu0 0.0
        %6132 = vmatpush1.msra.mxu0 %v6022
        %6133 = vmatprep.subr.mxu0 0.0
        %6134 = vmatpush1.msra.mxu0 %v6023
        %6135 = vmatprep.subr.mxu0 0.0
        %6136 = vmatpush1.msra.mxu0 %v6024
        %6137 = vmatprep.subr.mxu0 0.0
        %6138 = vmatpush1.msra.mxu0 %v6025
        %6139 = vmatprep.subr.mxu0 0.0
        %6140 = vmatpush1.msra.mxu0 %v6026
        %6141 = vmatprep.subr.mxu0 0.0
        %6142 = vmatpush1.msra.mxu0 %v6027
        %6143 = vmatprep.subr.mxu0 0.0
        %6144 = vmatpush1.msra.mxu0 %v6028
        %6145 = vmatprep.subr.mxu0 0.0
        %6146 = vmatpush1.msra.mxu0 %v6029
        %6147 = vmatprep.subr.mxu0 0.0
        %6148 = vmatpush1.msra.mxu0 %v6030
        %6149 = vmatprep.subr.mxu0 0.0
        %6150 = vmatpush1.msra.mxu0 %v6031
        %6151 = vmatprep.subr.mxu0 0.0
        %6152 = vmatpush1.msra.mxu0 0.0
        %6153 = vmatprep.subr.mxu0 0.0
        %6154 = vmatpush1.msra.mxu0 0.0
        %6155 = vmatprep.subr.mxu0 0.0
        %6156 = vmatpush1.msra.mxu0 0.0
        %6157 = vmatprep.subr.mxu0 0.0
        %6158 = vmatpush1.msra.mxu0 0.0
        %6159 = vmatprep.subr.mxu0 0.0
        %6160 = vmatpush1.msra.mxu0 0.0
        %6161 = vmatprep.subr.mxu0 0.0
        %6162 = vmatpush1.msra.mxu0 0.0
        %6163 = vmatprep.subr.mxu0 0.0
        %6164 = vmatpush1.msra.mxu0 0.0
        %6165 = vmatprep.subr.mxu0 0.0
        %6166 = vmatpush1.msra.mxu0 0.0
        %6167 = vmatprep.subr.mxu0 0.0
        %6168 = vmatpush1.msra.mxu0 0.0
        %6169 = vmatprep.subr.mxu0 0.0
        %6170 = vmatpush1.msra.mxu0 0.0
        %6171 = vmatprep.subr.mxu0 0.0
        %6172 = vmatpush1.msra.mxu0 0.0
        %6173 = vmatprep.subr.mxu0 0.0
        %6174 = vmatpush1.msra.mxu0 0.0
        %6175 = vmatprep.subr.mxu0 0.0
        %6176 = vmatpush1.msra.mxu0 0.0
        %6177 = vmatprep.subr.mxu0 0.0
        %6178 = vmatpush1.msra.mxu0 0.0
        %6179 = vmatprep.subr.mxu0 0.0
        %6180 = vmatpush1.msra.mxu0 0.0
        %6181 = vmatprep.subr.mxu0 0.0
        %6182 = vmatpush1.msra.mxu0 0.0
        %6183 = vmatprep.mubr.f32.mxu0 0.0
        %6184 = vmatmul.mubr.f32.gmra.mrb[0].mxu0 %v6015
        %v6185 = vpop.f32.mrb[0].mxu0
        %v6186 = vadd.f32 %v6116, %v6185
        %v6187 = vpop.f32.mrb[0].mxu0
        %6188 = vdwg.mxu0
        %v6189 = vld [vmem:[#allocation5 + $0x4] sm:$0xf]
        %v6190 = vld [vmem:[%s7 + $0x300] sm:$0xff]
        %v6191 = vld [vmem:[%s7 + $0x308] sm:$0xff]
        %v6192 = vld [vmem:[%s7 + $0x310] sm:$0xff]
        %v6193 = vld [vmem:[%s7 + $0x318] sm:$0xff]
        %v6194 = vld [vmem:[%s7 + $0x320] sm:$0xff]
        %v6195 = vld [vmem:[%s7 + $0x328] sm:$0xff]
        %v6196 = vld [vmem:[%s7 + $0x330] sm:$0xff]
        %v6197 = vld [vmem:[%s7 + $0x338] sm:$0xff]
        %v6198 = vld [vmem:[%s7 + $0x340] sm:$0xff]
        %v6199 = vld [vmem:[%s7 + $0x348] sm:$0xff]
        %v6200 = vld [vmem:[%s7 + $0x350] sm:$0xff]
        %v6201 = vld [vmem:[%s7 + $0x358] sm:$0xff]
        %v6202 = vld [vmem:[%s7 + $0x360] sm:$0xff]
        %v6203 = vld [vmem:[%s7 + $0x368] sm:$0xff]
        %v6204 = vld [vmem:[%s7 + $0x370] sm:$0xff]
        %v6205 = vld [vmem:[%s7 + $0x378] sm:$0xff]
        %6206 = vmatprep.subr.mxu0 0.0
        %6207 = vmatpush1.msra.mxu0 %v6190
        %6208 = vmatprep.subr.mxu0 0.0
        %6209 = vmatpush1.msra.mxu0 %v6191
        %6210 = vmatprep.subr.mxu0 0.0
        %6211 = vmatpush1.msra.mxu0 %v6192
        %6212 = vmatprep.subr.mxu0 0.0
        %6213 = vmatpush1.msra.mxu0 %v6193
        %6214 = vmatprep.subr.mxu0 0.0
        %6215 = vmatpush1.msra.mxu0 %v6194
        %6216 = vmatprep.subr.mxu0 0.0
        %6217 = vmatpush1.msra.mxu0 %v6195
        %6218 = vmatprep.subr.mxu0 0.0
        %6219 = vmatpush1.msra.mxu0 %v6196
        %6220 = vmatprep.subr.mxu0 0.0
        %6221 = vmatpush1.msra.mxu0 %v6197
        %6222 = vmatprep.subr.mxu0 0.0
        %6223 = vmatpush1.msra.mxu0 %v6198
        %6224 = vmatprep.subr.mxu0 0.0
        %6225 = vmatpush1.msra.mxu0 %v6199
        %6226 = vmatprep.subr.mxu0 0.0
        %6227 = vmatpush1.msra.mxu0 %v6200
        %6228 = vmatprep.subr.mxu0 0.0
        %6229 = vmatpush1.msra.mxu0 %v6201
        %6230 = vmatprep.subr.mxu0 0.0
        %6231 = vmatpush1.msra.mxu0 %v6202
        %6232 = vmatprep.subr.mxu0 0.0
        %6233 = vmatpush1.msra.mxu0 %v6203
        %6234 = vmatprep.subr.mxu0 0.0
        %6235 = vmatpush1.msra.mxu0 %v6204
        %6236 = vmatprep.subr.mxu0 0.0
        %6237 = vmatpush1.msra.mxu0 %v6205
        %6238 = vmatprep.subr.mxu0 0.0
        %6239 = vmatpush1.msra.mxu0 0.0
        %6240 = vmatprep.subr.mxu0 0.0
        %6241 = vmatpush1.msra.mxu0 0.0
        %6242 = vmatprep.subr.mxu0 0.0
        %6243 = vmatpush1.msra.mxu0 0.0
        %6244 = vmatprep.subr.mxu0 0.0
        %6245 = vmatpush1.msra.mxu0 0.0
        %6246 = vmatprep.subr.mxu0 0.0
        %6247 = vmatpush1.msra.mxu0 0.0
        %6248 = vmatprep.subr.mxu0 0.0
        %6249 = vmatpush1.msra.mxu0 0.0
        %6250 = vmatprep.subr.mxu0 0.0
        %6251 = vmatpush1.msra.mxu0 0.0
        %6252 = vmatprep.subr.mxu0 0.0
        %6253 = vmatpush1.msra.mxu0 0.0
        %6254 = vmatprep.subr.mxu0 0.0
        %6255 = vmatpush1.msra.mxu0 0.0
        %6256 = vmatprep.subr.mxu0 0.0
        %6257 = vmatpush1.msra.mxu0 0.0
        %6258 = vmatprep.subr.mxu0 0.0
        %6259 = vmatpush1.msra.mxu0 0.0
        %6260 = vmatprep.subr.mxu0 0.0
        %6261 = vmatpush1.msra.mxu0 0.0
        %6262 = vmatprep.subr.mxu0 0.0
        %6263 = vmatpush1.msra.mxu0 0.0
        %6264 = vmatprep.subr.mxu0 0.0
        %6265 = vmatpush1.msra.mxu0 0.0
        %6266 = vmatprep.subr.mxu0 0.0
        %6267 = vmatpush1.msra.mxu0 0.0
        %6268 = vmatprep.subr.mxu0 0.0
        %6269 = vmatpush1.msra.mxu0 0.0
        %6270 = vmatprep.mubr.f32.mxu0 0.0
        %6271 = vmatmul.mubr.f32.gmra.mrb[0].mxu0 %v6189
        %v6272 = vpop.f32.mrb[0].mxu0
        %v6273 = vadd.f32 0.0, %v6272
        %v6274 = vpop.f32.mrb[0].mxu0
        %6275 = vdwg.mxu0
        %v6276 = vadd.f32 %v6186, %v6273
        %v6277 = vsel %vm6013, %v6276, 0.0
        %v6278 = vadd.f32 %v6277, 0.0
        %v6279 = vld [vmem:[#allocation5 + $0x1] sm:$0xf]
        %v6280 = vld [vmem:[%s7 + $0x80] sm:$0xff]
        %v6281 = vld [vmem:[%s7 + $0x88] sm:$0xff]
        %v6282 = vld [vmem:[%s7 + $0x90] sm:$0xff]
        %v6283 = vld [vmem:[%s7 + $0x98] sm:$0xff]
        %v6284 = vld [vmem:[%s7 + $0xa0] sm:$0xff]
        %v6285 = vld [vmem:[%s7 + $0xa8] sm:$0xff]
        %v6286 = vld [vmem:[%s7 + $0xb0] sm:$0xff]
        %v6287 = vld [vmem:[%s7 + $0xb8] sm:$0xff]
        %v6288 = vld [vmem:[%s7 + $0xc0] sm:$0xff]
        %v6289 = vld [vmem:[%s7 + $0xc8] sm:$0xff]
        %v6290 = vld [vmem:[%s7 + $0xd0] sm:$0xff]
        %v6291 = vld [vmem:[%s7 + $0xd8] sm:$0xff]
        %v6292 = vld [vmem:[%s7 + $0xe0] sm:$0xff]
        %v6293 = vld [vmem:[%s7 + $0xe8] sm:$0xff]
        %v6294 = vld [vmem:[%s7 + $0xf0] sm:$0xff]
        %v6295 = vld [vmem:[%s7 + $0xf8] sm:$0xff]
        %v6296 = vld [vmem:[#allocation5 + $0x3] sm:$0xf]
        %v6297 = vld [vmem:[%s7 + $0x200] sm:$0xff]
        %v6298 = vld [vmem:[%s7 + $0x208] sm:$0xff]
        %v6299 = vld [vmem:[%s7 + $0x210] sm:$0xff]
        %v6300 = vld [vmem:[%s7 + $0x218] sm:$0xff]
        %v6301 = vld [vmem:[%s7 + $0x220] sm:$0xff]
        %v6302 = vld [vmem:[%s7 + $0x228] sm:$0xff]
        %v6303 = vld [vmem:[%s7 + $0x230] sm:$0xff]
        %v6304 = vld [vmem:[%s7 + $0x238] sm:$0xff]
        %v6305 = vld [vmem:[%s7 + $0x240] sm:$0xff]
        %v6306 = vld [vmem:[%s7 + $0x248] sm:$0xff]
        %v6307 = vld [vmem:[%s7 + $0x250] sm:$0xff]
        %v6308 = vld [vmem:[%s7 + $0x258] sm:$0xff]
        %v6309 = vld [vmem:[%s7 + $0x260] sm:$0xff]
        %v6310 = vld [vmem:[%s7 + $0x268] sm:$0xff]
        %v6311 = vld [vmem:[%s7 + $0x270] sm:$0xff]
        %v6312 = vld [vmem:[%s7 + $0x278] sm:$0xff]
        %6313 = vmatprep.subr.mxu0 0.0
        %6314 = vmatpush1.msra.mxu0 %v6297
        %6315 = vmatprep.subr.mxu0 0.0
        %6316 = vmatpush1.msra.mxu0 %v6298
        %6317 = vmatprep.subr.mxu0 0.0
        %6318 = vmatpush1.msra.mxu0 %v6299
        %6319 = vmatprep.subr.mxu0 0.0
        %6320 = vmatpush1.msra.mxu0 %v6300
        %6321 = vmatprep.subr.mxu0 0.0
        %6322 = vmatpush1.msra.mxu0 %v6301
        %6323 = vmatprep.subr.mxu0 0.0
        %6324 = vmatpush1.msra.mxu0 %v6302
        %6325 = vmatprep.subr.mxu0 0.0
        %6326 = vmatpush1.msra.mxu0 %v6303
        %6327 = vmatprep.subr.mxu0 0.0
        %6328 = vmatpush1.msra.mxu0 %v6304
        %6329 = vmatprep.subr.mxu0 0.0
        %6330 = vmatpush1.msra.mxu0 %v6305
        %6331 = vmatprep.subr.mxu0 0.0
        %6332 = vmatpush1.msra.mxu0 %v6306
        %6333 = vmatprep.subr.mxu0 0.0
        %6334 = vmatpush1.msra.mxu0 %v6307
        %6335 = vmatprep.subr.mxu0 0.0
        %6336 = vmatpush1.msra.mxu0 %v6308
        %6337 = vmatprep.subr.mxu0 0.0
        %6338 = vmatpush1.msra.mxu0 %v6309
        %6339 = vmatprep.subr.mxu0 0.0
        %6340 = vmatpush1.msra.mxu0 %v6310
        %6341 = vmatprep.subr.mxu0 0.0
        %6342 = vmatpush1.msra.mxu0 %v6311
        %6343 = vmatprep.subr.mxu0 0.0
        %6344 = vmatpush1.msra.mxu0 %v6312
        %6345 = vmatprep.subr.mxu0 0.0
        %6346 = vmatpush1.msra.mxu0 0.0
        %6347 = vmatprep.subr.mxu0 0.0
        %6348 = vmatpush1.msra.mxu0 0.0
        %6349 = vmatprep.subr.mxu0 0.0
        %6350 = vmatpush1.msra.mxu0 0.0
        %6351 = vmatprep.subr.mxu0 0.0
        %6352 = vmatpush1.msra.mxu0 0.0
        %6353 = vmatprep.subr.mxu0 0.0
        %6354 = vmatpush1.msra.mxu0 0.0
        %6355 = vmatprep.subr.mxu0 0.0
        %6356 = vmatpush1.msra.mxu0 0.0
        %6357 = vmatprep.subr.mxu0 0.0
        %6358 = vmatpush1.msra.mxu0 0.0
        %6359 = vmatprep.subr.mxu0 0.0
        %6360 = vmatpush1.msra.mxu0 0.0
        %6361 = vmatprep.subr.mxu0 0.0
        %6362 = vmatpush1.msra.mxu0 0.0
        %6363 = vmatprep.subr.mxu0 0.0
        %6364 = vmatpush1.msra.mxu0 0.0
        %6365 = vmatprep.subr.mxu0 0.0
        %6366 = vmatpush1.msra.mxu0 0.0
        %6367 = vmatprep.subr.mxu0 0.0
        %6368 = vmatpush1.msra.mxu0 0.0
        %6369 = vmatprep.subr.mxu0 0.0
        %6370 = vmatpush1.msra.mxu0 0.0
        %6371 = vmatprep.subr.mxu0 0.0
        %6372 = vmatpush1.msra.mxu0 0.0
        %6373 = vmatprep.subr.mxu0 0.0
        %6374 = vmatpush1.msra.mxu0 0.0
        %6375 = vmatprep.subr.mxu0 0.0
        %6376 = vmatpush1.msra.mxu0 0.0
        %6377 = vmatprep.mubr.f32.mxu0 0.0
        %6378 = vmatmul.mubr.f32.gmra.mrb[0].mxu0 %v6296
        %v6379 = vpop.f32.mrb[0].mxu0
        %v6380 = vadd.f32 0.0, %v6379
        %v6381 = vpop.f32.mrb[0].mxu0
        %6382 = vdwg.mxu0
        %6383 = vmatprep.subr.mxu0 0.0
        %6384 = vmatpush1.msra.mxu0 %v6280
        %6385 = vmatprep.subr.mxu0 0.0
        %6386 = vmatpush1.msra.mxu0 %v6281
        %6387 = vmatprep.subr.mxu0 0.0
        %6388 = vmatpush1.msra.mxu0 %v6282
        %6389 = vmatprep.subr.mxu0 0.0
        %6390 = vmatpush1.msra.mxu0 %v6283
        %6391 = vmatprep.subr.mxu0 0.0
        %6392 = vmatpush1.msra.mxu0 %v6284
        %6393 = vmatprep.subr.mxu0 0.0
        %6394 = vmatpush1.msra.mxu0 %v6285
        %6395 = vmatprep.subr.mxu0 0.0
        %6396 = vmatpush1.msra.mxu0 %v6286
        %6397 = vmatprep.subr.mxu0 0.0
        %6398 = vmatpush1.msra.mxu0 %v6287
        %6399 = vmatprep.subr.mxu0 0.0
        %6400 = vmatpush1.msra.mxu0 %v6288
        %6401 = vmatprep.subr.mxu0 0.0
        %6402 = vmatpush1.msra.mxu0 %v6289
        %6403 = vmatprep.subr.mxu0 0.0
        %6404 = vmatpush1.msra.mxu0 %v6290
        %6405 = vmatprep.subr.mxu0 0.0
        %6406 = vmatpush1.msra.mxu0 %v6291
        %6407 = vmatprep.subr.mxu0 0.0
        %6408 = vmatpush1.msra.mxu0 %v6292
        %6409 = vmatprep.subr.mxu0 0.0
        %6410 = vmatpush1.msra.mxu0 %v6293
        %6411 = vmatprep.subr.mxu0 0.0
        %6412 = vmatpush1.msra.mxu0 %v6294
        %6413 = vmatprep.subr.mxu0 0.0
        %6414 = vmatpush1.msra.mxu0 %v6295
        %6415 = vmatprep.subr.mxu0 0.0
        %6416 = vmatpush1.msra.mxu0 0.0
        %6417 = vmatprep.subr.mxu0 0.0
        %6418 = vmatpush1.msra.mxu0 0.0
        %6419 = vmatprep.subr.mxu0 0.0
        %6420 = vmatpush1.msra.mxu0 0.0
        %6421 = vmatprep.subr.mxu0 0.0
        %6422 = vmatpush1.msra.mxu0 0.0
        %6423 = vmatprep.subr.mxu0 0.0
        %6424 = vmatpush1.msra.mxu0 0.0
        %6425 = vmatprep.subr.mxu0 0.0
        %6426 = vmatpush1.msra.mxu0 0.0
        %6427 = vmatprep.subr.mxu0 0.0
        %6428 = vmatpush1.msra.mxu0 0.0
        %6429 = vmatprep.subr.mxu0 0.0
        %6430 = vmatpush1.msra.mxu0 0.0
        %6431 = vmatprep.subr.mxu0 0.0
        %6432 = vmatpush1.msra.mxu0 0.0
        %6433 = vmatprep.subr.mxu0 0.0
        %6434 = vmatpush1.msra.mxu0 0.0
        %6435 = vmatprep.subr.mxu0 0.0
        %6436 = vmatpush1.msra.mxu0 0.0
        %6437 = vmatprep.subr.mxu0 0.0
        %6438 = vmatpush1.msra.mxu0 0.0
        %6439 = vmatprep.subr.mxu0 0.0
        %6440 = vmatpush1.msra.mxu0 0.0
        %6441 = vmatprep.subr.mxu0 0.0
        %6442 = vmatpush1.msra.mxu0 0.0
        %6443 = vmatprep.subr.mxu0 0.0
        %6444 = vmatpush1.msra.mxu0 0.0
        %6445 = vmatprep.subr.mxu0 0.0
        %6446 = vmatpush1.msra.mxu0 0.0
        %6447 = vmatprep.mubr.f32.mxu0 0.0
        %6448 = vmatmul.mubr.f32.gmra.mrb[0].mxu0 %v6279
        %v6449 = vpop.f32.mrb[0].mxu0
        %v6450 = vadd.f32 %v6380, %v6449
        %v6451 = vpop.f32.mrb[0].mxu0
        %6452 = vdwg.mxu0
        %v6453 = vld [vmem:[#allocation5 + $0x5] sm:$0xf]
        %v6454 = vld [vmem:[%s7 + $0x380] sm:$0xff]
        %v6455 = vld [vmem:[%s7 + $0x388] sm:$0xff]
        %v6456 = vld [vmem:[%s7 + $0x390] sm:$0xff]
        %v6457 = vld [vmem:[%s7 + $0x398] sm:$0xff]
        %v6458 = vld [vmem:[%s7 + $0x3a0] sm:$0xff]
        %v6459 = vld [vmem:[%s7 + $0x3a8] sm:$0xff]
        %v6460 = vld [vmem:[%s7 + $0x3b0] sm:$0xff]
        %v6461 = vld [vmem:[%s7 + $0x3b8] sm:$0xff]
        %v6462 = vld [vmem:[%s7 + $0x3c0] sm:$0xff]
        %v6463 = vld [vmem:[%s7 + $0x3c8] sm:$0xff]
        %v6464 = vld [vmem:[%s7 + $0x3d0] sm:$0xff]
        %v6465 = vld [vmem:[%s7 + $0x3d8] sm:$0xff]
        %v6466 = vld [vmem:[%s7 + $0x3e0] sm:$0xff]
        %v6467 = vld [vmem:[%s7 + $0x3e8] sm:$0xff]
        %v6468 = vld [vmem:[%s7 + $0x3f0] sm:$0xff]
        %v6469 = vld [vmem:[%s7 + $0x3f8] sm:$0xff]
        %6470 = vmatprep.subr.mxu0 0.0
        %6471 = vmatpush1.msra.mxu0 %v6454
        %6472 = vmatprep.subr.mxu0 0.0
        %6473 = vmatpush1.msra.mxu0 %v6455
        %6474 = vmatprep.subr.mxu0 0.0
        %6475 = vmatpush1.msra.mxu0 %v6456
        %6476 = vmatprep.subr.mxu0 0.0
        %6477 = vmatpush1.msra.mxu0 %v6457
        %6478 = vmatprep.subr.mxu0 0.0
        %6479 = vmatpush1.msra.mxu0 %v6458
        %6480 = vmatprep.subr.mxu0 0.0
        %6481 = vmatpush1.msra.mxu0 %v6459
        %6482 = vmatprep.subr.mxu0 0.0
        %6483 = vmatpush1.msra.mxu0 %v6460
        %6484 = vmatprep.subr.mxu0 0.0
        %6485 = vmatpush1.msra.mxu0 %v6461
        %6486 = vmatprep.subr.mxu0 0.0
        %6487 = vmatpush1.msra.mxu0 %v6462
        %6488 = vmatprep.subr.mxu0 0.0
        %6489 = vmatpush1.msra.mxu0 %v6463
        %6490 = vmatprep.subr.mxu0 0.0
        %6491 = vmatpush1.msra.mxu0 %v6464
        %6492 = vmatprep.subr.mxu0 0.0
        %6493 = vmatpush1.msra.mxu0 %v6465
        %6494 = vmatprep.subr.mxu0 0.0
        %6495 = vmatpush1.msra.mxu0 %v6466
        %6496 = vmatprep.subr.mxu0 0.0
        %6497 = vmatpush1.msra.mxu0 %v6467
        %6498 = vmatprep.subr.mxu0 0.0
        %6499 = vmatpush1.msra.mxu0 %v6468
        %6500 = vmatprep.subr.mxu0 0.0
        %6501 = vmatpush1.msra.mxu0 %v6469
        %6502 = vmatprep.subr.mxu0 0.0
        %6503 = vmatpush1.msra.mxu0 0.0
        %6504 = vmatprep.subr.mxu0 0.0
        %6505 = vmatpush1.msra.mxu0 0.0
        %6506 = vmatprep.subr.mxu0 0.0
        %6507 = vmatpush1.msra.mxu0 0.0
        %6508 = vmatprep.subr.mxu0 0.0
        %6509 = vmatpush1.msra.mxu0 0.0
        %6510 = vmatprep.subr.mxu0 0.0
        %6511 = vmatpush1.msra.mxu0 0.0
        %6512 = vmatprep.subr.mxu0 0.0
        %6513 = vmatpush1.msra.mxu0 0.0
        %6514 = vmatprep.subr.mxu0 0.0
        %6515 = vmatpush1.msra.mxu0 0.0
        %6516 = vmatprep.subr.mxu0 0.0
        %6517 = vmatpush1.msra.mxu0 0.0
        %6518 = vmatprep.subr.mxu0 0.0
        %6519 = vmatpush1.msra.mxu0 0.0
        %6520 = vmatprep.subr.mxu0 0.0
        %6521 = vmatpush1.msra.mxu0 0.0
        %6522 = vmatprep.subr.mxu0 0.0
        %6523 = vmatpush1.msra.mxu0 0.0
        %6524 = vmatprep.subr.mxu0 0.0
        %6525 = vmatpush1.msra.mxu0 0.0
        %6526 = vmatprep.subr.mxu0 0.0
        %6527 = vmatpush1.msra.mxu0 0.0
        %6528 = vmatprep.subr.mxu0 0.0
        %6529 = vmatpush1.msra.mxu0 0.0
        %6530 = vmatprep.subr.mxu0 0.0
        %6531 = vmatpush1.msra.mxu0 0.0
        %6532 = vmatprep.subr.mxu0 0.0
        %6533 = vmatpush1.msra.mxu0 0.0
        %6534 = vmatprep.mubr.f32.mxu0 0.0
        %6535 = vmatmul.mubr.f32.gmra.mrb[0].mxu0 %v6453
        %v6536 = vpop.f32.mrb[0].mxu0
        %v6537 = vadd.f32 0.0, %v6536
        %v6538 = vpop.f32.mrb[0].mxu0
        %6539 = vdwg.mxu0
        %v6540 = vadd.f32 %v6450, %v6537
        %v6541 = vadd.f32 %v6278, %v6540
        %v6542 = vld [vmem:[%s7 + $0x100] sm:$0xff]
        %v6543 = vld [vmem:[%s7 + $0x108] sm:$0xff]
        %v6544 = vld [vmem:[%s7 + $0x110] sm:$0xff]
        %v6545 = vld [vmem:[%s7 + $0x118] sm:$0xff]
        %v6546 = vld [vmem:[%s7 + $0x120] sm:$0xff]
        %v6547 = vld [vmem:[%s7 + $0x128] sm:$0xff]
        %v6548 = vld [vmem:[%s7 + $0x130] sm:$0xff]
        %v6549 = vld [vmem:[%s7 + $0x138] sm:$0xff]
        %v6550 = vld [vmem:[%s7 + $0x140] sm:$0xff]
        %v6551 = vld [vmem:[%s7 + $0x148] sm:$0xff]
        %v6552 = vld [vmem:[%s7 + $0x150] sm:$0xff]
        %v6553 = vld [vmem:[%s7 + $0x158] sm:$0xff]
        %v6554 = vld [vmem:[%s7 + $0x160] sm:$0xff]
        %v6555 = vld [vmem:[%s7 + $0x168] sm:$0xff]
        %v6556 = vld [vmem:[%s7 + $0x170] sm:$0xff]
        %v6557 = vld [vmem:[%s7 + $0x178] sm:$0xff]
        %v6558 = vld [vmem:[%s7 + $0x280] sm:$0xff]
        %v6559 = vld [vmem:[%s7 + $0x288] sm:$0xff]
        %v6560 = vld [vmem:[%s7 + $0x290] sm:$0xff]
        %v6561 = vld [vmem:[%s7 + $0x298] sm:$0xff]
        %v6562 = vld [vmem:[%s7 + $0x2a0] sm:$0xff]
        %v6563 = vld [vmem:[%s7 + $0x2a8] sm:$0xff]
        %v6564 = vld [vmem:[%s7 + $0x2b0] sm:$0xff]
        %v6565 = vld [vmem:[%s7 + $0x2b8] sm:$0xff]
        %v6566 = vld [vmem:[%s7 + $0x2c0] sm:$0xff]
        %v6567 = vld [vmem:[%s7 + $0x2c8] sm:$0xff]
        %v6568 = vld [vmem:[%s7 + $0x2d0] sm:$0xff]
        %v6569 = vld [vmem:[%s7 + $0x2d8] sm:$0xff]
        %v6570 = vld [vmem:[%s7 + $0x2e0] sm:$0xff]
        %v6571 = vld [vmem:[%s7 + $0x2e8] sm:$0xff]
        %v6572 = vld [vmem:[%s7 + $0x2f0] sm:$0xff]
        %v6573 = vld [vmem:[%s7 + $0x2f8] sm:$0xff]
        %6574 = vmatprep.subr.mxu0 0.0
        %6575 = vmatpush1.msra.mxu0 %v6558
        %6576 = vmatprep.subr.mxu0 0.0
        %6577 = vmatpush1.msra.mxu0 %v6559
        %6578 = vmatprep.subr.mxu0 0.0
        %6579 = vmatpush1.msra.mxu0 %v6560
        %6580 = vmatprep.subr.mxu0 0.0
        %6581 = vmatpush1.msra.mxu0 %v6561
        %6582 = vmatprep.subr.mxu0 0.0
        %6583 = vmatpush1.msra.mxu0 %v6562
        %6584 = vmatprep.subr.mxu0 0.0
        %6585 = vmatpush1.msra.mxu0 %v6563
        %6586 = vmatprep.subr.mxu0 0.0
        %6587 = vmatpush1.msra.mxu0 %v6564
        %6588 = vmatprep.subr.mxu0 0.0
        %6589 = vmatpush1.msra.mxu0 %v6565
        %6590 = vmatprep.subr.mxu0 0.0
        %6591 = vmatpush1.msra.mxu0 %v6566
        %6592 = vmatprep.subr.mxu0 0.0
        %6593 = vmatpush1.msra.mxu0 %v6567
        %6594 = vmatprep.subr.mxu0 0.0
        %6595 = vmatpush1.msra.mxu0 %v6568
        %6596 = vmatprep.subr.mxu0 0.0
        %6597 = vmatpush1.msra.mxu0 %v6569
        %6598 = vmatprep.subr.mxu0 0.0
        %6599 = vmatpush1.msra.mxu0 %v6570
        %6600 = vmatprep.subr.mxu0 0.0
        %6601 = vmatpush1.msra.mxu0 %v6571
        %6602 = vmatprep.subr.mxu0 0.0
        %6603 = vmatpush1.msra.mxu0 %v6572
        %6604 = vmatprep.subr.mxu0 0.0
        %6605 = vmatpush1.msra.mxu0 %v6573
        %6606 = vmatprep.subr.mxu0 0.0
        %6607 = vmatpush1.msra.mxu0 0.0
        %6608 = vmatprep.subr.mxu0 0.0
        %6609 = vmatpush1.msra.mxu0 0.0
        %6610 = vmatprep.subr.mxu0 0.0
        %6611 = vmatpush1.msra.mxu0 0.0
        %6612 = vmatprep.subr.mxu0 0.0
        %6613 = vmatpush1.msra.mxu0 0.0
        %6614 = vmatprep.subr.mxu0 0.0
        %6615 = vmatpush1.msra.mxu0 0.0
        %6616 = vmatprep.subr.mxu0 0.0
        %6617 = vmatpush1.msra.mxu0 0.0
        %6618 = vmatprep.subr.mxu0 0.0
        %6619 = vmatpush1.msra.mxu0 0.0
        %6620 = vmatprep.subr.mxu0 0.0
        %6621 = vmatpush1.msra.mxu0 0.0
        %6622 = vmatprep.subr.mxu0 0.0
        %6623 = vmatpush1.msra.mxu0 0.0
        %6624 = vmatprep.subr.mxu0 0.0
        %6625 = vmatpush1.msra.mxu0 0.0
        %6626 = vmatprep.subr.mxu0 0.0
        %6627 = vmatpush1.msra.mxu0 0.0
        %6628 = vmatprep.subr.mxu0 0.0
        %6629 = vmatpush1.msra.mxu0 0.0
        %6630 = vmatprep.subr.mxu0 0.0
        %6631 = vmatpush1.msra.mxu0 0.0
        %6632 = vmatprep.subr.mxu0 0.0
        %6633 = vmatpush1.msra.mxu0 0.0
        %6634 = vmatprep.subr.mxu0 0.0
        %6635 = vmatpush1.msra.mxu0 0.0
        %6636 = vmatprep.subr.mxu0 0.0
        %6637 = vmatpush1.msra.mxu0 0.0
        %6638 = vmatprep.mubr.f32.mxu0 0.0
        %6639 = vmatmul.mubr.f32.gmra.mrb[0].mxu0 %v6189
        %v6640 = vpop.f32.mrb[0].mxu0
        %v6641 = vadd.f32 0.0, %v6640
        %v6642 = vpop.f32.mrb[0].mxu0
        %6643 = vdwg.mxu0
        %6644 = vmatprep.subr.mxu0 0.0
        %6645 = vmatpush1.msra.mxu0 %v6542
        %6646 = vmatprep.subr.mxu0 0.0
        %6647 = vmatpush1.msra.mxu0 %v6543
        %6648 = vmatprep.subr.mxu0 0.0
        %6649 = vmatpush1.msra.mxu0 %v6544
        %6650 = vmatprep.subr.mxu0 0.0
        %6651 = vmatpush1.msra.mxu0 %v6545
        %6652 = vmatprep.subr.mxu0 0.0
        %6653 = vmatpush1.msra.mxu0 %v6546
        %6654 = vmatprep.subr.mxu0 0.0
        %6655 = vmatpush1.msra.mxu0 %v6547
        %6656 = vmatprep.subr.mxu0 0.0
        %6657 = vmatpush1.msra.mxu0 %v6548
        %6658 = vmatprep.subr.mxu0 0.0
        %6659 = vmatpush1.msra.mxu0 %v6549
        %6660 = vmatprep.subr.mxu0 0.0
        %6661 = vmatpush1.msra.mxu0 %v6550
        %6662 = vmatprep.subr.mxu0 0.0
        %6663 = vmatpush1.msra.mxu0 %v6551
        %6664 = vmatprep.subr.mxu0 0.0
        %6665 = vmatpush1.msra.mxu0 %v6552
        %6666 = vmatprep.subr.mxu0 0.0
        %6667 = vmatpush1.msra.mxu0 %v6553
        %6668 = vmatprep.subr.mxu0 0.0
        %6669 = vmatpush1.msra.mxu0 %v6554
        %6670 = vmatprep.subr.mxu0 0.0
        %6671 = vmatpush1.msra.mxu0 %v6555
        %6672 = vmatprep.subr.mxu0 0.0
        %6673 = vmatpush1.msra.mxu0 %v6556
        %6674 = vmatprep.subr.mxu0 0.0
        %6675 = vmatpush1.msra.mxu0 %v6557
        %6676 = vmatprep.subr.mxu0 0.0
        %6677 = vmatpush1.msra.mxu0 0.0
        %6678 = vmatprep.subr.mxu0 0.0
        %6679 = vmatpush1.msra.mxu0 0.0
        %6680 = vmatprep.subr.mxu0 0.0
        %6681 = vmatpush1.msra.mxu0 0.0
        %6682 = vmatprep.subr.mxu0 0.0
        %6683 = vmatpush1.msra.mxu0 0.0
        %6684 = vmatprep.subr.mxu0 0.0
        %6685 = vmatpush1.msra.mxu0 0.0
        %6686 = vmatprep.subr.mxu0 0.0
        %6687 = vmatpush1.msra.mxu0 0.0
        %6688 = vmatprep.subr.mxu0 0.0
        %6689 = vmatpush1.msra.mxu0 0.0
        %6690 = vmatprep.subr.mxu0 0.0
        %6691 = vmatpush1.msra.mxu0 0.0
        %6692 = vmatprep.subr.mxu0 0.0
        %6693 = vmatpush1.msra.mxu0 0.0
        %6694 = vmatprep.subr.mxu0 0.0
        %6695 = vmatpush1.msra.mxu0 0.0
        %6696 = vmatprep.subr.mxu0 0.0
        %6697 = vmatpush1.msra.mxu0 0.0
        %6698 = vmatprep.subr.mxu0 0.0
        %6699 = vmatpush1.msra.mxu0 0.0
        %6700 = vmatprep.subr.mxu0 0.0
        %6701 = vmatpush1.msra.mxu0 0.0
        %6702 = vmatprep.subr.mxu0 0.0
        %6703 = vmatpush1.msra.mxu0 0.0
        %6704 = vmatprep.subr.mxu0 0.0
        %6705 = vmatpush1.msra.mxu0 0.0
        %6706 = vmatprep.subr.mxu0 0.0
        %6707 = vmatpush1.msra.mxu0 0.0
        %6708 = vmatprep.mubr.f32.mxu0 0.0
        %6709 = vmatmul.mubr.f32.gmra.mrb[0].mxu0 %v6032
        %v6710 = vpop.f32.mrb[0].mxu0
        %v6711 = vadd.f32 %v6641, %v6710
        %v6712 = vpop.f32.mrb[0].mxu0
        %6713 = vdwg.mxu0
        %v6714 = vld [vmem:[#allocation5 + $0x6] sm:$0xf]
        %v6715 = vld [vmem:[%s7 + $0x400] sm:$0xff]
        %v6716 = vld [vmem:[%s7 + $0x408] sm:$0xff]
        %v6717 = vld [vmem:[%s7 + $0x410] sm:$0xff]
        %v6718 = vld [vmem:[%s7 + $0x418] sm:$0xff]
        %v6719 = vld [vmem:[%s7 + $0x420] sm:$0xff]
        %v6720 = vld [vmem:[%s7 + $0x428] sm:$0xff]
        %v6721 = vld [vmem:[%s7 + $0x430] sm:$0xff]
        %v6722 = vld [vmem:[%s7 + $0x438] sm:$0xff]
        %v6723 = vld [vmem:[%s7 + $0x440] sm:$0xff]
        %v6724 = vld [vmem:[%s7 + $0x448] sm:$0xff]
        %v6725 = vld [vmem:[%s7 + $0x450] sm:$0xff]
        %v6726 = vld [vmem:[%s7 + $0x458] sm:$0xff]
        %v6727 = vld [vmem:[%s7 + $0x460] sm:$0xff]
        %v6728 = vld [vmem:[%s7 + $0x468] sm:$0xff]
        %v6729 = vld [vmem:[%s7 + $0x470] sm:$0xff]
        %v6730 = vld [vmem:[%s7 + $0x478] sm:$0xff]
        %6731 = vmatprep.subr.mxu0 0.0
        %6732 = vmatpush1.msra.mxu0 %v6715
        %6733 = vmatprep.subr.mxu0 0.0
        %6734 = vmatpush1.msra.mxu0 %v6716
        %6735 = vmatprep.subr.mxu0 0.0
        %6736 = vmatpush1.msra.mxu0 %v6717
        %6737 = vmatprep.subr.mxu0 0.0
        %6738 = vmatpush1.msra.mxu0 %v6718
        %6739 = vmatprep.subr.mxu0 0.0
        %6740 = vmatpush1.msra.mxu0 %v6719
        %6741 = vmatprep.subr.mxu0 0.0
        %6742 = vmatpush1.msra.mxu0 %v6720
        %6743 = vmatprep.subr.mxu0 0.0
        %6744 = vmatpush1.msra.mxu0 %v6721
        %6745 = vmatprep.subr.mxu0 0.0
        %6746 = vmatpush1.msra.mxu0 %v6722
        %6747 = vmatprep.subr.mxu0 0.0
        %6748 = vmatpush1.msra.mxu0 %v6723
        %6749 = vmatprep.subr.mxu0 0.0
        %6750 = vmatpush1.msra.mxu0 %v6724
        %6751 = vmatprep.subr.mxu0 0.0
        %6752 = vmatpush1.msra.mxu0 %v6725
        %6753 = vmatprep.subr.mxu0 0.0
        %6754 = vmatpush1.msra.mxu0 %v6726
        %6755 = vmatprep.subr.mxu0 0.0
        %6756 = vmatpush1.msra.mxu0 %v6727
        %6757 = vmatprep.subr.mxu0 0.0
        %6758 = vmatpush1.msra.mxu0 %v6728
        %6759 = vmatprep.subr.mxu0 0.0
        %6760 = vmatpush1.msra.mxu0 %v6729
        %6761 = vmatprep.subr.mxu0 0.0
        %6762 = vmatpush1.msra.mxu0 %v6730
        %6763 = vmatprep.subr.mxu0 0.0
        %6764 = vmatpush1.msra.mxu0 0.0
        %6765 = vmatprep.subr.mxu0 0.0
        %6766 = vmatpush1.msra.mxu0 0.0
        %6767 = vmatprep.subr.mxu0 0.0
        %6768 = vmatpush1.msra.mxu0 0.0
        %6769 = vmatprep.subr.mxu0 0.0
        %6770 = vmatpush1.msra.mxu0 0.0
        %6771 = vmatprep.subr.mxu0 0.0
        %6772 = vmatpush1.msra.mxu0 0.0
        %6773 = vmatprep.subr.mxu0 0.0
        %6774 = vmatpush1.msra.mxu0 0.0
        %6775 = vmatprep.subr.mxu0 0.0
        %6776 = vmatpush1.msra.mxu0 0.0
        %6777 = vmatprep.subr.mxu0 0.0
        %6778 = vmatpush1.msra.mxu0 0.0
        %6779 = vmatprep.subr.mxu0 0.0
        %6780 = vmatpush1.msra.mxu0 0.0
        %6781 = vmatprep.subr.mxu0 0.0
        %6782 = vmatpush1.msra.mxu0 0.0
        %6783 = vmatprep.subr.mxu0 0.0
        %6784 = vmatpush1.msra.mxu0 0.0
        %6785 = vmatprep.subr.mxu0 0.0
        %6786 = vmatpush1.msra.mxu0 0.0
        %6787 = vmatprep.subr.mxu0 0.0
        %6788 = vmatpush1.msra.mxu0 0.0
        %6789 = vmatprep.subr.mxu0 0.0
        %6790 = vmatpush1.msra.mxu0 0.0
        %6791 = vmatprep.subr.mxu0 0.0
        %6792 = vmatpush1.msra.mxu0 0.0
        %6793 = vmatprep.subr.mxu0 0.0
        %6794 = vmatpush1.msra.mxu0 0.0
        %6795 = vmatprep.mubr.f32.mxu0 0.0
        %6796 = vmatmul.mubr.f32.gmra.mrb[0].mxu0 %v6714
        %v6797 = vpop.f32.mrb[0].mxu0
        %v6798 = vadd.f32 0.0, %v6797
        %v6799 = vpop.f32.mrb[0].mxu0
        %6800 = vdwg.mxu0
        %v6801 = vadd.f32 %v6711, %v6798
        %v6802 = vsel %vm6014, %v6801, 0.0
        %v6803 = vadd.f32 %v6541, %v6802
        %v6804 = vld [vmem:[%s8] sm:$0x1]
        %v6806 = vlaneseq
        %v6807 = vshrl.u32 %v6806, 7
        %v6808 = vsub.s32 0, %v6807
        %v6809 = vrot.slane %v6804, %v6808
        %v6811 = vadd.f32 %v6803, %v6809
        %v6812 = vmax.f32 %v6811, 0.0
        %6813 = vst [vmem:[#allocation6] sm:$0xf] %v6812
        %v6814 = vld [vmem:[#allocation6] sm:$0xf]
        %v6815 = vld [vmem:[#allocation6 + $0x1] sm:$0xf]
        %v6816 = vmax.f32 %v6814, %v6815
        %v6817 = vld [vmem:[#allocation6 + $0x2] sm:$0xf]
        %v6818 = vld [vmem:[#allocation6 + $0x3] sm:$0xf]
        %v6819 = vmax.f32 %v6817, %v6818
        %v6820 = vmax.f32 %v6816, %v6819
        %v6821 = vld [vmem:[%s9] sm:$0xff]
        %v6822 = vld [vmem:[%s9 + $0x8] sm:$0xff]
        %v6823 = vld [vmem:[%s9 + $0x10] sm:$0xff]
        %v6824 = vld [vmem:[%s9 + $0x18] sm:$0xff]
        %v6825 = vld [vmem:[%s9 + $0x20] sm:$0xff]
        %v6826 = vld [vmem:[%s9 + $0x28] sm:$0xff]
        %v6827 = vld [vmem:[%s9 + $0x30] sm:$0xff]
        %v6828 = vld [vmem:[%s9 + $0x38] sm:$0xff]
        %v6829 = vld [vmem:[%s9 + $0x40] sm:$0xff]
        %v6830 = vld [vmem:[%s9 + $0x48] sm:$0xff]
        %v6831 = vld [vmem:[%s9 + $0x50] sm:$0xff]
        %v6832 = vld [vmem:[%s9 + $0x58] sm:$0xff]
        %v6833 = vld [vmem:[%s9 + $0x60] sm:$0xff]
        %v6834 = vld [vmem:[%s9 + $0x68] sm:$0xff]
        %v6835 = vld [vmem:[%s9 + $0x70] sm:$0xff]
        %v6836 = vld [vmem:[%s9 + $0x78] sm:$0xff]
        %v6837 = vld [vmem:[%s10] sm:$0x1]
        %6838 = vmatprep.subr.mxu0 0.0
        %6839 = vmatpush1.msra.mxu0 %v6821
        %6840 = vmatprep.subr.mxu0 0.0
        %6841 = vmatpush1.msra.mxu0 %v6822
        %6842 = vmatprep.subr.mxu0 0.0
        %6843 = vmatpush1.msra.mxu0 %v6823
        %6844 = vmatprep.subr.mxu0 0.0
        %6845 = vmatpush1.msra.mxu0 %v6824
        %6846 = vmatprep.subr.mxu0 0.0
        %6847 = vmatpush1.msra.mxu0 %v6825
        %6848 = vmatprep.subr.mxu0 0.0
        %6849 = vmatpush1.msra.mxu0 %v6826
        %6850 = vmatprep.subr.mxu0 0.0
        %6851 = vmatpush1.msra.mxu0 %v6827
        %6852 = vmatprep.subr.mxu0 0.0
        %6853 = vmatpush1.msra.mxu0 %v6828
        %6854 = vmatprep.subr.mxu0 0.0
        %6855 = vmatpush1.msra.mxu0 %v6829
        %6856 = vmatprep.subr.mxu0 0.0
        %6857 = vmatpush1.msra.mxu0 %v6830
        %6858 = vmatprep.subr.mxu0 0.0
        %6859 = vmatpush1.msra.mxu0 %v6831
        %6860 = vmatprep.subr.mxu0 0.0
        %6861 = vmatpush1.msra.mxu0 %v6832
        %6862 = vmatprep.subr.mxu0 0.0
        %6863 = vmatpush1.msra.mxu0 %v6833
        %6864 = vmatprep.subr.mxu0 0.0
        %6865 = vmatpush1.msra.mxu0 %v6834
        %6866 = vmatprep.subr.mxu0 0.0
        %6867 = vmatpush1.msra.mxu0 %v6835
        %6868 = vmatprep.subr.mxu0 0.0
        %6869 = vmatpush1.msra.mxu0 %v6836
        %6870 = vmatprep.subr.mxu0 0.0
        %6871 = vmatpush1.msra.mxu0 0.0
        %6872 = vmatprep.subr.mxu0 0.0
        %6873 = vmatpush1.msra.mxu0 0.0
        %6874 = vmatprep.subr.mxu0 0.0
        %6875 = vmatpush1.msra.mxu0 0.0
        %6876 = vmatprep.subr.mxu0 0.0
        %6877 = vmatpush1.msra.mxu0 0.0
        %6878 = vmatprep.subr.mxu0 0.0
        %6879 = vmatpush1.msra.mxu0 0.0
        %6880 = vmatprep.subr.mxu0 0.0
        %6881 = vmatpush1.msra.mxu0 0.0
        %6882 = vmatprep.subr.mxu0 0.0
        %6883 = vmatpush1.msra.mxu0 0.0
        %6884 = vmatprep.subr.mxu0 0.0
        %6885 = vmatpush1.msra.mxu0 0.0
        %6886 = vmatprep.subr.mxu0 0.0
        %6887 = vmatpush1.msra.mxu0 0.0
        %6888 = vmatprep.subr.mxu0 0.0
        %6889 = vmatpush1.msra.mxu0 0.0
        %6890 = vmatprep.subr.mxu0 0.0
        %6891 = vmatpush1.msra.mxu0 0.0
        %6892 = vmatprep.subr.mxu0 0.0
        %6893 = vmatpush1.msra.mxu0 0.0
        %6894 = vmatprep.subr.mxu0 0.0
        %6895 = vmatpush1.msra.mxu0 0.0
        %6896 = vmatprep.subr.mxu0 0.0
        %6897 = vmatpush1.msra.mxu0 0.0
        %6898 = vmatprep.subr.mxu0 0.0
        %6899 = vmatpush1.msra.mxu0 0.0
        %6900 = vmatprep.subr.mxu0 0.0
        %6901 = vmatpush1.msra.mxu0 0.0
        %6902 = vmatprep.mubr.f32.mxu0 0.0
        %6903 = vmatmul.mubr.f32.gmra.mrb[0].mxu0 %v6820
        %v6904 = vpop.f32.mrb[0].mxu0
        %v6905 = vadd.f32 %v6837, %v6904
        %v6906 = vpop.f32.mrb[0].mxu0
        %6907 = vdwg.mxu0
        %6908 = vst [vmem:[%s378] sm:$0x1] %v6905
        %s6909 = sand.u32 %s269, 1
        %s6910 = scalar_lea.sflag [#allocation8], %s6909
        %s6911 = sand.u32 %s269, 1
        %s6912 = scalar_lea.vmem [#allocation7], %s6911
        // Predicated region
        $region65: #{classifier_forward.1} parent=63 // pred_check
          %p6913 = pneg %p279
        $region66: #{classifier_forward.1} parent=63 // pred_check_branch
          %6915 = sbr.rel (%p6913) target = $region68
        $region67: #{classifier_forward.1} parent=63 // pred_region
          %s6917 = ssub.s32 16, 16
          %6918 = vsyncadd %s6910, %s6917
          %s6919 = smul.addr %s25, 16
          %s6920 = scalar_lea.hbm %s11, %s6919
          %s6922 = sshll.u32 %s6912, 4
          %s6923 = int_to_ptr.vmem [resolvable:$true] %s6922
          %6925 = dma.vmem_to_hbm [thread:$0]  %s6923, 16, %s6920, %s6910
        $region68: #{classifier_forward.1} parent=63 // pred_fallthru
          _
      $region64: #{classifier_forward.1} parent=5 // pred_fallthru
        _
      %p6926 = scmp.le.s32.totalorder 2, %s20
      // Predicated region
      $region69: #{classifier_forward.1} parent=5 // pred_check
        %p6927 = pneg %p6926
      $region70: #{classifier_forward.1} parent=5 // pred_check_branch
        %6929 = sbr.rel (%p6927) target = $region72
      $region71: #{classifier_forward.1} parent=5 // pred_region
        %s6930 = ssub.s32 %s20, 2
        // Predicated region
        $region73: #{classifier_forward.1} parent=71 // pred_check
          %p6931 = pneg %p285
        $region74: #{classifier_forward.1} parent=71 // pred_check_branch
          %6933 = sbr.rel (%p6931) target = $region76
        $region75: #{classifier_forward.1} parent=71 // pred_region
          %s6934 = sand.u32 %s270, 1
          %s6935 = scalar_lea.sflag [#allocation8], %s6934
          %s6936 = sand.u32 %s270, 1
          %s6937 = scalar_lea.vmem [#allocation7], %s6936
          %6938 = dma.done %s6935, 16
        $region76: #{classifier_forward.1} parent=71 // pred_fallthru
          _
      $region72: #{classifier_forward.1} parent=5 // pred_fallthru
        _
    $region6: #{classifier_forward.1} parent=1 // loop_footer
      %s24 = sadd.s32 1, %s20
    $region7: #{classifier_forward.1} parent=1 // loop_footer_branch
      %19 = sbr.rel target = $region3
    $region8: #{classifier_forward.1} parent=1 // loop_exit
      _
    %6939 = vsyncpa [#allocation8], 1
    %s6940 = scalar_lea.sflag [#allocation8], 1
    %6941 = vsyncpa %s6940, 1

</llo_original>
